<compile_context>
chip_gen: v7x
topology: tpu7x:2x2x1
jax: 0.10.0
libtpu: 0.0.40
codegen_flags: <defaults>
</compile_context>

<pallas_src>
import functools

import jax
import jax.numpy as jnp
from jax.experimental import pallas as pl
from jax.experimental.pallas import tpu as pltpu


_VMEM_LIMIT = 32 * 1024 * 1024   # explicit: above v5e's 16 MiB scoped default,
                                 # within v6e/v7x budgets
_TM_TARGET = 512                 # rows per M tile (review: 512-1024)
_LANE = 128


def _round_up(x, m):
    return ((x + m - 1) // m) * m


# ----------------------------------------------------------------------------
# Pallas kernels
# ----------------------------------------------------------------------------
def _matmul_stats_kernel(p_ref, w_ref, y_ref, sum_ref, sq_ref):
    """Pass 1: M-tiled conv-as-matmul + per-channel sum / sumsq accumulation.

    p_ref  : (TM, Kp)  bf16 im2col patch tile
    w_ref  : (Kp, Cp)  bf16 flattened conv weight (resident, index (0,0))
    y_ref  : (TM, Cp)  f32 pre-BN conv output tile
    sum_ref: (1, Cp)   f32 accumulator output (constant block index)
    sq_ref : (1, Cp)   f32 accumulator output (constant block index)
    """
    i = pl.program_id(0)

    @pl.when(i == 0)
    def _():
        sum_ref[...] = jnp.zeros_like(sum_ref)
        sq_ref[...] = jnp.zeros_like(sq_ref)

    y = jnp.dot(p_ref[...], w_ref[...], preferred_element_type=jnp.float32)
    y_ref[...] = y
    sum_ref[...] += jnp.sum(y, axis=0, keepdims=True)
    sq_ref[...] += jnp.sum(y * y, axis=0, keepdims=True)


def _bn_lrelu_kernel(y_ref, scale_ref, shift_ref, o_ref):
    """Pass 2: elementwise BatchNorm (folded scale/shift) + LeakyReLU(0.2).

    y_ref    : (TM, Cp) f32
    scale_ref: (1, Cp)  f32   gamma * rsqrt(var + eps)
    shift_ref: (1, Cp)  f32   beta - mean * scale
    o_ref    : (TM, Cp) bf16
    """
    yn = y_ref[...] * scale_ref[...] + shift_ref[...]
    o_ref[...] = jnp.where(yn >= 0, yn, 0.2 * yn).astype(o_ref.dtype)


def _fc_kernel(x_ref, w_ref, b_ref, o_ref):
    """Unconditional linear logits head, tiled over the contraction dim.

    x_ref: (Np, TK)  bf16 feature tile
    w_ref: (TK, 128) bf16 weight tile (lane-padded output)
    b_ref: (1, 128)  f32  bias (only column 0 meaningful)
    o_ref: (Np, 128) f32  accumulator output (constant block index)
    """
    k = pl.program_id(0)

    @pl.when(k == 0)
    def _():
        o_ref[...] = jnp.zeros_like(o_ref)

    o_ref[...] += jnp.dot(x_ref[...], w_ref[...],
                          preferred_element_type=jnp.float32)

    @pl.when(k == pl.num_programs(0) - 1)
    def _():
        o_ref[...] += b_ref[...]


# ----------------------------------------------------------------------------
# pallas_call wrappers
# ----------------------------------------------------------------------------
def _conv_matmul_stats(patches, wmat, tm):
    M_pad, K_pad = patches.shape
    C_pad = wmat.shape[1]
    G = M_pad // tm
    y, s1, s2 = pl.pallas_call(
        _matmul_stats_kernel,
        out_shape=(
            jax.ShapeDtypeStruct((M_pad, C_pad), jnp.float32),
            jax.ShapeDtypeStruct((1, C_pad), jnp.float32),
            jax.ShapeDtypeStruct((1, C_pad), jnp.float32),
        ),
        grid=(G,),
        in_specs=[
            pl.BlockSpec((tm, K_pad), lambda i: (i, 0)),
            pl.BlockSpec((K_pad, C_pad), lambda i: (0, 0)),
        ],
        out_specs=(
            pl.BlockSpec((tm, C_pad), lambda i: (i, 0)),
            pl.BlockSpec((1, C_pad), lambda i: (0, 0)),
            pl.BlockSpec((1, C_pad), lambda i: (0, 0)),
        ),
        compiler_params=pltpu.CompilerParams(
            dimension_semantics=("arbitrary",),   # stats accumulate across M
            vmem_limit_bytes=_VMEM_LIMIT,
        ),
    )(patches, wmat)
    return y, s1, s2


def _bn_lrelu(y, scale, shift, tm):
    M_pad, C_pad = y.shape
    G = M_pad // tm
    return pl.pallas_call(
        _bn_lrelu_kernel,
        out_shape=jax.ShapeDtypeStruct((M_pad, C_pad), jnp.bfloat16),
        grid=(G,),
        in_specs=[
            pl.BlockSpec((tm, C_pad), lambda i: (i, 0)),
            pl.BlockSpec((1, C_pad), lambda i: (0, 0)),
            pl.BlockSpec((1, C_pad), lambda i: (0, 0)),
        ],
        out_specs=pl.BlockSpec((tm, C_pad), lambda i: (i, 0)),
        compiler_params=pltpu.CompilerParams(
            dimension_semantics=("parallel",),    # megacore-splittable on v7x
            vmem_limit_bytes=_VMEM_LIMIT,
        ),
    )(y, scale, shift)


def fc_logits(feat, w, b):
    """feat: (N, F) bf16, channels-last flatten.  w: (F, 128) bf16.  b: (1,128) f32."""
    N, F = feat.shape
    OUT_PAD = w.shape[1]
    N_pad = _round_up(max(N, 8), 8)
    TK = min(512, F)
    F_pad = _round_up(F, TK)
    if N_pad > N or F_pad > F:
        feat = jnp.pad(feat, ((0, N_pad - N), (0, F_pad - F)))
    if F_pad > F:
        w = jnp.pad(w, ((0, F_pad - F), (0, 0)))
    G = F_pad // TK
    out = pl.pallas_call(
        _fc_kernel,
        out_shape=jax.ShapeDtypeStruct((N_pad, OUT_PAD), jnp.float32),
        grid=(G,),
        in_specs=[
            pl.BlockSpec((N_pad, TK), lambda k: (0, k)),
            pl.BlockSpec((TK, OUT_PAD), lambda k: (k, 0)),
            pl.BlockSpec((1, OUT_PAD), lambda k: (0, 0)),
        ],
        out_specs=pl.BlockSpec((N_pad, OUT_PAD), lambda k: (0, 0)),
        compiler_params=pltpu.CompilerParams(
            dimension_semantics=("arbitrary",),   # contraction accumulation
            vmem_limit_bytes=_VMEM_LIMIT,
        ),
    )(feat, w, b)
    return out[:N, 0]                              # real logits in lane 0


# ----------------------------------------------------------------------------
# JAX glue: im2col, conv layer, parameters, forward
# ----------------------------------------------------------------------------
def im2col(x_nhwc, k, s, p):
    """Extract conv patches (bf16). K ordered (kh, kw, Cin)."""
    N, H, W, C = x_nhwc.shape
    Hout = (H + 2 * p - k) // s + 1
    Wout = (W + 2 * p - k) // s + 1
    xp = jnp.pad(x_nhwc, ((0, 0), (p, p), (p, p), (0, 0)))
    cols = []
    for i in range(k):
        for j in range(k):
            cols.append(
                xp[:, i: i + s * (Hout - 1) + 1: s,
                      j: j + s * (Wout - 1) + 1: s, :]
            )
    patches = jnp.concatenate(cols, axis=-1)  # (N, Hout, Wout, k*k*C)
    return patches.reshape(N * Hout * Wout, k * k * C), Hout, Wout


def conv_bn_lrelu(x_nhwc, layer, k, s, p):
    """One Conv2d(no bias) + BatchNorm2d(batch stats) + LeakyReLU(0.2) block."""
    N = x_nhwc.shape[0]
    patches, Hout, Wout = im2col(x_nhwc, k, s, p)     # bf16 (M, K0)
    M, K0 = patches.shape
    wmat = layer["w"]                                  # bf16 (K_pad, C_pad)
    K_pad, C_pad = wmat.shape
    if K_pad > K0:                                     # zero-pad contraction dim
        patches = jnp.pad(patches, ((0, 0), (0, K_pad - K0)))

    tm = min(_TM_TARGET, _round_up(M, 8))
    M_pad = _round_up(M, tm)
    if M_pad > M:                                      # zero rows: 0-contribution
        patches = jnp.pad(patches, ((0, M_pad - M), (0, 0)))

    y, s1, s2 = _conv_matmul_stats(patches, wmat, tm)

    # BatchNorm2d training-mode batch stats over (N, H, W) == the M rows.
    # Padded rows/channels are exactly zero so they contribute nothing; divide
    # by the *real* M.  Conv bias is omitted (cancelled by the mean subtraction).
    mean = s1 / float(M)
    var = jnp.maximum(s2 / float(M) - mean * mean, 0.0)
    scale = layer["gamma"] * jax.lax.rsqrt(var + 1e-5)
    shift = layer["beta"] - mean * scale

    out = _bn_lrelu(y, scale, shift, tm)               # bf16 (M_pad, C_pad)
    return out[:M].reshape(N, Hout, Wout, C_pad)


def make_conv_layer(key, cin, cin_pad, cout, cout_pad, k):
    # PyTorch conv weight layout (Cout, Cin, kh, kw); deterministic synthetic init.
    w = jax.random.normal(key, (cout, cin, k, k), jnp.float32) * 0.05
    # NOTE: conv bias omitted on purpose — training-mode BatchNorm right after
    # subtracts the per-channel batch mean, so a constant bias cancels exactly.
    w_p = jnp.zeros((cout_pad, cin_pad, k, k), jnp.float32).at[:cout, :cin].set(w)
    # Flatten to (kh*kw*Cin_pad, Cout_pad) matching im2col K ordering (kh, kw, Cin).
    wmat = jnp.transpose(w_p, (2, 3, 1, 0)).reshape(k * k * cin_pad, cout_pad)
    K = k * k * cin_pad
    K_pad = _round_up(K, _LANE)
    if K_pad > K:
        wmat = jnp.pad(wmat, ((0, K_pad - K), (0, 0)))
    return {
        "w": wmat.astype(jnp.bfloat16),
        "gamma": jnp.ones((1, cout_pad), jnp.float32),   # BN default init
        "beta": jnp.zeros((1, cout_pad), jnp.float32),
    }


def make_params(key, ndf, size, input_nc=3):
    layer_defs = [
        (input_nc, ndf, 3),
        (ndf, ndf, 4),
        (ndf, ndf * 2, 3),
        (ndf * 2, ndf * 2, 4),
        (ndf * 2, ndf * 4, 3),
        (ndf * 4, ndf * 4, 4),
    ]
    keys = jax.random.split(key, len(layer_defs) + 1)
    convs = []
    prev_pad = input_nc                    # first layer input is not channel-padded
    for kk, (ci, co, kz) in zip(keys[:-1], layer_defs):
        co_pad = _round_up(co, _LANE)
        convs.append(make_conv_layer(kk, ci, prev_pad, co, co_pad, kz))
        prev_pad = co_pad

    final_res = size // 2 ** 3
    C = ndf * 4
    C_pad = _round_up(C, _LANE)
    feat_dim = C * final_res * final_res
    kfw, kfb = jax.random.split(keys[-1])
    fc_w = jax.random.normal(kfw, (feat_dim, 1), jnp.float32) * 0.05  # (c,h,w) order
    fc_b = jax.random.normal(kfb, (1,), jnp.float32) * 0.05

    # Fold the PyTorch NCHW `.view(N,-1)` into the FC weight: permute rows to
    # channels-last order, zero-pad the padded channels, and pad the output
    # lane dim 1 -> 128 so the matmul/store are lane-dense.
    w_chw = fc_w.reshape(C, final_res, final_res)
    w_hwc = jnp.transpose(w_chw, (1, 2, 0))                    # (H, W, C)
    w_hwc = jnp.pad(w_hwc, ((0, 0), (0, 0), (0, C_pad - C)))
    fc_w_mat = w_hwc.reshape(final_res * final_res * C_pad, 1)
    fc_w_mat = jnp.pad(fc_w_mat, ((0, 0), (0, _LANE - 1))).astype(jnp.bfloat16)
    fc_b_vec = jnp.zeros((1, _LANE), jnp.float32).at[0, 0].set(fc_b[0])
    return {"convs": convs, "fc_w": fc_w_mat, "fc_b": fc_b_vec}


# conv specs (kernel, stride, padding) exactly as in the PyTorch module
_CONV_SPECS = [(3, 1, 1), (4, 2, 1), (3, 1, 1), (4, 2, 1), (3, 1, 1), (4, 2, 1)]


@functools.partial(jax.jit, static_argnames=())
def img_discriminator_forward(x_nchw, params):
    # PyTorch NCHW input -> NHWC working layout, bf16 for the MXU feed.
    x = jnp.transpose(x_nchw, (0, 2, 3, 1)).astype(jnp.bfloat16)
    for (k, s, p), layer in zip(_CONV_SPECS, params["convs"]):
        x = conv_bn_lrelu(x, layer, k, s, p)
    # Channels-last flatten; the NCHW `.view` permutation lives in fc_w already.
    N, H, W, Cp = x.shape
    feat = x.reshape(N, H * W * Cp)
    out = fc_logits(feat, params["fc_w"], params["fc_b"])   # (N,)
    return out  # matches `assert len(result.shape) == 1`


if __name__ == "__main__":
    # Small config: batch=2, 3-channel 16x16 images, ndf=16
    N, SIZE, NDF = 2, 16, 16
    key = jax.random.PRNGKey(0)
    k_params, k_input = jax.random.split(key)

    params = make_params(k_params, ndf=NDF, size=SIZE)
    x = jax.random.normal(k_input, (N, 3, SIZE, SIZE), jnp.float32)  # NCHW

    logits = img_discriminator_forward(x, params)
    logits = jax.block_until_ready(logits)

    assert logits.shape == (N,), logits.shape
    assert logits.dtype == jnp.float32
    # TODO(synk): 'mask' conditioning head (LinearConditionalMaskLogits) and the
    # `features` extraction path are not exercised by forward() and are omitted.
    print("KERNEL_OK")
</pallas_src>

<mosaic_0001>
module attributes {stable_mosaic.version = 11 : i64} {
  func.func @_matmul_stats_kernel(%arg0: i32, %arg1: memref<512x128xbf16, #tpu.memory_space<vmem>>, %arg2: memref<128x128xbf16, #tpu.memory_space<vmem>>, %arg3: memref<512x128xf32, #tpu.memory_space<vmem>>, %arg4: memref<1x128xf32, #tpu.memory_space<vmem>>, %arg5: memref<1x128xf32, #tpu.memory_space<vmem>>) attributes {dimension_semantics = [#tpu.dimension_semantics<arbitrary>], iteration_bounds = array<i64: 1>, scalar_prefetch = 0 : i64, scratch_operands = 0 : i64, tpu.core_type = #tpu.core_type<tc>, window_params = [{transform_indices = @transform_0, window_bounds = array<i64: 512, 128>}, {pipeline_mode = #tpu.pipeline_mode<synchronous>, transform_indices = @transform_1, window_bounds = array<i64: 128, 128>}, {transform_indices = @transform_2, window_bounds = array<i64: 512, 128>}, {pipeline_mode = #tpu.pipeline_mode<synchronous>, transform_indices = @transform_3, window_bounds = array<i64: 1, 128>}, {pipeline_mode = #tpu.pipeline_mode<synchronous>, transform_indices = @transform_4, window_bounds = array<i64: 1, 128>}]} {
    %c0_i32 = arith.constant 0 : i32
    %0 = arith.cmpi eq, %arg0, %c0_i32 : i32
    %1 = arith.extui %0 : i1 to i32
    %c0_i32_0 = arith.constant 0 : i32
    %2 = arith.cmpi ne, %1, %c0_i32_0 : i32
    scf.if %2 {
      %cst_16 = arith.constant 0.000000e+00 : f32
      %18 = vector.broadcast %cst_16 : f32 to vector<1x128xf32>
      %c0_17 = arith.constant 0 : index
      %c0_18 = arith.constant 0 : index
      %19 = vector.load %arg4[%c0_17, %c0_18] : memref<1x128xf32, #tpu.memory_space<vmem>>, vector<1x128xf32>
      tpu.vector_store %arg4[%c0_17, %c0_18], %18 {strides = array<i32>} : memref<1x128xf32, #tpu.memory_space<vmem>>, vector<1x128xf32>,
      %cst_19 = arith.constant 0.000000e+00 : f32
      %20 = vector.broadcast %cst_19 : f32 to vector<1x128xf32>
      %c0_20 = arith.constant 0 : index
      %c0_21 = arith.constant 0 : index
      %21 = vector.load %arg5[%c0_20, %c0_21] : memref<1x128xf32, #tpu.memory_space<vmem>>, vector<1x128xf32>
      tpu.vector_store %arg5[%c0_20, %c0_21], %20 {strides = array<i32>} : memref<1x128xf32, #tpu.memory_space<vmem>>, vector<1x128xf32>,
    } else {
    }
    %c0 = arith.constant 0 : index
    %c0_1 = arith.constant 0 : index
    %3 = vector.load %arg1[%c0, %c0_1] : memref<512x128xbf16, #tpu.memory_space<vmem>>, vector<512x128xbf16>
    %c0_2 = arith.constant 0 : index
    %c0_3 = arith.constant 0 : index
    %4 = vector.load %arg2[%c0_2, %c0_3] : memref<128x128xbf16, #tpu.memory_space<vmem>>, vector<128x128xbf16>
    %cst = arith.constant dense<0.000000e+00> : vector<512x128xf32>
    %5 = tpu.matmul %3, %4, %cst {dimension_numbers = #tpu.dot_dimension_numbers<[1], [0], [0], [1], [0, 0, 1, 1], [], []>} : vector<512x128xbf16>, vector<128x128xbf16>, vector<512x128xf32> -> vector<512x128xf32>
    %c0_4 = arith.constant 0 : index
    %c0_5 = arith.constant 0 : index
    %6 = vector.load %arg3[%c0_4, %c0_5] : memref<512x128xf32, #tpu.memory_space<vmem>>, vector<512x128xf32>
    tpu.vector_store %arg3[%c0_4, %c0_5], %5 {strides = array<i32>} : memref<512x128xf32, #tpu.memory_space<vmem>>, vector<512x128xf32>,
    %c0_6 = arith.constant 0 : index
    %c0_7 = arith.constant 0 : index
    %7 = vector.load %arg4[%c0_6, %c0_7] : memref<1x128xf32, #tpu.memory_space<vmem>>, vector<1x128xf32>
    %cst_8 = arith.constant dense<0.000000e+00> : vector<128xf32>
    %8 = vector.multi_reduction <add>, %5, %cst_8 [0] : vector<512x128xf32> to vector<128xf32>
    %9 = vector.shape_cast %8 : vector<128xf32> to vector<1x128xf32>
    %10 = arith.addf %7, %9 : vector<1x128xf32>
    %c0_9 = arith.constant 0 : index
    %c0_10 = arith.constant 0 : index
    %11 = vector.load %arg4[%c0_9, %c0_10] : memref<1x128xf32, #tpu.memory_space<vmem>>, vector<1x128xf32>
    tpu.vector_store %arg4[%c0_9, %c0_10], %10 {strides = array<i32>} : memref<1x128xf32, #tpu.memory_space<vmem>>, vector<1x128xf32>,
    %c0_11 = arith.constant 0 : index
    %c0_12 = arith.constant 0 : index
    %12 = vector.load %arg5[%c0_11, %c0_12] : memref<1x128xf32, #tpu.memory_space<vmem>>, vector<1x128xf32>
    %13 = arith.mulf %5, %5 : vector<512x128xf32>
    %cst_13 = arith.constant dense<0.000000e+00> : vector<128xf32>
    %14 = vector.multi_reduction <add>, %13, %cst_13 [0] : vector<512x128xf32> to vector<128xf32>
    %15 = vector.shape_cast %14 : vector<128xf32> to vector<1x128xf32>
    %16 = arith.addf %12, %15 : vector<1x128xf32>
    %c0_14 = arith.constant 0 : index
    %c0_15 = arith.constant 0 : index
    %17 = vector.load %arg5[%c0_14, %c0_15] : memref<1x128xf32, #tpu.memory_space<vmem>>, vector<1x128xf32>
    tpu.vector_store %arg5[%c0_14, %c0_15], %16 {strides = array<i32>} : memref<1x128xf32, #tpu.memory_space<vmem>>, vector<1x128xf32>,
    return
  }
  func.func @transform_0(%arg0: i32) -> (i32, i32) {
    %c0_i32 = arith.constant 0 : i32
    %c0_i32_0 = arith.constant 0 : i32
    return %arg0, %c0_i32 : i32, i32
  }
  func.func @transform_1(%arg0: i32) -> (i32, i32) {
    %c0_i32 = arith.constant 0 : i32
    %c0_i32_0 = arith.constant 0 : i32
    %c0_i32_1 = arith.constant 0 : i32
    return %c0_i32, %c0_i32_0 : i32, i32
  }
  func.func @transform_2(%arg0: i32) -> (i32, i32) {
    %c0_i32 = arith.constant 0 : i32
    %c0_i32_0 = arith.constant 0 : i32
    return %arg0, %c0_i32 : i32, i32
  }
  func.func @transform_3(%arg0: i32) -> (i32, i32) {
    %c0_i32 = arith.constant 0 : i32
    %c0_i32_0 = arith.constant 0 : i32
    %c0_i32_1 = arith.constant 0 : i32
    return %c0_i32, %c0_i32_0 : i32, i32
  }
  func.func @transform_4(%arg0: i32) -> (i32, i32) {
    %c0_i32 = arith.constant 0 : i32
    %c0_i32_0 = arith.constant 0 : i32
    %c0_i32_1 = arith.constant 0 : i32
    return %c0_i32, %c0_i32_0 : i32, i32
  }
}

module attributes {stable_mosaic.version = 11 : i64} {
  func.func @_bn_lrelu_kernel(%arg0: i32, %arg1: memref<512x128xf32, #tpu.memory_space<vmem>>, %arg2: memref<1x128xf32, #tpu.memory_space<vmem>>, %arg3: memref<1x128xf32, #tpu.memory_space<vmem>>, %arg4: memref<512x128xbf16, #tpu.memory_space<vmem>>) attributes {dimension_semantics = [#tpu.dimension_semantics<parallel>], iteration_bounds = array<i64: 1>, scalar_prefetch = 0 : i64, scratch_operands = 0 : i64, tpu.core_type = #tpu.core_type<tc>, window_params = [{transform_indices = @transform_0, window_bounds = array<i64: 512, 128>}, {pipeline_mode = #tpu.pipeline_mode<synchronous>, transform_indices = @transform_1, window_bounds = array<i64: 1, 128>}, {pipeline_mode = #tpu.pipeline_mode<synchronous>, transform_indices = @transform_2, window_bounds = array<i64: 1, 128>}, {transform_indices = @transform_3, window_bounds = array<i64: 512, 128>}]} {
    %c0 = arith.constant 0 : index
    %c0_0 = arith.constant 0 : index
    %0 = vector.load %arg1[%c0, %c0_0] : memref<512x128xf32, #tpu.memory_space<vmem>>, vector<512x128xf32>
    %c0_1 = arith.constant 0 : index
    %c0_2 = arith.constant 0 : index
    %1 = vector.load %arg2[%c0_1, %c0_2] : memref<1x128xf32, #tpu.memory_space<vmem>>, vector<1x128xf32>
    %2 = vector.broadcast %1 : vector<1x128xf32> to vector<512x128xf32>
    %3 = arith.mulf %0, %2 : vector<512x128xf32>
    %c0_3 = arith.constant 0 : index
    %c0_4 = arith.constant 0 : index
    %4 = vector.load %arg3[%c0_3, %c0_4] : memref<1x128xf32, #tpu.memory_space<vmem>>, vector<1x128xf32>
    %5 = vector.broadcast %4 : vector<1x128xf32> to vector<512x128xf32>
    %6 = arith.addf %3, %5 : vector<512x128xf32>
    %cst = arith.constant 0.000000e+00 : f32
    %7 = vector.broadcast %cst : f32 to vector<512x128xf32>
    %8 = arith.cmpf oge, %6, %7 : vector<512x128xf32>
    %cst_5 = arith.constant 2.000000e-01 : f32
    %9 = vector.broadcast %cst_5 : f32 to vector<512x128xf32>
    %10 = arith.mulf %9, %6 : vector<512x128xf32>
    %11 = arith.select %8, %6, %10 : vector<512x128xi1>, vector<512x128xf32>
    %12 = arith.truncf %11 : vector<512x128xf32> to vector<512x128xbf16>
    %c0_6 = arith.constant 0 : index
    %c0_7 = arith.constant 0 : index
    %13 = vector.load %arg4[%c0_6, %c0_7] : memref<512x128xbf16, #tpu.memory_space<vmem>>, vector<512x128xbf16>
    tpu.vector_store %arg4[%c0_6, %c0_7], %12 {strides = array<i32>} : memref<512x128xbf16, #tpu.memory_space<vmem>>, vector<512x128xbf16>,
    return
  }
  func.func @transform_0(%arg0: i32) -> (i32, i32) {
    %c0_i32 = arith.constant 0 : i32
    %c0_i32_0 = arith.constant 0 : i32
    return %arg0, %c0_i32 : i32, i32
  }
  func.func @transform_1(%arg0: i32) -> (i32, i32) {
    %c0_i32 = arith.constant 0 : i32
    %c0_i32_0 = arith.constant 0 : i32
    %c0_i32_1 = arith.constant 0 : i32
    return %c0_i32, %c0_i32_0 : i32, i32
  }
  func.func @transform_2(%arg0: i32) -> (i32, i32) {
    %c0_i32 = arith.constant 0 : i32
    %c0_i32_0 = arith.constant 0 : i32
    %c0_i32_1 = arith.constant 0 : i32
    return %c0_i32, %c0_i32_0 : i32, i32
  }
  func.func @transform_3(%arg0: i32) -> (i32, i32) {
    %c0_i32 = arith.constant 0 : i32
    %c0_i32_0 = arith.constant 0 : i32
    return %arg0, %c0_i32 : i32, i32
  }
}

module attributes {stable_mosaic.version = 11 : i64} {
  func.func @_bn_lrelu_kernel(%arg0: i32, %arg1: memref<128x128xf32, #tpu.memory_space<vmem>>, %arg2: memref<1x128xf32, #tpu.memory_space<vmem>>, %arg3: memref<1x128xf32, #tpu.memory_space<vmem>>, %arg4: memref<128x128xbf16, #tpu.memory_space<vmem>>) attributes {dimension_semantics = [#tpu.dimension_semantics<parallel>], iteration_bounds = array<i64: 1>, scalar_prefetch = 0 : i64, scratch_operands = 0 : i64, tpu.core_type = #tpu.core_type<tc>, window_params = [{transform_indices = @transform_0, window_bounds = array<i64: 128, 128>}, {pipeline_mode = #tpu.pipeline_mode<synchronous>, transform_indices = @transform_1, window_bounds = array<i64: 1, 128>}, {pipeline_mode = #tpu.pipeline_mode<synchronous>, transform_indices = @transform_2, window_bounds = array<i64: 1, 128>}, {transform_indices = @transform_3, window_bounds = array<i64: 128, 128>}]} {
    %c0 = arith.constant 0 : index
    %c0_0 = arith.constant 0 : index
    %0 = vector.load %arg1[%c0, %c0_0] : memref<128x128xf32, #tpu.memory_space<vmem>>, vector<128x128xf32>
    %c0_1 = arith.constant 0 : index
    %c0_2 = arith.constant 0 : index
    %1 = vector.load %arg2[%c0_1, %c0_2] : memref<1x128xf32, #tpu.memory_space<vmem>>, vector<1x128xf32>
    %2 = vector.broadcast %1 : vector<1x128xf32> to vector<128x128xf32>
    %3 = arith.mulf %0, %2 : vector<128x128xf32>
    %c0_3 = arith.constant 0 : index
    %c0_4 = arith.constant 0 : index
    %4 = vector.load %arg3[%c0_3, %c0_4] : memref<1x128xf32, #tpu.memory_space<vmem>>, vector<1x128xf32>
    %5 = vector.broadcast %4 : vector<1x128xf32> to vector<128x128xf32>
    %6 = arith.addf %3, %5 : vector<128x128xf32>
    %cst = arith.constant 0.000000e+00 : f32
    %7 = vector.broadcast %cst : f32 to vector<128x128xf32>
    %8 = arith.cmpf oge, %6, %7 : vector<128x128xf32>
    %cst_5 = arith.constant 2.000000e-01 : f32
    %9 = vector.broadcast %cst_5 : f32 to vector<128x128xf32>
    %10 = arith.mulf %9, %6 : vector<128x128xf32>
    %11 = arith.select %8, %6, %10 : vector<128x128xi1>, vector<128x128xf32>
    %12 = arith.truncf %11 : vector<128x128xf32> to vector<128x128xbf16>
    %c0_6 = arith.constant 0 : index
    %c0_7 = arith.constant 0 : index
    %13 = vector.load %arg4[%c0_6, %c0_7] : memref<128x128xbf16, #tpu.memory_space<vmem>>, vector<128x128xbf16>
    tpu.vector_store %arg4[%c0_6, %c0_7], %12 {strides = array<i32>} : memref<128x128xbf16, #tpu.memory_space<vmem>>, vector<128x128xbf16>,
    return
  }
  func.func @transform_0(%arg0: i32) -> (i32, i32) {
    %c0_i32 = arith.constant 0 : i32
    %c0_i32_0 = arith.constant 0 : i32
    return %arg0, %c0_i32 : i32, i32
  }
  func.func @transform_1(%arg0: i32) -> (i32, i32) {
    %c0_i32 = arith.constant 0 : i32
    %c0_i32_0 = arith.constant 0 : i32
    %c0_i32_1 = arith.constant 0 : i32
    return %c0_i32, %c0_i32_0 : i32, i32
  }
  func.func @transform_2(%arg0: i32) -> (i32, i32) {
    %c0_i32 = arith.constant 0 : i32
    %c0_i32_0 = arith.constant 0 : i32
    %c0_i32_1 = arith.constant 0 : i32
    return %c0_i32, %c0_i32_0 : i32, i32
  }
  func.func @transform_3(%arg0: i32) -> (i32, i32) {
    %c0_i32 = arith.constant 0 : i32
    %c0_i32_0 = arith.constant 0 : i32
    return %arg0, %c0_i32 : i32, i32
  }
}

module attributes {stable_mosaic.version = 11 : i64} {
  func.func @_matmul_stats_kernel(%arg0: i32, %arg1: memref<128x2048xbf16, #tpu.memory_space<vmem>>, %arg2: memref<2048x128xbf16, #tpu.memory_space<vmem>>, %arg3: memref<128x128xf32, #tpu.memory_space<vmem>>, %arg4: memref<1x128xf32, #tpu.memory_space<vmem>>, %arg5: memref<1x128xf32, #tpu.memory_space<vmem>>) attributes {dimension_semantics = [#tpu.dimension_semantics<arbitrary>], iteration_bounds = array<i64: 1>, scalar_prefetch = 0 : i64, scratch_operands = 0 : i64, tpu.core_type = #tpu.core_type<tc>, window_params = [{transform_indices = @transform_0, window_bounds = array<i64: 128, 2048>}, {pipeline_mode = #tpu.pipeline_mode<synchronous>, transform_indices = @transform_1, window_bounds = array<i64: 2048, 128>}, {transform_indices = @transform_2, window_bounds = array<i64: 128, 128>}, {pipeline_mode = #tpu.pipeline_mode<synchronous>, transform_indices = @transform_3, window_bounds = array<i64: 1, 128>}, {pipeline_mode = #tpu.pipeline_mode<synchronous>, transform_indices = @transform_4, window_bounds = array<i64: 1, 128>}]} {
    %c0_i32 = arith.constant 0 : i32
    %0 = arith.cmpi eq, %arg0, %c0_i32 : i32
    %1 = arith.extui %0 : i1 to i32
    %c0_i32_0 = arith.constant 0 : i32
    %2 = arith.cmpi ne, %1, %c0_i32_0 : i32
    scf.if %2 {
      %cst_16 = arith.constant 0.000000e+00 : f32
      %18 = vector.broadcast %cst_16 : f32 to vector<1x128xf32>
      %c0_17 = arith.constant 0 : index
      %c0_18 = arith.constant 0 : index
      %19 = vector.load %arg4[%c0_17, %c0_18] : memref<1x128xf32, #tpu.memory_space<vmem>>, vector<1x128xf32>
      tpu.vector_store %arg4[%c0_17, %c0_18], %18 {strides = array<i32>} : memref<1x128xf32, #tpu.memory_space<vmem>>, vector<1x128xf32>,
      %cst_19 = arith.constant 0.000000e+00 : f32
      %20 = vector.broadcast %cst_19 : f32 to vector<1x128xf32>
      %c0_20 = arith.constant 0 : index
      %c0_21 = arith.constant 0 : index
      %21 = vector.load %arg5[%c0_20, %c0_21] : memref<1x128xf32, #tpu.memory_space<vmem>>, vector<1x128xf32>
      tpu.vector_store %arg5[%c0_20, %c0_21], %20 {strides = array<i32>} : memref<1x128xf32, #tpu.memory_space<vmem>>, vector<1x128xf32>,
    } else {
    }
    %c0 = arith.constant 0 : index
    %c0_1 = arith.constant 0 : index
    %3 = vector.load %arg1[%c0, %c0_1] : memref<128x2048xbf16, #tpu.memory_space<vmem>>, vector<128x2048xbf16>
    %c0_2 = arith.constant 0 : index
    %c0_3 = arith.constant 0 : index
    %4 = vector.load %arg2[%c0_2, %c0_3] : memref<2048x128xbf16, #tpu.memory_space<vmem>>, vector<2048x128xbf16>
    %cst = arith.constant dense<0.000000e+00> : vector<128x128xf32>
    %5 = tpu.matmul %3, %4, %cst {dimension_numbers = #tpu.dot_dimension_numbers<[1], [0], [0], [1], [0, 0, 1, 1], [], []>} : vector<128x2048xbf16>, vector<2048x128xbf16>, vector<128x128xf32> -> vector<128x128xf32>
    %c0_4 = arith.constant 0 : index
    %c0_5 = arith.constant 0 : index
    %6 = vector.load %arg3[%c0_4, %c0_5] : memref<128x128xf32, #tpu.memory_space<vmem>>, vector<128x128xf32>
    tpu.vector_store %arg3[%c0_4, %c0_5], %5 {strides = array<i32>} : memref<128x128xf32, #tpu.memory_space<vmem>>, vector<128x128xf32>,
    %c0_6 = arith.constant 0 : index
    %c0_7 = arith.constant 0 : index
    %7 = vector.load %arg4[%c0_6, %c0_7] : memref<1x128xf32, #tpu.memory_space<vmem>>, vector<1x128xf32>
    %cst_8 = arith.constant dense<0.000000e+00> : vector<128xf32>
    %8 = vector.multi_reduction <add>, %5, %cst_8 [0] : vector<128x128xf32> to vector<128xf32>
    %9 = vector.shape_cast %8 : vector<128xf32> to vector<1x128xf32>
    %10 = arith.addf %7, %9 : vector<1x128xf32>
    %c0_9 = arith.constant 0 : index
    %c0_10 = arith.constant 0 : index
    %11 = vector.load %arg4[%c0_9, %c0_10] : memref<1x128xf32, #tpu.memory_space<vmem>>, vector<1x128xf32>
    tpu.vector_store %arg4[%c0_9, %c0_10], %10 {strides = array<i32>} : memref<1x128xf32, #tpu.memory_space<vmem>>, vector<1x128xf32>,
    %c0_11 = arith.constant 0 : index
    %c0_12 = arith.constant 0 : index
    %12 = vector.load %arg5[%c0_11, %c0_12] : memref<1x128xf32, #tpu.memory_space<vmem>>, vector<1x128xf32>
    %13 = arith.mulf %5, %5 : vector<128x128xf32>
    %cst_13 = arith.constant dense<0.000000e+00> : vector<128xf32>
    %14 = vector.multi_reduction <add>, %13, %cst_13 [0] : vector<128x128xf32> to vector<128xf32>
    %15 = vector.shape_cast %14 : vector<128xf32> to vector<1x128xf32>
    %16 = arith.addf %12, %15 : vector<1x128xf32>
    %c0_14 = arith.constant 0 : index
    %c0_15 = arith.constant 0 : index
    %17 = vector.load %arg5[%c0_14, %c0_15] : memref<1x128xf32, #tpu.memory_space<vmem>>, vector<1x128xf32>
    tpu.vector_store %arg5[%c0_14, %c0_15], %16 {strides = array<i32>} : memref<1x128xf32, #tpu.memory_space<vmem>>, vector<1x128xf32>,
    return
  }
  func.func @transform_0(%arg0: i32) -> (i32, i32) {
    %c0_i32 = arith.constant 0 : i32
    %c0_i32_0 = arith.constant 0 : i32
    return %arg0, %c0_i32 : i32, i32
  }
  func.func @transform_1(%arg0: i32) -> (i32, i32) {
    %c0_i32 = arith.constant 0 : i32
    %c0_i32_0 = arith.constant 0 : i32
    %c0_i32_1 = arith.constant 0 : i32
    return %c0_i32, %c0_i32_0 : i32, i32
  }
  func.func @transform_2(%arg0: i32) -> (i32, i32) {
    %c0_i32 = arith.constant 0 : i32
    %c0_i32_0 = arith.constant 0 : i32
    return %arg0, %c0_i32 : i32, i32
  }
  func.func @transform_3(%arg0: i32) -> (i32, i32) {
    %c0_i32 = arith.constant 0 : i32
    %c0_i32_0 = arith.constant 0 : i32
    %c0_i32_1 = arith.constant 0 : i32
    return %c0_i32, %c0_i32_0 : i32, i32
  }
  func.func @transform_4(%arg0: i32) -> (i32, i32) {
    %c0_i32 = arith.constant 0 : i32
    %c0_i32_0 = arith.constant 0 : i32
    %c0_i32_1 = arith.constant 0 : i32
    return %c0_i32, %c0_i32_0 : i32, i32
  }
}

module attributes {stable_mosaic.version = 11 : i64} {
  func.func @_matmul_stats_kernel(%arg0: i32, %arg1: memref<128x1152xbf16, #tpu.memory_space<vmem>>, %arg2: memref<1152x128xbf16, #tpu.memory_space<vmem>>, %arg3: memref<128x128xf32, #tpu.memory_space<vmem>>, %arg4: memref<1x128xf32, #tpu.memory_space<vmem>>, %arg5: memref<1x128xf32, #tpu.memory_space<vmem>>) attributes {dimension_semantics = [#tpu.dimension_semantics<arbitrary>], iteration_bounds = array<i64: 1>, scalar_prefetch = 0 : i64, scratch_operands = 0 : i64, tpu.core_type = #tpu.core_type<tc>, window_params = [{transform_indices = @transform_0, window_bounds = array<i64: 128, 1152>}, {pipeline_mode = #tpu.pipeline_mode<synchronous>, transform_indices = @transform_1, window_bounds = array<i64: 1152, 128>}, {transform_indices = @transform_2, window_bounds = array<i64: 128, 128>}, {pipeline_mode = #tpu.pipeline_mode<synchronous>, transform_indices = @transform_3, window_bounds = array<i64: 1, 128>}, {pipeline_mode = #tpu.pipeline_mode<synchronous>, transform_indices = @transform_4, window_bounds = array<i64: 1, 128>}]} {
    %c0_i32 = arith.constant 0 : i32
    %0 = arith.cmpi eq, %arg0, %c0_i32 : i32
    %1 = arith.extui %0 : i1 to i32
    %c0_i32_0 = arith.constant 0 : i32
    %2 = arith.cmpi ne, %1, %c0_i32_0 : i32
    scf.if %2 {
      %cst_16 = arith.constant 0.000000e+00 : f32
      %18 = vector.broadcast %cst_16 : f32 to vector<1x128xf32>
      %c0_17 = arith.constant 0 : index
      %c0_18 = arith.constant 0 : index
      %19 = vector.load %arg4[%c0_17, %c0_18] : memref<1x128xf32, #tpu.memory_space<vmem>>, vector<1x128xf32>
      tpu.vector_store %arg4[%c0_17, %c0_18], %18 {strides = array<i32>} : memref<1x128xf32, #tpu.memory_space<vmem>>, vector<1x128xf32>,
      %cst_19 = arith.constant 0.000000e+00 : f32
      %20 = vector.broadcast %cst_19 : f32 to vector<1x128xf32>
      %c0_20 = arith.constant 0 : index
      %c0_21 = arith.constant 0 : index
      %21 = vector.load %arg5[%c0_20, %c0_21] : memref<1x128xf32, #tpu.memory_space<vmem>>, vector<1x128xf32>
      tpu.vector_store %arg5[%c0_20, %c0_21], %20 {strides = array<i32>} : memref<1x128xf32, #tpu.memory_space<vmem>>, vector<1x128xf32>,
    } else {
    }
    %c0 = arith.constant 0 : index
    %c0_1 = arith.constant 0 : index
    %3 = vector.load %arg1[%c0, %c0_1] : memref<128x1152xbf16, #tpu.memory_space<vmem>>, vector<128x1152xbf16>
    %c0_2 = arith.constant 0 : index
    %c0_3 = arith.constant 0 : index
    %4 = vector.load %arg2[%c0_2, %c0_3] : memref<1152x128xbf16, #tpu.memory_space<vmem>>, vector<1152x128xbf16>
    %cst = arith.constant dense<0.000000e+00> : vector<128x128xf32>
    %5 = tpu.matmul %3, %4, %cst {dimension_numbers = #tpu.dot_dimension_numbers<[1], [0], [0], [1], [0, 0, 1, 1], [], []>} : vector<128x1152xbf16>, vector<1152x128xbf16>, vector<128x128xf32> -> vector<128x128xf32>
    %c0_4 = arith.constant 0 : index
    %c0_5 = arith.constant 0 : index
    %6 = vector.load %arg3[%c0_4, %c0_5] : memref<128x128xf32, #tpu.memory_space<vmem>>, vector<128x128xf32>
    tpu.vector_store %arg3[%c0_4, %c0_5], %5 {strides = array<i32>} : memref<128x128xf32, #tpu.memory_space<vmem>>, vector<128x128xf32>,
    %c0_6 = arith.constant 0 : index
    %c0_7 = arith.constant 0 : index
    %7 = vector.load %arg4[%c0_6, %c0_7] : memref<1x128xf32, #tpu.memory_space<vmem>>, vector<1x128xf32>
    %cst_8 = arith.constant dense<0.000000e+00> : vector<128xf32>
    %8 = vector.multi_reduction <add>, %5, %cst_8 [0] : vector<128x128xf32> to vector<128xf32>
    %9 = vector.shape_cast %8 : vector<128xf32> to vector<1x128xf32>
    %10 = arith.addf %7, %9 : vector<1x128xf32>
    %c0_9 = arith.constant 0 : index
    %c0_10 = arith.constant 0 : index
    %11 = vector.load %arg4[%c0_9, %c0_10] : memref<1x128xf32, #tpu.memory_space<vmem>>, vector<1x128xf32>
    tpu.vector_store %arg4[%c0_9, %c0_10], %10 {strides = array<i32>} : memref<1x128xf32, #tpu.memory_space<vmem>>, vector<1x128xf32>,
    %c0_11 = arith.constant 0 : index
    %c0_12 = arith.constant 0 : index
    %12 = vector.load %arg5[%c0_11, %c0_12] : memref<1x128xf32, #tpu.memory_space<vmem>>, vector<1x128xf32>
    %13 = arith.mulf %5, %5 : vector<128x128xf32>
    %cst_13 = arith.constant dense<0.000000e+00> : vector<128xf32>
    %14 = vector.multi_reduction <add>, %13, %cst_13 [0] : vector<128x128xf32> to vector<128xf32>
    %15 = vector.shape_cast %14 : vector<128xf32> to vector<1x128xf32>
    %16 = arith.addf %12, %15 : vector<1x128xf32>
    %c0_14 = arith.constant 0 : index
    %c0_15 = arith.constant 0 : index
    %17 = vector.load %arg5[%c0_14, %c0_15] : memref<1x128xf32, #tpu.memory_space<vmem>>, vector<1x128xf32>
    tpu.vector_store %arg5[%c0_14, %c0_15], %16 {strides = array<i32>} : memref<1x128xf32, #tpu.memory_space<vmem>>, vector<1x128xf32>,
    return
  }
  func.func @transform_0(%arg0: i32) -> (i32, i32) {
    %c0_i32 = arith.constant 0 : i32
    %c0_i32_0 = arith.constant 0 : i32
    return %arg0, %c0_i32 : i32, i32
  }
  func.func @transform_1(%arg0: i32) -> (i32, i32) {
    %c0_i32 = arith.constant 0 : i32
    %c0_i32_0 = arith.constant 0 : i32
    %c0_i32_1 = arith.constant 0 : i32
    return %c0_i32, %c0_i32_0 : i32, i32
  }
  func.func @transform_2(%arg0: i32) -> (i32, i32) {
    %c0_i32 = arith.constant 0 : i32
    %c0_i32_0 = arith.constant 0 : i32
    return %arg0, %c0_i32 : i32, i32
  }
  func.func @transform_3(%arg0: i32) -> (i32, i32) {
    %c0_i32 = arith.constant 0 : i32
    %c0_i32_0 = arith.constant 0 : i32
    %c0_i32_1 = arith.constant 0 : i32
    return %c0_i32, %c0_i32_0 : i32, i32
  }
  func.func @transform_4(%arg0: i32) -> (i32, i32) {
    %c0_i32 = arith.constant 0 : i32
    %c0_i32_0 = arith.constant 0 : i32
    %c0_i32_1 = arith.constant 0 : i32
    return %c0_i32, %c0_i32_0 : i32, i32
  }
}

module attributes {stable_mosaic.version = 11 : i64} {
  func.func @_bn_lrelu_kernel(%arg0: i32, %arg1: memref<32x128xf32, #tpu.memory_space<vmem>>, %arg2: memref<1x128xf32, #tpu.memory_space<vmem>>, %arg3: memref<1x128xf32, #tpu.memory_space<vmem>>, %arg4: memref<32x128xbf16, #tpu.memory_space<vmem>>) attributes {dimension_semantics = [#tpu.dimension_semantics<parallel>], iteration_bounds = array<i64: 1>, scalar_prefetch = 0 : i64, scratch_operands = 0 : i64, tpu.core_type = #tpu.core_type<tc>, window_params = [{transform_indices = @transform_0, window_bounds = array<i64: 32, 128>}, {pipeline_mode = #tpu.pipeline_mode<synchronous>, transform_indices = @transform_1, window_bounds = array<i64: 1, 128>}, {pipeline_mode = #tpu.pipeline_mode<synchronous>, transform_indices = @transform_2, window_bounds = array<i64: 1, 128>}, {transform_indices = @transform_3, window_bounds = array<i64: 32, 128>}]} {
    %c0 = arith.constant 0 : index
    %c0_0 = arith.constant 0 : index
    %0 = vector.load %arg1[%c0, %c0_0] : memref<32x128xf32, #tpu.memory_space<vmem>>, vector<32x128xf32>
    %c0_1 = arith.constant 0 : index
    %c0_2 = arith.constant 0 : index
    %1 = vector.load %arg2[%c0_1, %c0_2] : memref<1x128xf32, #tpu.memory_space<vmem>>, vector<1x128xf32>
    %2 = vector.broadcast %1 : vector<1x128xf32> to vector<32x128xf32>
    %3 = arith.mulf %0, %2 : vector<32x128xf32>
    %c0_3 = arith.constant 0 : index
    %c0_4 = arith.constant 0 : index
    %4 = vector.load %arg3[%c0_3, %c0_4] : memref<1x128xf32, #tpu.memory_space<vmem>>, vector<1x128xf32>
    %5 = vector.broadcast %4 : vector<1x128xf32> to vector<32x128xf32>
    %6 = arith.addf %3, %5 : vector<32x128xf32>
    %cst = arith.constant 0.000000e+00 : f32
    %7 = vector.broadcast %cst : f32 to vector<32x128xf32>
    %8 = arith.cmpf oge, %6, %7 : vector<32x128xf32>
    %cst_5 = arith.constant 2.000000e-01 : f32
    %9 = vector.broadcast %cst_5 : f32 to vector<32x128xf32>
    %10 = arith.mulf %9, %6 : vector<32x128xf32>
    %11 = arith.select %8, %6, %10 : vector<32x128xi1>, vector<32x128xf32>
    %12 = arith.truncf %11 : vector<32x128xf32> to vector<32x128xbf16>
    %c0_6 = arith.constant 0 : index
    %c0_7 = arith.constant 0 : index
    %13 = vector.load %arg4[%c0_6, %c0_7] : memref<32x128xbf16, #tpu.memory_space<vmem>>, vector<32x128xbf16>
    tpu.vector_store %arg4[%c0_6, %c0_7], %12 {strides = array<i32>} : memref<32x128xbf16, #tpu.memory_space<vmem>>, vector<32x128xbf16>,
    return
  }
  func.func @transform_0(%arg0: i32) -> (i32, i32) {
    %c0_i32 = arith.constant 0 : i32
    %c0_i32_0 = arith.constant 0 : i32
    return %arg0, %c0_i32 : i32, i32
  }
  func.func @transform_1(%arg0: i32) -> (i32, i32) {
    %c0_i32 = arith.constant 0 : i32
    %c0_i32_0 = arith.constant 0 : i32
    %c0_i32_1 = arith.constant 0 : i32
    return %c0_i32, %c0_i32_0 : i32, i32
  }
  func.func @transform_2(%arg0: i32) -> (i32, i32) {
    %c0_i32 = arith.constant 0 : i32
    %c0_i32_0 = arith.constant 0 : i32
    %c0_i32_1 = arith.constant 0 : i32
    return %c0_i32, %c0_i32_0 : i32, i32
  }
  func.func @transform_3(%arg0: i32) -> (i32, i32) {
    %c0_i32 = arith.constant 0 : i32
    %c0_i32_0 = arith.constant 0 : i32
    return %arg0, %c0_i32 : i32, i32
  }
}

module attributes {stable_mosaic.version = 11 : i64} {
  func.func @_matmul_stats_kernel(%arg0: i32, %arg1: memref<32x2048xbf16, #tpu.memory_space<vmem>>, %arg2: memref<2048x128xbf16, #tpu.memory_space<vmem>>, %arg3: memref<32x128xf32, #tpu.memory_space<vmem>>, %arg4: memref<1x128xf32, #tpu.memory_space<vmem>>, %arg5: memref<1x128xf32, #tpu.memory_space<vmem>>) attributes {dimension_semantics = [#tpu.dimension_semantics<arbitrary>], iteration_bounds = array<i64: 1>, scalar_prefetch = 0 : i64, scratch_operands = 0 : i64, tpu.core_type = #tpu.core_type<tc>, window_params = [{transform_indices = @transform_0, window_bounds = array<i64: 32, 2048>}, {pipeline_mode = #tpu.pipeline_mode<synchronous>, transform_indices = @transform_1, window_bounds = array<i64: 2048, 128>}, {transform_indices = @transform_2, window_bounds = array<i64: 32, 128>}, {pipeline_mode = #tpu.pipeline_mode<synchronous>, transform_indices = @transform_3, window_bounds = array<i64: 1, 128>}, {pipeline_mode = #tpu.pipeline_mode<synchronous>, transform_indices = @transform_4, window_bounds = array<i64: 1, 128>}]} {
    %c0_i32 = arith.constant 0 : i32
    %0 = arith.cmpi eq, %arg0, %c0_i32 : i32
    %1 = arith.extui %0 : i1 to i32
    %c0_i32_0 = arith.constant 0 : i32
    %2 = arith.cmpi ne, %1, %c0_i32_0 : i32
    scf.if %2 {
      %cst_16 = arith.constant 0.000000e+00 : f32
      %18 = vector.broadcast %cst_16 : f32 to vector<1x128xf32>
      %c0_17 = arith.constant 0 : index
      %c0_18 = arith.constant 0 : index
      %19 = vector.load %arg4[%c0_17, %c0_18] : memref<1x128xf32, #tpu.memory_space<vmem>>, vector<1x128xf32>
      tpu.vector_store %arg4[%c0_17, %c0_18], %18 {strides = array<i32>} : memref<1x128xf32, #tpu.memory_space<vmem>>, vector<1x128xf32>,
      %cst_19 = arith.constant 0.000000e+00 : f32
      %20 = vector.broadcast %cst_19 : f32 to vector<1x128xf32>
      %c0_20 = arith.constant 0 : index
      %c0_21 = arith.constant 0 : index
      %21 = vector.load %arg5[%c0_20, %c0_21] : memref<1x128xf32, #tpu.memory_space<vmem>>, vector<1x128xf32>
      tpu.vector_store %arg5[%c0_20, %c0_21], %20 {strides = array<i32>} : memref<1x128xf32, #tpu.memory_space<vmem>>, vector<1x128xf32>,
    } else {
    }
    %c0 = arith.constant 0 : index
    %c0_1 = arith.constant 0 : index
    %3 = vector.load %arg1[%c0, %c0_1] : memref<32x2048xbf16, #tpu.memory_space<vmem>>, vector<32x2048xbf16>
    %c0_2 = arith.constant 0 : index
    %c0_3 = arith.constant 0 : index
    %4 = vector.load %arg2[%c0_2, %c0_3] : memref<2048x128xbf16, #tpu.memory_space<vmem>>, vector<2048x128xbf16>
    %cst = arith.constant dense<0.000000e+00> : vector<32x128xf32>
    %5 = tpu.matmul %3, %4, %cst {dimension_numbers = #tpu.dot_dimension_numbers<[1], [0], [0], [1], [0, 0, 1, 1], [], []>} : vector<32x2048xbf16>, vector<2048x128xbf16>, vector<32x128xf32> -> vector<32x128xf32>
    %c0_4 = arith.constant 0 : index
    %c0_5 = arith.constant 0 : index
    %6 = vector.load %arg3[%c0_4, %c0_5] : memref<32x128xf32, #tpu.memory_space<vmem>>, vector<32x128xf32>
    tpu.vector_store %arg3[%c0_4, %c0_5], %5 {strides = array<i32>} : memref<32x128xf32, #tpu.memory_space<vmem>>, vector<32x128xf32>,
    %c0_6 = arith.constant 0 : index
    %c0_7 = arith.constant 0 : index
    %7 = vector.load %arg4[%c0_6, %c0_7] : memref<1x128xf32, #tpu.memory_space<vmem>>, vector<1x128xf32>
    %cst_8 = arith.constant dense<0.000000e+00> : vector<128xf32>
    %8 = vector.multi_reduction <add>, %5, %cst_8 [0] : vector<32x128xf32> to vector<128xf32>
    %9 = vector.shape_cast %8 : vector<128xf32> to vector<1x128xf32>
    %10 = arith.addf %7, %9 : vector<1x128xf32>
    %c0_9 = arith.constant 0 : index
    %c0_10 = arith.constant 0 : index
    %11 = vector.load %arg4[%c0_9, %c0_10] : memref<1x128xf32, #tpu.memory_space<vmem>>, vector<1x128xf32>
    tpu.vector_store %arg4[%c0_9, %c0_10], %10 {strides = array<i32>} : memref<1x128xf32, #tpu.memory_space<vmem>>, vector<1x128xf32>,
    %c0_11 = arith.constant 0 : index
    %c0_12 = arith.constant 0 : index
    %12 = vector.load %arg5[%c0_11, %c0_12] : memref<1x128xf32, #tpu.memory_space<vmem>>, vector<1x128xf32>
    %13 = arith.mulf %5, %5 : vector<32x128xf32>
    %cst_13 = arith.constant dense<0.000000e+00> : vector<128xf32>
    %14 = vector.multi_reduction <add>, %13, %cst_13 [0] : vector<32x128xf32> to vector<128xf32>
    %15 = vector.shape_cast %14 : vector<128xf32> to vector<1x128xf32>
    %16 = arith.addf %12, %15 : vector<1x128xf32>
    %c0_14 = arith.constant 0 : index
    %c0_15 = arith.constant 0 : index
    %17 = vector.load %arg5[%c0_14, %c0_15] : memref<1x128xf32, #tpu.memory_space<vmem>>, vector<1x128xf32>
    tpu.vector_store %arg5[%c0_14, %c0_15], %16 {strides = array<i32>} : memref<1x128xf32, #tpu.memory_space<vmem>>, vector<1x128xf32>,
    return
  }
  func.func @transform_0(%arg0: i32) -> (i32, i32) {
    %c0_i32 = arith.constant 0 : i32
    %c0_i32_0 = arith.constant 0 : i32
    return %arg0, %c0_i32 : i32, i32
  }
  func.func @transform_1(%arg0: i32) -> (i32, i32) {
    %c0_i32 = arith.constant 0 : i32
    %c0_i32_0 = arith.constant 0 : i32
    %c0_i32_1 = arith.constant 0 : i32
    return %c0_i32, %c0_i32_0 : i32, i32
  }
  func.func @transform_2(%arg0: i32) -> (i32, i32) {
    %c0_i32 = arith.constant 0 : i32
    %c0_i32_0 = arith.constant 0 : i32
    return %arg0, %c0_i32 : i32, i32
  }
  func.func @transform_3(%arg0: i32) -> (i32, i32) {
    %c0_i32 = arith.constant 0 : i32
    %c0_i32_0 = arith.constant 0 : i32
    %c0_i32_1 = arith.constant 0 : i32
    return %c0_i32, %c0_i32_0 : i32, i32
  }
  func.func @transform_4(%arg0: i32) -> (i32, i32) {
    %c0_i32 = arith.constant 0 : i32
    %c0_i32_0 = arith.constant 0 : i32
    %c0_i32_1 = arith.constant 0 : i32
    return %c0_i32, %c0_i32_0 : i32, i32
  }
}

module attributes {stable_mosaic.version = 11 : i64} {
  func.func @_matmul_stats_kernel(%arg0: i32, %arg1: memref<32x1152xbf16, #tpu.memory_space<vmem>>, %arg2: memref<1152x128xbf16, #tpu.memory_space<vmem>>, %arg3: memref<32x128xf32, #tpu.memory_space<vmem>>, %arg4: memref<1x128xf32, #tpu.memory_space<vmem>>, %arg5: memref<1x128xf32, #tpu.memory_space<vmem>>) attributes {dimension_semantics = [#tpu.dimension_semantics<arbitrary>], iteration_bounds = array<i64: 1>, scalar_prefetch = 0 : i64, scratch_operands = 0 : i64, tpu.core_type = #tpu.core_type<tc>, window_params = [{transform_indices = @transform_0, window_bounds = array<i64: 32, 1152>}, {pipeline_mode = #tpu.pipeline_mode<synchronous>, transform_indices = @transform_1, window_bounds = array<i64: 1152, 128>}, {transform_indices = @transform_2, window_bounds = array<i64: 32, 128>}, {pipeline_mode = #tpu.pipeline_mode<synchronous>, transform_indices = @transform_3, window_bounds = array<i64: 1, 128>}, {pipeline_mode = #tpu.pipeline_mode<synchronous>, transform_indices = @transform_4, window_bounds = array<i64: 1, 128>}]} {
    %c0_i32 = arith.constant 0 : i32
    %0 = arith.cmpi eq, %arg0, %c0_i32 : i32
    %1 = arith.extui %0 : i1 to i32
    %c0_i32_0 = arith.constant 0 : i32
    %2 = arith.cmpi ne, %1, %c0_i32_0 : i32
    scf.if %2 {
      %cst_16 = arith.constant 0.000000e+00 : f32
      %18 = vector.broadcast %cst_16 : f32 to vector<1x128xf32>
      %c0_17 = arith.constant 0 : index
      %c0_18 = arith.constant 0 : index
      %19 = vector.load %arg4[%c0_17, %c0_18] : memref<1x128xf32, #tpu.memory_space<vmem>>, vector<1x128xf32>
      tpu.vector_store %arg4[%c0_17, %c0_18], %18 {strides = array<i32>} : memref<1x128xf32, #tpu.memory_space<vmem>>, vector<1x128xf32>,
      %cst_19 = arith.constant 0.000000e+00 : f32
      %20 = vector.broadcast %cst_19 : f32 to vector<1x128xf32>
      %c0_20 = arith.constant 0 : index
      %c0_21 = arith.constant 0 : index
      %21 = vector.load %arg5[%c0_20, %c0_21] : memref<1x128xf32, #tpu.memory_space<vmem>>, vector<1x128xf32>
      tpu.vector_store %arg5[%c0_20, %c0_21], %20 {strides = array<i32>} : memref<1x128xf32, #tpu.memory_space<vmem>>, vector<1x128xf32>,
    } else {
    }
    %c0 = arith.constant 0 : index
    %c0_1 = arith.constant 0 : index
    %3 = vector.load %arg1[%c0, %c0_1] : memref<32x1152xbf16, #tpu.memory_space<vmem>>, vector<32x1152xbf16>
    %c0_2 = arith.constant 0 : index
    %c0_3 = arith.constant 0 : index
    %4 = vector.load %arg2[%c0_2, %c0_3] : memref<1152x128xbf16, #tpu.memory_space<vmem>>, vector<1152x128xbf16>
    %cst = arith.constant dense<0.000000e+00> : vector<32x128xf32>
    %5 = tpu.matmul %3, %4, %cst {dimension_numbers = #tpu.dot_dimension_numbers<[1], [0], [0], [1], [0, 0, 1, 1], [], []>} : vector<32x1152xbf16>, vector<1152x128xbf16>, vector<32x128xf32> -> vector<32x128xf32>
    %c0_4 = arith.constant 0 : index
    %c0_5 = arith.constant 0 : index
    %6 = vector.load %arg3[%c0_4, %c0_5] : memref<32x128xf32, #tpu.memory_space<vmem>>, vector<32x128xf32>
    tpu.vector_store %arg3[%c0_4, %c0_5], %5 {strides = array<i32>} : memref<32x128xf32, #tpu.memory_space<vmem>>, vector<32x128xf32>,
    %c0_6 = arith.constant 0 : index
    %c0_7 = arith.constant 0 : index
    %7 = vector.load %arg4[%c0_6, %c0_7] : memref<1x128xf32, #tpu.memory_space<vmem>>, vector<1x128xf32>
    %cst_8 = arith.constant dense<0.000000e+00> : vector<128xf32>
    %8 = vector.multi_reduction <add>, %5, %cst_8 [0] : vector<32x128xf32> to vector<128xf32>
    %9 = vector.shape_cast %8 : vector<128xf32> to vector<1x128xf32>
    %10 = arith.addf %7, %9 : vector<1x128xf32>
    %c0_9 = arith.constant 0 : index
    %c0_10 = arith.constant 0 : index
    %11 = vector.load %arg4[%c0_9, %c0_10] : memref<1x128xf32, #tpu.memory_space<vmem>>, vector<1x128xf32>
    tpu.vector_store %arg4[%c0_9, %c0_10], %10 {strides = array<i32>} : memref<1x128xf32, #tpu.memory_space<vmem>>, vector<1x128xf32>,
    %c0_11 = arith.constant 0 : index
    %c0_12 = arith.constant 0 : index
    %12 = vector.load %arg5[%c0_11, %c0_12] : memref<1x128xf32, #tpu.memory_space<vmem>>, vector<1x128xf32>
    %13 = arith.mulf %5, %5 : vector<32x128xf32>
    %cst_13 = arith.constant dense<0.000000e+00> : vector<128xf32>
    %14 = vector.multi_reduction <add>, %13, %cst_13 [0] : vector<32x128xf32> to vector<128xf32>
    %15 = vector.shape_cast %14 : vector<128xf32> to vector<1x128xf32>
    %16 = arith.addf %12, %15 : vector<1x128xf32>
    %c0_14 = arith.constant 0 : index
    %c0_15 = arith.constant 0 : index
    %17 = vector.load %arg5[%c0_14, %c0_15] : memref<1x128xf32, #tpu.memory_space<vmem>>, vector<1x128xf32>
    tpu.vector_store %arg5[%c0_14, %c0_15], %16 {strides = array<i32>} : memref<1x128xf32, #tpu.memory_space<vmem>>, vector<1x128xf32>,
    return
  }
  func.func @transform_0(%arg0: i32) -> (i32, i32) {
    %c0_i32 = arith.constant 0 : i32
    %c0_i32_0 = arith.constant 0 : i32
    return %arg0, %c0_i32 : i32, i32
  }
  func.func @transform_1(%arg0: i32) -> (i32, i32) {
    %c0_i32 = arith.constant 0 : i32
    %c0_i32_0 = arith.constant 0 : i32
    %c0_i32_1 = arith.constant 0 : i32
    return %c0_i32, %c0_i32_0 : i32, i32
  }
  func.func @transform_2(%arg0: i32) -> (i32, i32) {
    %c0_i32 = arith.constant 0 : i32
    %c0_i32_0 = arith.constant 0 : i32
    return %arg0, %c0_i32 : i32, i32
  }
  func.func @transform_3(%arg0: i32) -> (i32, i32) {
    %c0_i32 = arith.constant 0 : i32
    %c0_i32_0 = arith.constant 0 : i32
    %c0_i32_1 = arith.constant 0 : i32
    return %c0_i32, %c0_i32_0 : i32, i32
  }
  func.func @transform_4(%arg0: i32) -> (i32, i32) {
    %c0_i32 = arith.constant 0 : i32
    %c0_i32_0 = arith.constant 0 : i32
    %c0_i32_1 = arith.constant 0 : i32
    return %c0_i32, %c0_i32_0 : i32, i32
  }
}

module attributes {stable_mosaic.version = 11 : i64} {
  func.func @_bn_lrelu_kernel(%arg0: i32, %arg1: memref<8x128xf32, #tpu.memory_space<vmem>>, %arg2: memref<1x128xf32, #tpu.memory_space<vmem>>, %arg3: memref<1x128xf32, #tpu.memory_space<vmem>>, %arg4: memref<8x128xbf16, #tpu.memory_space<vmem>>) attributes {dimension_semantics = [#tpu.dimension_semantics<parallel>], iteration_bounds = array<i64: 1>, scalar_prefetch = 0 : i64, scratch_operands = 0 : i64, tpu.core_type = #tpu.core_type<tc>, window_params = [{transform_indices = @transform_0, window_bounds = array<i64: 8, 128>}, {pipeline_mode = #tpu.pipeline_mode<synchronous>, transform_indices = @transform_1, window_bounds = array<i64: 1, 128>}, {pipeline_mode = #tpu.pipeline_mode<synchronous>, transform_indices = @transform_2, window_bounds = array<i64: 1, 128>}, {transform_indices = @transform_3, window_bounds = array<i64: 8, 128>}]} {
    %c0 = arith.constant 0 : index
    %c0_0 = arith.constant 0 : index
    %0 = vector.load %arg1[%c0, %c0_0] : memref<8x128xf32, #tpu.memory_space<vmem>>, vector<8x128xf32>
    %c0_1 = arith.constant 0 : index
    %c0_2 = arith.constant 0 : index
    %1 = vector.load %arg2[%c0_1, %c0_2] : memref<1x128xf32, #tpu.memory_space<vmem>>, vector<1x128xf32>
    %2 = vector.broadcast %1 : vector<1x128xf32> to vector<8x128xf32>
    %3 = arith.mulf %0, %2 : vector<8x128xf32>
    %c0_3 = arith.constant 0 : index
    %c0_4 = arith.constant 0 : index
    %4 = vector.load %arg3[%c0_3, %c0_4] : memref<1x128xf32, #tpu.memory_space<vmem>>, vector<1x128xf32>
    %5 = vector.broadcast %4 : vector<1x128xf32> to vector<8x128xf32>
    %6 = arith.addf %3, %5 : vector<8x128xf32>
    %cst = arith.constant 0.000000e+00 : f32
    %7 = vector.broadcast %cst : f32 to vector<8x128xf32>
    %8 = arith.cmpf oge, %6, %7 : vector<8x128xf32>
    %cst_5 = arith.constant 2.000000e-01 : f32
    %9 = vector.broadcast %cst_5 : f32 to vector<8x128xf32>
    %10 = arith.mulf %9, %6 : vector<8x128xf32>
    %11 = arith.select %8, %6, %10 : vector<8x128xi1>, vector<8x128xf32>
    %12 = arith.truncf %11 : vector<8x128xf32> to vector<8x128xbf16>
    %c0_6 = arith.constant 0 : index
    %c0_7 = arith.constant 0 : index
    %13 = vector.load %arg4[%c0_6, %c0_7] : memref<8x128xbf16, #tpu.memory_space<vmem>>, vector<8x128xbf16>
    tpu.vector_store %arg4[%c0_6, %c0_7], %12 {strides = array<i32>} : memref<8x128xbf16, #tpu.memory_space<vmem>>, vector<8x128xbf16>,
    return
  }
  func.func @transform_0(%arg0: i32) -> (i32, i32) {
    %c0_i32 = arith.constant 0 : i32
    %c0_i32_0 = arith.constant 0 : i32
    return %arg0, %c0_i32 : i32, i32
  }
  func.func @transform_1(%arg0: i32) -> (i32, i32) {
    %c0_i32 = arith.constant 0 : i32
    %c0_i32_0 = arith.constant 0 : i32
    %c0_i32_1 = arith.constant 0 : i32
    return %c0_i32, %c0_i32_0 : i32, i32
  }
  func.func @transform_2(%arg0: i32) -> (i32, i32) {
    %c0_i32 = arith.constant 0 : i32
    %c0_i32_0 = arith.constant 0 : i32
    %c0_i32_1 = arith.constant 0 : i32
    return %c0_i32, %c0_i32_0 : i32, i32
  }
  func.func @transform_3(%arg0: i32) -> (i32, i32) {
    %c0_i32 = arith.constant 0 : i32
    %c0_i32_0 = arith.constant 0 : i32
    return %arg0, %c0_i32 : i32, i32
  }
}

module attributes {stable_mosaic.version = 11 : i64} {
  func.func @_fc_kernel(%arg0: i32, %arg1: memref<8x512xbf16, #tpu.memory_space<vmem>>, %arg2: memref<512x128xbf16, #tpu.memory_space<vmem>>, %arg3: memref<1x128xf32, #tpu.memory_space<vmem>>, %arg4: memref<8x128xf32, #tpu.memory_space<vmem>>) attributes {dimension_semantics = [#tpu.dimension_semantics<arbitrary>], iteration_bounds = array<i64: 1>, scalar_prefetch = 0 : i64, scratch_operands = 0 : i64, tpu.core_type = #tpu.core_type<tc>, window_params = [{transform_indices = @transform_0, window_bounds = array<i64: 8, 512>}, {transform_indices = @transform_1, window_bounds = array<i64: 512, 128>}, {pipeline_mode = #tpu.pipeline_mode<synchronous>, transform_indices = @transform_2, window_bounds = array<i64: 1, 128>}, {pipeline_mode = #tpu.pipeline_mode<synchronous>, transform_indices = @transform_3, window_bounds = array<i64: 8, 128>}]} {
    %c0_i32 = arith.constant 0 : i32
    %0 = arith.cmpi eq, %arg0, %c0_i32 : i32
    %1 = arith.extui %0 : i1 to i32
    %c0_i32_0 = arith.constant 0 : i32
    %2 = arith.cmpi ne, %1, %c0_i32_0 : i32
    scf.if %2 {
      %cst_10 = arith.constant 0.000000e+00 : f32
      %12 = vector.broadcast %cst_10 : f32 to vector<8x128xf32>
      %c0_11 = arith.constant 0 : index
      %c0_12 = arith.constant 0 : index
      %13 = vector.load %arg4[%c0_11, %c0_12] : memref<8x128xf32, #tpu.memory_space<vmem>>, vector<8x128xf32>
      tpu.vector_store %arg4[%c0_11, %c0_12], %12 {strides = array<i32>} : memref<8x128xf32, #tpu.memory_space<vmem>>, vector<8x128xf32>,
    } else {
    }
    %c0 = arith.constant 0 : index
    %c0_1 = arith.constant 0 : index
    %3 = vector.load %arg4[%c0, %c0_1] : memref<8x128xf32, #tpu.memory_space<vmem>>, vector<8x128xf32>
    %c0_2 = arith.constant 0 : index
    %c0_3 = arith.constant 0 : index
    %4 = vector.load %arg1[%c0_2, %c0_3] : memref<8x512xbf16, #tpu.memory_space<vmem>>, vector<8x512xbf16>
    %c0_4 = arith.constant 0 : index
    %c0_5 = arith.constant 0 : index
    %5 = vector.load %arg2[%c0_4, %c0_5] : memref<512x128xbf16, #tpu.memory_space<vmem>>, vector<512x128xbf16>
    %cst = arith.constant dense<0.000000e+00> : vector<8x128xf32>
    %6 = tpu.matmul %4, %5, %cst {dimension_numbers = #tpu.dot_dimension_numbers<[1], [0], [0], [1], [0, 0, 1, 1], [], []>} : vector<8x512xbf16>, vector<512x128xbf16>, vector<8x128xf32> -> vector<8x128xf32>
    %7 = arith.addf %3, %6 : vector<8x128xf32>
    %c0_6 = arith.constant 0 : index
    %c0_7 = arith.constant 0 : index
    %8 = vector.load %arg4[%c0_6, %c0_7] : memref<8x128xf32, #tpu.memory_space<vmem>>, vector<8x128xf32>
    tpu.vector_store %arg4[%c0_6, %c0_7], %7 {strides = array<i32>} : memref<8x128xf32, #tpu.memory_space<vmem>>, vector<8x128xf32>,
    %c0_i32_8 = arith.constant 0 : i32
    %9 = arith.cmpi eq, %arg0, %c0_i32_8 : i32
    %10 = arith.extui %9 : i1 to i32
    %c0_i32_9 = arith.constant 0 : i32
    %11 = arith.cmpi ne, %10, %c0_i32_9 : i32
    scf.if %11 {
      %c0_10 = arith.constant 0 : index
      %c0_11 = arith.constant 0 : index
      %12 = vector.load %arg4[%c0_10, %c0_11] : memref<8x128xf32, #tpu.memory_space<vmem>>, vector<8x128xf32>
      %c0_12 = arith.constant 0 : index
      %c0_13 = arith.constant 0 : index
      %13 = vector.load %arg3[%c0_12, %c0_13] : memref<1x128xf32, #tpu.memory_space<vmem>>, vector<1x128xf32>
      %14 = vector.broadcast %13 : vector<1x128xf32> to vector<8x128xf32>
      %15 = arith.addf %12, %14 : vector<8x128xf32>
      %c0_14 = arith.constant 0 : index
      %c0_15 = arith.constant 0 : index
      %16 = vector.load %arg4[%c0_14, %c0_15] : memref<8x128xf32, #tpu.memory_space<vmem>>, vector<8x128xf32>
      tpu.vector_store %arg4[%c0_14, %c0_15], %15 {strides = array<i32>} : memref<8x128xf32, #tpu.memory_space<vmem>>, vector<8x128xf32>,
    } else {
    }
    return
  }
  func.func @transform_0(%arg0: i32) -> (i32, i32) {
    %c0_i32 = arith.constant 0 : i32
    %c0_i32_0 = arith.constant 0 : i32
    return %c0_i32, %arg0 : i32, i32
  }
  func.func @transform_1(%arg0: i32) -> (i32, i32) {
    %c0_i32 = arith.constant 0 : i32
    %c0_i32_0 = arith.constant 0 : i32
    return %arg0, %c0_i32 : i32, i32
  }
  func.func @transform_2(%arg0: i32) -> (i32, i32) {
    %c0_i32 = arith.constant 0 : i32
    %c0_i32_0 = arith.constant 0 : i32
    %c0_i32_1 = arith.constant 0 : i32
    return %c0_i32, %c0_i32_0 : i32, i32
  }
  func.func @transform_3(%arg0: i32) -> (i32, i32) {
    %c0_i32 = arith.constant 0 : i32
    %c0_i32_0 = arith.constant 0 : i32
    %c0_i32_1 = arith.constant 0 : i32
    return %c0_i32, %c0_i32_0 : i32, i32
  }
}

module attributes {stable_mosaic.version = 11 : i64} {
  func.func @_matmul_stats_kernel(%arg0: i32, %arg1: memref<8x2048xbf16, #tpu.memory_space<vmem>>, %arg2: memref<2048x128xbf16, #tpu.memory_space<vmem>>, %arg3: memref<8x128xf32, #tpu.memory_space<vmem>>, %arg4: memref<1x128xf32, #tpu.memory_space<vmem>>, %arg5: memref<1x128xf32, #tpu.memory_space<vmem>>) attributes {dimension_semantics = [#tpu.dimension_semantics<arbitrary>], iteration_bounds = array<i64: 1>, scalar_prefetch = 0 : i64, scratch_operands = 0 : i64, tpu.core_type = #tpu.core_type<tc>, window_params = [{transform_indices = @transform_0, window_bounds = array<i64: 8, 2048>}, {pipeline_mode = #tpu.pipeline_mode<synchronous>, transform_indices = @transform_1, window_bounds = array<i64: 2048, 128>}, {transform_indices = @transform_2, window_bounds = array<i64: 8, 128>}, {pipeline_mode = #tpu.pipeline_mode<synchronous>, transform_indices = @transform_3, window_bounds = array<i64: 1, 128>}, {pipeline_mode = #tpu.pipeline_mode<synchronous>, transform_indices = @transform_4, window_bounds = array<i64: 1, 128>}]} {
    %c0_i32 = arith.constant 0 : i32
    %0 = arith.cmpi eq, %arg0, %c0_i32 : i32
    %1 = arith.extui %0 : i1 to i32
    %c0_i32_0 = arith.constant 0 : i32
    %2 = arith.cmpi ne, %1, %c0_i32_0 : i32
    scf.if %2 {
      %cst_16 = arith.constant 0.000000e+00 : f32
      %18 = vector.broadcast %cst_16 : f32 to vector<1x128xf32>
      %c0_17 = arith.constant 0 : index
      %c0_18 = arith.constant 0 : index
      %19 = vector.load %arg4[%c0_17, %c0_18] : memref<1x128xf32, #tpu.memory_space<vmem>>, vector<1x128xf32>
      tpu.vector_store %arg4[%c0_17, %c0_18], %18 {strides = array<i32>} : memref<1x128xf32, #tpu.memory_space<vmem>>, vector<1x128xf32>,
      %cst_19 = arith.constant 0.000000e+00 : f32
      %20 = vector.broadcast %cst_19 : f32 to vector<1x128xf32>
      %c0_20 = arith.constant 0 : index
      %c0_21 = arith.constant 0 : index
      %21 = vector.load %arg5[%c0_20, %c0_21] : memref<1x128xf32, #tpu.memory_space<vmem>>, vector<1x128xf32>
      tpu.vector_store %arg5[%c0_20, %c0_21], %20 {strides = array<i32>} : memref<1x128xf32, #tpu.memory_space<vmem>>, vector<1x128xf32>,
    } else {
    }
    %c0 = arith.constant 0 : index
    %c0_1 = arith.constant 0 : index
    %3 = vector.load %arg1[%c0, %c0_1] : memref<8x2048xbf16, #tpu.memory_space<vmem>>, vector<8x2048xbf16>
    %c0_2 = arith.constant 0 : index
    %c0_3 = arith.constant 0 : index
    %4 = vector.load %arg2[%c0_2, %c0_3] : memref<2048x128xbf16, #tpu.memory_space<vmem>>, vector<2048x128xbf16>
    %cst = arith.constant dense<0.000000e+00> : vector<8x128xf32>
    %5 = tpu.matmul %3, %4, %cst {dimension_numbers = #tpu.dot_dimension_numbers<[1], [0], [0], [1], [0, 0, 1, 1], [], []>} : vector<8x2048xbf16>, vector<2048x128xbf16>, vector<8x128xf32> -> vector<8x128xf32>
    %c0_4 = arith.constant 0 : index
    %c0_5 = arith.constant 0 : index
    %6 = vector.load %arg3[%c0_4, %c0_5] : memref<8x128xf32, #tpu.memory_space<vmem>>, vector<8x128xf32>
    tpu.vector_store %arg3[%c0_4, %c0_5], %5 {strides = array<i32>} : memref<8x128xf32, #tpu.memory_space<vmem>>, vector<8x128xf32>,
    %c0_6 = arith.constant 0 : index
    %c0_7 = arith.constant 0 : index
    %7 = vector.load %arg4[%c0_6, %c0_7] : memref<1x128xf32, #tpu.memory_space<vmem>>, vector<1x128xf32>
    %cst_8 = arith.constant dense<0.000000e+00> : vector<128xf32>
    %8 = vector.multi_reduction <add>, %5, %cst_8 [0] : vector<8x128xf32> to vector<128xf32>
    %9 = vector.shape_cast %8 : vector<128xf32> to vector<1x128xf32>
    %10 = arith.addf %7, %9 : vector<1x128xf32>
    %c0_9 = arith.constant 0 : index
    %c0_10 = arith.constant 0 : index
    %11 = vector.load %arg4[%c0_9, %c0_10] : memref<1x128xf32, #tpu.memory_space<vmem>>, vector<1x128xf32>
    tpu.vector_store %arg4[%c0_9, %c0_10], %10 {strides = array<i32>} : memref<1x128xf32, #tpu.memory_space<vmem>>, vector<1x128xf32>,
    %c0_11 = arith.constant 0 : index
    %c0_12 = arith.constant 0 : index
    %12 = vector.load %arg5[%c0_11, %c0_12] : memref<1x128xf32, #tpu.memory_space<vmem>>, vector<1x128xf32>
    %13 = arith.mulf %5, %5 : vector<8x128xf32>
    %cst_13 = arith.constant dense<0.000000e+00> : vector<128xf32>
    %14 = vector.multi_reduction <add>, %13, %cst_13 [0] : vector<8x128xf32> to vector<128xf32>
    %15 = vector.shape_cast %14 : vector<128xf32> to vector<1x128xf32>
    %16 = arith.addf %12, %15 : vector<1x128xf32>
    %c0_14 = arith.constant 0 : index
    %c0_15 = arith.constant 0 : index
    %17 = vector.load %arg5[%c0_14, %c0_15] : memref<1x128xf32, #tpu.memory_space<vmem>>, vector<1x128xf32>
    tpu.vector_store %arg5[%c0_14, %c0_15], %16 {strides = array<i32>} : memref<1x128xf32, #tpu.memory_space<vmem>>, vector<1x128xf32>,
    return
  }
  func.func @transform_0(%arg0: i32) -> (i32, i32) {
    %c0_i32 = arith.constant 0 : i32
    %c0_i32_0 = arith.constant 0 : i32
    return %arg0, %c0_i32 : i32, i32
  }
  func.func @transform_1(%arg0: i32) -> (i32, i32) {
    %c0_i32 = arith.constant 0 : i32
    %c0_i32_0 = arith.constant 0 : i32
    %c0_i32_1 = arith.constant 0 : i32
    return %c0_i32, %c0_i32_0 : i32, i32
  }
  func.func @transform_2(%arg0: i32) -> (i32, i32) {
    %c0_i32 = arith.constant 0 : i32
    %c0_i32_0 = arith.constant 0 : i32
    return %arg0, %c0_i32 : i32, i32
  }
  func.func @transform_3(%arg0: i32) -> (i32, i32) {
    %c0_i32 = arith.constant 0 : i32
    %c0_i32_0 = arith.constant 0 : i32
    %c0_i32_1 = arith.constant 0 : i32
    return %c0_i32, %c0_i32_0 : i32, i32
  }
  func.func @transform_4(%arg0: i32) -> (i32, i32) {
    %c0_i32 = arith.constant 0 : i32
    %c0_i32_0 = arith.constant 0 : i32
    %c0_i32_1 = arith.constant 0 : i32
    return %c0_i32, %c0_i32_0 : i32, i32
  }
}

</mosaic_0001>

<llo_original>
// kernel: img_discriminator_forward.13
$region0: #{img_discriminator_forward.13}
  #allocation0 [shape = 'u32[]', space=smem, size = 0x4, offset = 0x4, fixed_abs, tag = 'smem constant byte address 0x4 - core index']
  #allocation1 [shape = 'u32[144,128]{1,0:T(1,128)}', space=vmem, size = 0x12000, scoped, tag = 'internal scratch']
  %s0 = inlined_call_operand.vmem [shape: bf16[512,128], index: 0, kind: input, shape index: {}]
  %s1 = inlined_call_operand.vmem [shape: bf16[128,128], index: 1, kind: input, shape index: {}]
  %s2 = inlined_call_operand.vmem [shape: f32[512,128], index: 2, kind: output, shape index: {0}]
  %s3 = inlined_call_operand.vmem [shape: f32[1,128], index: 3, kind: output, shape index: {1}]
  %s4 = inlined_call_operand.vmem [shape: f32[1,128], index: 4, kind: output, shape index: {2}]
  %5 = xla_tuple %s2, %s3, %s4
  %s6 = sld [smem:[#allocation0]]
  $region38: #{img_discriminator_forward.13} parent=0
    _
  %s8 = ssub.s32 1, %s6
  %s9 = scalar_select 0, %s8, %s6
  // Predicated region
  $region2: #{img_discriminator_forward.13} parent=0 // pred_check
    _
  $region3: #{img_discriminator_forward.13} parent=0 // pred_check_branch
    %11 = sbr.rel (0) target = $region5
  $region4: #{img_discriminator_forward.13} parent=0 // pred_region
    _
  $region5: #{img_discriminator_forward.13} parent=0 // pred_fallthru
    _
  // Predicated region
  $region6: #{img_discriminator_forward.13} parent=0 // pred_check
    _
  $region7: #{img_discriminator_forward.13} parent=0 // pred_check_branch
    %13 = sbr.rel (0) target = $region9
  $region8: #{img_discriminator_forward.13} parent=0 // pred_region
    _
  $region9: #{img_discriminator_forward.13} parent=0 // pred_fallthru
    _
  %p15 = scmp.eq.s32.totalorder 0, 0
  // Predicated region
  $region10: #{img_discriminator_forward.13} parent=0 // pred_check
    %p16 = pneg %p15
  $region11: #{img_discriminator_forward.13} parent=0 // pred_check_branch
    %18 = sbr.rel (%p16) target = $region13
  $region12: #{img_discriminator_forward.13} parent=0 // pred_region
    %19 = vst [vmem:[%s3] sm:$0x1] 0.0
    %20 = vst [vmem:[%s4] sm:$0x1] 0.0
  $region13: #{img_discriminator_forward.13} parent=0 // pred_fallthru
    _
  %v21 = vld [vmem:[%s0] sm:$0xf]
  %v22 = vld [vmem:[%s0 + $0x4] sm:$0xf]
  %v23 = vld [vmem:[%s0 + $0x8] sm:$0xf]
  %v24 = vld [vmem:[%s0 + $0xc] sm:$0xf]
  %v25 = vld [vmem:[%s0 + $0x10] sm:$0xf]
  %v26 = vld [vmem:[%s0 + $0x14] sm:$0xf]
  %v27 = vld [vmem:[%s0 + $0x18] sm:$0xf]
  %v28 = vld [vmem:[%s0 + $0x1c] sm:$0xf]
  %v29 = vld [vmem:[%s0 + $0x20] sm:$0xf]
  %v30 = vld [vmem:[%s0 + $0x24] sm:$0xf]
  %v31 = vld [vmem:[%s0 + $0x28] sm:$0xf]
  %v32 = vld [vmem:[%s0 + $0x2c] sm:$0xf]
  %v33 = vld [vmem:[%s0 + $0x30] sm:$0xf]
  %v34 = vld [vmem:[%s0 + $0x34] sm:$0xf]
  %v35 = vld [vmem:[%s0 + $0x38] sm:$0xf]
  %v36 = vld [vmem:[%s0 + $0x3c] sm:$0xf]
  %v37 = vld [vmem:[%s0 + $0x40] sm:$0xf]
  %v38 = vld [vmem:[%s0 + $0x44] sm:$0xf]
  %v39 = vld [vmem:[%s0 + $0x48] sm:$0xf]
  %v40 = vld [vmem:[%s0 + $0x4c] sm:$0xf]
  %v41 = vld [vmem:[%s0 + $0x50] sm:$0xf]
  %v42 = vld [vmem:[%s0 + $0x54] sm:$0xf]
  %v43 = vld [vmem:[%s0 + $0x58] sm:$0xf]
  %v44 = vld [vmem:[%s0 + $0x5c] sm:$0xf]
  %v45 = vld [vmem:[%s0 + $0x60] sm:$0xf]
  %v46 = vld [vmem:[%s0 + $0x64] sm:$0xf]
  %v47 = vld [vmem:[%s0 + $0x68] sm:$0xf]
  %v48 = vld [vmem:[%s0 + $0x6c] sm:$0xf]
  %v49 = vld [vmem:[%s0 + $0x70] sm:$0xf]
  %v50 = vld [vmem:[%s0 + $0x74] sm:$0xf]
  %v51 = vld [vmem:[%s0 + $0x78] sm:$0xf]
  %v52 = vld [vmem:[%s0 + $0x7c] sm:$0xf]
  %v53 = vld [vmem:[%s0 + $0x80] sm:$0xf]
  %v54 = vld [vmem:[%s0 + $0x84] sm:$0xf]
  %v55 = vld [vmem:[%s0 + $0x88] sm:$0xf]
  %v56 = vld [vmem:[%s0 + $0x8c] sm:$0xf]
  %v57 = vld [vmem:[%s0 + $0x90] sm:$0xf]
  %v58 = vld [vmem:[%s0 + $0x94] sm:$0xf]
  %v59 = vld [vmem:[%s0 + $0x98] sm:$0xf]
  %v60 = vld [vmem:[%s0 + $0x9c] sm:$0xf]
  %v61 = vld [vmem:[%s0 + $0xa0] sm:$0xf]
  %v62 = vld [vmem:[%s0 + $0xa4] sm:$0xf]
  %v63 = vld [vmem:[%s0 + $0xa8] sm:$0xf]
  %v64 = vld [vmem:[%s0 + $0xac] sm:$0xf]
  %v65 = vld [vmem:[%s0 + $0xb0] sm:$0xf]
  %v66 = vld [vmem:[%s0 + $0xb4] sm:$0xf]
  %v67 = vld [vmem:[%s0 + $0xb8] sm:$0xf]
  %v68 = vld [vmem:[%s0 + $0xbc] sm:$0xf]
  %v69 = vld [vmem:[%s0 + $0xc0] sm:$0xf]
  %v70 = vld [vmem:[%s0 + $0xc4] sm:$0xf]
  %v71 = vld [vmem:[%s0 + $0xc8] sm:$0xf]
  %v72 = vld [vmem:[%s0 + $0xcc] sm:$0xf]
  %v73 = vld [vmem:[%s0 + $0xd0] sm:$0xf]
  %v74 = vld [vmem:[%s0 + $0xd4] sm:$0xf]
  %v75 = vld [vmem:[%s0 + $0xd8] sm:$0xf]
  %v76 = vld [vmem:[%s0 + $0xdc] sm:$0xf]
  %v77 = vld [vmem:[%s0 + $0xe0] sm:$0xf]
  %v78 = vld [vmem:[%s0 + $0xe4] sm:$0xf]
  %v79 = vld [vmem:[%s0 + $0xe8] sm:$0xf]
  %v80 = vld [vmem:[%s0 + $0xec] sm:$0xf]
  %v81 = vld [vmem:[%s0 + $0xf0] sm:$0xf]
  %v82 = vld [vmem:[%s0 + $0xf4] sm:$0xf]
  %v83 = vld [vmem:[%s0 + $0xf8] sm:$0xf]
  %v84 = vld [vmem:[%s0 + $0xfc] sm:$0xf]
  %v85 = vld [vmem:[%s1] sm:$0xf]
  %v86 = vld [vmem:[%s1 + $0x4] sm:$0xf]
  %v87 = vld [vmem:[%s1 + $0x8] sm:$0xf]
  %v88 = vld [vmem:[%s1 + $0xc] sm:$0xf]
  %v89 = vld [vmem:[%s1 + $0x10] sm:$0xf]
  %v90 = vld [vmem:[%s1 + $0x14] sm:$0xf]
  %v91 = vld [vmem:[%s1 + $0x18] sm:$0xf]
  %v92 = vld [vmem:[%s1 + $0x1c] sm:$0xf]
  %v93 = vld [vmem:[%s1 + $0x20] sm:$0xf]
  %v94 = vld [vmem:[%s1 + $0x24] sm:$0xf]
  %v95 = vld [vmem:[%s1 + $0x28] sm:$0xf]
  %v96 = vld [vmem:[%s1 + $0x2c] sm:$0xf]
  %v97 = vld [vmem:[%s1 + $0x30] sm:$0xf]
  %v98 = vld [vmem:[%s1 + $0x34] sm:$0xf]
  %v99 = vld [vmem:[%s1 + $0x38] sm:$0xf]
  %v100 = vld [vmem:[%s1 + $0x3c] sm:$0xf]
  %v165 = vunpack.c.l.b16 %v21
  %v166 = vunpack.c.l.b16 %v22
  %v167 = vunpack.c.l.b16 %v23
  %v168 = vunpack.c.l.b16 %v24
  %v169 = vunpack.c.l.b16 %v25
  %v170 = vunpack.c.l.b16 %v26
  %v171 = vunpack.c.l.b16 %v27
  %v172 = vunpack.c.l.b16 %v28
  %v173 = vunpack.c.l.b16 %v29
  %v174 = vunpack.c.l.b16 %v30
  %v175 = vunpack.c.l.b16 %v31
  %v176 = vunpack.c.l.b16 %v32
  %v177 = vunpack.c.l.b16 %v33
  %v178 = vunpack.c.l.b16 %v34
  %v179 = vunpack.c.l.b16 %v35
  %v180 = vunpack.c.l.b16 %v36
  %v181 = vunpack.c.l.b16 %v37
  %v182 = vunpack.c.l.b16 %v38
  %v183 = vunpack.c.l.b16 %v39
  %v184 = vunpack.c.l.b16 %v40
  %v185 = vunpack.c.l.b16 %v41
  %v186 = vunpack.c.l.b16 %v42
  %v187 = vunpack.c.l.b16 %v43
  %v188 = vunpack.c.l.b16 %v44
  %v189 = vunpack.c.l.b16 %v45
  %v190 = vunpack.c.l.b16 %v46
  %v191 = vunpack.c.l.b16 %v47
  %v192 = vunpack.c.l.b16 %v48
  %v193 = vunpack.c.l.b16 %v49
  %v194 = vunpack.c.l.b16 %v50
  %v195 = vunpack.c.l.b16 %v51
  %v196 = vunpack.c.l.b16 %v52
  %v197 = vunpack.c.l.b16 %v53
  %v198 = vunpack.c.l.b16 %v54
  %v199 = vunpack.c.l.b16 %v55
  %v200 = vunpack.c.l.b16 %v56
  %v201 = vunpack.c.l.b16 %v57
  %v202 = vunpack.c.l.b16 %v58
  %v203 = vunpack.c.l.b16 %v59
  %v204 = vunpack.c.l.b16 %v60
  %v205 = vunpack.c.l.b16 %v61
  %v206 = vunpack.c.l.b16 %v62
  %v207 = vunpack.c.l.b16 %v63
  %v208 = vunpack.c.l.b16 %v64
  %v209 = vunpack.c.l.b16 %v65
  %v210 = vunpack.c.l.b16 %v66
  %v211 = vunpack.c.l.b16 %v67
  %v212 = vunpack.c.l.b16 %v68
  %v213 = vunpack.c.l.b16 %v69
  %v214 = vunpack.c.l.b16 %v70
  %v215 = vunpack.c.l.b16 %v71
  %v216 = vunpack.c.l.b16 %v72
  %v217 = vunpack.c.l.b16 %v73
  %v218 = vunpack.c.l.b16 %v74
  %v219 = vunpack.c.l.b16 %v75
  %v220 = vunpack.c.l.b16 %v76
  %v221 = vunpack.c.l.b16 %v77
  %v222 = vunpack.c.l.b16 %v78
  %v223 = vunpack.c.l.b16 %v79
  %v224 = vunpack.c.l.b16 %v80
  %v225 = vunpack.c.l.b16 %v81
  %v226 = vunpack.c.l.b16 %v82
  %v227 = vunpack.c.l.b16 %v83
  %v228 = vunpack.c.l.b16 %v84
  %v229 = vpack.c.b16 %v166, %v165
  %v230 = vpack.c.b16 %v168, %v167
  %v231 = vpack.c.b16 %v170, %v169
  %v232 = vpack.c.b16 %v172, %v171
  %v233 = vpack.c.b16 %v174, %v173
  %v234 = vpack.c.b16 %v176, %v175
  %v235 = vpack.c.b16 %v178, %v177
  %v236 = vpack.c.b16 %v180, %v179
  %v237 = vpack.c.b16 %v182, %v181
  %v238 = vpack.c.b16 %v184, %v183
  %v239 = vpack.c.b16 %v186, %v185
  %v240 = vpack.c.b16 %v188, %v187
  %v241 = vpack.c.b16 %v190, %v189
  %v242 = vpack.c.b16 %v192, %v191
  %v243 = vpack.c.b16 %v194, %v193
  %v244 = vpack.c.b16 %v196, %v195
  %v245 = vpack.c.b16 %v198, %v197
  %v246 = vpack.c.b16 %v200, %v199
  %v247 = vpack.c.b16 %v202, %v201
  %v248 = vpack.c.b16 %v204, %v203
  %v249 = vpack.c.b16 %v206, %v205
  %v250 = vpack.c.b16 %v208, %v207
  %v251 = vpack.c.b16 %v210, %v209
  %v252 = vpack.c.b16 %v212, %v211
  %v253 = vpack.c.b16 %v214, %v213
  %v254 = vpack.c.b16 %v216, %v215
  %v255 = vpack.c.b16 %v218, %v217
  %v256 = vpack.c.b16 %v220, %v219
  %v257 = vpack.c.b16 %v222, %v221
  %v258 = vpack.c.b16 %v224, %v223
  %v259 = vpack.c.b16 %v226, %v225
  %v260 = vpack.c.b16 %v228, %v227
  %v309 = vunpack.c.l.b16 %v85
  %v310 = vunpack.c.l.b16 %v86
  %v311 = vunpack.c.l.b16 %v87
  %v312 = vunpack.c.l.b16 %v88
  %v313 = vunpack.c.l.b16 %v89
  %v314 = vunpack.c.l.b16 %v90
  %v315 = vunpack.c.l.b16 %v91
  %v316 = vunpack.c.l.b16 %v92
  %v317 = vunpack.c.l.b16 %v93
  %v318 = vunpack.c.l.b16 %v94
  %v319 = vunpack.c.l.b16 %v95
  %v320 = vunpack.c.l.b16 %v96
  %v321 = vunpack.c.l.b16 %v97
  %v322 = vunpack.c.l.b16 %v98
  %v323 = vunpack.c.l.b16 %v99
  %v324 = vunpack.c.l.b16 %v100
  %v325 = vpack.c.b16 %v310, %v309
  %v326 = vpack.c.b16 %v312, %v311
  %v327 = vpack.c.b16 %v314, %v313
  %v328 = vpack.c.b16 %v316, %v315
  %v329 = vpack.c.b16 %v318, %v317
  %v330 = vpack.c.b16 %v320, %v319
  %v331 = vpack.c.b16 %v322, %v321
  %v332 = vpack.c.b16 %v324, %v323
  %341 = vmatprep.subr.bf16.mxu0 0
  %342 = vmatpush1.bf16.msra.mxu0 %v325
  %343 = vmatprep.subr.bf16.mxu0 0
  %344 = vmatpush1.bf16.msra.mxu0 %v326
  %345 = vmatprep.subr.bf16.mxu0 0
  %346 = vmatpush1.bf16.msra.mxu0 %v327
  %347 = vmatprep.subr.bf16.mxu0 0
  %348 = vmatpush1.bf16.msra.mxu0 %v328
  %349 = vmatprep.subr.bf16.mxu0 0
  %350 = vmatpush1.bf16.msra.mxu0 %v329
  %351 = vmatprep.subr.bf16.mxu0 0
  %352 = vmatpush1.bf16.msra.mxu0 %v330
  %353 = vmatprep.subr.bf16.mxu0 0
  %354 = vmatpush1.bf16.msra.mxu0 %v331
  %355 = vmatprep.subr.bf16.mxu0 0
  %356 = vmatpush1.bf16.msra.mxu0 %v332
  %357 = vmatprep.subr.bf16.mxu0 0
  %358 = vmatpush1.bf16.msra.mxu0 0
  %359 = vmatprep.subr.bf16.mxu0 0
  %360 = vmatpush1.bf16.msra.mxu0 0
  %361 = vmatprep.subr.bf16.mxu0 0
  %362 = vmatpush1.bf16.msra.mxu0 0
  %363 = vmatprep.subr.bf16.mxu0 0
  %364 = vmatpush1.bf16.msra.mxu0 0
  %365 = vmatprep.subr.bf16.mxu0 0
  %366 = vmatpush1.bf16.msra.mxu0 0
  %367 = vmatprep.subr.bf16.mxu0 0
  %368 = vmatpush1.bf16.msra.mxu0 0
  %369 = vmatprep.subr.bf16.mxu0 0
  %370 = vmatpush1.bf16.msra.mxu0 0
  %371 = vmatprep.subr.bf16.mxu0 0
  %372 = vmatpush1.bf16.msra.mxu0 0
  %373 = vmatprep.mubr.bf16.mxu0 0
  %374 = vmatmul.mubr.bf16.gmra.mrb[0].mxu0 %v229
  %v375 = vpop.f32.mrb[0].mxu0
  %v376 = vadd.f32 0.0, %v375
  %v377 = vpop.f32.mrb[0].mxu0
  %v378 = vpop.f32.mrb[0].mxu0
  %v379 = vadd.f32 0.0, %v378
  %v380 = vpop.f32.mrb[0].mxu0
  %381 = vmatprep.mubr.bf16.mxu0 0
  %382 = vmatmul.mubr.bf16.gmra.mrb[0].mxu0 %v230
  %v383 = vpop.f32.mrb[0].mxu0
  %v384 = vadd.f32 0.0, %v383
  %v385 = vpop.f32.mrb[0].mxu0
  %v386 = vpop.f32.mrb[0].mxu0
  %v387 = vadd.f32 0.0, %v386
  %v388 = vpop.f32.mrb[0].mxu0
  %389 = vmatprep.mubr.bf16.mxu0 0
  %390 = vmatmul.mubr.bf16.gmra.mrb[0].mxu0 %v231
  %v391 = vpop.f32.mrb[0].mxu0
  %v392 = vadd.f32 0.0, %v391
  %v393 = vpop.f32.mrb[0].mxu0
  %v394 = vpop.f32.mrb[0].mxu0
  %v395 = vadd.f32 0.0, %v394
  %v396 = vpop.f32.mrb[0].mxu0
  %397 = vmatprep.mubr.bf16.mxu0 0
  %398 = vmatmul.mubr.bf16.gmra.mrb[0].mxu0 %v232
  %v399 = vpop.f32.mrb[0].mxu0
  %v400 = vadd.f32 0.0, %v399
  %v401 = vpop.f32.mrb[0].mxu0
  %v402 = vpop.f32.mrb[0].mxu0
  %v403 = vadd.f32 0.0, %v402
  %v404 = vpop.f32.mrb[0].mxu0
  %405 = vmatprep.mubr.bf16.mxu0 0
  %406 = vmatmul.mubr.bf16.gmra.mrb[0].mxu0 %v233
  %v407 = vpop.f32.mrb[0].mxu0
  %v408 = vadd.f32 0.0, %v407
  %v409 = vpop.f32.mrb[0].mxu0
  %v410 = vpop.f32.mrb[0].mxu0
  %v411 = vadd.f32 0.0, %v410
  %v412 = vpop.f32.mrb[0].mxu0
  %413 = vmatprep.mubr.bf16.mxu0 0
  %414 = vmatmul.mubr.bf16.gmra.mrb[0].mxu0 %v234
  %v415 = vpop.f32.mrb[0].mxu0
  %v416 = vadd.f32 0.0, %v415
  %v417 = vpop.f32.mrb[0].mxu0
  %v418 = vpop.f32.mrb[0].mxu0
  %v419 = vadd.f32 0.0, %v418
  %v420 = vpop.f32.mrb[0].mxu0
  %421 = vmatprep.mubr.bf16.mxu0 0
  %422 = vmatmul.mubr.bf16.gmra.mrb[0].mxu0 %v235
  %v423 = vpop.f32.mrb[0].mxu0
  %v424 = vadd.f32 0.0, %v423
  %v425 = vpop.f32.mrb[0].mxu0
  %v426 = vpop.f32.mrb[0].mxu0
  %v427 = vadd.f32 0.0, %v426
  %v428 = vpop.f32.mrb[0].mxu0
  %429 = vmatprep.mubr.bf16.mxu0 0
  %430 = vmatmul.mubr.bf16.gmra.mrb[0].mxu0 %v236
  %v431 = vpop.f32.mrb[0].mxu0
  %v432 = vadd.f32 0.0, %v431
  %v433 = vpop.f32.mrb[0].mxu0
  %v434 = vpop.f32.mrb[0].mxu0
  %v435 = vadd.f32 0.0, %v434
  %v436 = vpop.f32.mrb[0].mxu0
  %437 = vmatprep.mubr.bf16.mxu0 0
  %438 = vmatmul.mubr.bf16.gmra.mrb[0].mxu0 %v237
  %v439 = vpop.f32.mrb[0].mxu0
  %v440 = vadd.f32 0.0, %v439
  %v441 = vpop.f32.mrb[0].mxu0
  %v442 = vpop.f32.mrb[0].mxu0
  %v443 = vadd.f32 0.0, %v442
  %v444 = vpop.f32.mrb[0].mxu0
  %445 = vmatprep.mubr.bf16.mxu0 0
  %446 = vmatmul.mubr.bf16.gmra.mrb[0].mxu0 %v238
  %v447 = vpop.f32.mrb[0].mxu0
  %v448 = vadd.f32 0.0, %v447
  %v449 = vpop.f32.mrb[0].mxu0
  %v450 = vpop.f32.mrb[0].mxu0
  %v451 = vadd.f32 0.0, %v450
  %v452 = vpop.f32.mrb[0].mxu0
  %453 = vmatprep.mubr.bf16.mxu0 0
  %454 = vmatmul.mubr.bf16.gmra.mrb[0].mxu0 %v239
  %v455 = vpop.f32.mrb[0].mxu0
  %v456 = vadd.f32 0.0, %v455
  %v457 = vpop.f32.mrb[0].mxu0
  %v458 = vpop.f32.mrb[0].mxu0
  %v459 = vadd.f32 0.0, %v458
  %v460 = vpop.f32.mrb[0].mxu0
  %461 = vmatprep.mubr.bf16.mxu0 0
  %462 = vmatmul.mubr.bf16.gmra.mrb[0].mxu0 %v240
  %v463 = vpop.f32.mrb[0].mxu0
  %v464 = vadd.f32 0.0, %v463
  %v465 = vpop.f32.mrb[0].mxu0
  %v466 = vpop.f32.mrb[0].mxu0
  %v467 = vadd.f32 0.0, %v466
  %v468 = vpop.f32.mrb[0].mxu0
  %469 = vmatprep.mubr.bf16.mxu0 0
  %470 = vmatmul.mubr.bf16.gmra.mrb[0].mxu0 %v241
  %v471 = vpop.f32.mrb[0].mxu0
  %v472 = vadd.f32 0.0, %v471
  %v473 = vpop.f32.mrb[0].mxu0
  %v474 = vpop.f32.mrb[0].mxu0
  %v475 = vadd.f32 0.0, %v474
  %v476 = vpop.f32.mrb[0].mxu0
  %477 = vmatprep.mubr.bf16.mxu0 0
  %478 = vmatmul.mubr.bf16.gmra.mrb[0].mxu0 %v242
  %v479 = vpop.f32.mrb[0].mxu0
  %v480 = vadd.f32 0.0, %v479
  %v481 = vpop.f32.mrb[0].mxu0
  %v482 = vpop.f32.mrb[0].mxu0
  %v483 = vadd.f32 0.0, %v482
  %v484 = vpop.f32.mrb[0].mxu0
  %485 = vmatprep.mubr.bf16.mxu0 0
  %486 = vmatmul.mubr.bf16.gmra.mrb[0].mxu0 %v243
  %v487 = vpop.f32.mrb[0].mxu0
  %v488 = vadd.f32 0.0, %v487
  %v489 = vpop.f32.mrb[0].mxu0
  %v490 = vpop.f32.mrb[0].mxu0
  %v491 = vadd.f32 0.0, %v490
  %v492 = vpop.f32.mrb[0].mxu0
  %493 = vmatprep.mubr.bf16.mxu0 0
  %494 = vmatmul.mubr.bf16.gmra.mrb[0].mxu0 %v244
  %v495 = vpop.f32.mrb[0].mxu0
  %v496 = vadd.f32 0.0, %v495
  %v497 = vpop.f32.mrb[0].mxu0
  %v498 = vpop.f32.mrb[0].mxu0
  %v499 = vadd.f32 0.0, %v498
  %v500 = vpop.f32.mrb[0].mxu0
  %501 = vmatprep.mubr.bf16.mxu0 0
  %502 = vmatmul.mubr.bf16.gmra.mrb[0].mxu0 %v245
  %v503 = vpop.f32.mrb[0].mxu0
  %v504 = vadd.f32 0.0, %v503
  %v505 = vpop.f32.mrb[0].mxu0
  %v506 = vpop.f32.mrb[0].mxu0
  %v507 = vadd.f32 0.0, %v506
  %v508 = vpop.f32.mrb[0].mxu0
  %509 = vmatprep.mubr.bf16.mxu0 0
  %510 = vmatmul.mubr.bf16.gmra.mrb[0].mxu0 %v246
  %v511 = vpop.f32.mrb[0].mxu0
  %v512 = vadd.f32 0.0, %v511
  %v513 = vpop.f32.mrb[0].mxu0
  %v514 = vpop.f32.mrb[0].mxu0
  %v515 = vadd.f32 0.0, %v514
  %v516 = vpop.f32.mrb[0].mxu0
  %517 = vmatprep.mubr.bf16.mxu0 0
  %518 = vmatmul.mubr.bf16.gmra.mrb[0].mxu0 %v247
  %v519 = vpop.f32.mrb[0].mxu0
  %v520 = vadd.f32 0.0, %v519
  %v521 = vpop.f32.mrb[0].mxu0
  %v522 = vpop.f32.mrb[0].mxu0
  %v523 = vadd.f32 0.0, %v522
  %v524 = vpop.f32.mrb[0].mxu0
  %525 = vmatprep.mubr.bf16.mxu0 0
  %526 = vmatmul.mubr.bf16.gmra.mrb[0].mxu0 %v248
  %v527 = vpop.f32.mrb[0].mxu0
  %v528 = vadd.f32 0.0, %v527
  %v529 = vpop.f32.mrb[0].mxu0
  %v530 = vpop.f32.mrb[0].mxu0
  %v531 = vadd.f32 0.0, %v530
  %v532 = vpop.f32.mrb[0].mxu0
  %533 = vmatprep.mubr.bf16.mxu0 0
  %534 = vmatmul.mubr.bf16.gmra.mrb[0].mxu0 %v249
  %v535 = vpop.f32.mrb[0].mxu0
  %v536 = vadd.f32 0.0, %v535
  %v537 = vpop.f32.mrb[0].mxu0
  %v538 = vpop.f32.mrb[0].mxu0
  %v539 = vadd.f32 0.0, %v538
  %v540 = vpop.f32.mrb[0].mxu0
  %541 = vmatprep.mubr.bf16.mxu0 0
  %542 = vmatmul.mubr.bf16.gmra.mrb[0].mxu0 %v250
  %v543 = vpop.f32.mrb[0].mxu0
  %v544 = vadd.f32 0.0, %v543
  %v545 = vpop.f32.mrb[0].mxu0
  %v546 = vpop.f32.mrb[0].mxu0
  %v547 = vadd.f32 0.0, %v546
  %v548 = vpop.f32.mrb[0].mxu0
  %549 = vmatprep.mubr.bf16.mxu0 0
  %550 = vmatmul.mubr.bf16.gmra.mrb[0].mxu0 %v251
  %v551 = vpop.f32.mrb[0].mxu0
  %v552 = vadd.f32 0.0, %v551
  %v553 = vpop.f32.mrb[0].mxu0
  %v554 = vpop.f32.mrb[0].mxu0
  %v555 = vadd.f32 0.0, %v554
  %v556 = vpop.f32.mrb[0].mxu0
  %557 = vmatprep.mubr.bf16.mxu0 0
  %558 = vmatmul.mubr.bf16.gmra.mrb[0].mxu0 %v252
  %v559 = vpop.f32.mrb[0].mxu0
  %v560 = vadd.f32 0.0, %v559
  %v561 = vpop.f32.mrb[0].mxu0
  %v562 = vpop.f32.mrb[0].mxu0
  %v563 = vadd.f32 0.0, %v562
  %v564 = vpop.f32.mrb[0].mxu0
  %565 = vmatprep.mubr.bf16.mxu0 0
  %566 = vmatmul.mubr.bf16.gmra.mrb[0].mxu0 %v253
  %v567 = vpop.f32.mrb[0].mxu0
  %v568 = vadd.f32 0.0, %v567
  %v569 = vpop.f32.mrb[0].mxu0
  %v570 = vpop.f32.mrb[0].mxu0
  %v571 = vadd.f32 0.0, %v570
  %v572 = vpop.f32.mrb[0].mxu0
  %573 = vmatprep.mubr.bf16.mxu0 0
  %574 = vmatmul.mubr.bf16.gmra.mrb[0].mxu0 %v254
  %v575 = vpop.f32.mrb[0].mxu0
  %v576 = vadd.f32 0.0, %v575
  %v577 = vpop.f32.mrb[0].mxu0
  %v578 = vpop.f32.mrb[0].mxu0
  %v579 = vadd.f32 0.0, %v578
  %v580 = vpop.f32.mrb[0].mxu0
  %581 = vmatprep.mubr.bf16.mxu0 0
  %582 = vmatmul.mubr.bf16.gmra.mrb[0].mxu0 %v255
  %v583 = vpop.f32.mrb[0].mxu0
  %v584 = vadd.f32 0.0, %v583
  %v585 = vpop.f32.mrb[0].mxu0
  %v586 = vpop.f32.mrb[0].mxu0
  %v587 = vadd.f32 0.0, %v586
  %v588 = vpop.f32.mrb[0].mxu0
  %589 = vmatprep.mubr.bf16.mxu0 0
  %590 = vmatmul.mubr.bf16.gmra.mrb[0].mxu0 %v256
  %v591 = vpop.f32.mrb[0].mxu0
  %v592 = vadd.f32 0.0, %v591
  %v593 = vpop.f32.mrb[0].mxu0
  %v594 = vpop.f32.mrb[0].mxu0
  %v595 = vadd.f32 0.0, %v594
  %v596 = vpop.f32.mrb[0].mxu0
  %597 = vmatprep.mubr.bf16.mxu0 0
  %598 = vmatmul.mubr.bf16.gmra.mrb[0].mxu0 %v257
  %v599 = vpop.f32.mrb[0].mxu0
  %v600 = vadd.f32 0.0, %v599
  %v601 = vpop.f32.mrb[0].mxu0
  %v602 = vpop.f32.mrb[0].mxu0
  %v603 = vadd.f32 0.0, %v602
  %v604 = vpop.f32.mrb[0].mxu0
  %605 = vmatprep.mubr.bf16.mxu0 0
  %606 = vmatmul.mubr.bf16.gmra.mrb[0].mxu0 %v258
  %v607 = vpop.f32.mrb[0].mxu0
  %v608 = vadd.f32 0.0, %v607
  %v609 = vpop.f32.mrb[0].mxu0
  %v610 = vpop.f32.mrb[0].mxu0
  %v611 = vadd.f32 0.0, %v610
  %v612 = vpop.f32.mrb[0].mxu0
  %613 = vmatprep.mubr.bf16.mxu0 0
  %614 = vmatmul.mubr.bf16.gmra.mrb[0].mxu0 %v259
  %v615 = vpop.f32.mrb[0].mxu0
  %v616 = vadd.f32 0.0, %v615
  %v617 = vpop.f32.mrb[0].mxu0
  %v618 = vpop.f32.mrb[0].mxu0
  %v619 = vadd.f32 0.0, %v618
  %v620 = vpop.f32.mrb[0].mxu0
  %621 = vmatprep.mubr.bf16.mxu0 0
  %622 = vmatmul.mubr.bf16.gmra.mrb[0].mxu0 %v260
  %v623 = vpop.f32.mrb[0].mxu0
  %v624 = vadd.f32 0.0, %v623
  %v625 = vpop.f32.mrb[0].mxu0
  %v626 = vpop.f32.mrb[0].mxu0
  %v627 = vadd.f32 0.0, %v626
  %v628 = vpop.f32.mrb[0].mxu0
  %629 = vdwg.mxu0
  %630 = vst [vmem:[%s2] sm:$0xff] %v376
  %631 = vst [vmem:[%s2 + $0x8] sm:$0xff] %v379
  %632 = vst [vmem:[%s2 + $0x10] sm:$0xff] %v384
  %633 = vst [vmem:[%s2 + $0x18] sm:$0xff] %v387
  %634 = vst [vmem:[%s2 + $0x20] sm:$0xff] %v392
  %635 = vst [vmem:[%s2 + $0x28] sm:$0xff] %v395
  %636 = vst [vmem:[%s2 + $0x30] sm:$0xff] %v400
  %637 = vst [vmem:[%s2 + $0x38] sm:$0xff] %v403
  %638 = vst [vmem:[%s2 + $0x40] sm:$0xff] %v408
  %639 = vst [vmem:[%s2 + $0x48] sm:$0xff] %v411
  %640 = vst [vmem:[%s2 + $0x50] sm:$0xff] %v416
  %641 = vst [vmem:[%s2 + $0x58] sm:$0xff] %v419
  %642 = vst [vmem:[%s2 + $0x60] sm:$0xff] %v424
  %643 = vst [vmem:[%s2 + $0x68] sm:$0xff] %v427
  %644 = vst [vmem:[%s2 + $0x70] sm:$0xff] %v432
  %645 = vst [vmem:[%s2 + $0x78] sm:$0xff] %v435
  %646 = vst [vmem:[%s2 + $0x80] sm:$0xff] %v440
  %647 = vst [vmem:[%s2 + $0x88] sm:$0xff] %v443
  %648 = vst [vmem:[%s2 + $0x90] sm:$0xff] %v448
  %649 = vst [vmem:[%s2 + $0x98] sm:$0xff] %v451
  %650 = vst [vmem:[%s2 + $0xa0] sm:$0xff] %v456
  %651 = vst [vmem:[%s2 + $0xa8] sm:$0xff] %v459
  %652 = vst [vmem:[%s2 + $0xb0] sm:$0xff] %v464
  %653 = vst [vmem:[%s2 + $0xb8] sm:$0xff] %v467
  %654 = vst [vmem:[%s2 + $0xc0] sm:$0xff] %v472
  %655 = vst [vmem:[%s2 + $0xc8] sm:$0xff] %v475
  %656 = vst [vmem:[%s2 + $0xd0] sm:$0xff] %v480
  %657 = vst [vmem:[%s2 + $0xd8] sm:$0xff] %v483
  %658 = vst [vmem:[%s2 + $0xe0] sm:$0xff] %v488
  %659 = vst [vmem:[%s2 + $0xe8] sm:$0xff] %v491
  %660 = vst [vmem:[%s2 + $0xf0] sm:$0xff] %v496
  %661 = vst [vmem:[%s2 + $0xf8] sm:$0xff] %v499
  %662 = vst [vmem:[%s2 + $0x100] sm:$0xff] %v504
  %663 = vst [vmem:[%s2 + $0x108] sm:$0xff] %v507
  %664 = vst [vmem:[%s2 + $0x110] sm:$0xff] %v512
  %665 = vst [vmem:[%s2 + $0x118] sm:$0xff] %v515
  %666 = vst [vmem:[%s2 + $0x120] sm:$0xff] %v520
  %667 = vst [vmem:[%s2 + $0x128] sm:$0xff] %v523
  %668 = vst [vmem:[%s2 + $0x130] sm:$0xff] %v528
  %669 = vst [vmem:[%s2 + $0x138] sm:$0xff] %v531
  %670 = vst [vmem:[%s2 + $0x140] sm:$0xff] %v536
  %671 = vst [vmem:[%s2 + $0x148] sm:$0xff] %v539
  %672 = vst [vmem:[%s2 + $0x150] sm:$0xff] %v544
  %673 = vst [vmem:[%s2 + $0x158] sm:$0xff] %v547
  %674 = vst [vmem:[%s2 + $0x160] sm:$0xff] %v552
  %675 = vst [vmem:[%s2 + $0x168] sm:$0xff] %v555
  %676 = vst [vmem:[%s2 + $0x170] sm:$0xff] %v560
  %677 = vst [vmem:[%s2 + $0x178] sm:$0xff] %v563
  %678 = vst [vmem:[%s2 + $0x180] sm:$0xff] %v568
  %679 = vst [vmem:[%s2 + $0x188] sm:$0xff] %v571
  %680 = vst [vmem:[%s2 + $0x190] sm:$0xff] %v576
  %681 = vst [vmem:[%s2 + $0x198] sm:$0xff] %v579
  %682 = vst [vmem:[%s2 + $0x1a0] sm:$0xff] %v584
  %683 = vst [vmem:[%s2 + $0x1a8] sm:$0xff] %v587
  %684 = vst [vmem:[%s2 + $0x1b0] sm:$0xff] %v592
  %685 = vst [vmem:[%s2 + $0x1b8] sm:$0xff] %v595
  %686 = vst [vmem:[%s2 + $0x1c0] sm:$0xff] %v600
  %687 = vst [vmem:[%s2 + $0x1c8] sm:$0xff] %v603
  %688 = vst [vmem:[%s2 + $0x1d0] sm:$0xff] %v608
  %689 = vst [vmem:[%s2 + $0x1d8] sm:$0xff] %v611
  %690 = vst [vmem:[%s2 + $0x1e0] sm:$0xff] %v616
  %691 = vst [vmem:[%s2 + $0x1e8] sm:$0xff] %v619
  %692 = vst [vmem:[%s2 + $0x1f0] sm:$0xff] %v624
  %693 = vst [vmem:[%s2 + $0x1f8] sm:$0xff] %v627
  %v694 = vld [vmem:[%s3] sm:$0x1]
  %v695 = vadd.f32 %v376, %v379
  %v696 = vadd.f32 %v695, %v384
  %v697 = vadd.f32 %v696, %v387
  %v698 = vadd.f32 %v697, %v392
  %v699 = vadd.f32 %v698, %v395
  %v700 = vadd.f32 %v699, %v400
  %v701 = vadd.f32 %v700, %v403
  %v702 = vadd.f32 %v701, %v408
  %v703 = vadd.f32 %v702, %v411
  %v704 = vadd.f32 %v703, %v416
  %v705 = vadd.f32 %v704, %v419
  %v706 = vadd.f32 %v705, %v424
  %v707 = vadd.f32 %v706, %v427
  %v708 = vadd.f32 %v707, %v432
  %v709 = vadd.f32 %v708, %v435
  %v710 = vadd.f32 %v709, %v440
  %v711 = vadd.f32 %v710, %v443
  %v712 = vadd.f32 %v711, %v448
  %v713 = vadd.f32 %v712, %v451
  %v714 = vadd.f32 %v713, %v456
  %v715 = vadd.f32 %v714, %v459
  %v716 = vadd.f32 %v715, %v464
  %v717 = vadd.f32 %v716, %v467
  %v718 = vadd.f32 %v717, %v472
  %v719 = vadd.f32 %v718, %v475
  %v720 = vadd.f32 %v719, %v480
  %v721 = vadd.f32 %v720, %v483
  %v722 = vadd.f32 %v721, %v488
  %v723 = vadd.f32 %v722, %v491
  %v724 = vadd.f32 %v723, %v496
  %v725 = vadd.f32 %v724, %v499
  %v726 = vadd.f32 %v725, %v504
  %v727 = vadd.f32 %v726, %v507
  %v728 = vadd.f32 %v727, %v512
  %v729 = vadd.f32 %v728, %v515
  %v730 = vadd.f32 %v729, %v520
  %v731 = vadd.f32 %v730, %v523
  %v732 = vadd.f32 %v731, %v528
  %v733 = vadd.f32 %v732, %v531
  %v734 = vadd.f32 %v733, %v536
  %v735 = vadd.f32 %v734, %v539
  %v736 = vadd.f32 %v735, %v544
  %v737 = vadd.f32 %v736, %v547
  %v738 = vadd.f32 %v737, %v552
  %v739 = vadd.f32 %v738, %v555
  %v740 = vadd.f32 %v739, %v560
  %v741 = vadd.f32 %v740, %v563
  %v742 = vadd.f32 %v741, %v568
  %v743 = vadd.f32 %v742, %v571
  %v744 = vadd.f32 %v743, %v576
  %v745 = vadd.f32 %v744, %v579
  %v746 = vadd.f32 %v745, %v584
  %v747 = vadd.f32 %v746, %v587
  %v748 = vadd.f32 %v747, %v592
  %v749 = vadd.f32 %v748, %v595
  %v750 = vadd.f32 %v749, %v600
  %v751 = vadd.f32 %v750, %v603
  %v752 = vadd.f32 %v751, %v608
  %v753 = vadd.f32 %v752, %v611
  %v754 = vadd.f32 %v753, %v616
  %v755 = vadd.f32 %v754, %v619
  %v756 = vadd.f32 %v755, %v624
  %v757 = vadd.f32 %v756, %v627
  %v758 = vrot.slane %v757, 4
  %v759 = vadd.f32 %v757, %v758
  %v760 = vrot.slane %v759, 2
  %v761 = vadd.f32 %v759, %v760
  %v762 = vrot.slane %v761, 1
  %v763 = vadd.f32 %v761, %v762
  %v764 = vadd.f32 %v694, %v763
  %765 = vst [vmem:[%s3] sm:$0x1] %v764
  %v766 = vld [vmem:[%s4] sm:$0x1]
  %v767 = vmul.f32 %v376, %v376
  %v768 = vmul.f32 %v379, %v379
  %v769 = vmul.f32 %v384, %v384
  %v770 = vmul.f32 %v387, %v387
  %v771 = vmul.f32 %v392, %v392
  %v772 = vmul.f32 %v395, %v395
  %v773 = vmul.f32 %v400, %v400
  %v774 = vmul.f32 %v403, %v403
  %v775 = vmul.f32 %v408, %v408
  %v776 = vmul.f32 %v411, %v411
  %v777 = vmul.f32 %v416, %v416
  %v778 = vmul.f32 %v419, %v419
  %v779 = vmul.f32 %v424, %v424
  %v780 = vmul.f32 %v427, %v427
  %v781 = vmul.f32 %v432, %v432
  %v782 = vmul.f32 %v435, %v435
  %v783 = vmul.f32 %v440, %v440
  %v784 = vmul.f32 %v443, %v443
  %v785 = vmul.f32 %v448, %v448
  %v786 = vmul.f32 %v451, %v451
  %v787 = vmul.f32 %v456, %v456
  %v788 = vmul.f32 %v459, %v459
  %v789 = vmul.f32 %v464, %v464
  %v790 = vmul.f32 %v467, %v467
  %v791 = vmul.f32 %v472, %v472
  %v792 = vmul.f32 %v475, %v475
  %v793 = vmul.f32 %v480, %v480
  %v794 = vmul.f32 %v483, %v483
  %v795 = vmul.f32 %v488, %v488
  %v796 = vmul.f32 %v491, %v491
  %v797 = vmul.f32 %v496, %v496
  %v798 = vmul.f32 %v499, %v499
  %v799 = vmul.f32 %v504, %v504
  %v800 = vmul.f32 %v507, %v507
  %v801 = vmul.f32 %v512, %v512
  %v802 = vmul.f32 %v515, %v515
  %v803 = vmul.f32 %v520, %v520
  %v804 = vmul.f32 %v523, %v523
  %v805 = vmul.f32 %v528, %v528
  %v806 = vmul.f32 %v531, %v531
  %v807 = vmul.f32 %v536, %v536
  %v808 = vmul.f32 %v539, %v539
  %v809 = vmul.f32 %v544, %v544
  %v810 = vmul.f32 %v547, %v547
  %v811 = vmul.f32 %v552, %v552
  %v812 = vmul.f32 %v555, %v555
  %v813 = vmul.f32 %v560, %v560
  %v814 = vmul.f32 %v563, %v563
  %v815 = vmul.f32 %v568, %v568
  %v816 = vmul.f32 %v571, %v571
  %v817 = vmul.f32 %v576, %v576
  %v818 = vmul.f32 %v579, %v579
  %v819 = vmul.f32 %v584, %v584
  %v820 = vmul.f32 %v587, %v587
  %v821 = vmul.f32 %v592, %v592
  %v822 = vmul.f32 %v595, %v595
  %v823 = vmul.f32 %v600, %v600
  %v824 = vmul.f32 %v603, %v603
  %v825 = vmul.f32 %v608, %v608
  %v826 = vmul.f32 %v611, %v611
  %v827 = vmul.f32 %v616, %v616
  %v828 = vmul.f32 %v619, %v619
  %v829 = vmul.f32 %v624, %v624
  %v830 = vmul.f32 %v627, %v627
  %v831 = vadd.f32 %v767, %v768
  %v832 = vadd.f32 %v831, %v769
  %v833 = vadd.f32 %v832, %v770
  %v834 = vadd.f32 %v833, %v771
  %v835 = vadd.f32 %v834, %v772
  %v836 = vadd.f32 %v835, %v773
  %v837 = vadd.f32 %v836, %v774
  %v838 = vadd.f32 %v837, %v775
  %v839 = vadd.f32 %v838, %v776
  %v840 = vadd.f32 %v839, %v777
  %v841 = vadd.f32 %v840, %v778
  %v842 = vadd.f32 %v841, %v779
  %v843 = vadd.f32 %v842, %v780
  %v844 = vadd.f32 %v843, %v781
  %v845 = vadd.f32 %v844, %v782
  %v846 = vadd.f32 %v845, %v783
  %v847 = vadd.f32 %v846, %v784
  %v848 = vadd.f32 %v847, %v785
  %v849 = vadd.f32 %v848, %v786
  %v850 = vadd.f32 %v849, %v787
  %v851 = vadd.f32 %v850, %v788
  %v852 = vadd.f32 %v851, %v789
  %v853 = vadd.f32 %v852, %v790
  %v854 = vadd.f32 %v853, %v791
  %v855 = vadd.f32 %v854, %v792
  %v856 = vadd.f32 %v855, %v793
  %v857 = vadd.f32 %v856, %v794
  %v858 = vadd.f32 %v857, %v795
  %v859 = vadd.f32 %v858, %v796
  %v860 = vadd.f32 %v859, %v797
  %v861 = vadd.f32 %v860, %v798
  %v862 = vadd.f32 %v861, %v799
  %v863 = vadd.f32 %v862, %v800
  %v864 = vadd.f32 %v863, %v801
  %v865 = vadd.f32 %v864, %v802
  %v866 = vadd.f32 %v865, %v803
  %v867 = vadd.f32 %v866, %v804
  %v868 = vadd.f32 %v867, %v805
  %v869 = vadd.f32 %v868, %v806
  %v870 = vadd.f32 %v869, %v807
  %v871 = vadd.f32 %v870, %v808
  %v872 = vadd.f32 %v871, %v809
  %v873 = vadd.f32 %v872, %v810
  %v874 = vadd.f32 %v873, %v811
  %v875 = vadd.f32 %v874, %v812
  %v876 = vadd.f32 %v875, %v813
  %v877 = vadd.f32 %v876, %v814
  %v878 = vadd.f32 %v877, %v815
  %v879 = vadd.f32 %v878, %v816
  %v880 = vadd.f32 %v879, %v817
  %v881 = vadd.f32 %v880, %v818
  %v882 = vadd.f32 %v881, %v819
  %v883 = vadd.f32 %v882, %v820
  %v884 = vadd.f32 %v883, %v821
  %v885 = vadd.f32 %v884, %v822
  %v886 = vadd.f32 %v885, %v823
  %v887 = vadd.f32 %v886, %v824
  %v888 = vadd.f32 %v887, %v825
  %v889 = vadd.f32 %v888, %v826
  %v890 = vadd.f32 %v889, %v827
  %v891 = vadd.f32 %v890, %v828
  %v892 = vadd.f32 %v891, %v829
  %v893 = vadd.f32 %v892, %v830
  %v894 = vrot.slane %v893, 4
  %v895 = vadd.f32 %v893, %v894
  %v896 = vrot.slane %v895, 2
  %v897 = vadd.f32 %v895, %v896
  %v898 = vrot.slane %v897, 1
  %v899 = vadd.f32 %v897, %v898
  %v900 = vadd.f32 %v766, %v899
  %901 = vst [vmem:[%s4] sm:$0x1] %v900
  // Predicated region
  $region14: #{img_discriminator_forward.13} parent=0 // pred_check
    _
  $region15: #{img_discriminator_forward.13} parent=0 // pred_check_branch
    %903 = sbr.rel (0) target = $region17
  $region16: #{img_discriminator_forward.13} parent=0 // pred_region
    _
  $region17: #{img_discriminator_forward.13} parent=0 // pred_fallthru
    _
  // Predicated region
  $region18: #{img_discriminator_forward.13} parent=0 // pred_check
    _
  $region19: #{img_discriminator_forward.13} parent=0 // pred_check_branch
    %905 = sbr.rel (0) target = $region21
  $region20: #{img_discriminator_forward.13} parent=0 // pred_region
    _
  $region21: #{img_discriminator_forward.13} parent=0 // pred_fallthru
    _
  // Predicated region
  $region22: #{img_discriminator_forward.13} parent=0 // pred_check
    _
  $region23: #{img_discriminator_forward.13} parent=0 // pred_check_branch
    %907 = sbr.rel (0) target = $region25
  $region24: #{img_discriminator_forward.13} parent=0 // pred_region
    _
  $region25: #{img_discriminator_forward.13} parent=0 // pred_fallthru
    _
  // Predicated region
  $region26: #{img_discriminator_forward.13} parent=0 // pred_check
    _
  $region27: #{img_discriminator_forward.13} parent=0 // pred_check_branch
    %909 = sbr.rel (0) target = $region29
  $region28: #{img_discriminator_forward.13} parent=0 // pred_region
    _
  $region29: #{img_discriminator_forward.13} parent=0 // pred_fallthru
    _
  // Predicated region
  $region30: #{img_discriminator_forward.13} parent=0 // pred_check
    _
  $region31: #{img_discriminator_forward.13} parent=0 // pred_check_branch
    %911 = sbr.rel (0) target = $region33
  $region32: #{img_discriminator_forward.13} parent=0 // pred_region
    _
  $region33: #{img_discriminator_forward.13} parent=0 // pred_fallthru
    _
  // Predicated region
  $region34: #{img_discriminator_forward.13} parent=0 // pred_check
    _
  $region35: #{img_discriminator_forward.13} parent=0 // pred_check_branch
    %913 = sbr.rel (0) target = $region37
  $region36: #{img_discriminator_forward.13} parent=0 // pred_region
    _
  $region37: #{img_discriminator_forward.13} parent=0 // pred_fallthru
    _

// kernel: img_discriminator_forward.14
$region0: #{img_discriminator_forward.14}
  #allocation0 [shape = 'u32[]', space=smem, size = 0x4, offset = 0x4, fixed_abs, tag = 'smem constant byte address 0x4 - core index']
  #allocation1 [shape = 'u32[144,128]{1,0:T(1,128)}', space=vmem, size = 0x12000, scoped, tag = 'internal scratch']
  %s0 = inlined_call_operand.vmem [shape: f32[512,128], index: 0, kind: input, shape index: {}]
  %s1 = inlined_call_operand.vmem [shape: f32[1,128], index: 1, kind: input, shape index: {}]
  %s2 = inlined_call_operand.vmem [shape: f32[1,128], index: 2, kind: input, shape index: {}]
  %s3 = inlined_call_operand.vmem [shape: bf16[512,128], index: 3, kind: output, shape index: {}]
  %s4 = sld [smem:[#allocation0]]
  $region22: #{img_discriminator_forward.14} parent=0
    _
  %s6 = ssub.s32 1, %s4
  %s7 = scalar_select 0, %s6, %s4
  // Predicated region
  $region2: #{img_discriminator_forward.14} parent=0 // pred_check
    _
  $region3: #{img_discriminator_forward.14} parent=0 // pred_check_branch
    %9 = sbr.rel (0) target = $region5
  $region4: #{img_discriminator_forward.14} parent=0 // pred_region
    _
  $region5: #{img_discriminator_forward.14} parent=0 // pred_fallthru
    _
  // Predicated region
  $region6: #{img_discriminator_forward.14} parent=0 // pred_check
    _
  $region7: #{img_discriminator_forward.14} parent=0 // pred_check_branch
    %11 = sbr.rel (0) target = $region9
  $region8: #{img_discriminator_forward.14} parent=0 // pred_region
    _
  $region9: #{img_discriminator_forward.14} parent=0 // pred_fallthru
    _
  // Predicated region
  $region10: #{img_discriminator_forward.14} parent=0 // pred_check
    _
  $region11: #{img_discriminator_forward.14} parent=0 // pred_check_branch
    %13 = sbr.rel (0) target = $region13
  $region12: #{img_discriminator_forward.14} parent=0 // pred_region
    _
  $region13: #{img_discriminator_forward.14} parent=0 // pred_fallthru
    _
  %v14 = vld [vmem:[%s0] sm:$0xff]
  %v15 = vld [vmem:[%s0 + $0x8] sm:$0xff]
  %v16 = vld [vmem:[%s0 + $0x10] sm:$0xff]
  %v17 = vld [vmem:[%s0 + $0x18] sm:$0xff]
  %v18 = vld [vmem:[%s0 + $0x20] sm:$0xff]
  %v19 = vld [vmem:[%s0 + $0x28] sm:$0xff]
  %v20 = vld [vmem:[%s0 + $0x30] sm:$0xff]
  %v21 = vld [vmem:[%s0 + $0x38] sm:$0xff]
  %v22 = vld [vmem:[%s0 + $0x40] sm:$0xff]
  %v23 = vld [vmem:[%s0 + $0x48] sm:$0xff]
  %v24 = vld [vmem:[%s0 + $0x50] sm:$0xff]
  %v25 = vld [vmem:[%s0 + $0x58] sm:$0xff]
  %v26 = vld [vmem:[%s0 + $0x60] sm:$0xff]
  %v27 = vld [vmem:[%s0 + $0x68] sm:$0xff]
  %v28 = vld [vmem:[%s0 + $0x70] sm:$0xff]
  %v29 = vld [vmem:[%s0 + $0x78] sm:$0xff]
  %v30 = vld [vmem:[%s0 + $0x80] sm:$0xff]
  %v31 = vld [vmem:[%s0 + $0x88] sm:$0xff]
  %v32 = vld [vmem:[%s0 + $0x90] sm:$0xff]
  %v33 = vld [vmem:[%s0 + $0x98] sm:$0xff]
  %v34 = vld [vmem:[%s0 + $0xa0] sm:$0xff]
  %v35 = vld [vmem:[%s0 + $0xa8] sm:$0xff]
  %v36 = vld [vmem:[%s0 + $0xb0] sm:$0xff]
  %v37 = vld [vmem:[%s0 + $0xb8] sm:$0xff]
  %v38 = vld [vmem:[%s0 + $0xc0] sm:$0xff]
  %v39 = vld [vmem:[%s0 + $0xc8] sm:$0xff]
  %v40 = vld [vmem:[%s0 + $0xd0] sm:$0xff]
  %v41 = vld [vmem:[%s0 + $0xd8] sm:$0xff]
  %v42 = vld [vmem:[%s0 + $0xe0] sm:$0xff]
  %v43 = vld [vmem:[%s0 + $0xe8] sm:$0xff]
  %v44 = vld [vmem:[%s0 + $0xf0] sm:$0xff]
  %v45 = vld [vmem:[%s0 + $0xf8] sm:$0xff]
  %v46 = vld [vmem:[%s0 + $0x100] sm:$0xff]
  %v47 = vld [vmem:[%s0 + $0x108] sm:$0xff]
  %v48 = vld [vmem:[%s0 + $0x110] sm:$0xff]
  %v49 = vld [vmem:[%s0 + $0x118] sm:$0xff]
  %v50 = vld [vmem:[%s0 + $0x120] sm:$0xff]
  %v51 = vld [vmem:[%s0 + $0x128] sm:$0xff]
  %v52 = vld [vmem:[%s0 + $0x130] sm:$0xff]
  %v53 = vld [vmem:[%s0 + $0x138] sm:$0xff]
  %v54 = vld [vmem:[%s0 + $0x140] sm:$0xff]
  %v55 = vld [vmem:[%s0 + $0x148] sm:$0xff]
  %v56 = vld [vmem:[%s0 + $0x150] sm:$0xff]
  %v57 = vld [vmem:[%s0 + $0x158] sm:$0xff]
  %v58 = vld [vmem:[%s0 + $0x160] sm:$0xff]
  %v59 = vld [vmem:[%s0 + $0x168] sm:$0xff]
  %v60 = vld [vmem:[%s0 + $0x170] sm:$0xff]
  %v61 = vld [vmem:[%s0 + $0x178] sm:$0xff]
  %v62 = vld [vmem:[%s0 + $0x180] sm:$0xff]
  %v63 = vld [vmem:[%s0 + $0x188] sm:$0xff]
  %v64 = vld [vmem:[%s0 + $0x190] sm:$0xff]
  %v65 = vld [vmem:[%s0 + $0x198] sm:$0xff]
  %v66 = vld [vmem:[%s0 + $0x1a0] sm:$0xff]
  %v67 = vld [vmem:[%s0 + $0x1a8] sm:$0xff]
  %v68 = vld [vmem:[%s0 + $0x1b0] sm:$0xff]
  %v69 = vld [vmem:[%s0 + $0x1b8] sm:$0xff]
  %v70 = vld [vmem:[%s0 + $0x1c0] sm:$0xff]
  %v71 = vld [vmem:[%s0 + $0x1c8] sm:$0xff]
  %v72 = vld [vmem:[%s0 + $0x1d0] sm:$0xff]
  %v73 = vld [vmem:[%s0 + $0x1d8] sm:$0xff]
  %v74 = vld [vmem:[%s0 + $0x1e0] sm:$0xff]
  %v75 = vld [vmem:[%s0 + $0x1e8] sm:$0xff]
  %v76 = vld [vmem:[%s0 + $0x1f0] sm:$0xff]
  %v77 = vld [vmem:[%s0 + $0x1f8] sm:$0xff]
  %v78 = vld [vmem:[%s1] sm:$0x1]
  %v80 = vlaneseq
  %v81 = vshrl.u32 %v80, 7
  %v82 = vsub.s32 0, %v81
  %v83 = vrot.slane %v78, %v82
  %v85 = vmul.f32 %v14, %v83
  %v86 = vmul.f32 %v15, %v83
  %v87 = vmul.f32 %v16, %v83
  %v88 = vmul.f32 %v17, %v83
  %v89 = vmul.f32 %v18, %v83
  %v90 = vmul.f32 %v19, %v83
  %v91 = vmul.f32 %v20, %v83
  %v92 = vmul.f32 %v21, %v83
  %v93 = vmul.f32 %v22, %v83
  %v94 = vmul.f32 %v23, %v83
  %v95 = vmul.f32 %v24, %v83
  %v96 = vmul.f32 %v25, %v83
  %v97 = vmul.f32 %v26, %v83
  %v98 = vmul.f32 %v27, %v83
  %v99 = vmul.f32 %v28, %v83
  %v100 = vmul.f32 %v29, %v83
  %v101 = vmul.f32 %v30, %v83
  %v102 = vmul.f32 %v31, %v83
  %v103 = vmul.f32 %v32, %v83
  %v104 = vmul.f32 %v33, %v83
  %v105 = vmul.f32 %v34, %v83
  %v106 = vmul.f32 %v35, %v83
  %v107 = vmul.f32 %v36, %v83
  %v108 = vmul.f32 %v37, %v83
  %v109 = vmul.f32 %v38, %v83
  %v110 = vmul.f32 %v39, %v83
  %v111 = vmul.f32 %v40, %v83
  %v112 = vmul.f32 %v41, %v83
  %v113 = vmul.f32 %v42, %v83
  %v114 = vmul.f32 %v43, %v83
  %v115 = vmul.f32 %v44, %v83
  %v116 = vmul.f32 %v45, %v83
  %v117 = vmul.f32 %v46, %v83
  %v118 = vmul.f32 %v47, %v83
  %v119 = vmul.f32 %v48, %v83
  %v120 = vmul.f32 %v49, %v83
  %v121 = vmul.f32 %v50, %v83
  %v122 = vmul.f32 %v51, %v83
  %v123 = vmul.f32 %v52, %v83
  %v124 = vmul.f32 %v53, %v83
  %v125 = vmul.f32 %v54, %v83
  %v126 = vmul.f32 %v55, %v83
  %v127 = vmul.f32 %v56, %v83
  %v128 = vmul.f32 %v57, %v83
  %v129 = vmul.f32 %v58, %v83
  %v130 = vmul.f32 %v59, %v83
  %v131 = vmul.f32 %v60, %v83
  %v132 = vmul.f32 %v61, %v83
  %v133 = vmul.f32 %v62, %v83
  %v134 = vmul.f32 %v63, %v83
  %v135 = vmul.f32 %v64, %v83
  %v136 = vmul.f32 %v65, %v83
  %v137 = vmul.f32 %v66, %v83
  %v138 = vmul.f32 %v67, %v83
  %v139 = vmul.f32 %v68, %v83
  %v140 = vmul.f32 %v69, %v83
  %v141 = vmul.f32 %v70, %v83
  %v142 = vmul.f32 %v71, %v83
  %v143 = vmul.f32 %v72, %v83
  %v144 = vmul.f32 %v73, %v83
  %v145 = vmul.f32 %v74, %v83
  %v146 = vmul.f32 %v75, %v83
  %v147 = vmul.f32 %v76, %v83
  %v148 = vmul.f32 %v77, %v83
  %v149 = vld [vmem:[%s2] sm:$0x1]
  %v151 = vlaneseq
  %v152 = vshrl.u32 %v151, 7
  %v153 = vsub.s32 0, %v152
  %v154 = vrot.slane %v149, %v153
  %v156 = vadd.f32 %v85, %v154
  %v157 = vadd.f32 %v86, %v154
  %v158 = vadd.f32 %v87, %v154
  %v159 = vadd.f32 %v88, %v154
  %v160 = vadd.f32 %v89, %v154
  %v161 = vadd.f32 %v90, %v154
  %v162 = vadd.f32 %v91, %v154
  %v163 = vadd.f32 %v92, %v154
  %v164 = vadd.f32 %v93, %v154
  %v165 = vadd.f32 %v94, %v154
  %v166 = vadd.f32 %v95, %v154
  %v167 = vadd.f32 %v96, %v154
  %v168 = vadd.f32 %v97, %v154
  %v169 = vadd.f32 %v98, %v154
  %v170 = vadd.f32 %v99, %v154
  %v171 = vadd.f32 %v100, %v154
  %v172 = vadd.f32 %v101, %v154
  %v173 = vadd.f32 %v102, %v154
  %v174 = vadd.f32 %v103, %v154
  %v175 = vadd.f32 %v104, %v154
  %v176 = vadd.f32 %v105, %v154
  %v177 = vadd.f32 %v106, %v154
  %v178 = vadd.f32 %v107, %v154
  %v179 = vadd.f32 %v108, %v154
  %v180 = vadd.f32 %v109, %v154
  %v181 = vadd.f32 %v110, %v154
  %v182 = vadd.f32 %v111, %v154
  %v183 = vadd.f32 %v112, %v154
  %v184 = vadd.f32 %v113, %v154
  %v185 = vadd.f32 %v114, %v154
  %v186 = vadd.f32 %v115, %v154
  %v187 = vadd.f32 %v116, %v154
  %v188 = vadd.f32 %v117, %v154
  %v189 = vadd.f32 %v118, %v154
  %v190 = vadd.f32 %v119, %v154
  %v191 = vadd.f32 %v120, %v154
  %v192 = vadd.f32 %v121, %v154
  %v193 = vadd.f32 %v122, %v154
  %v194 = vadd.f32 %v123, %v154
  %v195 = vadd.f32 %v124, %v154
  %v196 = vadd.f32 %v125, %v154
  %v197 = vadd.f32 %v126, %v154
  %v198 = vadd.f32 %v127, %v154
  %v199 = vadd.f32 %v128, %v154
  %v200 = vadd.f32 %v129, %v154
  %v201 = vadd.f32 %v130, %v154
  %v202 = vadd.f32 %v131, %v154
  %v203 = vadd.f32 %v132, %v154
  %v204 = vadd.f32 %v133, %v154
  %v205 = vadd.f32 %v134, %v154
  %v206 = vadd.f32 %v135, %v154
  %v207 = vadd.f32 %v136, %v154
  %v208 = vadd.f32 %v137, %v154
  %v209 = vadd.f32 %v138, %v154
  %v210 = vadd.f32 %v139, %v154
  %v211 = vadd.f32 %v140, %v154
  %v212 = vadd.f32 %v141, %v154
  %v213 = vadd.f32 %v142, %v154
  %v214 = vadd.f32 %v143, %v154
  %v215 = vadd.f32 %v144, %v154
  %v216 = vadd.f32 %v145, %v154
  %v217 = vadd.f32 %v146, %v154
  %v218 = vadd.f32 %v147, %v154
  %v219 = vadd.f32 %v148, %v154
  %vm220 = vcmp.ge.f32.partialorder %v156, 0.0
  %vm221 = vcmp.ge.f32.partialorder %v157, 0.0
  %vm222 = vcmp.ge.f32.partialorder %v158, 0.0
  %vm223 = vcmp.ge.f32.partialorder %v159, 0.0
  %vm224 = vcmp.ge.f32.partialorder %v160, 0.0
  %vm225 = vcmp.ge.f32.partialorder %v161, 0.0
  %vm226 = vcmp.ge.f32.partialorder %v162, 0.0
  %vm227 = vcmp.ge.f32.partialorder %v163, 0.0
  %vm228 = vcmp.ge.f32.partialorder %v164, 0.0
  %vm229 = vcmp.ge.f32.partialorder %v165, 0.0
  %vm230 = vcmp.ge.f32.partialorder %v166, 0.0
  %vm231 = vcmp.ge.f32.partialorder %v167, 0.0
  %vm232 = vcmp.ge.f32.partialorder %v168, 0.0
  %vm233 = vcmp.ge.f32.partialorder %v169, 0.0
  %vm234 = vcmp.ge.f32.partialorder %v170, 0.0
  %vm235 = vcmp.ge.f32.partialorder %v171, 0.0
  %vm236 = vcmp.ge.f32.partialorder %v172, 0.0
  %vm237 = vcmp.ge.f32.partialorder %v173, 0.0
  %vm238 = vcmp.ge.f32.partialorder %v174, 0.0
  %vm239 = vcmp.ge.f32.partialorder %v175, 0.0
  %vm240 = vcmp.ge.f32.partialorder %v176, 0.0
  %vm241 = vcmp.ge.f32.partialorder %v177, 0.0
  %vm242 = vcmp.ge.f32.partialorder %v178, 0.0
  %vm243 = vcmp.ge.f32.partialorder %v179, 0.0
  %vm244 = vcmp.ge.f32.partialorder %v180, 0.0
  %vm245 = vcmp.ge.f32.partialorder %v181, 0.0
  %vm246 = vcmp.ge.f32.partialorder %v182, 0.0
  %vm247 = vcmp.ge.f32.partialorder %v183, 0.0
  %vm248 = vcmp.ge.f32.partialorder %v184, 0.0
  %vm249 = vcmp.ge.f32.partialorder %v185, 0.0
  %vm250 = vcmp.ge.f32.partialorder %v186, 0.0
  %vm251 = vcmp.ge.f32.partialorder %v187, 0.0
  %vm252 = vcmp.ge.f32.partialorder %v188, 0.0
  %vm253 = vcmp.ge.f32.partialorder %v189, 0.0
  %vm254 = vcmp.ge.f32.partialorder %v190, 0.0
  %vm255 = vcmp.ge.f32.partialorder %v191, 0.0
  %vm256 = vcmp.ge.f32.partialorder %v192, 0.0
  %vm257 = vcmp.ge.f32.partialorder %v193, 0.0
  %vm258 = vcmp.ge.f32.partialorder %v194, 0.0
  %vm259 = vcmp.ge.f32.partialorder %v195, 0.0
  %vm260 = vcmp.ge.f32.partialorder %v196, 0.0
  %vm261 = vcmp.ge.f32.partialorder %v197, 0.0
  %vm262 = vcmp.ge.f32.partialorder %v198, 0.0
  %vm263 = vcmp.ge.f32.partialorder %v199, 0.0
  %vm264 = vcmp.ge.f32.partialorder %v200, 0.0
  %vm265 = vcmp.ge.f32.partialorder %v201, 0.0
  %vm266 = vcmp.ge.f32.partialorder %v202, 0.0
  %vm267 = vcmp.ge.f32.partialorder %v203, 0.0
  %vm268 = vcmp.ge.f32.partialorder %v204, 0.0
  %vm269 = vcmp.ge.f32.partialorder %v205, 0.0
  %vm270 = vcmp.ge.f32.partialorder %v206, 0.0
  %vm271 = vcmp.ge.f32.partialorder %v207, 0.0
  %vm272 = vcmp.ge.f32.partialorder %v208, 0.0
  %vm273 = vcmp.ge.f32.partialorder %v209, 0.0
  %vm274 = vcmp.ge.f32.partialorder %v210, 0.0
  %vm275 = vcmp.ge.f32.partialorder %v211, 0.0
  %vm276 = vcmp.ge.f32.partialorder %v212, 0.0
  %vm277 = vcmp.ge.f32.partialorder %v213, 0.0
  %vm278 = vcmp.ge.f32.partialorder %v214, 0.0
  %vm279 = vcmp.ge.f32.partialorder %v215, 0.0
  %vm280 = vcmp.ge.f32.partialorder %v216, 0.0
  %vm281 = vcmp.ge.f32.partialorder %v217, 0.0
  %vm282 = vcmp.ge.f32.partialorder %v218, 0.0
  %vm283 = vcmp.ge.f32.partialorder %v219, 0.0
  %v284 = vmul.f32 %v156, 0.2
  %v285 = vmul.f32 %v157, 0.2
  %v286 = vmul.f32 %v158, 0.2
  %v287 = vmul.f32 %v159, 0.2
  %v288 = vmul.f32 %v160, 0.2
  %v289 = vmul.f32 %v161, 0.2
  %v290 = vmul.f32 %v162, 0.2
  %v291 = vmul.f32 %v163, 0.2
  %v292 = vmul.f32 %v164, 0.2
  %v293 = vmul.f32 %v165, 0.2
  %v294 = vmul.f32 %v166, 0.2
  %v295 = vmul.f32 %v167, 0.2
  %v296 = vmul.f32 %v168, 0.2
  %v297 = vmul.f32 %v169, 0.2
  %v298 = vmul.f32 %v170, 0.2
  %v299 = vmul.f32 %v171, 0.2
  %v300 = vmul.f32 %v172, 0.2
  %v301 = vmul.f32 %v173, 0.2
  %v302 = vmul.f32 %v174, 0.2
  %v303 = vmul.f32 %v175, 0.2
  %v304 = vmul.f32 %v176, 0.2
  %v305 = vmul.f32 %v177, 0.2
  %v306 = vmul.f32 %v178, 0.2
  %v307 = vmul.f32 %v179, 0.2
  %v308 = vmul.f32 %v180, 0.2
  %v309 = vmul.f32 %v181, 0.2
  %v310 = vmul.f32 %v182, 0.2
  %v311 = vmul.f32 %v183, 0.2
  %v312 = vmul.f32 %v184, 0.2
  %v313 = vmul.f32 %v185, 0.2
  %v314 = vmul.f32 %v186, 0.2
  %v315 = vmul.f32 %v187, 0.2
  %v316 = vmul.f32 %v188, 0.2
  %v317 = vmul.f32 %v189, 0.2
  %v318 = vmul.f32 %v190, 0.2
  %v319 = vmul.f32 %v191, 0.2
  %v320 = vmul.f32 %v192, 0.2
  %v321 = vmul.f32 %v193, 0.2
  %v322 = vmul.f32 %v194, 0.2
  %v323 = vmul.f32 %v195, 0.2
  %v324 = vmul.f32 %v196, 0.2
  %v325 = vmul.f32 %v197, 0.2
  %v326 = vmul.f32 %v198, 0.2
  %v327 = vmul.f32 %v199, 0.2
  %v328 = vmul.f32 %v200, 0.2
  %v329 = vmul.f32 %v201, 0.2
  %v330 = vmul.f32 %v202, 0.2
  %v331 = vmul.f32 %v203, 0.2
  %v332 = vmul.f32 %v204, 0.2
  %v333 = vmul.f32 %v205, 0.2
  %v334 = vmul.f32 %v206, 0.2
  %v335 = vmul.f32 %v207, 0.2
  %v336 = vmul.f32 %v208, 0.2
  %v337 = vmul.f32 %v209, 0.2
  %v338 = vmul.f32 %v210, 0.2
  %v339 = vmul.f32 %v211, 0.2
  %v340 = vmul.f32 %v212, 0.2
  %v341 = vmul.f32 %v213, 0.2
  %v342 = vmul.f32 %v214, 0.2
  %v343 = vmul.f32 %v215, 0.2
  %v344 = vmul.f32 %v216, 0.2
  %v345 = vmul.f32 %v217, 0.2
  %v346 = vmul.f32 %v218, 0.2
  %v347 = vmul.f32 %v219, 0.2
  %v348 = vsel %vm220, %v156, %v284
  %v349 = vsel %vm221, %v157, %v285
  %v350 = vsel %vm222, %v158, %v286
  %v351 = vsel %vm223, %v159, %v287
  %v352 = vsel %vm224, %v160, %v288
  %v353 = vsel %vm225, %v161, %v289
  %v354 = vsel %vm226, %v162, %v290
  %v355 = vsel %vm227, %v163, %v291
  %v356 = vsel %vm228, %v164, %v292
  %v357 = vsel %vm229, %v165, %v293
  %v358 = vsel %vm230, %v166, %v294
  %v359 = vsel %vm231, %v167, %v295
  %v360 = vsel %vm232, %v168, %v296
  %v361 = vsel %vm233, %v169, %v297
  %v362 = vsel %vm234, %v170, %v298
  %v363 = vsel %vm235, %v171, %v299
  %v364 = vsel %vm236, %v172, %v300
  %v365 = vsel %vm237, %v173, %v301
  %v366 = vsel %vm238, %v174, %v302
  %v367 = vsel %vm239, %v175, %v303
  %v368 = vsel %vm240, %v176, %v304
  %v369 = vsel %vm241, %v177, %v305
  %v370 = vsel %vm242, %v178, %v306
  %v371 = vsel %vm243, %v179, %v307
  %v372 = vsel %vm244, %v180, %v308
  %v373 = vsel %vm245, %v181, %v309
  %v374 = vsel %vm246, %v182, %v310
  %v375 = vsel %vm247, %v183, %v311
  %v376 = vsel %vm248, %v184, %v312
  %v377 = vsel %vm249, %v185, %v313
  %v378 = vsel %vm250, %v186, %v314
  %v379 = vsel %vm251, %v187, %v315
  %v380 = vsel %vm252, %v188, %v316
  %v381 = vsel %vm253, %v189, %v317
  %v382 = vsel %vm254, %v190, %v318
  %v383 = vsel %vm255, %v191, %v319
  %v384 = vsel %vm256, %v192, %v320
  %v385 = vsel %vm257, %v193, %v321
  %v386 = vsel %vm258, %v194, %v322
  %v387 = vsel %vm259, %v195, %v323
  %v388 = vsel %vm260, %v196, %v324
  %v389 = vsel %vm261, %v197, %v325
  %v390 = vsel %vm262, %v198, %v326
  %v391 = vsel %vm263, %v199, %v327
  %v392 = vsel %vm264, %v200, %v328
  %v393 = vsel %vm265, %v201, %v329
  %v394 = vsel %vm266, %v202, %v330
  %v395 = vsel %vm267, %v203, %v331
  %v396 = vsel %vm268, %v204, %v332
  %v397 = vsel %vm269, %v205, %v333
  %v398 = vsel %vm270, %v206, %v334
  %v399 = vsel %vm271, %v207, %v335
  %v400 = vsel %vm272, %v208, %v336
  %v401 = vsel %vm273, %v209, %v337
  %v402 = vsel %vm274, %v210, %v338
  %v403 = vsel %vm275, %v211, %v339
  %v404 = vsel %vm276, %v212, %v340
  %v405 = vsel %vm277, %v213, %v341
  %v406 = vsel %vm278, %v214, %v342
  %v407 = vsel %vm279, %v215, %v343
  %v408 = vsel %vm280, %v216, %v344
  %v409 = vsel %vm281, %v217, %v345
  %v410 = vsel %vm282, %v218, %v346
  %v411 = vsel %vm283, %v219, %v347
  %v412 = vpack.c.bf16 %v349, %v348
  %v413 = vpack.c.bf16 %v351, %v350
  %v414 = vpack.c.bf16 %v353, %v352
  %v415 = vpack.c.bf16 %v355, %v354
  %v416 = vpack.c.bf16 %v357, %v356
  %v417 = vpack.c.bf16 %v359, %v358
  %v418 = vpack.c.bf16 %v361, %v360
  %v419 = vpack.c.bf16 %v363, %v362
  %v420 = vpack.c.bf16 %v365, %v364
  %v421 = vpack.c.bf16 %v367, %v366
  %v422 = vpack.c.bf16 %v369, %v368
  %v423 = vpack.c.bf16 %v371, %v370
  %v424 = vpack.c.bf16 %v373, %v372
  %v425 = vpack.c.bf16 %v375, %v374
  %v426 = vpack.c.bf16 %v377, %v376
  %v427 = vpack.c.bf16 %v379, %v378
  %v428 = vpack.c.bf16 %v381, %v380
  %v429 = vpack.c.bf16 %v383, %v382
  %v430 = vpack.c.bf16 %v385, %v384
  %v431 = vpack.c.bf16 %v387, %v386
  %v432 = vpack.c.bf16 %v389, %v388
  %v433 = vpack.c.bf16 %v391, %v390
  %v434 = vpack.c.bf16 %v393, %v392
  %v435 = vpack.c.bf16 %v395, %v394
  %v436 = vpack.c.bf16 %v397, %v396
  %v437 = vpack.c.bf16 %v399, %v398
  %v438 = vpack.c.bf16 %v401, %v400
  %v439 = vpack.c.bf16 %v403, %v402
  %v440 = vpack.c.bf16 %v405, %v404
  %v441 = vpack.c.bf16 %v407, %v406
  %v442 = vpack.c.bf16 %v409, %v408
  %v443 = vpack.c.bf16 %v411, %v410
  %v476 = vunpack.c.l.b16 %v412
  %v477 = vunpack.c.h.b16 %v412
  %v478 = vunpack.c.l.b16 %v413
  %v479 = vunpack.c.h.b16 %v413
  %v480 = vunpack.c.l.b16 %v414
  %v481 = vunpack.c.h.b16 %v414
  %v482 = vunpack.c.l.b16 %v415
  %v483 = vunpack.c.h.b16 %v415
  %v484 = vunpack.c.l.b16 %v416
  %v485 = vunpack.c.h.b16 %v416
  %v486 = vunpack.c.l.b16 %v417
  %v487 = vunpack.c.h.b16 %v417
  %v488 = vunpack.c.l.b16 %v418
  %v489 = vunpack.c.h.b16 %v418
  %v490 = vunpack.c.l.b16 %v419
  %v491 = vunpack.c.h.b16 %v419
  %v492 = vunpack.c.l.b16 %v420
  %v493 = vunpack.c.h.b16 %v420
  %v494 = vunpack.c.l.b16 %v421
  %v495 = vunpack.c.h.b16 %v421
  %v496 = vunpack.c.l.b16 %v422
  %v497 = vunpack.c.h.b16 %v422
  %v498 = vunpack.c.l.b16 %v423
  %v499 = vunpack.c.h.b16 %v423
  %v500 = vunpack.c.l.b16 %v424
  %v501 = vunpack.c.h.b16 %v424
  %v502 = vunpack.c.l.b16 %v425
  %v503 = vunpack.c.h.b16 %v425
  %v504 = vunpack.c.l.b16 %v426
  %v505 = vunpack.c.h.b16 %v426
  %v506 = vunpack.c.l.b16 %v427
  %v507 = vunpack.c.h.b16 %v427
  %v508 = vunpack.c.l.b16 %v428
  %v509 = vunpack.c.h.b16 %v428
  %v510 = vunpack.c.l.b16 %v429
  %v511 = vunpack.c.h.b16 %v429
  %v512 = vunpack.c.l.b16 %v430
  %v513 = vunpack.c.h.b16 %v430
  %v514 = vunpack.c.l.b16 %v431
  %v515 = vunpack.c.h.b16 %v431
  %v516 = vunpack.c.l.b16 %v432
  %v517 = vunpack.c.h.b16 %v432
  %v518 = vunpack.c.l.b16 %v433
  %v519 = vunpack.c.h.b16 %v433
  %v520 = vunpack.c.l.b16 %v434
  %v521 = vunpack.c.h.b16 %v434
  %v522 = vunpack.c.l.b16 %v435
  %v523 = vunpack.c.h.b16 %v435
  %v524 = vunpack.c.l.b16 %v436
  %v525 = vunpack.c.h.b16 %v436
  %v526 = vunpack.c.l.b16 %v437
  %v527 = vunpack.c.h.b16 %v437
  %v528 = vunpack.c.l.b16 %v438
  %v529 = vunpack.c.h.b16 %v438
  %v530 = vunpack.c.l.b16 %v439
  %v531 = vunpack.c.h.b16 %v439
  %v532 = vunpack.c.l.b16 %v440
  %v533 = vunpack.c.h.b16 %v440
  %v534 = vunpack.c.l.b16 %v441
  %v535 = vunpack.c.h.b16 %v441
  %v536 = vunpack.c.l.b16 %v442
  %v537 = vunpack.c.h.b16 %v442
  %v538 = vunpack.c.l.b16 %v443
  %v539 = vunpack.c.h.b16 %v443
  %v540 = vpack.c.b16 %v476, %v476
  %v541 = vpack.c.b16 %v477, %v477
  %v542 = vpack.c.b16 %v478, %v478
  %v543 = vpack.c.b16 %v479, %v479
  %v544 = vpack.c.b16 %v480, %v480
  %v545 = vpack.c.b16 %v481, %v481
  %v546 = vpack.c.b16 %v482, %v482
  %v547 = vpack.c.b16 %v483, %v483
  %v548 = vpack.c.b16 %v484, %v484
  %v549 = vpack.c.b16 %v485, %v485
  %v550 = vpack.c.b16 %v486, %v486
  %v551 = vpack.c.b16 %v487, %v487
  %v552 = vpack.c.b16 %v488, %v488
  %v553 = vpack.c.b16 %v489, %v489
  %v554 = vpack.c.b16 %v490, %v490
  %v555 = vpack.c.b16 %v491, %v491
  %v556 = vpack.c.b16 %v492, %v492
  %v557 = vpack.c.b16 %v493, %v493
  %v558 = vpack.c.b16 %v494, %v494
  %v559 = vpack.c.b16 %v495, %v495
  %v560 = vpack.c.b16 %v496, %v496
  %v561 = vpack.c.b16 %v497, %v497
  %v562 = vpack.c.b16 %v498, %v498
  %v563 = vpack.c.b16 %v499, %v499
  %v564 = vpack.c.b16 %v500, %v500
  %v565 = vpack.c.b16 %v501, %v501
  %v566 = vpack.c.b16 %v502, %v502
  %v567 = vpack.c.b16 %v503, %v503
  %v568 = vpack.c.b16 %v504, %v504
  %v569 = vpack.c.b16 %v505, %v505
  %v570 = vpack.c.b16 %v506, %v506
  %v571 = vpack.c.b16 %v507, %v507
  %v572 = vpack.c.b16 %v508, %v508
  %v573 = vpack.c.b16 %v509, %v509
  %v574 = vpack.c.b16 %v510, %v510
  %v575 = vpack.c.b16 %v511, %v511
  %v576 = vpack.c.b16 %v512, %v512
  %v577 = vpack.c.b16 %v513, %v513
  %v578 = vpack.c.b16 %v514, %v514
  %v579 = vpack.c.b16 %v515, %v515
  %v580 = vpack.c.b16 %v516, %v516
  %v581 = vpack.c.b16 %v517, %v517
  %v582 = vpack.c.b16 %v518, %v518
  %v583 = vpack.c.b16 %v519, %v519
  %v584 = vpack.c.b16 %v520, %v520
  %v585 = vpack.c.b16 %v521, %v521
  %v586 = vpack.c.b16 %v522, %v522
  %v587 = vpack.c.b16 %v523, %v523
  %v588 = vpack.c.b16 %v524, %v524
  %v589 = vpack.c.b16 %v525, %v525
  %v590 = vpack.c.b16 %v526, %v526
  %v591 = vpack.c.b16 %v527, %v527
  %v592 = vpack.c.b16 %v528, %v528
  %v593 = vpack.c.b16 %v529, %v529
  %v594 = vpack.c.b16 %v530, %v530
  %v595 = vpack.c.b16 %v531, %v531
  %v596 = vpack.c.b16 %v532, %v532
  %v597 = vpack.c.b16 %v533, %v533
  %v598 = vpack.c.b16 %v534, %v534
  %v599 = vpack.c.b16 %v535, %v535
  %v600 = vpack.c.b16 %v536, %v536
  %v601 = vpack.c.b16 %v537, %v537
  %v602 = vpack.c.b16 %v538, %v538
  %v603 = vpack.c.b16 %v539, %v539
  %668 = vst [vmem:[%s3] sm:$0xf] %v540
  %669 = vst [vmem:[%s3 + $0x4] sm:$0xf] %v541
  %670 = vst [vmem:[%s3 + $0x8] sm:$0xf] %v542
  %671 = vst [vmem:[%s3 + $0xc] sm:$0xf] %v543
  %672 = vst [vmem:[%s3 + $0x10] sm:$0xf] %v544
  %673 = vst [vmem:[%s3 + $0x14] sm:$0xf] %v545
  %674 = vst [vmem:[%s3 + $0x18] sm:$0xf] %v546
  %675 = vst [vmem:[%s3 + $0x1c] sm:$0xf] %v547
  %676 = vst [vmem:[%s3 + $0x20] sm:$0xf] %v548
  %677 = vst [vmem:[%s3 + $0x24] sm:$0xf] %v549
  %678 = vst [vmem:[%s3 + $0x28] sm:$0xf] %v550
  %679 = vst [vmem:[%s3 + $0x2c] sm:$0xf] %v551
  %680 = vst [vmem:[%s3 + $0x30] sm:$0xf] %v552
  %681 = vst [vmem:[%s3 + $0x34] sm:$0xf] %v553
  %682 = vst [vmem:[%s3 + $0x38] sm:$0xf] %v554
  %683 = vst [vmem:[%s3 + $0x3c] sm:$0xf] %v555
  %684 = vst [vmem:[%s3 + $0x40] sm:$0xf] %v556
  %685 = vst [vmem:[%s3 + $0x44] sm:$0xf] %v557
  %686 = vst [vmem:[%s3 + $0x48] sm:$0xf] %v558
  %687 = vst [vmem:[%s3 + $0x4c] sm:$0xf] %v559
  %688 = vst [vmem:[%s3 + $0x50] sm:$0xf] %v560
  %689 = vst [vmem:[%s3 + $0x54] sm:$0xf] %v561
  %690 = vst [vmem:[%s3 + $0x58] sm:$0xf] %v562
  %691 = vst [vmem:[%s3 + $0x5c] sm:$0xf] %v563
  %692 = vst [vmem:[%s3 + $0x60] sm:$0xf] %v564
  %693 = vst [vmem:[%s3 + $0x64] sm:$0xf] %v565
  %694 = vst [vmem:[%s3 + $0x68] sm:$0xf] %v566
  %695 = vst [vmem:[%s3 + $0x6c] sm:$0xf] %v567
  %696 = vst [vmem:[%s3 + $0x70] sm:$0xf] %v568
  %697 = vst [vmem:[%s3 + $0x74] sm:$0xf] %v569
  %698 = vst [vmem:[%s3 + $0x78] sm:$0xf] %v570
  %699 = vst [vmem:[%s3 + $0x7c] sm:$0xf] %v571
  %700 = vst [vmem:[%s3 + $0x80] sm:$0xf] %v572
  %701 = vst [vmem:[%s3 + $0x84] sm:$0xf] %v573
  %702 = vst [vmem:[%s3 + $0x88] sm:$0xf] %v574
  %703 = vst [vmem:[%s3 + $0x8c] sm:$0xf] %v575
  %704 = vst [vmem:[%s3 + $0x90] sm:$0xf] %v576
  %705 = vst [vmem:[%s3 + $0x94] sm:$0xf] %v577
  %706 = vst [vmem:[%s3 + $0x98] sm:$0xf] %v578
  %707 = vst [vmem:[%s3 + $0x9c] sm:$0xf] %v579
  %708 = vst [vmem:[%s3 + $0xa0] sm:$0xf] %v580
  %709 = vst [vmem:[%s3 + $0xa4] sm:$0xf] %v581
  %710 = vst [vmem:[%s3 + $0xa8] sm:$0xf] %v582
  %711 = vst [vmem:[%s3 + $0xac] sm:$0xf] %v583
  %712 = vst [vmem:[%s3 + $0xb0] sm:$0xf] %v584
  %713 = vst [vmem:[%s3 + $0xb4] sm:$0xf] %v585
  %714 = vst [vmem:[%s3 + $0xb8] sm:$0xf] %v586
  %715 = vst [vmem:[%s3 + $0xbc] sm:$0xf] %v587
  %716 = vst [vmem:[%s3 + $0xc0] sm:$0xf] %v588
  %717 = vst [vmem:[%s3 + $0xc4] sm:$0xf] %v589
  %718 = vst [vmem:[%s3 + $0xc8] sm:$0xf] %v590
  %719 = vst [vmem:[%s3 + $0xcc] sm:$0xf] %v591
  %720 = vst [vmem:[%s3 + $0xd0] sm:$0xf] %v592
  %721 = vst [vmem:[%s3 + $0xd4] sm:$0xf] %v593
  %722 = vst [vmem:[%s3 + $0xd8] sm:$0xf] %v594
  %723 = vst [vmem:[%s3 + $0xdc] sm:$0xf] %v595
  %724 = vst [vmem:[%s3 + $0xe0] sm:$0xf] %v596
  %725 = vst [vmem:[%s3 + $0xe4] sm:$0xf] %v597
  %726 = vst [vmem:[%s3 + $0xe8] sm:$0xf] %v598
  %727 = vst [vmem:[%s3 + $0xec] sm:$0xf] %v599
  %728 = vst [vmem:[%s3 + $0xf0] sm:$0xf] %v600
  %729 = vst [vmem:[%s3 + $0xf4] sm:$0xf] %v601
  %730 = vst [vmem:[%s3 + $0xf8] sm:$0xf] %v602
  %731 = vst [vmem:[%s3 + $0xfc] sm:$0xf] %v603
  // Predicated region
  $region14: #{img_discriminator_forward.14} parent=0 // pred_check
    _
  $region15: #{img_discriminator_forward.14} parent=0 // pred_check_branch
    %733 = sbr.rel (0) target = $region17
  $region16: #{img_discriminator_forward.14} parent=0 // pred_region
    _
  $region17: #{img_discriminator_forward.14} parent=0 // pred_fallthru
    _
  // Predicated region
  $region18: #{img_discriminator_forward.14} parent=0 // pred_check
    _
  $region19: #{img_discriminator_forward.14} parent=0 // pred_check_branch
    %735 = sbr.rel (0) target = $region21
  $region20: #{img_discriminator_forward.14} parent=0 // pred_region
    _
  $region21: #{img_discriminator_forward.14} parent=0 // pred_fallthru
    _

// kernel: img_discriminator_forward.16
$region0: #{img_discriminator_forward.16}
  #allocation0 [shape = 'u32[]', space=smem, size = 0x4, offset = 0x4, fixed_abs, tag = 'smem constant byte address 0x4 - core index']
  #allocation1 [shape = 'u32[144,128]{1,0:T(1,128)}', space=vmem, size = 0x12000, scoped, tag = 'internal scratch']
  %s0 = inlined_call_operand.vmem [shape: f32[128,128], index: 0, kind: input, shape index: {}]
  %s1 = inlined_call_operand.vmem [shape: f32[1,128], index: 1, kind: input, shape index: {}]
  %s2 = inlined_call_operand.vmem [shape: f32[1,128], index: 2, kind: input, shape index: {}]
  %s3 = inlined_call_operand.vmem [shape: bf16[128,128], index: 3, kind: output, shape index: {}]
  %s4 = sld [smem:[#allocation0]]
  $region22: #{img_discriminator_forward.16} parent=0
    _
  %s6 = ssub.s32 1, %s4
  %s7 = scalar_select 0, %s6, %s4
  // Predicated region
  $region2: #{img_discriminator_forward.16} parent=0 // pred_check
    _
  $region3: #{img_discriminator_forward.16} parent=0 // pred_check_branch
    %9 = sbr.rel (0) target = $region5
  $region4: #{img_discriminator_forward.16} parent=0 // pred_region
    _
  $region5: #{img_discriminator_forward.16} parent=0 // pred_fallthru
    _
  // Predicated region
  $region6: #{img_discriminator_forward.16} parent=0 // pred_check
    _
  $region7: #{img_discriminator_forward.16} parent=0 // pred_check_branch
    %11 = sbr.rel (0) target = $region9
  $region8: #{img_discriminator_forward.16} parent=0 // pred_region
    _
  $region9: #{img_discriminator_forward.16} parent=0 // pred_fallthru
    _
  // Predicated region
  $region10: #{img_discriminator_forward.16} parent=0 // pred_check
    _
  $region11: #{img_discriminator_forward.16} parent=0 // pred_check_branch
    %13 = sbr.rel (0) target = $region13
  $region12: #{img_discriminator_forward.16} parent=0 // pred_region
    _
  $region13: #{img_discriminator_forward.16} parent=0 // pred_fallthru
    _
  %v14 = vld [vmem:[%s0] sm:$0xff]
  %v15 = vld [vmem:[%s0 + $0x8] sm:$0xff]
  %v16 = vld [vmem:[%s0 + $0x10] sm:$0xff]
  %v17 = vld [vmem:[%s0 + $0x18] sm:$0xff]
  %v18 = vld [vmem:[%s0 + $0x20] sm:$0xff]
  %v19 = vld [vmem:[%s0 + $0x28] sm:$0xff]
  %v20 = vld [vmem:[%s0 + $0x30] sm:$0xff]
  %v21 = vld [vmem:[%s0 + $0x38] sm:$0xff]
  %v22 = vld [vmem:[%s0 + $0x40] sm:$0xff]
  %v23 = vld [vmem:[%s0 + $0x48] sm:$0xff]
  %v24 = vld [vmem:[%s0 + $0x50] sm:$0xff]
  %v25 = vld [vmem:[%s0 + $0x58] sm:$0xff]
  %v26 = vld [vmem:[%s0 + $0x60] sm:$0xff]
  %v27 = vld [vmem:[%s0 + $0x68] sm:$0xff]
  %v28 = vld [vmem:[%s0 + $0x70] sm:$0xff]
  %v29 = vld [vmem:[%s0 + $0x78] sm:$0xff]
  %v30 = vld [vmem:[%s1] sm:$0x1]
  %v32 = vlaneseq
  %v33 = vshrl.u32 %v32, 7
  %v34 = vsub.s32 0, %v33
  %v35 = vrot.slane %v30, %v34
  %v37 = vmul.f32 %v14, %v35
  %v38 = vmul.f32 %v15, %v35
  %v39 = vmul.f32 %v16, %v35
  %v40 = vmul.f32 %v17, %v35
  %v41 = vmul.f32 %v18, %v35
  %v42 = vmul.f32 %v19, %v35
  %v43 = vmul.f32 %v20, %v35
  %v44 = vmul.f32 %v21, %v35
  %v45 = vmul.f32 %v22, %v35
  %v46 = vmul.f32 %v23, %v35
  %v47 = vmul.f32 %v24, %v35
  %v48 = vmul.f32 %v25, %v35
  %v49 = vmul.f32 %v26, %v35
  %v50 = vmul.f32 %v27, %v35
  %v51 = vmul.f32 %v28, %v35
  %v52 = vmul.f32 %v29, %v35
  %v53 = vld [vmem:[%s2] sm:$0x1]
  %v55 = vlaneseq
  %v56 = vshrl.u32 %v55, 7
  %v57 = vsub.s32 0, %v56
  %v58 = vrot.slane %v53, %v57
  %v60 = vadd.f32 %v37, %v58
  %v61 = vadd.f32 %v38, %v58
  %v62 = vadd.f32 %v39, %v58
  %v63 = vadd.f32 %v40, %v58
  %v64 = vadd.f32 %v41, %v58
  %v65 = vadd.f32 %v42, %v58
  %v66 = vadd.f32 %v43, %v58
  %v67 = vadd.f32 %v44, %v58
  %v68 = vadd.f32 %v45, %v58
  %v69 = vadd.f32 %v46, %v58
  %v70 = vadd.f32 %v47, %v58
  %v71 = vadd.f32 %v48, %v58
  %v72 = vadd.f32 %v49, %v58
  %v73 = vadd.f32 %v50, %v58
  %v74 = vadd.f32 %v51, %v58
  %v75 = vadd.f32 %v52, %v58
  %vm76 = vcmp.ge.f32.partialorder %v60, 0.0
  %vm77 = vcmp.ge.f32.partialorder %v61, 0.0
  %vm78 = vcmp.ge.f32.partialorder %v62, 0.0
  %vm79 = vcmp.ge.f32.partialorder %v63, 0.0
  %vm80 = vcmp.ge.f32.partialorder %v64, 0.0
  %vm81 = vcmp.ge.f32.partialorder %v65, 0.0
  %vm82 = vcmp.ge.f32.partialorder %v66, 0.0
  %vm83 = vcmp.ge.f32.partialorder %v67, 0.0
  %vm84 = vcmp.ge.f32.partialorder %v68, 0.0
  %vm85 = vcmp.ge.f32.partialorder %v69, 0.0
  %vm86 = vcmp.ge.f32.partialorder %v70, 0.0
  %vm87 = vcmp.ge.f32.partialorder %v71, 0.0
  %vm88 = vcmp.ge.f32.partialorder %v72, 0.0
  %vm89 = vcmp.ge.f32.partialorder %v73, 0.0
  %vm90 = vcmp.ge.f32.partialorder %v74, 0.0
  %vm91 = vcmp.ge.f32.partialorder %v75, 0.0
  %v92 = vmul.f32 %v60, 0.2
  %v93 = vmul.f32 %v61, 0.2
  %v94 = vmul.f32 %v62, 0.2
  %v95 = vmul.f32 %v63, 0.2
  %v96 = vmul.f32 %v64, 0.2
  %v97 = vmul.f32 %v65, 0.2
  %v98 = vmul.f32 %v66, 0.2
  %v99 = vmul.f32 %v67, 0.2
  %v100 = vmul.f32 %v68, 0.2
  %v101 = vmul.f32 %v69, 0.2
  %v102 = vmul.f32 %v70, 0.2
  %v103 = vmul.f32 %v71, 0.2
  %v104 = vmul.f32 %v72, 0.2
  %v105 = vmul.f32 %v73, 0.2
  %v106 = vmul.f32 %v74, 0.2
  %v107 = vmul.f32 %v75, 0.2
  %v108 = vsel %vm76, %v60, %v92
  %v109 = vsel %vm77, %v61, %v93
  %v110 = vsel %vm78, %v62, %v94
  %v111 = vsel %vm79, %v63, %v95
  %v112 = vsel %vm80, %v64, %v96
  %v113 = vsel %vm81, %v65, %v97
  %v114 = vsel %vm82, %v66, %v98
  %v115 = vsel %vm83, %v67, %v99
  %v116 = vsel %vm84, %v68, %v100
  %v117 = vsel %vm85, %v69, %v101
  %v118 = vsel %vm86, %v70, %v102
  %v119 = vsel %vm87, %v71, %v103
  %v120 = vsel %vm88, %v72, %v104
  %v121 = vsel %vm89, %v73, %v105
  %v122 = vsel %vm90, %v74, %v106
  %v123 = vsel %vm91, %v75, %v107
  %v124 = vpack.c.bf16 %v109, %v108
  %v125 = vpack.c.bf16 %v111, %v110
  %v126 = vpack.c.bf16 %v113, %v112
  %v127 = vpack.c.bf16 %v115, %v114
  %v128 = vpack.c.bf16 %v117, %v116
  %v129 = vpack.c.bf16 %v119, %v118
  %v130 = vpack.c.bf16 %v121, %v120
  %v131 = vpack.c.bf16 %v123, %v122
  %v140 = vunpack.c.l.b16 %v124
  %v141 = vunpack.c.h.b16 %v124
  %v142 = vunpack.c.l.b16 %v125
  %v143 = vunpack.c.h.b16 %v125
  %v144 = vunpack.c.l.b16 %v126
  %v145 = vunpack.c.h.b16 %v126
  %v146 = vunpack.c.l.b16 %v127
  %v147 = vunpack.c.h.b16 %v127
  %v148 = vunpack.c.l.b16 %v128
  %v149 = vunpack.c.h.b16 %v128
  %v150 = vunpack.c.l.b16 %v129
  %v151 = vunpack.c.h.b16 %v129
  %v152 = vunpack.c.l.b16 %v130
  %v153 = vunpack.c.h.b16 %v130
  %v154 = vunpack.c.l.b16 %v131
  %v155 = vunpack.c.h.b16 %v131
  %v156 = vpack.c.b16 %v140, %v140
  %v157 = vpack.c.b16 %v141, %v141
  %v158 = vpack.c.b16 %v142, %v142
  %v159 = vpack.c.b16 %v143, %v143
  %v160 = vpack.c.b16 %v144, %v144
  %v161 = vpack.c.b16 %v145, %v145
  %v162 = vpack.c.b16 %v146, %v146
  %v163 = vpack.c.b16 %v147, %v147
  %v164 = vpack.c.b16 %v148, %v148
  %v165 = vpack.c.b16 %v149, %v149
  %v166 = vpack.c.b16 %v150, %v150
  %v167 = vpack.c.b16 %v151, %v151
  %v168 = vpack.c.b16 %v152, %v152
  %v169 = vpack.c.b16 %v153, %v153
  %v170 = vpack.c.b16 %v154, %v154
  %v171 = vpack.c.b16 %v155, %v155
  %188 = vst [vmem:[%s3] sm:$0xf] %v156
  %189 = vst [vmem:[%s3 + $0x4] sm:$0xf] %v157
  %190 = vst [vmem:[%s3 + $0x8] sm:$0xf] %v158
  %191 = vst [vmem:[%s3 + $0xc] sm:$0xf] %v159
  %192 = vst [vmem:[%s3 + $0x10] sm:$0xf] %v160
  %193 = vst [vmem:[%s3 + $0x14] sm:$0xf] %v161
  %194 = vst [vmem:[%s3 + $0x18] sm:$0xf] %v162
  %195 = vst [vmem:[%s3 + $0x1c] sm:$0xf] %v163
  %196 = vst [vmem:[%s3 + $0x20] sm:$0xf] %v164
  %197 = vst [vmem:[%s3 + $0x24] sm:$0xf] %v165
  %198 = vst [vmem:[%s3 + $0x28] sm:$0xf] %v166
  %199 = vst [vmem:[%s3 + $0x2c] sm:$0xf] %v167
  %200 = vst [vmem:[%s3 + $0x30] sm:$0xf] %v168
  %201 = vst [vmem:[%s3 + $0x34] sm:$0xf] %v169
  %202 = vst [vmem:[%s3 + $0x38] sm:$0xf] %v170
  %203 = vst [vmem:[%s3 + $0x3c] sm:$0xf] %v171
  // Predicated region
  $region14: #{img_discriminator_forward.16} parent=0 // pred_check
    _
  $region15: #{img_discriminator_forward.16} parent=0 // pred_check_branch
    %205 = sbr.rel (0) target = $region17
  $region16: #{img_discriminator_forward.16} parent=0 // pred_region
    _
  $region17: #{img_discriminator_forward.16} parent=0 // pred_fallthru
    _
  // Predicated region
  $region18: #{img_discriminator_forward.16} parent=0 // pred_check
    _
  $region19: #{img_discriminator_forward.16} parent=0 // pred_check_branch
    %207 = sbr.rel (0) target = $region21
  $region20: #{img_discriminator_forward.16} parent=0 // pred_region
    _
  $region21: #{img_discriminator_forward.16} parent=0 // pred_fallthru
    _

// kernel: img_discriminator_forward.17
$region0: #{img_discriminator_forward.17}
  #allocation0 [shape = 'u32[]', space=smem, size = 0x4, offset = 0x4, fixed_abs, tag = 'smem constant byte address 0x4 - core index']
  #allocation1 [shape = 'u32[144,128]{1,0:T(1,128)}', space=vmem, size = 0x12000, scoped, tag = 'internal scratch']
  %s0 = inlined_call_operand.vmem [shape: bf16[128,1152], index: 0, kind: input, shape index: {}]
  %s1 = inlined_call_operand.vmem [shape: bf16[1152,128], index: 1, kind: input, shape index: {}]
  %s2 = inlined_call_operand.vmem [shape: f32[128,128], index: 2, kind: output, shape index: {0}]
  %s3 = inlined_call_operand.vmem [shape: f32[1,128], index: 3, kind: output, shape index: {1}]
  %s4 = inlined_call_operand.vmem [shape: f32[1,128], index: 4, kind: output, shape index: {2}]
  %5 = xla_tuple %s2, %s3, %s4
  %s6 = sld [smem:[#allocation0]]
  $region38: #{img_discriminator_forward.17} parent=0
    _
  %s8 = ssub.s32 1, %s6
  %s9 = scalar_select 0, %s8, %s6
  // Predicated region
  $region2: #{img_discriminator_forward.17} parent=0 // pred_check
    _
  $region3: #{img_discriminator_forward.17} parent=0 // pred_check_branch
    %11 = sbr.rel (0) target = $region5
  $region4: #{img_discriminator_forward.17} parent=0 // pred_region
    _
  $region5: #{img_discriminator_forward.17} parent=0 // pred_fallthru
    _
  // Predicated region
  $region6: #{img_discriminator_forward.17} parent=0 // pred_check
    _
  $region7: #{img_discriminator_forward.17} parent=0 // pred_check_branch
    %13 = sbr.rel (0) target = $region9
  $region8: #{img_discriminator_forward.17} parent=0 // pred_region
    _
  $region9: #{img_discriminator_forward.17} parent=0 // pred_fallthru
    _
  %p15 = scmp.eq.s32.totalorder 0, 0
  // Predicated region
  $region10: #{img_discriminator_forward.17} parent=0 // pred_check
    %p16 = pneg %p15
  $region11: #{img_discriminator_forward.17} parent=0 // pred_check_branch
    %18 = sbr.rel (%p16) target = $region13
  $region12: #{img_discriminator_forward.17} parent=0 // pred_region
    %19 = vst [vmem:[%s3] sm:$0x1] 0.0
    %20 = vst [vmem:[%s4] sm:$0x1] 0.0
  $region13: #{img_discriminator_forward.17} parent=0 // pred_fallthru
    _
  %v21 = vld [vmem:[%s0] sm:$0xff]
  %v22 = vld [vmem:[%s0 + $0x8] sm:$0xff]
  %v23 = vld [vmem:[%s0 + $0x10] sm:$0xff]
  %v24 = vld [vmem:[%s0 + $0x18] sm:$0xff]
  %v25 = vld [vmem:[%s0 + $0x20] sm:$0xf]
  %v26 = vld [vmem:[%s0 + $0x24] sm:$0xff]
  %v27 = vld [vmem:[%s0 + $0x2c] sm:$0xff]
  %v28 = vld [vmem:[%s0 + $0x34] sm:$0xff]
  %v29 = vld [vmem:[%s0 + $0x3c] sm:$0xff]
  %v30 = vld [vmem:[%s0 + $0x44] sm:$0xf]
  %v31 = vld [vmem:[%s0 + $0x48] sm:$0xff]
  %v32 = vld [vmem:[%s0 + $0x50] sm:$0xff]
  %v33 = vld [vmem:[%s0 + $0x58] sm:$0xff]
  %v34 = vld [vmem:[%s0 + $0x60] sm:$0xff]
  %v35 = vld [vmem:[%s0 + $0x68] sm:$0xf]
  %v36 = vld [vmem:[%s0 + $0x6c] sm:$0xff]
  %v37 = vld [vmem:[%s0 + $0x74] sm:$0xff]
  %v38 = vld [vmem:[%s0 + $0x7c] sm:$0xff]
  %v39 = vld [vmem:[%s0 + $0x84] sm:$0xff]
  %v40 = vld [vmem:[%s0 + $0x8c] sm:$0xf]
  %v41 = vld [vmem:[%s0 + $0x90] sm:$0xff]
  %v42 = vld [vmem:[%s0 + $0x98] sm:$0xff]
  %v43 = vld [vmem:[%s0 + $0xa0] sm:$0xff]
  %v44 = vld [vmem:[%s0 + $0xa8] sm:$0xff]
  %v45 = vld [vmem:[%s0 + $0xb0] sm:$0xf]
  %v46 = vld [vmem:[%s0 + $0xb4] sm:$0xff]
  %v47 = vld [vmem:[%s0 + $0xbc] sm:$0xff]
  %v48 = vld [vmem:[%s0 + $0xc4] sm:$0xff]
  %v49 = vld [vmem:[%s0 + $0xcc] sm:$0xff]
  %v50 = vld [vmem:[%s0 + $0xd4] sm:$0xf]
  %v51 = vld [vmem:[%s0 + $0xd8] sm:$0xff]
  %v52 = vld [vmem:[%s0 + $0xe0] sm:$0xff]
  %v53 = vld [vmem:[%s0 + $0xe8] sm:$0xff]
  %v54 = vld [vmem:[%s0 + $0xf0] sm:$0xff]
  %v55 = vld [vmem:[%s0 + $0xf8] sm:$0xf]
  %v56 = vld [vmem:[%s0 + $0xfc] sm:$0xff]
  %v57 = vld [vmem:[%s0 + $0x104] sm:$0xff]
  %v58 = vld [vmem:[%s0 + $0x10c] sm:$0xff]
  %v59 = vld [vmem:[%s0 + $0x114] sm:$0xff]
  %v60 = vld [vmem:[%s0 + $0x11c] sm:$0xf]
  %v61 = vld [vmem:[%s0 + $0x120] sm:$0xff]
  %v62 = vld [vmem:[%s0 + $0x128] sm:$0xff]
  %v63 = vld [vmem:[%s0 + $0x130] sm:$0xff]
  %v64 = vld [vmem:[%s0 + $0x138] sm:$0xff]
  %v65 = vld [vmem:[%s0 + $0x140] sm:$0xf]
  %v66 = vld [vmem:[%s0 + $0x144] sm:$0xff]
  %v67 = vld [vmem:[%s0 + $0x14c] sm:$0xff]
  %v68 = vld [vmem:[%s0 + $0x154] sm:$0xff]
  %v69 = vld [vmem:[%s0 + $0x15c] sm:$0xff]
  %v70 = vld [vmem:[%s0 + $0x164] sm:$0xf]
  %v71 = vld [vmem:[%s0 + $0x168] sm:$0xff]
  %v72 = vld [vmem:[%s0 + $0x170] sm:$0xff]
  %v73 = vld [vmem:[%s0 + $0x178] sm:$0xff]
  %v74 = vld [vmem:[%s0 + $0x180] sm:$0xff]
  %v75 = vld [vmem:[%s0 + $0x188] sm:$0xf]
  %v76 = vld [vmem:[%s0 + $0x18c] sm:$0xff]
  %v77 = vld [vmem:[%s0 + $0x194] sm:$0xff]
  %v78 = vld [vmem:[%s0 + $0x19c] sm:$0xff]
  %v79 = vld [vmem:[%s0 + $0x1a4] sm:$0xff]
  %v80 = vld [vmem:[%s0 + $0x1ac] sm:$0xf]
  %v81 = vld [vmem:[%s0 + $0x1b0] sm:$0xff]
  %v82 = vld [vmem:[%s0 + $0x1b8] sm:$0xff]
  %v83 = vld [vmem:[%s0 + $0x1c0] sm:$0xff]
  %v84 = vld [vmem:[%s0 + $0x1c8] sm:$0xff]
  %v85 = vld [vmem:[%s0 + $0x1d0] sm:$0xf]
  %v86 = vld [vmem:[%s0 + $0x1d4] sm:$0xff]
  %v87 = vld [vmem:[%s0 + $0x1dc] sm:$0xff]
  %v88 = vld [vmem:[%s0 + $0x1e4] sm:$0xff]
  %v89 = vld [vmem:[%s0 + $0x1ec] sm:$0xff]
  %v90 = vld [vmem:[%s0 + $0x1f4] sm:$0xf]
  %v91 = vld [vmem:[%s0 + $0x1f8] sm:$0xff]
  %v92 = vld [vmem:[%s0 + $0x200] sm:$0xff]
  %v93 = vld [vmem:[%s0 + $0x208] sm:$0xff]
  %v94 = vld [vmem:[%s0 + $0x210] sm:$0xff]
  %v95 = vld [vmem:[%s0 + $0x218] sm:$0xf]
  %v96 = vld [vmem:[%s0 + $0x21c] sm:$0xff]
  %v97 = vld [vmem:[%s0 + $0x224] sm:$0xff]
  %v98 = vld [vmem:[%s0 + $0x22c] sm:$0xff]
  %v99 = vld [vmem:[%s0 + $0x234] sm:$0xff]
  %v100 = vld [vmem:[%s0 + $0x23c] sm:$0xf]
  %v101 = vld [vmem:[%s1] sm:$0xf]
  %v102 = vld [vmem:[%s1 + $0x4] sm:$0xf]
  %v103 = vld [vmem:[%s1 + $0x8] sm:$0xf]
  %v104 = vld [vmem:[%s1 + $0xc] sm:$0xf]
  %v105 = vld [vmem:[%s1 + $0x10] sm:$0xf]
  %v106 = vld [vmem:[%s1 + $0x14] sm:$0xf]
  %v107 = vld [vmem:[%s1 + $0x18] sm:$0xf]
  %v108 = vld [vmem:[%s1 + $0x1c] sm:$0xf]
  %v109 = vld [vmem:[%s1 + $0x20] sm:$0xf]
  %v110 = vld [vmem:[%s1 + $0x24] sm:$0xf]
  %v111 = vld [vmem:[%s1 + $0x28] sm:$0xf]
  %v112 = vld [vmem:[%s1 + $0x2c] sm:$0xf]
  %v113 = vld [vmem:[%s1 + $0x30] sm:$0xf]
  %v114 = vld [vmem:[%s1 + $0x34] sm:$0xf]
  %v115 = vld [vmem:[%s1 + $0x38] sm:$0xf]
  %v116 = vld [vmem:[%s1 + $0x3c] sm:$0xf]
  %v117 = vld [vmem:[%s1 + $0x40] sm:$0xf]
  %v118 = vld [vmem:[%s1 + $0x44] sm:$0xf]
  %v119 = vld [vmem:[%s1 + $0x48] sm:$0xf]
  %v120 = vld [vmem:[%s1 + $0x4c] sm:$0xf]
  %v121 = vld [vmem:[%s1 + $0x50] sm:$0xf]
  %v122 = vld [vmem:[%s1 + $0x54] sm:$0xf]
  %v123 = vld [vmem:[%s1 + $0x58] sm:$0xf]
  %v124 = vld [vmem:[%s1 + $0x5c] sm:$0xf]
  %v125 = vld [vmem:[%s1 + $0x60] sm:$0xf]
  %v126 = vld [vmem:[%s1 + $0x64] sm:$0xf]
  %v127 = vld [vmem:[%s1 + $0x68] sm:$0xf]
  %v128 = vld [vmem:[%s1 + $0x6c] sm:$0xf]
  %v129 = vld [vmem:[%s1 + $0x70] sm:$0xf]
  %v130 = vld [vmem:[%s1 + $0x74] sm:$0xf]
  %v131 = vld [vmem:[%s1 + $0x78] sm:$0xf]
  %v132 = vld [vmem:[%s1 + $0x7c] sm:$0xf]
  %v133 = vld [vmem:[%s1 + $0x80] sm:$0xf]
  %v134 = vld [vmem:[%s1 + $0x84] sm:$0xf]
  %v135 = vld [vmem:[%s1 + $0x88] sm:$0xf]
  %v136 = vld [vmem:[%s1 + $0x8c] sm:$0xf]
  %v137 = vld [vmem:[%s1 + $0x90] sm:$0xf]
  %v138 = vld [vmem:[%s1 + $0x94] sm:$0xf]
  %v139 = vld [vmem:[%s1 + $0x98] sm:$0xf]
  %v140 = vld [vmem:[%s1 + $0x9c] sm:$0xf]
  %v141 = vld [vmem:[%s1 + $0xa0] sm:$0xf]
  %v142 = vld [vmem:[%s1 + $0xa4] sm:$0xf]
  %v143 = vld [vmem:[%s1 + $0xa8] sm:$0xf]
  %v144 = vld [vmem:[%s1 + $0xac] sm:$0xf]
  %v145 = vld [vmem:[%s1 + $0xb0] sm:$0xf]
  %v146 = vld [vmem:[%s1 + $0xb4] sm:$0xf]
  %v147 = vld [vmem:[%s1 + $0xb8] sm:$0xf]
  %v148 = vld [vmem:[%s1 + $0xbc] sm:$0xf]
  %v149 = vld [vmem:[%s1 + $0xc0] sm:$0xf]
  %v150 = vld [vmem:[%s1 + $0xc4] sm:$0xf]
  %v151 = vld [vmem:[%s1 + $0xc8] sm:$0xf]
  %v152 = vld [vmem:[%s1 + $0xcc] sm:$0xf]
  %v153 = vld [vmem:[%s1 + $0xd0] sm:$0xf]
  %v154 = vld [vmem:[%s1 + $0xd4] sm:$0xf]
  %v155 = vld [vmem:[%s1 + $0xd8] sm:$0xf]
  %v156 = vld [vmem:[%s1 + $0xdc] sm:$0xf]
  %v157 = vld [vmem:[%s1 + $0xe0] sm:$0xf]
  %v158 = vld [vmem:[%s1 + $0xe4] sm:$0xf]
  %v159 = vld [vmem:[%s1 + $0xe8] sm:$0xf]
  %v160 = vld [vmem:[%s1 + $0xec] sm:$0xf]
  %v161 = vld [vmem:[%s1 + $0xf0] sm:$0xf]
  %v162 = vld [vmem:[%s1 + $0xf4] sm:$0xf]
  %v163 = vld [vmem:[%s1 + $0xf8] sm:$0xf]
  %v164 = vld [vmem:[%s1 + $0xfc] sm:$0xf]
  %v165 = vld [vmem:[%s1 + $0x100] sm:$0xf]
  %v166 = vld [vmem:[%s1 + $0x104] sm:$0xf]
  %v167 = vld [vmem:[%s1 + $0x108] sm:$0xf]
  %v168 = vld [vmem:[%s1 + $0x10c] sm:$0xf]
  %v169 = vld [vmem:[%s1 + $0x110] sm:$0xf]
  %v170 = vld [vmem:[%s1 + $0x114] sm:$0xf]
  %v171 = vld [vmem:[%s1 + $0x118] sm:$0xf]
  %v172 = vld [vmem:[%s1 + $0x11c] sm:$0xf]
  %v173 = vld [vmem:[%s1 + $0x120] sm:$0xf]
  %v174 = vld [vmem:[%s1 + $0x124] sm:$0xf]
  %v175 = vld [vmem:[%s1 + $0x128] sm:$0xf]
  %v176 = vld [vmem:[%s1 + $0x12c] sm:$0xf]
  %v177 = vld [vmem:[%s1 + $0x130] sm:$0xf]
  %v178 = vld [vmem:[%s1 + $0x134] sm:$0xf]
  %v179 = vld [vmem:[%s1 + $0x138] sm:$0xf]
  %v180 = vld [vmem:[%s1 + $0x13c] sm:$0xf]
  %v181 = vld [vmem:[%s1 + $0x140] sm:$0xf]
  %v182 = vld [vmem:[%s1 + $0x144] sm:$0xf]
  %v183 = vld [vmem:[%s1 + $0x148] sm:$0xf]
  %v184 = vld [vmem:[%s1 + $0x14c] sm:$0xf]
  %v185 = vld [vmem:[%s1 + $0x150] sm:$0xf]
  %v186 = vld [vmem:[%s1 + $0x154] sm:$0xf]
  %v187 = vld [vmem:[%s1 + $0x158] sm:$0xf]
  %v188 = vld [vmem:[%s1 + $0x15c] sm:$0xf]
  %v189 = vld [vmem:[%s1 + $0x160] sm:$0xf]
  %v190 = vld [vmem:[%s1 + $0x164] sm:$0xf]
  %v191 = vld [vmem:[%s1 + $0x168] sm:$0xf]
  %v192 = vld [vmem:[%s1 + $0x16c] sm:$0xf]
  %v193 = vld [vmem:[%s1 + $0x170] sm:$0xf]
  %v194 = vld [vmem:[%s1 + $0x174] sm:$0xf]
  %v195 = vld [vmem:[%s1 + $0x178] sm:$0xf]
  %v196 = vld [vmem:[%s1 + $0x17c] sm:$0xf]
  %v197 = vld [vmem:[%s1 + $0x180] sm:$0xf]
  %v198 = vld [vmem:[%s1 + $0x184] sm:$0xf]
  %v199 = vld [vmem:[%s1 + $0x188] sm:$0xf]
  %v200 = vld [vmem:[%s1 + $0x18c] sm:$0xf]
  %v201 = vld [vmem:[%s1 + $0x190] sm:$0xf]
  %v202 = vld [vmem:[%s1 + $0x194] sm:$0xf]
  %v203 = vld [vmem:[%s1 + $0x198] sm:$0xf]
  %v204 = vld [vmem:[%s1 + $0x19c] sm:$0xf]
  %v205 = vld [vmem:[%s1 + $0x1a0] sm:$0xf]
  %v206 = vld [vmem:[%s1 + $0x1a4] sm:$0xf]
  %v207 = vld [vmem:[%s1 + $0x1a8] sm:$0xf]
  %v208 = vld [vmem:[%s1 + $0x1ac] sm:$0xf]
  %v209 = vld [vmem:[%s1 + $0x1b0] sm:$0xf]
  %v210 = vld [vmem:[%s1 + $0x1b4] sm:$0xf]
  %v211 = vld [vmem:[%s1 + $0x1b8] sm:$0xf]
  %v212 = vld [vmem:[%s1 + $0x1bc] sm:$0xf]
  %v213 = vld [vmem:[%s1 + $0x1c0] sm:$0xf]
  %v214 = vld [vmem:[%s1 + $0x1c4] sm:$0xf]
  %v215 = vld [vmem:[%s1 + $0x1c8] sm:$0xf]
  %v216 = vld [vmem:[%s1 + $0x1cc] sm:$0xf]
  %v217 = vld [vmem:[%s1 + $0x1d0] sm:$0xf]
  %v218 = vld [vmem:[%s1 + $0x1d4] sm:$0xf]
  %v219 = vld [vmem:[%s1 + $0x1d8] sm:$0xf]
  %v220 = vld [vmem:[%s1 + $0x1dc] sm:$0xf]
  %v221 = vld [vmem:[%s1 + $0x1e0] sm:$0xf]
  %v222 = vld [vmem:[%s1 + $0x1e4] sm:$0xf]
  %v223 = vld [vmem:[%s1 + $0x1e8] sm:$0xf]
  %v224 = vld [vmem:[%s1 + $0x1ec] sm:$0xf]
  %v225 = vld [vmem:[%s1 + $0x1f0] sm:$0xf]
  %v226 = vld [vmem:[%s1 + $0x1f4] sm:$0xf]
  %v227 = vld [vmem:[%s1 + $0x1f8] sm:$0xf]
  %v228 = vld [vmem:[%s1 + $0x1fc] sm:$0xf]
  %v229 = vld [vmem:[%s1 + $0x200] sm:$0xf]
  %v230 = vld [vmem:[%s1 + $0x204] sm:$0xf]
  %v231 = vld [vmem:[%s1 + $0x208] sm:$0xf]
  %v232 = vld [vmem:[%s1 + $0x20c] sm:$0xf]
  %v233 = vld [vmem:[%s1 + $0x210] sm:$0xf]
  %v234 = vld [vmem:[%s1 + $0x214] sm:$0xf]
  %v235 = vld [vmem:[%s1 + $0x218] sm:$0xf]
  %v236 = vld [vmem:[%s1 + $0x21c] sm:$0xf]
  %v237 = vld [vmem:[%s1 + $0x220] sm:$0xf]
  %v238 = vld [vmem:[%s1 + $0x224] sm:$0xf]
  %v239 = vld [vmem:[%s1 + $0x228] sm:$0xf]
  %v240 = vld [vmem:[%s1 + $0x22c] sm:$0xf]
  %v241 = vld [vmem:[%s1 + $0x230] sm:$0xf]
  %v242 = vld [vmem:[%s1 + $0x234] sm:$0xf]
  %v243 = vld [vmem:[%s1 + $0x238] sm:$0xf]
  %v244 = vld [vmem:[%s1 + $0x23c] sm:$0xf]
  %v325 = vunpack.c.l.b16 %v21
  %v326 = vunpack.c.h.b16 %v21
  %v327 = vunpack.c.l.b16 %v22
  %v328 = vunpack.c.h.b16 %v22
  %v329 = vunpack.c.l.b16 %v23
  %v330 = vunpack.c.h.b16 %v23
  %v331 = vunpack.c.l.b16 %v24
  %v332 = vunpack.c.h.b16 %v24
  %v333 = vunpack.c.l.b16 %v25
  %v334 = vunpack.c.l.b16 %v26
  %v335 = vunpack.c.h.b16 %v26
  %v336 = vunpack.c.l.b16 %v27
  %v337 = vunpack.c.h.b16 %v27
  %v338 = vunpack.c.l.b16 %v28
  %v339 = vunpack.c.h.b16 %v28
  %v340 = vunpack.c.l.b16 %v29
  %v341 = vunpack.c.h.b16 %v29
  %v342 = vunpack.c.l.b16 %v30
  %v343 = vunpack.c.l.b16 %v31
  %v344 = vunpack.c.h.b16 %v31
  %v345 = vunpack.c.l.b16 %v32
  %v346 = vunpack.c.h.b16 %v32
  %v347 = vunpack.c.l.b16 %v33
  %v348 = vunpack.c.h.b16 %v33
  %v349 = vunpack.c.l.b16 %v34
  %v350 = vunpack.c.h.b16 %v34
  %v351 = vunpack.c.l.b16 %v35
  %v352 = vunpack.c.l.b16 %v36
  %v353 = vunpack.c.h.b16 %v36
  %v354 = vunpack.c.l.b16 %v37
  %v355 = vunpack.c.h.b16 %v37
  %v356 = vunpack.c.l.b16 %v38
  %v357 = vunpack.c.h.b16 %v38
  %v358 = vunpack.c.l.b16 %v39
  %v359 = vunpack.c.h.b16 %v39
  %v360 = vunpack.c.l.b16 %v40
  %v361 = vunpack.c.l.b16 %v41
  %v362 = vunpack.c.h.b16 %v41
  %v363 = vunpack.c.l.b16 %v42
  %v364 = vunpack.c.h.b16 %v42
  %v365 = vunpack.c.l.b16 %v43
  %v366 = vunpack.c.h.b16 %v43
  %v367 = vunpack.c.l.b16 %v44
  %v368 = vunpack.c.h.b16 %v44
  %v369 = vunpack.c.l.b16 %v45
  %v370 = vunpack.c.l.b16 %v46
  %v371 = vunpack.c.h.b16 %v46
  %v372 = vunpack.c.l.b16 %v47
  %v373 = vunpack.c.h.b16 %v47
  %v374 = vunpack.c.l.b16 %v48
  %v375 = vunpack.c.h.b16 %v48
  %v376 = vunpack.c.l.b16 %v49
  %v377 = vunpack.c.h.b16 %v49
  %v378 = vunpack.c.l.b16 %v50
  %v379 = vunpack.c.l.b16 %v51
  %v380 = vunpack.c.h.b16 %v51
  %v381 = vunpack.c.l.b16 %v52
  %v382 = vunpack.c.h.b16 %v52
  %v383 = vunpack.c.l.b16 %v53
  %v384 = vunpack.c.h.b16 %v53
  %v385 = vunpack.c.l.b16 %v54
  %v386 = vunpack.c.h.b16 %v54
  %v387 = vunpack.c.l.b16 %v55
  %v388 = vunpack.c.l.b16 %v56
  %v389 = vunpack.c.h.b16 %v56
  %v390 = vunpack.c.l.b16 %v57
  %v391 = vunpack.c.h.b16 %v57
  %v392 = vunpack.c.l.b16 %v58
  %v393 = vunpack.c.h.b16 %v58
  %v394 = vunpack.c.l.b16 %v59
  %v395 = vunpack.c.h.b16 %v59
  %v396 = vunpack.c.l.b16 %v60
  %v397 = vunpack.c.l.b16 %v61
  %v398 = vunpack.c.h.b16 %v61
  %v399 = vunpack.c.l.b16 %v62
  %v400 = vunpack.c.h.b16 %v62
  %v401 = vunpack.c.l.b16 %v63
  %v402 = vunpack.c.h.b16 %v63
  %v403 = vunpack.c.l.b16 %v64
  %v404 = vunpack.c.h.b16 %v64
  %v405 = vunpack.c.l.b16 %v65
  %v406 = vunpack.c.l.b16 %v66
  %v407 = vunpack.c.h.b16 %v66
  %v408 = vunpack.c.l.b16 %v67
  %v409 = vunpack.c.h.b16 %v67
  %v410 = vunpack.c.l.b16 %v68
  %v411 = vunpack.c.h.b16 %v68
  %v412 = vunpack.c.l.b16 %v69
  %v413 = vunpack.c.h.b16 %v69
  %v414 = vunpack.c.l.b16 %v70
  %v415 = vunpack.c.l.b16 %v71
  %v416 = vunpack.c.h.b16 %v71
  %v417 = vunpack.c.l.b16 %v72
  %v418 = vunpack.c.h.b16 %v72
  %v419 = vunpack.c.l.b16 %v73
  %v420 = vunpack.c.h.b16 %v73
  %v421 = vunpack.c.l.b16 %v74
  %v422 = vunpack.c.h.b16 %v74
  %v423 = vunpack.c.l.b16 %v75
  %v424 = vunpack.c.l.b16 %v76
  %v425 = vunpack.c.h.b16 %v76
  %v426 = vunpack.c.l.b16 %v77
  %v427 = vunpack.c.h.b16 %v77
  %v428 = vunpack.c.l.b16 %v78
  %v429 = vunpack.c.h.b16 %v78
  %v430 = vunpack.c.l.b16 %v79
  %v431 = vunpack.c.h.b16 %v79
  %v432 = vunpack.c.l.b16 %v80
  %v433 = vunpack.c.l.b16 %v81
  %v434 = vunpack.c.h.b16 %v81
  %v435 = vunpack.c.l.b16 %v82
  %v436 = vunpack.c.h.b16 %v82
  %v437 = vunpack.c.l.b16 %v83
  %v438 = vunpack.c.h.b16 %v83
  %v439 = vunpack.c.l.b16 %v84
  %v440 = vunpack.c.h.b16 %v84
  %v441 = vunpack.c.l.b16 %v85
  %v442 = vunpack.c.l.b16 %v86
  %v443 = vunpack.c.h.b16 %v86
  %v444 = vunpack.c.l.b16 %v87
  %v445 = vunpack.c.h.b16 %v87
  %v446 = vunpack.c.l.b16 %v88
  %v447 = vunpack.c.h.b16 %v88
  %v448 = vunpack.c.l.b16 %v89
  %v449 = vunpack.c.h.b16 %v89
  %v450 = vunpack.c.l.b16 %v90
  %v451 = vunpack.c.l.b16 %v91
  %v452 = vunpack.c.h.b16 %v91
  %v453 = vunpack.c.l.b16 %v92
  %v454 = vunpack.c.h.b16 %v92
  %v455 = vunpack.c.l.b16 %v93
  %v456 = vunpack.c.h.b16 %v93
  %v457 = vunpack.c.l.b16 %v94
  %v458 = vunpack.c.h.b16 %v94
  %v459 = vunpack.c.l.b16 %v95
  %v460 = vunpack.c.l.b16 %v96
  %v461 = vunpack.c.h.b16 %v96
  %v462 = vunpack.c.l.b16 %v97
  %v463 = vunpack.c.h.b16 %v97
  %v464 = vunpack.c.l.b16 %v98
  %v465 = vunpack.c.h.b16 %v98
  %v466 = vunpack.c.l.b16 %v99
  %v467 = vunpack.c.h.b16 %v99
  %v468 = vunpack.c.l.b16 %v100
  %v469 = vpack.c.b16 %v334, %v325
  %v470 = vpack.c.b16 %v335, %v326
  %v471 = vpack.c.b16 %v336, %v327
  %v472 = vpack.c.b16 %v337, %v328
  %v473 = vpack.c.b16 %v338, %v329
  %v474 = vpack.c.b16 %v339, %v330
  %v475 = vpack.c.b16 %v340, %v331
  %v476 = vpack.c.b16 %v341, %v332
  %v477 = vpack.c.b16 %v342, %v333
  %v478 = vpack.c.b16 %v352, %v343
  %v479 = vpack.c.b16 %v353, %v344
  %v480 = vpack.c.b16 %v354, %v345
  %v481 = vpack.c.b16 %v355, %v346
  %v482 = vpack.c.b16 %v356, %v347
  %v483 = vpack.c.b16 %v357, %v348
  %v484 = vpack.c.b16 %v358, %v349
  %v485 = vpack.c.b16 %v359, %v350
  %v486 = vpack.c.b16 %v360, %v351
  %v487 = vpack.c.b16 %v370, %v361
  %v488 = vpack.c.b16 %v371, %v362
  %v489 = vpack.c.b16 %v372, %v363
  %v490 = vpack.c.b16 %v373, %v364
  %v491 = vpack.c.b16 %v374, %v365
  %v492 = vpack.c.b16 %v375, %v366
  %v493 = vpack.c.b16 %v376, %v367
  %v494 = vpack.c.b16 %v377, %v368
  %v495 = vpack.c.b16 %v378, %v369
  %v496 = vpack.c.b16 %v388, %v379
  %v497 = vpack.c.b16 %v389, %v380
  %v498 = vpack.c.b16 %v390, %v381
  %v499 = vpack.c.b16 %v391, %v382
  %v500 = vpack.c.b16 %v392, %v383
  %v501 = vpack.c.b16 %v393, %v384
  %v502 = vpack.c.b16 %v394, %v385
  %v503 = vpack.c.b16 %v395, %v386
  %v504 = vpack.c.b16 %v396, %v387
  %v505 = vpack.c.b16 %v406, %v397
  %v506 = vpack.c.b16 %v407, %v398
  %v507 = vpack.c.b16 %v408, %v399
  %v508 = vpack.c.b16 %v409, %v400
  %v509 = vpack.c.b16 %v410, %v401
  %v510 = vpack.c.b16 %v411, %v402
  %v511 = vpack.c.b16 %v412, %v403
  %v512 = vpack.c.b16 %v413, %v404
  %v513 = vpack.c.b16 %v414, %v405
  %v514 = vpack.c.b16 %v424, %v415
  %v515 = vpack.c.b16 %v425, %v416
  %v516 = vpack.c.b16 %v426, %v417
  %v517 = vpack.c.b16 %v427, %v418
  %v518 = vpack.c.b16 %v428, %v419
  %v519 = vpack.c.b16 %v429, %v420
  %v520 = vpack.c.b16 %v430, %v421
  %v521 = vpack.c.b16 %v431, %v422
  %v522 = vpack.c.b16 %v432, %v423
  %v523 = vpack.c.b16 %v442, %v433
  %v524 = vpack.c.b16 %v443, %v434
  %v525 = vpack.c.b16 %v444, %v435
  %v526 = vpack.c.b16 %v445, %v436
  %v527 = vpack.c.b16 %v446, %v437
  %v528 = vpack.c.b16 %v447, %v438
  %v529 = vpack.c.b16 %v448, %v439
  %v530 = vpack.c.b16 %v449, %v440
  %v531 = vpack.c.b16 %v450, %v441
  %v532 = vpack.c.b16 %v460, %v451
  %v533 = vpack.c.b16 %v461, %v452
  %v534 = vpack.c.b16 %v462, %v453
  %v535 = vpack.c.b16 %v463, %v454
  %v536 = vpack.c.b16 %v464, %v455
  %v537 = vpack.c.b16 %v465, %v456
  %v538 = vpack.c.b16 %v466, %v457
  %v539 = vpack.c.b16 %v467, %v458
  %v540 = vpack.c.b16 %v468, %v459
  %v757 = vunpack.c.l.b16 %v101
  %v758 = vunpack.c.l.b16 %v102
  %v759 = vunpack.c.l.b16 %v103
  %v760 = vunpack.c.l.b16 %v104
  %v761 = vunpack.c.l.b16 %v105
  %v762 = vunpack.c.l.b16 %v106
  %v763 = vunpack.c.l.b16 %v107
  %v764 = vunpack.c.l.b16 %v108
  %v765 = vunpack.c.l.b16 %v109
  %v766 = vunpack.c.l.b16 %v110
  %v767 = vunpack.c.l.b16 %v111
  %v768 = vunpack.c.l.b16 %v112
  %v769 = vunpack.c.l.b16 %v113
  %v770 = vunpack.c.l.b16 %v114
  %v771 = vunpack.c.l.b16 %v115
  %v772 = vunpack.c.l.b16 %v116
  %v773 = vunpack.c.l.b16 %v117
  %v774 = vunpack.c.l.b16 %v118
  %v775 = vunpack.c.l.b16 %v119
  %v776 = vunpack.c.l.b16 %v120
  %v777 = vunpack.c.l.b16 %v121
  %v778 = vunpack.c.l.b16 %v122
  %v779 = vunpack.c.l.b16 %v123
  %v780 = vunpack.c.l.b16 %v124
  %v781 = vunpack.c.l.b16 %v125
  %v782 = vunpack.c.l.b16 %v126
  %v783 = vunpack.c.l.b16 %v127
  %v784 = vunpack.c.l.b16 %v128
  %v785 = vunpack.c.l.b16 %v129
  %v786 = vunpack.c.l.b16 %v130
  %v787 = vunpack.c.l.b16 %v131
  %v788 = vunpack.c.l.b16 %v132
  %v789 = vunpack.c.l.b16 %v133
  %v790 = vunpack.c.l.b16 %v134
  %v791 = vunpack.c.l.b16 %v135
  %v792 = vunpack.c.l.b16 %v136
  %v793 = vunpack.c.l.b16 %v137
  %v794 = vunpack.c.l.b16 %v138
  %v795 = vunpack.c.l.b16 %v139
  %v796 = vunpack.c.l.b16 %v140
  %v797 = vunpack.c.l.b16 %v141
  %v798 = vunpack.c.l.b16 %v142
  %v799 = vunpack.c.l.b16 %v143
  %v800 = vunpack.c.l.b16 %v144
  %v801 = vunpack.c.l.b16 %v145
  %v802 = vunpack.c.l.b16 %v146
  %v803 = vunpack.c.l.b16 %v147
  %v804 = vunpack.c.l.b16 %v148
  %v805 = vunpack.c.l.b16 %v149
  %v806 = vunpack.c.l.b16 %v150
  %v807 = vunpack.c.l.b16 %v151
  %v808 = vunpack.c.l.b16 %v152
  %v809 = vunpack.c.l.b16 %v153
  %v810 = vunpack.c.l.b16 %v154
  %v811 = vunpack.c.l.b16 %v155
  %v812 = vunpack.c.l.b16 %v156
  %v813 = vunpack.c.l.b16 %v157
  %v814 = vunpack.c.l.b16 %v158
  %v815 = vunpack.c.l.b16 %v159
  %v816 = vunpack.c.l.b16 %v160
  %v817 = vunpack.c.l.b16 %v161
  %v818 = vunpack.c.l.b16 %v162
  %v819 = vunpack.c.l.b16 %v163
  %v820 = vunpack.c.l.b16 %v164
  %v821 = vunpack.c.l.b16 %v165
  %v822 = vunpack.c.l.b16 %v166
  %v823 = vunpack.c.l.b16 %v167
  %v824 = vunpack.c.l.b16 %v168
  %v825 = vunpack.c.l.b16 %v169
  %v826 = vunpack.c.l.b16 %v170
  %v827 = vunpack.c.l.b16 %v171
  %v828 = vunpack.c.l.b16 %v172
  %v829 = vunpack.c.l.b16 %v173
  %v830 = vunpack.c.l.b16 %v174
  %v831 = vunpack.c.l.b16 %v175
  %v832 = vunpack.c.l.b16 %v176
  %v833 = vunpack.c.l.b16 %v177
  %v834 = vunpack.c.l.b16 %v178
  %v835 = vunpack.c.l.b16 %v179
  %v836 = vunpack.c.l.b16 %v180
  %v837 = vunpack.c.l.b16 %v181
  %v838 = vunpack.c.l.b16 %v182
  %v839 = vunpack.c.l.b16 %v183
  %v840 = vunpack.c.l.b16 %v184
  %v841 = vunpack.c.l.b16 %v185
  %v842 = vunpack.c.l.b16 %v186
  %v843 = vunpack.c.l.b16 %v187
  %v844 = vunpack.c.l.b16 %v188
  %v845 = vunpack.c.l.b16 %v189
  %v846 = vunpack.c.l.b16 %v190
  %v847 = vunpack.c.l.b16 %v191
  %v848 = vunpack.c.l.b16 %v192
  %v849 = vunpack.c.l.b16 %v193
  %v850 = vunpack.c.l.b16 %v194
  %v851 = vunpack.c.l.b16 %v195
  %v852 = vunpack.c.l.b16 %v196
  %v853 = vunpack.c.l.b16 %v197
  %v854 = vunpack.c.l.b16 %v198
  %v855 = vunpack.c.l.b16 %v199
  %v856 = vunpack.c.l.b16 %v200
  %v857 = vunpack.c.l.b16 %v201
  %v858 = vunpack.c.l.b16 %v202
  %v859 = vunpack.c.l.b16 %v203
  %v860 = vunpack.c.l.b16 %v204
  %v861 = vunpack.c.l.b16 %v205
  %v862 = vunpack.c.l.b16 %v206
  %v863 = vunpack.c.l.b16 %v207
  %v864 = vunpack.c.l.b16 %v208
  %v865 = vunpack.c.l.b16 %v209
  %v866 = vunpack.c.l.b16 %v210
  %v867 = vunpack.c.l.b16 %v211
  %v868 = vunpack.c.l.b16 %v212
  %v869 = vunpack.c.l.b16 %v213
  %v870 = vunpack.c.l.b16 %v214
  %v871 = vunpack.c.l.b16 %v215
  %v872 = vunpack.c.l.b16 %v216
  %v873 = vunpack.c.l.b16 %v217
  %v874 = vunpack.c.l.b16 %v218
  %v875 = vunpack.c.l.b16 %v219
  %v876 = vunpack.c.l.b16 %v220
  %v877 = vunpack.c.l.b16 %v221
  %v878 = vunpack.c.l.b16 %v222
  %v879 = vunpack.c.l.b16 %v223
  %v880 = vunpack.c.l.b16 %v224
  %v881 = vunpack.c.l.b16 %v225
  %v882 = vunpack.c.l.b16 %v226
  %v883 = vunpack.c.l.b16 %v227
  %v884 = vunpack.c.l.b16 %v228
  %v885 = vunpack.c.l.b16 %v229
  %v886 = vunpack.c.l.b16 %v230
  %v887 = vunpack.c.l.b16 %v231
  %v888 = vunpack.c.l.b16 %v232
  %v889 = vunpack.c.l.b16 %v233
  %v890 = vunpack.c.l.b16 %v234
  %v891 = vunpack.c.l.b16 %v235
  %v892 = vunpack.c.l.b16 %v236
  %v893 = vunpack.c.l.b16 %v237
  %v894 = vunpack.c.l.b16 %v238
  %v895 = vunpack.c.l.b16 %v239
  %v896 = vunpack.c.l.b16 %v240
  %v897 = vunpack.c.l.b16 %v241
  %v898 = vunpack.c.l.b16 %v242
  %v899 = vunpack.c.l.b16 %v243
  %v900 = vunpack.c.l.b16 %v244
  %v901 = vpack.c.b16 %v758, %v757
  %v902 = vpack.c.b16 %v760, %v759
  %v903 = vpack.c.b16 %v762, %v761
  %v904 = vpack.c.b16 %v764, %v763
  %v905 = vpack.c.b16 %v766, %v765
  %v906 = vpack.c.b16 %v768, %v767
  %v907 = vpack.c.b16 %v770, %v769
  %v908 = vpack.c.b16 %v772, %v771
  %v909 = vpack.c.b16 %v774, %v773
  %v910 = vpack.c.b16 %v776, %v775
  %v911 = vpack.c.b16 %v778, %v777
  %v912 = vpack.c.b16 %v780, %v779
  %v913 = vpack.c.b16 %v782, %v781
  %v914 = vpack.c.b16 %v784, %v783
  %v915 = vpack.c.b16 %v786, %v785
  %v916 = vpack.c.b16 %v788, %v787
  %v917 = vpack.c.b16 %v790, %v789
  %v918 = vpack.c.b16 %v792, %v791
  %v919 = vpack.c.b16 %v794, %v793
  %v920 = vpack.c.b16 %v796, %v795
  %v921 = vpack.c.b16 %v798, %v797
  %v922 = vpack.c.b16 %v800, %v799
  %v923 = vpack.c.b16 %v802, %v801
  %v924 = vpack.c.b16 %v804, %v803
  %v925 = vpack.c.b16 %v806, %v805
  %v926 = vpack.c.b16 %v808, %v807
  %v927 = vpack.c.b16 %v810, %v809
  %v928 = vpack.c.b16 %v812, %v811
  %v929 = vpack.c.b16 %v814, %v813
  %v930 = vpack.c.b16 %v816, %v815
  %v931 = vpack.c.b16 %v818, %v817
  %v932 = vpack.c.b16 %v820, %v819
  %v933 = vpack.c.b16 %v822, %v821
  %v934 = vpack.c.b16 %v824, %v823
  %v935 = vpack.c.b16 %v826, %v825
  %v936 = vpack.c.b16 %v828, %v827
  %v937 = vpack.c.b16 %v830, %v829
  %v938 = vpack.c.b16 %v832, %v831
  %v939 = vpack.c.b16 %v834, %v833
  %v940 = vpack.c.b16 %v836, %v835
  %v941 = vpack.c.b16 %v838, %v837
  %v942 = vpack.c.b16 %v840, %v839
  %v943 = vpack.c.b16 %v842, %v841
  %v944 = vpack.c.b16 %v844, %v843
  %v945 = vpack.c.b16 %v846, %v845
  %v946 = vpack.c.b16 %v848, %v847
  %v947 = vpack.c.b16 %v850, %v849
  %v948 = vpack.c.b16 %v852, %v851
  %v949 = vpack.c.b16 %v854, %v853
  %v950 = vpack.c.b16 %v856, %v855
  %v951 = vpack.c.b16 %v858, %v857
  %v952 = vpack.c.b16 %v860, %v859
  %v953 = vpack.c.b16 %v862, %v861
  %v954 = vpack.c.b16 %v864, %v863
  %v955 = vpack.c.b16 %v866, %v865
  %v956 = vpack.c.b16 %v868, %v867
  %v957 = vpack.c.b16 %v870, %v869
  %v958 = vpack.c.b16 %v872, %v871
  %v959 = vpack.c.b16 %v874, %v873
  %v960 = vpack.c.b16 %v876, %v875
  %v961 = vpack.c.b16 %v878, %v877
  %v962 = vpack.c.b16 %v880, %v879
  %v963 = vpack.c.b16 %v882, %v881
  %v964 = vpack.c.b16 %v884, %v883
  %v965 = vpack.c.b16 %v886, %v885
  %v966 = vpack.c.b16 %v888, %v887
  %v967 = vpack.c.b16 %v890, %v889
  %v968 = vpack.c.b16 %v892, %v891
  %v969 = vpack.c.b16 %v894, %v893
  %v970 = vpack.c.b16 %v896, %v895
  %v971 = vpack.c.b16 %v898, %v897
  %v972 = vpack.c.b16 %v900, %v899
  %1045 = vmatprep.subr.bf16.mxu0 0
  %1046 = vmatpush1.bf16.msra.mxu0 %v901
  %1047 = vmatprep.subr.bf16.mxu0 0
  %1048 = vmatpush1.bf16.msra.mxu0 %v902
  %1049 = vmatprep.subr.bf16.mxu0 0
  %1050 = vmatpush1.bf16.msra.mxu0 %v903
  %1051 = vmatprep.subr.bf16.mxu0 0
  %1052 = vmatpush1.bf16.msra.mxu0 %v904
  %1053 = vmatprep.subr.bf16.mxu0 0
  %1054 = vmatpush1.bf16.msra.mxu0 %v905
  %1055 = vmatprep.subr.bf16.mxu0 0
  %1056 = vmatpush1.bf16.msra.mxu0 %v906
  %1057 = vmatprep.subr.bf16.mxu0 0
  %1058 = vmatpush1.bf16.msra.mxu0 %v907
  %1059 = vmatprep.subr.bf16.mxu0 0
  %1060 = vmatpush1.bf16.msra.mxu0 %v908
  %1061 = vmatprep.subr.bf16.mxu0 0
  %1062 = vmatpush1.bf16.msra.mxu0 %v909
  %1063 = vmatprep.subr.bf16.mxu0 0
  %1064 = vmatpush1.bf16.msra.mxu0 %v910
  %1065 = vmatprep.subr.bf16.mxu0 0
  %1066 = vmatpush1.bf16.msra.mxu0 %v911
  %1067 = vmatprep.subr.bf16.mxu0 0
  %1068 = vmatpush1.bf16.msra.mxu0 %v912
  %1069 = vmatprep.subr.bf16.mxu0 0
  %1070 = vmatpush1.bf16.msra.mxu0 %v913
  %1071 = vmatprep.subr.bf16.mxu0 0
  %1072 = vmatpush1.bf16.msra.mxu0 %v914
  %1073 = vmatprep.subr.bf16.mxu0 0
  %1074 = vmatpush1.bf16.msra.mxu0 %v915
  %1075 = vmatprep.subr.bf16.mxu0 0
  %1076 = vmatpush1.bf16.msra.mxu0 %v916
  %1077 = vmatprep.mubr.bf16.mxu0 %v470
  %1078 = vmatmul.mubr.bf16.gmra.mrb[0].mxu0 %v469
  %v1079 = vpop.f32.mrb[0].mxu0
  %v1080 = vadd.f32 0.0, %v1079
  %v1081 = vpop.f32.mrb[0].mxu0
  %v1082 = vpop.f32.mrb[0].mxu0
  %v1083 = vadd.f32 0.0, %v1082
  %v1084 = vpop.f32.mrb[0].mxu0
  %1085 = vmatprep.mubr.bf16.mxu0 %v479
  %1086 = vmatmul.mubr.bf16.gmra.mrb[0].mxu0 %v478
  %v1087 = vpop.f32.mrb[0].mxu0
  %v1088 = vadd.f32 0.0, %v1087
  %v1089 = vpop.f32.mrb[0].mxu0
  %v1090 = vpop.f32.mrb[0].mxu0
  %v1091 = vadd.f32 0.0, %v1090
  %v1092 = vpop.f32.mrb[0].mxu0
  %1093 = vmatprep.mubr.bf16.mxu0 %v488
  %1094 = vmatmul.mubr.bf16.gmra.mrb[0].mxu0 %v487
  %v1095 = vpop.f32.mrb[0].mxu0
  %v1096 = vadd.f32 0.0, %v1095
  %v1097 = vpop.f32.mrb[0].mxu0
  %v1098 = vpop.f32.mrb[0].mxu0
  %v1099 = vadd.f32 0.0, %v1098
  %v1100 = vpop.f32.mrb[0].mxu0
  %1101 = vmatprep.mubr.bf16.mxu0 %v497
  %1102 = vmatmul.mubr.bf16.gmra.mrb[0].mxu0 %v496
  %v1103 = vpop.f32.mrb[0].mxu0
  %v1104 = vadd.f32 0.0, %v1103
  %v1105 = vpop.f32.mrb[0].mxu0
  %v1106 = vpop.f32.mrb[0].mxu0
  %v1107 = vadd.f32 0.0, %v1106
  %v1108 = vpop.f32.mrb[0].mxu0
  %1109 = vmatprep.mubr.bf16.mxu0 %v506
  %1110 = vmatmul.mubr.bf16.gmra.mrb[0].mxu0 %v505
  %v1111 = vpop.f32.mrb[0].mxu0
  %v1112 = vadd.f32 0.0, %v1111
  %v1113 = vpop.f32.mrb[0].mxu0
  %v1114 = vpop.f32.mrb[0].mxu0
  %v1115 = vadd.f32 0.0, %v1114
  %v1116 = vpop.f32.mrb[0].mxu0
  %1117 = vmatprep.mubr.bf16.mxu0 %v515
  %1118 = vmatmul.mubr.bf16.gmra.mrb[0].mxu0 %v514
  %v1119 = vpop.f32.mrb[0].mxu0
  %v1120 = vadd.f32 0.0, %v1119
  %v1121 = vpop.f32.mrb[0].mxu0
  %v1122 = vpop.f32.mrb[0].mxu0
  %v1123 = vadd.f32 0.0, %v1122
  %v1124 = vpop.f32.mrb[0].mxu0
  %1125 = vmatprep.mubr.bf16.mxu0 %v524
  %1126 = vmatmul.mubr.bf16.gmra.mrb[0].mxu0 %v523
  %v1127 = vpop.f32.mrb[0].mxu0
  %v1128 = vadd.f32 0.0, %v1127
  %v1129 = vpop.f32.mrb[0].mxu0
  %v1130 = vpop.f32.mrb[0].mxu0
  %v1131 = vadd.f32 0.0, %v1130
  %v1132 = vpop.f32.mrb[0].mxu0
  %1133 = vmatprep.mubr.bf16.mxu0 %v533
  %1134 = vmatmul.mubr.bf16.gmra.mrb[0].mxu0 %v532
  %v1135 = vpop.f32.mrb[0].mxu0
  %v1136 = vadd.f32 0.0, %v1135
  %v1137 = vpop.f32.mrb[0].mxu0
  %v1138 = vpop.f32.mrb[0].mxu0
  %v1139 = vadd.f32 0.0, %v1138
  %v1140 = vpop.f32.mrb[0].mxu0
  %1141 = vdwg.mxu0
  %1142 = vmatprep.subr.bf16.mxu0 0
  %1143 = vmatpush1.bf16.msra.mxu0 %v917
  %1144 = vmatprep.subr.bf16.mxu0 0
  %1145 = vmatpush1.bf16.msra.mxu0 %v918
  %1146 = vmatprep.subr.bf16.mxu0 0
  %1147 = vmatpush1.bf16.msra.mxu0 %v919
  %1148 = vmatprep.subr.bf16.mxu0 0
  %1149 = vmatpush1.bf16.msra.mxu0 %v920
  %1150 = vmatprep.subr.bf16.mxu0 0
  %1151 = vmatpush1.bf16.msra.mxu0 %v921
  %1152 = vmatprep.subr.bf16.mxu0 0
  %1153 = vmatpush1.bf16.msra.mxu0 %v922
  %1154 = vmatprep.subr.bf16.mxu0 0
  %1155 = vmatpush1.bf16.msra.mxu0 %v923
  %1156 = vmatprep.subr.bf16.mxu0 0
  %1157 = vmatpush1.bf16.msra.mxu0 %v924
  %1158 = vmatprep.subr.bf16.mxu0 0
  %1159 = vmatpush1.bf16.msra.mxu0 %v925
  %1160 = vmatprep.subr.bf16.mxu0 0
  %1161 = vmatpush1.bf16.msra.mxu0 %v926
  %1162 = vmatprep.subr.bf16.mxu0 0
  %1163 = vmatpush1.bf16.msra.mxu0 %v927
  %1164 = vmatprep.subr.bf16.mxu0 0
  %1165 = vmatpush1.bf16.msra.mxu0 %v928
  %1166 = vmatprep.subr.bf16.mxu0 0
  %1167 = vmatpush1.bf16.msra.mxu0 %v929
  %1168 = vmatprep.subr.bf16.mxu0 0
  %1169 = vmatpush1.bf16.msra.mxu0 %v930
  %1170 = vmatprep.subr.bf16.mxu0 0
  %1171 = vmatpush1.bf16.msra.mxu0 %v931
  %1172 = vmatprep.subr.bf16.mxu0 0
  %1173 = vmatpush1.bf16.msra.mxu0 %v932
  %1174 = vmatprep.mubr.bf16.mxu0 %v472
  %1175 = vmatmul.mubr.bf16.gmra.mrb[0].mxu0 %v471
  %v1176 = vpop.f32.mrb[0].mxu0
  %v1177 = vadd.f32 %v1080, %v1176
  %v1178 = vpop.f32.mrb[0].mxu0
  %v1179 = vpop.f32.mrb[0].mxu0
  %v1180 = vadd.f32 %v1083, %v1179
  %v1181 = vpop.f32.mrb[0].mxu0
  %1182 = vmatprep.mubr.bf16.mxu0 %v481
  %1183 = vmatmul.mubr.bf16.gmra.mrb[0].mxu0 %v480
  %v1184 = vpop.f32.mrb[0].mxu0
  %v1185 = vadd.f32 %v1088, %v1184
  %v1186 = vpop.f32.mrb[0].mxu0
  %v1187 = vpop.f32.mrb[0].mxu0
  %v1188 = vadd.f32 %v1091, %v1187
  %v1189 = vpop.f32.mrb[0].mxu0
  %1190 = vmatprep.mubr.bf16.mxu0 %v490
  %1191 = vmatmul.mubr.bf16.gmra.mrb[0].mxu0 %v489
  %v1192 = vpop.f32.mrb[0].mxu0
  %v1193 = vadd.f32 %v1096, %v1192
  %v1194 = vpop.f32.mrb[0].mxu0
  %v1195 = vpop.f32.mrb[0].mxu0
  %v1196 = vadd.f32 %v1099, %v1195
  %v1197 = vpop.f32.mrb[0].mxu0
  %1198 = vmatprep.mubr.bf16.mxu0 %v499
  %1199 = vmatmul.mubr.bf16.gmra.mrb[0].mxu0 %v498
  %v1200 = vpop.f32.mrb[0].mxu0
  %v1201 = vadd.f32 %v1104, %v1200
  %v1202 = vpop.f32.mrb[0].mxu0
  %v1203 = vpop.f32.mrb[0].mxu0
  %v1204 = vadd.f32 %v1107, %v1203
  %v1205 = vpop.f32.mrb[0].mxu0
  %1206 = vmatprep.mubr.bf16.mxu0 %v508
  %1207 = vmatmul.mubr.bf16.gmra.mrb[0].mxu0 %v507
  %v1208 = vpop.f32.mrb[0].mxu0
  %v1209 = vadd.f32 %v1112, %v1208
  %v1210 = vpop.f32.mrb[0].mxu0
  %v1211 = vpop.f32.mrb[0].mxu0
  %v1212 = vadd.f32 %v1115, %v1211
  %v1213 = vpop.f32.mrb[0].mxu0
  %1214 = vmatprep.mubr.bf16.mxu0 %v517
  %1215 = vmatmul.mubr.bf16.gmra.mrb[0].mxu0 %v516
  %v1216 = vpop.f32.mrb[0].mxu0
  %v1217 = vadd.f32 %v1120, %v1216
  %v1218 = vpop.f32.mrb[0].mxu0
  %v1219 = vpop.f32.mrb[0].mxu0
  %v1220 = vadd.f32 %v1123, %v1219
  %v1221 = vpop.f32.mrb[0].mxu0
  %1222 = vmatprep.mubr.bf16.mxu0 %v526
  %1223 = vmatmul.mubr.bf16.gmra.mrb[0].mxu0 %v525
  %v1224 = vpop.f32.mrb[0].mxu0
  %v1225 = vadd.f32 %v1128, %v1224
  %v1226 = vpop.f32.mrb[0].mxu0
  %v1227 = vpop.f32.mrb[0].mxu0
  %v1228 = vadd.f32 %v1131, %v1227
  %v1229 = vpop.f32.mrb[0].mxu0
  %1230 = vmatprep.mubr.bf16.mxu0 %v535
  %1231 = vmatmul.mubr.bf16.gmra.mrb[0].mxu0 %v534
  %v1232 = vpop.f32.mrb[0].mxu0
  %v1233 = vadd.f32 %v1136, %v1232
  %v1234 = vpop.f32.mrb[0].mxu0
  %v1235 = vpop.f32.mrb[0].mxu0
  %v1236 = vadd.f32 %v1139, %v1235
  %v1237 = vpop.f32.mrb[0].mxu0
  %1238 = vdwg.mxu0
  %1239 = vmatprep.subr.bf16.mxu0 0
  %1240 = vmatpush1.bf16.msra.mxu0 %v933
  %1241 = vmatprep.subr.bf16.mxu0 0
  %1242 = vmatpush1.bf16.msra.mxu0 %v934
  %1243 = vmatprep.subr.bf16.mxu0 0
  %1244 = vmatpush1.bf16.msra.mxu0 %v935
  %1245 = vmatprep.subr.bf16.mxu0 0
  %1246 = vmatpush1.bf16.msra.mxu0 %v936
  %1247 = vmatprep.subr.bf16.mxu0 0
  %1248 = vmatpush1.bf16.msra.mxu0 %v937
  %1249 = vmatprep.subr.bf16.mxu0 0
  %1250 = vmatpush1.bf16.msra.mxu0 %v938
  %1251 = vmatprep.subr.bf16.mxu0 0
  %1252 = vmatpush1.bf16.msra.mxu0 %v939
  %1253 = vmatprep.subr.bf16.mxu0 0
  %1254 = vmatpush1.bf16.msra.mxu0 %v940
  %1255 = vmatprep.subr.bf16.mxu0 0
  %1256 = vmatpush1.bf16.msra.mxu0 %v941
  %1257 = vmatprep.subr.bf16.mxu0 0
  %1258 = vmatpush1.bf16.msra.mxu0 %v942
  %1259 = vmatprep.subr.bf16.mxu0 0
  %1260 = vmatpush1.bf16.msra.mxu0 %v943
  %1261 = vmatprep.subr.bf16.mxu0 0
  %1262 = vmatpush1.bf16.msra.mxu0 %v944
  %1263 = vmatprep.subr.bf16.mxu0 0
  %1264 = vmatpush1.bf16.msra.mxu0 %v945
  %1265 = vmatprep.subr.bf16.mxu0 0
  %1266 = vmatpush1.bf16.msra.mxu0 %v946
  %1267 = vmatprep.subr.bf16.mxu0 0
  %1268 = vmatpush1.bf16.msra.mxu0 %v947
  %1269 = vmatprep.subr.bf16.mxu0 0
  %1270 = vmatpush1.bf16.msra.mxu0 %v948
  %1271 = vmatprep.mubr.bf16.mxu0 %v474
  %1272 = vmatmul.mubr.bf16.gmra.mrb[0].mxu0 %v473
  %v1273 = vpop.f32.mrb[0].mxu0
  %v1274 = vadd.f32 %v1177, %v1273
  %v1275 = vpop.f32.mrb[0].mxu0
  %v1276 = vpop.f32.mrb[0].mxu0
  %v1277 = vadd.f32 %v1180, %v1276
  %v1278 = vpop.f32.mrb[0].mxu0
  %1279 = vmatprep.mubr.bf16.mxu0 %v483
  %1280 = vmatmul.mubr.bf16.gmra.mrb[0].mxu0 %v482
  %v1281 = vpop.f32.mrb[0].mxu0
  %v1282 = vadd.f32 %v1185, %v1281
  %v1283 = vpop.f32.mrb[0].mxu0
  %v1284 = vpop.f32.mrb[0].mxu0
  %v1285 = vadd.f32 %v1188, %v1284
  %v1286 = vpop.f32.mrb[0].mxu0
  %1287 = vmatprep.mubr.bf16.mxu0 %v492
  %1288 = vmatmul.mubr.bf16.gmra.mrb[0].mxu0 %v491
  %v1289 = vpop.f32.mrb[0].mxu0
  %v1290 = vadd.f32 %v1193, %v1289
  %v1291 = vpop.f32.mrb[0].mxu0
  %v1292 = vpop.f32.mrb[0].mxu0
  %v1293 = vadd.f32 %v1196, %v1292
  %v1294 = vpop.f32.mrb[0].mxu0
  %1295 = vmatprep.mubr.bf16.mxu0 %v501
  %1296 = vmatmul.mubr.bf16.gmra.mrb[0].mxu0 %v500
  %v1297 = vpop.f32.mrb[0].mxu0
  %v1298 = vadd.f32 %v1201, %v1297
  %v1299 = vpop.f32.mrb[0].mxu0
  %v1300 = vpop.f32.mrb[0].mxu0
  %v1301 = vadd.f32 %v1204, %v1300
  %v1302 = vpop.f32.mrb[0].mxu0
  %1303 = vmatprep.mubr.bf16.mxu0 %v510
  %1304 = vmatmul.mubr.bf16.gmra.mrb[0].mxu0 %v509
  %v1305 = vpop.f32.mrb[0].mxu0
  %v1306 = vadd.f32 %v1209, %v1305
  %v1307 = vpop.f32.mrb[0].mxu0
  %v1308 = vpop.f32.mrb[0].mxu0
  %v1309 = vadd.f32 %v1212, %v1308
  %v1310 = vpop.f32.mrb[0].mxu0
  %1311 = vmatprep.mubr.bf16.mxu0 %v519
  %1312 = vmatmul.mubr.bf16.gmra.mrb[0].mxu0 %v518
  %v1313 = vpop.f32.mrb[0].mxu0
  %v1314 = vadd.f32 %v1217, %v1313
  %v1315 = vpop.f32.mrb[0].mxu0
  %v1316 = vpop.f32.mrb[0].mxu0
  %v1317 = vadd.f32 %v1220, %v1316
  %v1318 = vpop.f32.mrb[0].mxu0
  %1319 = vmatprep.mubr.bf16.mxu0 %v528
  %1320 = vmatmul.mubr.bf16.gmra.mrb[0].mxu0 %v527
  %v1321 = vpop.f32.mrb[0].mxu0
  %v1322 = vadd.f32 %v1225, %v1321
  %v1323 = vpop.f32.mrb[0].mxu0
  %v1324 = vpop.f32.mrb[0].mxu0
  %v1325 = vadd.f32 %v1228, %v1324
  %v1326 = vpop.f32.mrb[0].mxu0
  %1327 = vmatprep.mubr.bf16.mxu0 %v537
  %1328 = vmatmul.mubr.bf16.gmra.mrb[0].mxu0 %v536
  %v1329 = vpop.f32.mrb[0].mxu0
  %v1330 = vadd.f32 %v1233, %v1329
  %v1331 = vpop.f32.mrb[0].mxu0
  %v1332 = vpop.f32.mrb[0].mxu0
  %v1333 = vadd.f32 %v1236, %v1332
  %v1334 = vpop.f32.mrb[0].mxu0
  %1335 = vdwg.mxu0
  %1336 = vmatprep.subr.bf16.mxu0 0
  %1337 = vmatpush1.bf16.msra.mxu0 %v949
  %1338 = vmatprep.subr.bf16.mxu0 0
  %1339 = vmatpush1.bf16.msra.mxu0 %v950
  %1340 = vmatprep.subr.bf16.mxu0 0
  %1341 = vmatpush1.bf16.msra.mxu0 %v951
  %1342 = vmatprep.subr.bf16.mxu0 0
  %1343 = vmatpush1.bf16.msra.mxu0 %v952
  %1344 = vmatprep.subr.bf16.mxu0 0
  %1345 = vmatpush1.bf16.msra.mxu0 %v953
  %1346 = vmatprep.subr.bf16.mxu0 0
  %1347 = vmatpush1.bf16.msra.mxu0 %v954
  %1348 = vmatprep.subr.bf16.mxu0 0
  %1349 = vmatpush1.bf16.msra.mxu0 %v955
  %1350 = vmatprep.subr.bf16.mxu0 0
  %1351 = vmatpush1.bf16.msra.mxu0 %v956
  %1352 = vmatprep.subr.bf16.mxu0 0
  %1353 = vmatpush1.bf16.msra.mxu0 %v957
  %1354 = vmatprep.subr.bf16.mxu0 0
  %1355 = vmatpush1.bf16.msra.mxu0 %v958
  %1356 = vmatprep.subr.bf16.mxu0 0
  %1357 = vmatpush1.bf16.msra.mxu0 %v959
  %1358 = vmatprep.subr.bf16.mxu0 0
  %1359 = vmatpush1.bf16.msra.mxu0 %v960
  %1360 = vmatprep.subr.bf16.mxu0 0
  %1361 = vmatpush1.bf16.msra.mxu0 %v961
  %1362 = vmatprep.subr.bf16.mxu0 0
  %1363 = vmatpush1.bf16.msra.mxu0 %v962
  %1364 = vmatprep.subr.bf16.mxu0 0
  %1365 = vmatpush1.bf16.msra.mxu0 %v963
  %1366 = vmatprep.subr.bf16.mxu0 0
  %1367 = vmatpush1.bf16.msra.mxu0 %v964
  %1368 = vmatprep.mubr.bf16.mxu0 %v476
  %1369 = vmatmul.mubr.bf16.gmra.mrb[0].mxu0 %v475
  %v1370 = vpop.f32.mrb[0].mxu0
  %v1371 = vadd.f32 %v1274, %v1370
  %v1372 = vpop.f32.mrb[0].mxu0
  %v1373 = vpop.f32.mrb[0].mxu0
  %v1374 = vadd.f32 %v1277, %v1373
  %v1375 = vpop.f32.mrb[0].mxu0
  %1376 = vmatprep.mubr.bf16.mxu0 %v485
  %1377 = vmatmul.mubr.bf16.gmra.mrb[0].mxu0 %v484
  %v1378 = vpop.f32.mrb[0].mxu0
  %v1379 = vadd.f32 %v1282, %v1378
  %v1380 = vpop.f32.mrb[0].mxu0
  %v1381 = vpop.f32.mrb[0].mxu0
  %v1382 = vadd.f32 %v1285, %v1381
  %v1383 = vpop.f32.mrb[0].mxu0
  %1384 = vmatprep.mubr.bf16.mxu0 %v494
  %1385 = vmatmul.mubr.bf16.gmra.mrb[0].mxu0 %v493
  %v1386 = vpop.f32.mrb[0].mxu0
  %v1387 = vadd.f32 %v1290, %v1386
  %v1388 = vpop.f32.mrb[0].mxu0
  %v1389 = vpop.f32.mrb[0].mxu0
  %v1390 = vadd.f32 %v1293, %v1389
  %v1391 = vpop.f32.mrb[0].mxu0
  %1392 = vmatprep.mubr.bf16.mxu0 %v503
  %1393 = vmatmul.mubr.bf16.gmra.mrb[0].mxu0 %v502
  %v1394 = vpop.f32.mrb[0].mxu0
  %v1395 = vadd.f32 %v1298, %v1394
  %v1396 = vpop.f32.mrb[0].mxu0
  %v1397 = vpop.f32.mrb[0].mxu0
  %v1398 = vadd.f32 %v1301, %v1397
  %v1399 = vpop.f32.mrb[0].mxu0
  %1400 = vmatprep.mubr.bf16.mxu0 %v512
  %1401 = vmatmul.mubr.bf16.gmra.mrb[0].mxu0 %v511
  %v1402 = vpop.f32.mrb[0].mxu0
  %v1403 = vadd.f32 %v1306, %v1402
  %v1404 = vpop.f32.mrb[0].mxu0
  %v1405 = vpop.f32.mrb[0].mxu0
  %v1406 = vadd.f32 %v1309, %v1405
  %v1407 = vpop.f32.mrb[0].mxu0
  %1408 = vmatprep.mubr.bf16.mxu0 %v521
  %1409 = vmatmul.mubr.bf16.gmra.mrb[0].mxu0 %v520
  %v1410 = vpop.f32.mrb[0].mxu0
  %v1411 = vadd.f32 %v1314, %v1410
  %v1412 = vpop.f32.mrb[0].mxu0
  %v1413 = vpop.f32.mrb[0].mxu0
  %v1414 = vadd.f32 %v1317, %v1413
  %v1415 = vpop.f32.mrb[0].mxu0
  %1416 = vmatprep.mubr.bf16.mxu0 %v530
  %1417 = vmatmul.mubr.bf16.gmra.mrb[0].mxu0 %v529
  %v1418 = vpop.f32.mrb[0].mxu0
  %v1419 = vadd.f32 %v1322, %v1418
  %v1420 = vpop.f32.mrb[0].mxu0
  %v1421 = vpop.f32.mrb[0].mxu0
  %v1422 = vadd.f32 %v1325, %v1421
  %v1423 = vpop.f32.mrb[0].mxu0
  %1424 = vmatprep.mubr.bf16.mxu0 %v539
  %1425 = vmatmul.mubr.bf16.gmra.mrb[0].mxu0 %v538
  %v1426 = vpop.f32.mrb[0].mxu0
  %v1427 = vadd.f32 %v1330, %v1426
  %v1428 = vpop.f32.mrb[0].mxu0
  %v1429 = vpop.f32.mrb[0].mxu0
  %v1430 = vadd.f32 %v1333, %v1429
  %v1431 = vpop.f32.mrb[0].mxu0
  %1432 = vdwg.mxu0
  %1433 = vmatprep.subr.bf16.mxu0 0
  %1434 = vmatpush1.bf16.msra.mxu0 %v965
  %1435 = vmatprep.subr.bf16.mxu0 0
  %1436 = vmatpush1.bf16.msra.mxu0 %v966
  %1437 = vmatprep.subr.bf16.mxu0 0
  %1438 = vmatpush1.bf16.msra.mxu0 %v967
  %1439 = vmatprep.subr.bf16.mxu0 0
  %1440 = vmatpush1.bf16.msra.mxu0 %v968
  %1441 = vmatprep.subr.bf16.mxu0 0
  %1442 = vmatpush1.bf16.msra.mxu0 %v969
  %1443 = vmatprep.subr.bf16.mxu0 0
  %1444 = vmatpush1.bf16.msra.mxu0 %v970
  %1445 = vmatprep.subr.bf16.mxu0 0
  %1446 = vmatpush1.bf16.msra.mxu0 %v971
  %1447 = vmatprep.subr.bf16.mxu0 0
  %1448 = vmatpush1.bf16.msra.mxu0 %v972
  %1449 = vmatprep.subr.bf16.mxu0 0
  %1450 = vmatpush1.bf16.msra.mxu0 0
  %1451 = vmatprep.subr.bf16.mxu0 0
  %1452 = vmatpush1.bf16.msra.mxu0 0
  %1453 = vmatprep.subr.bf16.mxu0 0
  %1454 = vmatpush1.bf16.msra.mxu0 0
  %1455 = vmatprep.subr.bf16.mxu0 0
  %1456 = vmatpush1.bf16.msra.mxu0 0
  %1457 = vmatprep.subr.bf16.mxu0 0
  %1458 = vmatpush1.bf16.msra.mxu0 0
  %1459 = vmatprep.subr.bf16.mxu0 0
  %1460 = vmatpush1.bf16.msra.mxu0 0
  %1461 = vmatprep.subr.bf16.mxu0 0
  %1462 = vmatpush1.bf16.msra.mxu0 0
  %1463 = vmatprep.subr.bf16.mxu0 0
  %1464 = vmatpush1.bf16.msra.mxu0 0
  %1465 = vmatprep.mubr.bf16.mxu0 0
  %1466 = vmatmul.mubr.bf16.gmra.mrb[0].mxu0 %v477
  %v1467 = vpop.f32.mrb[0].mxu0
  %v1468 = vadd.f32 %v1371, %v1467
  %v1469 = vpop.f32.mrb[0].mxu0
  %v1470 = vpop.f32.mrb[0].mxu0
  %v1471 = vadd.f32 %v1374, %v1470
  %v1472 = vpop.f32.mrb[0].mxu0
  %1473 = vmatprep.mubr.bf16.mxu0 0
  %1474 = vmatmul.mubr.bf16.gmra.mrb[0].mxu0 %v486
  %v1475 = vpop.f32.mrb[0].mxu0
  %v1476 = vadd.f32 %v1379, %v1475
  %v1477 = vpop.f32.mrb[0].mxu0
  %v1478 = vpop.f32.mrb[0].mxu0
  %v1479 = vadd.f32 %v1382, %v1478
  %v1480 = vpop.f32.mrb[0].mxu0
  %1481 = vmatprep.mubr.bf16.mxu0 0
  %1482 = vmatmul.mubr.bf16.gmra.mrb[0].mxu0 %v495
  %v1483 = vpop.f32.mrb[0].mxu0
  %v1484 = vadd.f32 %v1387, %v1483
  %v1485 = vpop.f32.mrb[0].mxu0
  %v1486 = vpop.f32.mrb[0].mxu0
  %v1487 = vadd.f32 %v1390, %v1486
  %v1488 = vpop.f32.mrb[0].mxu0
  %1489 = vmatprep.mubr.bf16.mxu0 0
  %1490 = vmatmul.mubr.bf16.gmra.mrb[0].mxu0 %v504
  %v1491 = vpop.f32.mrb[0].mxu0
  %v1492 = vadd.f32 %v1395, %v1491
  %v1493 = vpop.f32.mrb[0].mxu0
  %v1494 = vpop.f32.mrb[0].mxu0
  %v1495 = vadd.f32 %v1398, %v1494
  %v1496 = vpop.f32.mrb[0].mxu0
  %1497 = vmatprep.mubr.bf16.mxu0 0
  %1498 = vmatmul.mubr.bf16.gmra.mrb[0].mxu0 %v513
  %v1499 = vpop.f32.mrb[0].mxu0
  %v1500 = vadd.f32 %v1403, %v1499
  %v1501 = vpop.f32.mrb[0].mxu0
  %v1502 = vpop.f32.mrb[0].mxu0
  %v1503 = vadd.f32 %v1406, %v1502
  %v1504 = vpop.f32.mrb[0].mxu0
  %1505 = vmatprep.mubr.bf16.mxu0 0
  %1506 = vmatmul.mubr.bf16.gmra.mrb[0].mxu0 %v522
  %v1507 = vpop.f32.mrb[0].mxu0
  %v1508 = vadd.f32 %v1411, %v1507
  %v1509 = vpop.f32.mrb[0].mxu0
  %v1510 = vpop.f32.mrb[0].mxu0
  %v1511 = vadd.f32 %v1414, %v1510
  %v1512 = vpop.f32.mrb[0].mxu0
  %1513 = vmatprep.mubr.bf16.mxu0 0
  %1514 = vmatmul.mubr.bf16.gmra.mrb[0].mxu0 %v531
  %v1515 = vpop.f32.mrb[0].mxu0
  %v1516 = vadd.f32 %v1419, %v1515
  %v1517 = vpop.f32.mrb[0].mxu0
  %v1518 = vpop.f32.mrb[0].mxu0
  %v1519 = vadd.f32 %v1422, %v1518
  %v1520 = vpop.f32.mrb[0].mxu0
  %1521 = vmatprep.mubr.bf16.mxu0 0
  %1522 = vmatmul.mubr.bf16.gmra.mrb[0].mxu0 %v540
  %v1523 = vpop.f32.mrb[0].mxu0
  %v1524 = vadd.f32 %v1427, %v1523
  %v1525 = vpop.f32.mrb[0].mxu0
  %v1526 = vpop.f32.mrb[0].mxu0
  %v1527 = vadd.f32 %v1430, %v1526
  %v1528 = vpop.f32.mrb[0].mxu0
  %1529 = vdwg.mxu0
  %1530 = vst [vmem:[%s2] sm:$0xff] %v1468
  %1531 = vst [vmem:[%s2 + $0x8] sm:$0xff] %v1471
  %1532 = vst [vmem:[%s2 + $0x10] sm:$0xff] %v1476
  %1533 = vst [vmem:[%s2 + $0x18] sm:$0xff] %v1479
  %1534 = vst [vmem:[%s2 + $0x20] sm:$0xff] %v1484
  %1535 = vst [vmem:[%s2 + $0x28] sm:$0xff] %v1487
  %1536 = vst [vmem:[%s2 + $0x30] sm:$0xff] %v1492
  %1537 = vst [vmem:[%s2 + $0x38] sm:$0xff] %v1495
  %1538 = vst [vmem:[%s2 + $0x40] sm:$0xff] %v1500
  %1539 = vst [vmem:[%s2 + $0x48] sm:$0xff] %v1503
  %1540 = vst [vmem:[%s2 + $0x50] sm:$0xff] %v1508
  %1541 = vst [vmem:[%s2 + $0x58] sm:$0xff] %v1511
  %1542 = vst [vmem:[%s2 + $0x60] sm:$0xff] %v1516
  %1543 = vst [vmem:[%s2 + $0x68] sm:$0xff] %v1519
  %1544 = vst [vmem:[%s2 + $0x70] sm:$0xff] %v1524
  %1545 = vst [vmem:[%s2 + $0x78] sm:$0xff] %v1527
  %v1546 = vld [vmem:[%s3] sm:$0x1]
  %v1547 = vadd.f32 %v1468, %v1471
  %v1548 = vadd.f32 %v1547, %v1476
  %v1549 = vadd.f32 %v1548, %v1479
  %v1550 = vadd.f32 %v1549, %v1484
  %v1551 = vadd.f32 %v1550, %v1487
  %v1552 = vadd.f32 %v1551, %v1492
  %v1553 = vadd.f32 %v1552, %v1495
  %v1554 = vadd.f32 %v1553, %v1500
  %v1555 = vadd.f32 %v1554, %v1503
  %v1556 = vadd.f32 %v1555, %v1508
  %v1557 = vadd.f32 %v1556, %v1511
  %v1558 = vadd.f32 %v1557, %v1516
  %v1559 = vadd.f32 %v1558, %v1519
  %v1560 = vadd.f32 %v1559, %v1524
  %v1561 = vadd.f32 %v1560, %v1527
  %v1562 = vrot.slane %v1561, 4
  %v1563 = vadd.f32 %v1561, %v1562
  %v1564 = vrot.slane %v1563, 2
  %v1565 = vadd.f32 %v1563, %v1564
  %v1566 = vrot.slane %v1565, 1
  %v1567 = vadd.f32 %v1565, %v1566
  %v1568 = vadd.f32 %v1546, %v1567
  %1569 = vst [vmem:[%s3] sm:$0x1] %v1568
  %v1570 = vld [vmem:[%s4] sm:$0x1]
  %v1571 = vmul.f32 %v1468, %v1468
  %v1572 = vmul.f32 %v1471, %v1471
  %v1573 = vmul.f32 %v1476, %v1476
  %v1574 = vmul.f32 %v1479, %v1479
  %v1575 = vmul.f32 %v1484, %v1484
  %v1576 = vmul.f32 %v1487, %v1487
  %v1577 = vmul.f32 %v1492, %v1492
  %v1578 = vmul.f32 %v1495, %v1495
  %v1579 = vmul.f32 %v1500, %v1500
  %v1580 = vmul.f32 %v1503, %v1503
  %v1581 = vmul.f32 %v1508, %v1508
  %v1582 = vmul.f32 %v1511, %v1511
  %v1583 = vmul.f32 %v1516, %v1516
  %v1584 = vmul.f32 %v1519, %v1519
  %v1585 = vmul.f32 %v1524, %v1524
  %v1586 = vmul.f32 %v1527, %v1527
  %v1587 = vadd.f32 %v1571, %v1572
  %v1588 = vadd.f32 %v1587, %v1573
  %v1589 = vadd.f32 %v1588, %v1574
  %v1590 = vadd.f32 %v1589, %v1575
  %v1591 = vadd.f32 %v1590, %v1576
  %v1592 = vadd.f32 %v1591, %v1577
  %v1593 = vadd.f32 %v1592, %v1578
  %v1594 = vadd.f32 %v1593, %v1579
  %v1595 = vadd.f32 %v1594, %v1580
  %v1596 = vadd.f32 %v1595, %v1581
  %v1597 = vadd.f32 %v1596, %v1582
  %v1598 = vadd.f32 %v1597, %v1583
  %v1599 = vadd.f32 %v1598, %v1584
  %v1600 = vadd.f32 %v1599, %v1585
  %v1601 = vadd.f32 %v1600, %v1586
  %v1602 = vrot.slane %v1601, 4
  %v1603 = vadd.f32 %v1601, %v1602
  %v1604 = vrot.slane %v1603, 2
  %v1605 = vadd.f32 %v1603, %v1604
  %v1606 = vrot.slane %v1605, 1
  %v1607 = vadd.f32 %v1605, %v1606
  %v1608 = vadd.f32 %v1570, %v1607
  %1609 = vst [vmem:[%s4] sm:$0x1] %v1608
  // Predicated region
  $region14: #{img_discriminator_forward.17} parent=0 // pred_check
    _
  $region15: #{img_discriminator_forward.17} parent=0 // pred_check_branch
    %1611 = sbr.rel (0) target = $region17
  $region16: #{img_discriminator_forward.17} parent=0 // pred_region
    _
  $region17: #{img_discriminator_forward.17} parent=0 // pred_fallthru
    _
  // Predicated region
  $region18: #{img_discriminator_forward.17} parent=0 // pred_check
    _
  $region19: #{img_discriminator_forward.17} parent=0 // pred_check_branch
    %1613 = sbr.rel (0) target = $region21
  $region20: #{img_discriminator_forward.17} parent=0 // pred_region
    _
  $region21: #{img_discriminator_forward.17} parent=0 // pred_fallthru
    _
  // Predicated region
  $region22: #{img_discriminator_forward.17} parent=0 // pred_check
    _
  $region23: #{img_discriminator_forward.17} parent=0 // pred_check_branch
    %1615 = sbr.rel (0) target = $region25
  $region24: #{img_discriminator_forward.17} parent=0 // pred_region
    _
  $region25: #{img_discriminator_forward.17} parent=0 // pred_fallthru
    _
  // Predicated region
  $region26: #{img_discriminator_forward.17} parent=0 // pred_check
    _
  $region27: #{img_discriminator_forward.17} parent=0 // pred_check_branch
    %1617 = sbr.rel (0) target = $region29
  $region28: #{img_discriminator_forward.17} parent=0 // pred_region
    _
  $region29: #{img_discriminator_forward.17} parent=0 // pred_fallthru
    _
  // Predicated region
  $region30: #{img_discriminator_forward.17} parent=0 // pred_check
    _
  $region31: #{img_discriminator_forward.17} parent=0 // pred_check_branch
    %1619 = sbr.rel (0) target = $region33
  $region32: #{img_discriminator_forward.17} parent=0 // pred_region
    _
  $region33: #{img_discriminator_forward.17} parent=0 // pred_fallthru
    _
  // Predicated region
  $region34: #{img_discriminator_forward.17} parent=0 // pred_check
    _
  $region35: #{img_discriminator_forward.17} parent=0 // pred_check_branch
    %1621 = sbr.rel (0) target = $region37
  $region36: #{img_discriminator_forward.17} parent=0 // pred_region
    _
  $region37: #{img_discriminator_forward.17} parent=0 // pred_fallthru
    _

// kernel: img_discriminator_forward.15
$region0: #{img_discriminator_forward.15}
  #allocation0 [shape = 'u32[]', space=smem, size = 0x4, offset = 0x4, fixed_abs, tag = 'smem constant byte address 0x4 - core index']
  #allocation1 [shape = 'u32[144,128]{1,0:T(1,128)}', space=vmem, size = 0x12000, scoped, tag = 'internal scratch']
  %s0 = inlined_call_operand.vmem [shape: bf16[128,2048], index: 0, kind: input, shape index: {}]
  %s1 = inlined_call_operand.vmem [shape: bf16[2048,128], index: 1, kind: input, shape index: {}]
  %s2 = inlined_call_operand.vmem [shape: f32[128,128], index: 2, kind: output, shape index: {0}]
  %s3 = inlined_call_operand.vmem [shape: f32[1,128], index: 3, kind: output, shape index: {1}]
  %s4 = inlined_call_operand.vmem [shape: f32[1,128], index: 4, kind: output, shape index: {2}]
  %5 = xla_tuple %s2, %s3, %s4
  %s6 = sld [smem:[#allocation0]]
  $region38: #{img_discriminator_forward.15} parent=0
    _
  %s8 = ssub.s32 1, %s6
  %s9 = scalar_select 0, %s8, %s6
  // Predicated region
  $region2: #{img_discriminator_forward.15} parent=0 // pred_check
    _
  $region3: #{img_discriminator_forward.15} parent=0 // pred_check_branch
    %11 = sbr.rel (0) target = $region5
  $region4: #{img_discriminator_forward.15} parent=0 // pred_region
    _
  $region5: #{img_discriminator_forward.15} parent=0 // pred_fallthru
    _
  // Predicated region
  $region6: #{img_discriminator_forward.15} parent=0 // pred_check
    _
  $region7: #{img_discriminator_forward.15} parent=0 // pred_check_branch
    %13 = sbr.rel (0) target = $region9
  $region8: #{img_discriminator_forward.15} parent=0 // pred_region
    _
  $region9: #{img_discriminator_forward.15} parent=0 // pred_fallthru
    _
  %p15 = scmp.eq.s32.totalorder 0, 0
  // Predicated region
  $region10: #{img_discriminator_forward.15} parent=0 // pred_check
    %p16 = pneg %p15
  $region11: #{img_discriminator_forward.15} parent=0 // pred_check_branch
    %18 = sbr.rel (%p16) target = $region13
  $region12: #{img_discriminator_forward.15} parent=0 // pred_region
    %19 = vst [vmem:[%s3] sm:$0x1] 0.0
    %20 = vst [vmem:[%s4] sm:$0x1] 0.0
  $region13: #{img_discriminator_forward.15} parent=0 // pred_fallthru
    _
  %v21 = vld [vmem:[%s0] sm:$0xff]
  %v22 = vld [vmem:[%s0 + $0x8] sm:$0xff]
  %v23 = vld [vmem:[%s0 + $0x10] sm:$0xff]
  %v24 = vld [vmem:[%s0 + $0x18] sm:$0xff]
  %v25 = vld [vmem:[%s0 + $0x20] sm:$0xff]
  %v26 = vld [vmem:[%s0 + $0x28] sm:$0xff]
  %v27 = vld [vmem:[%s0 + $0x30] sm:$0xff]
  %v28 = vld [vmem:[%s0 + $0x38] sm:$0xff]
  %v29 = vld [vmem:[%s0 + $0x40] sm:$0xff]
  %v30 = vld [vmem:[%s0 + $0x48] sm:$0xff]
  %v31 = vld [vmem:[%s0 + $0x50] sm:$0xff]
  %v32 = vld [vmem:[%s0 + $0x58] sm:$0xff]
  %v33 = vld [vmem:[%s0 + $0x60] sm:$0xff]
  %v34 = vld [vmem:[%s0 + $0x68] sm:$0xff]
  %v35 = vld [vmem:[%s0 + $0x70] sm:$0xff]
  %v36 = vld [vmem:[%s0 + $0x78] sm:$0xff]
  %v37 = vld [vmem:[%s0 + $0x80] sm:$0xff]
  %v38 = vld [vmem:[%s0 + $0x88] sm:$0xff]
  %v39 = vld [vmem:[%s0 + $0x90] sm:$0xff]
  %v40 = vld [vmem:[%s0 + $0x98] sm:$0xff]
  %v41 = vld [vmem:[%s0 + $0xa0] sm:$0xff]
  %v42 = vld [vmem:[%s0 + $0xa8] sm:$0xff]
  %v43 = vld [vmem:[%s0 + $0xb0] sm:$0xff]
  %v44 = vld [vmem:[%s0 + $0xb8] sm:$0xff]
  %v45 = vld [vmem:[%s0 + $0xc0] sm:$0xff]
  %v46 = vld [vmem:[%s0 + $0xc8] sm:$0xff]
  %v47 = vld [vmem:[%s0 + $0xd0] sm:$0xff]
  %v48 = vld [vmem:[%s0 + $0xd8] sm:$0xff]
  %v49 = vld [vmem:[%s0 + $0xe0] sm:$0xff]
  %v50 = vld [vmem:[%s0 + $0xe8] sm:$0xff]
  %v51 = vld [vmem:[%s0 + $0xf0] sm:$0xff]
  %v52 = vld [vmem:[%s0 + $0xf8] sm:$0xff]
  %v53 = vld [vmem:[%s0 + $0x100] sm:$0xff]
  %v54 = vld [vmem:[%s0 + $0x108] sm:$0xff]
  %v55 = vld [vmem:[%s0 + $0x110] sm:$0xff]
  %v56 = vld [vmem:[%s0 + $0x118] sm:$0xff]
  %v57 = vld [vmem:[%s0 + $0x120] sm:$0xff]
  %v58 = vld [vmem:[%s0 + $0x128] sm:$0xff]
  %v59 = vld [vmem:[%s0 + $0x130] sm:$0xff]
  %v60 = vld [vmem:[%s0 + $0x138] sm:$0xff]
  %v61 = vld [vmem:[%s0 + $0x140] sm:$0xff]
  %v62 = vld [vmem:[%s0 + $0x148] sm:$0xff]
  %v63 = vld [vmem:[%s0 + $0x150] sm:$0xff]
  %v64 = vld [vmem:[%s0 + $0x158] sm:$0xff]
  %v65 = vld [vmem:[%s0 + $0x160] sm:$0xff]
  %v66 = vld [vmem:[%s0 + $0x168] sm:$0xff]
  %v67 = vld [vmem:[%s0 + $0x170] sm:$0xff]
  %v68 = vld [vmem:[%s0 + $0x178] sm:$0xff]
  %v69 = vld [vmem:[%s0 + $0x180] sm:$0xff]
  %v70 = vld [vmem:[%s0 + $0x188] sm:$0xff]
  %v71 = vld [vmem:[%s0 + $0x190] sm:$0xff]
  %v72 = vld [vmem:[%s0 + $0x198] sm:$0xff]
  %v73 = vld [vmem:[%s0 + $0x1a0] sm:$0xff]
  %v74 = vld [vmem:[%s0 + $0x1a8] sm:$0xff]
  %v75 = vld [vmem:[%s0 + $0x1b0] sm:$0xff]
  %v76 = vld [vmem:[%s0 + $0x1b8] sm:$0xff]
  %v77 = vld [vmem:[%s0 + $0x1c0] sm:$0xff]
  %v78 = vld [vmem:[%s0 + $0x1c8] sm:$0xff]
  %v79 = vld [vmem:[%s0 + $0x1d0] sm:$0xff]
  %v80 = vld [vmem:[%s0 + $0x1d8] sm:$0xff]
  %v81 = vld [vmem:[%s0 + $0x1e0] sm:$0xff]
  %v82 = vld [vmem:[%s0 + $0x1e8] sm:$0xff]
  %v83 = vld [vmem:[%s0 + $0x1f0] sm:$0xff]
  %v84 = vld [vmem:[%s0 + $0x1f8] sm:$0xff]
  %v85 = vld [vmem:[%s0 + $0x200] sm:$0xff]
  %v86 = vld [vmem:[%s0 + $0x208] sm:$0xff]
  %v87 = vld [vmem:[%s0 + $0x210] sm:$0xff]
  %v88 = vld [vmem:[%s0 + $0x218] sm:$0xff]
  %v89 = vld [vmem:[%s0 + $0x220] sm:$0xff]
  %v90 = vld [vmem:[%s0 + $0x228] sm:$0xff]
  %v91 = vld [vmem:[%s0 + $0x230] sm:$0xff]
  %v92 = vld [vmem:[%s0 + $0x238] sm:$0xff]
  %v93 = vld [vmem:[%s0 + $0x240] sm:$0xff]
  %v94 = vld [vmem:[%s0 + $0x248] sm:$0xff]
  %v95 = vld [vmem:[%s0 + $0x250] sm:$0xff]
  %v96 = vld [vmem:[%s0 + $0x258] sm:$0xff]
  %v97 = vld [vmem:[%s0 + $0x260] sm:$0xff]
  %v98 = vld [vmem:[%s0 + $0x268] sm:$0xff]
  %v99 = vld [vmem:[%s0 + $0x270] sm:$0xff]
  %v100 = vld [vmem:[%s0 + $0x278] sm:$0xff]
  %v101 = vld [vmem:[%s0 + $0x280] sm:$0xff]
  %v102 = vld [vmem:[%s0 + $0x288] sm:$0xff]
  %v103 = vld [vmem:[%s0 + $0x290] sm:$0xff]
  %v104 = vld [vmem:[%s0 + $0x298] sm:$0xff]
  %v105 = vld [vmem:[%s0 + $0x2a0] sm:$0xff]
  %v106 = vld [vmem:[%s0 + $0x2a8] sm:$0xff]
  %v107 = vld [vmem:[%s0 + $0x2b0] sm:$0xff]
  %v108 = vld [vmem:[%s0 + $0x2b8] sm:$0xff]
  %v109 = vld [vmem:[%s0 + $0x2c0] sm:$0xff]
  %v110 = vld [vmem:[%s0 + $0x2c8] sm:$0xff]
  %v111 = vld [vmem:[%s0 + $0x2d0] sm:$0xff]
  %v112 = vld [vmem:[%s0 + $0x2d8] sm:$0xff]
  %v113 = vld [vmem:[%s0 + $0x2e0] sm:$0xff]
  %v114 = vld [vmem:[%s0 + $0x2e8] sm:$0xff]
  %v115 = vld [vmem:[%s0 + $0x2f0] sm:$0xff]
  %v116 = vld [vmem:[%s0 + $0x2f8] sm:$0xff]
  %v117 = vld [vmem:[%s0 + $0x300] sm:$0xff]
  %v118 = vld [vmem:[%s0 + $0x308] sm:$0xff]
  %v119 = vld [vmem:[%s0 + $0x310] sm:$0xff]
  %v120 = vld [vmem:[%s0 + $0x318] sm:$0xff]
  %v121 = vld [vmem:[%s0 + $0x320] sm:$0xff]
  %v122 = vld [vmem:[%s0 + $0x328] sm:$0xff]
  %v123 = vld [vmem:[%s0 + $0x330] sm:$0xff]
  %v124 = vld [vmem:[%s0 + $0x338] sm:$0xff]
  %v125 = vld [vmem:[%s0 + $0x340] sm:$0xff]
  %v126 = vld [vmem:[%s0 + $0x348] sm:$0xff]
  %v127 = vld [vmem:[%s0 + $0x350] sm:$0xff]
  %v128 = vld [vmem:[%s0 + $0x358] sm:$0xff]
  %v129 = vld [vmem:[%s0 + $0x360] sm:$0xff]
  %v130 = vld [vmem:[%s0 + $0x368] sm:$0xff]
  %v131 = vld [vmem:[%s0 + $0x370] sm:$0xff]
  %v132 = vld [vmem:[%s0 + $0x378] sm:$0xff]
  %v133 = vld [vmem:[%s0 + $0x380] sm:$0xff]
  %v134 = vld [vmem:[%s0 + $0x388] sm:$0xff]
  %v135 = vld [vmem:[%s0 + $0x390] sm:$0xff]
  %v136 = vld [vmem:[%s0 + $0x398] sm:$0xff]
  %v137 = vld [vmem:[%s0 + $0x3a0] sm:$0xff]
  %v138 = vld [vmem:[%s0 + $0x3a8] sm:$0xff]
  %v139 = vld [vmem:[%s0 + $0x3b0] sm:$0xff]
  %v140 = vld [vmem:[%s0 + $0x3b8] sm:$0xff]
  %v141 = vld [vmem:[%s0 + $0x3c0] sm:$0xff]
  %v142 = vld [vmem:[%s0 + $0x3c8] sm:$0xff]
  %v143 = vld [vmem:[%s0 + $0x3d0] sm:$0xff]
  %v144 = vld [vmem:[%s0 + $0x3d8] sm:$0xff]
  %v145 = vld [vmem:[%s0 + $0x3e0] sm:$0xff]
  %v146 = vld [vmem:[%s0 + $0x3e8] sm:$0xff]
  %v147 = vld [vmem:[%s0 + $0x3f0] sm:$0xff]
  %v148 = vld [vmem:[%s0 + $0x3f8] sm:$0xff]
  %v149 = vld [vmem:[%s1] sm:$0xf]
  %v150 = vld [vmem:[%s1 + $0x4] sm:$0xf]
  %v151 = vld [vmem:[%s1 + $0x8] sm:$0xf]
  %v152 = vld [vmem:[%s1 + $0xc] sm:$0xf]
  %v153 = vld [vmem:[%s1 + $0x10] sm:$0xf]
  %v154 = vld [vmem:[%s1 + $0x14] sm:$0xf]
  %v155 = vld [vmem:[%s1 + $0x18] sm:$0xf]
  %v156 = vld [vmem:[%s1 + $0x1c] sm:$0xf]
  %v157 = vld [vmem:[%s1 + $0x20] sm:$0xf]
  %v158 = vld [vmem:[%s1 + $0x24] sm:$0xf]
  %v159 = vld [vmem:[%s1 + $0x28] sm:$0xf]
  %v160 = vld [vmem:[%s1 + $0x2c] sm:$0xf]
  %v161 = vld [vmem:[%s1 + $0x30] sm:$0xf]
  %v162 = vld [vmem:[%s1 + $0x34] sm:$0xf]
  %v163 = vld [vmem:[%s1 + $0x38] sm:$0xf]
  %v164 = vld [vmem:[%s1 + $0x3c] sm:$0xf]
  %v165 = vld [vmem:[%s1 + $0x40] sm:$0xf]
  %v166 = vld [vmem:[%s1 + $0x44] sm:$0xf]
  %v167 = vld [vmem:[%s1 + $0x48] sm:$0xf]
  %v168 = vld [vmem:[%s1 + $0x4c] sm:$0xf]
  %v169 = vld [vmem:[%s1 + $0x50] sm:$0xf]
  %v170 = vld [vmem:[%s1 + $0x54] sm:$0xf]
  %v171 = vld [vmem:[%s1 + $0x58] sm:$0xf]
  %v172 = vld [vmem:[%s1 + $0x5c] sm:$0xf]
  %v173 = vld [vmem:[%s1 + $0x60] sm:$0xf]
  %v174 = vld [vmem:[%s1 + $0x64] sm:$0xf]
  %v175 = vld [vmem:[%s1 + $0x68] sm:$0xf]
  %v176 = vld [vmem:[%s1 + $0x6c] sm:$0xf]
  %v177 = vld [vmem:[%s1 + $0x70] sm:$0xf]
  %v178 = vld [vmem:[%s1 + $0x74] sm:$0xf]
  %v179 = vld [vmem:[%s1 + $0x78] sm:$0xf]
  %v180 = vld [vmem:[%s1 + $0x7c] sm:$0xf]
  %v181 = vld [vmem:[%s1 + $0x80] sm:$0xf]
  %v182 = vld [vmem:[%s1 + $0x84] sm:$0xf]
  %v183 = vld [vmem:[%s1 + $0x88] sm:$0xf]
  %v184 = vld [vmem:[%s1 + $0x8c] sm:$0xf]
  %v185 = vld [vmem:[%s1 + $0x90] sm:$0xf]
  %v186 = vld [vmem:[%s1 + $0x94] sm:$0xf]
  %v187 = vld [vmem:[%s1 + $0x98] sm:$0xf]
  %v188 = vld [vmem:[%s1 + $0x9c] sm:$0xf]
  %v189 = vld [vmem:[%s1 + $0xa0] sm:$0xf]
  %v190 = vld [vmem:[%s1 + $0xa4] sm:$0xf]
  %v191 = vld [vmem:[%s1 + $0xa8] sm:$0xf]
  %v192 = vld [vmem:[%s1 + $0xac] sm:$0xf]
  %v193 = vld [vmem:[%s1 + $0xb0] sm:$0xf]
  %v194 = vld [vmem:[%s1 + $0xb4] sm:$0xf]
  %v195 = vld [vmem:[%s1 + $0xb8] sm:$0xf]
  %v196 = vld [vmem:[%s1 + $0xbc] sm:$0xf]
  %v197 = vld [vmem:[%s1 + $0xc0] sm:$0xf]
  %v198 = vld [vmem:[%s1 + $0xc4] sm:$0xf]
  %v199 = vld [vmem:[%s1 + $0xc8] sm:$0xf]
  %v200 = vld [vmem:[%s1 + $0xcc] sm:$0xf]
  %v201 = vld [vmem:[%s1 + $0xd0] sm:$0xf]
  %v202 = vld [vmem:[%s1 + $0xd4] sm:$0xf]
  %v203 = vld [vmem:[%s1 + $0xd8] sm:$0xf]
  %v204 = vld [vmem:[%s1 + $0xdc] sm:$0xf]
  %v205 = vld [vmem:[%s1 + $0xe0] sm:$0xf]
  %v206 = vld [vmem:[%s1 + $0xe4] sm:$0xf]
  %v207 = vld [vmem:[%s1 + $0xe8] sm:$0xf]
  %v208 = vld [vmem:[%s1 + $0xec] sm:$0xf]
  %v209 = vld [vmem:[%s1 + $0xf0] sm:$0xf]
  %v210 = vld [vmem:[%s1 + $0xf4] sm:$0xf]
  %v211 = vld [vmem:[%s1 + $0xf8] sm:$0xf]
  %v212 = vld [vmem:[%s1 + $0xfc] sm:$0xf]
  %v213 = vld [vmem:[%s1 + $0x100] sm:$0xf]
  %v214 = vld [vmem:[%s1 + $0x104] sm:$0xf]
  %v215 = vld [vmem:[%s1 + $0x108] sm:$0xf]
  %v216 = vld [vmem:[%s1 + $0x10c] sm:$0xf]
  %v217 = vld [vmem:[%s1 + $0x110] sm:$0xf]
  %v218 = vld [vmem:[%s1 + $0x114] sm:$0xf]
  %v219 = vld [vmem:[%s1 + $0x118] sm:$0xf]
  %v220 = vld [vmem:[%s1 + $0x11c] sm:$0xf]
  %v221 = vld [vmem:[%s1 + $0x120] sm:$0xf]
  %v222 = vld [vmem:[%s1 + $0x124] sm:$0xf]
  %v223 = vld [vmem:[%s1 + $0x128] sm:$0xf]
  %v224 = vld [vmem:[%s1 + $0x12c] sm:$0xf]
  %v225 = vld [vmem:[%s1 + $0x130] sm:$0xf]
  %v226 = vld [vmem:[%s1 + $0x134] sm:$0xf]
  %v227 = vld [vmem:[%s1 + $0x138] sm:$0xf]
  %v228 = vld [vmem:[%s1 + $0x13c] sm:$0xf]
  %v229 = vld [vmem:[%s1 + $0x140] sm:$0xf]
  %v230 = vld [vmem:[%s1 + $0x144] sm:$0xf]
  %v231 = vld [vmem:[%s1 + $0x148] sm:$0xf]
  %v232 = vld [vmem:[%s1 + $0x14c] sm:$0xf]
  %v233 = vld [vmem:[%s1 + $0x150] sm:$0xf]
  %v234 = vld [vmem:[%s1 + $0x154] sm:$0xf]
  %v235 = vld [vmem:[%s1 + $0x158] sm:$0xf]
  %v236 = vld [vmem:[%s1 + $0x15c] sm:$0xf]
  %v237 = vld [vmem:[%s1 + $0x160] sm:$0xf]
  %v238 = vld [vmem:[%s1 + $0x164] sm:$0xf]
  %v239 = vld [vmem:[%s1 + $0x168] sm:$0xf]
  %v240 = vld [vmem:[%s1 + $0x16c] sm:$0xf]
  %v241 = vld [vmem:[%s1 + $0x170] sm:$0xf]
  %v242 = vld [vmem:[%s1 + $0x174] sm:$0xf]
  %v243 = vld [vmem:[%s1 + $0x178] sm:$0xf]
  %v244 = vld [vmem:[%s1 + $0x17c] sm:$0xf]
  %v245 = vld [vmem:[%s1 + $0x180] sm:$0xf]
  %v246 = vld [vmem:[%s1 + $0x184] sm:$0xf]
  %v247 = vld [vmem:[%s1 + $0x188] sm:$0xf]
  %v248 = vld [vmem:[%s1 + $0x18c] sm:$0xf]
  %v249 = vld [vmem:[%s1 + $0x190] sm:$0xf]
  %v250 = vld [vmem:[%s1 + $0x194] sm:$0xf]
  %v251 = vld [vmem:[%s1 + $0x198] sm:$0xf]
  %v252 = vld [vmem:[%s1 + $0x19c] sm:$0xf]
  %v253 = vld [vmem:[%s1 + $0x1a0] sm:$0xf]
  %v254 = vld [vmem:[%s1 + $0x1a4] sm:$0xf]
  %v255 = vld [vmem:[%s1 + $0x1a8] sm:$0xf]
  %v256 = vld [vmem:[%s1 + $0x1ac] sm:$0xf]
  %v257 = vld [vmem:[%s1 + $0x1b0] sm:$0xf]
  %v258 = vld [vmem:[%s1 + $0x1b4] sm:$0xf]
  %v259 = vld [vmem:[%s1 + $0x1b8] sm:$0xf]
  %v260 = vld [vmem:[%s1 + $0x1bc] sm:$0xf]
  %v261 = vld [vmem:[%s1 + $0x1c0] sm:$0xf]
  %v262 = vld [vmem:[%s1 + $0x1c4] sm:$0xf]
  %v263 = vld [vmem:[%s1 + $0x1c8] sm:$0xf]
  %v264 = vld [vmem:[%s1 + $0x1cc] sm:$0xf]
  %v265 = vld [vmem:[%s1 + $0x1d0] sm:$0xf]
  %v266 = vld [vmem:[%s1 + $0x1d4] sm:$0xf]
  %v267 = vld [vmem:[%s1 + $0x1d8] sm:$0xf]
  %v268 = vld [vmem:[%s1 + $0x1dc] sm:$0xf]
  %v269 = vld [vmem:[%s1 + $0x1e0] sm:$0xf]
  %v270 = vld [vmem:[%s1 + $0x1e4] sm:$0xf]
  %v271 = vld [vmem:[%s1 + $0x1e8] sm:$0xf]
  %v272 = vld [vmem:[%s1 + $0x1ec] sm:$0xf]
  %v273 = vld [vmem:[%s1 + $0x1f0] sm:$0xf]
  %v274 = vld [vmem:[%s1 + $0x1f4] sm:$0xf]
  %v275 = vld [vmem:[%s1 + $0x1f8] sm:$0xf]
  %v276 = vld [vmem:[%s1 + $0x1fc] sm:$0xf]
  %v277 = vld [vmem:[%s1 + $0x200] sm:$0xf]
  %v278 = vld [vmem:[%s1 + $0x204] sm:$0xf]
  %v279 = vld [vmem:[%s1 + $0x208] sm:$0xf]
  %v280 = vld [vmem:[%s1 + $0x20c] sm:$0xf]
  %v281 = vld [vmem:[%s1 + $0x210] sm:$0xf]
  %v282 = vld [vmem:[%s1 + $0x214] sm:$0xf]
  %v283 = vld [vmem:[%s1 + $0x218] sm:$0xf]
  %v284 = vld [vmem:[%s1 + $0x21c] sm:$0xf]
  %v285 = vld [vmem:[%s1 + $0x220] sm:$0xf]
  %v286 = vld [vmem:[%s1 + $0x224] sm:$0xf]
  %v287 = vld [vmem:[%s1 + $0x228] sm:$0xf]
  %v288 = vld [vmem:[%s1 + $0x22c] sm:$0xf]
  %v289 = vld [vmem:[%s1 + $0x230] sm:$0xf]
  %v290 = vld [vmem:[%s1 + $0x234] sm:$0xf]
  %v291 = vld [vmem:[%s1 + $0x238] sm:$0xf]
  %v292 = vld [vmem:[%s1 + $0x23c] sm:$0xf]
  %v293 = vld [vmem:[%s1 + $0x240] sm:$0xf]
  %v294 = vld [vmem:[%s1 + $0x244] sm:$0xf]
  %v295 = vld [vmem:[%s1 + $0x248] sm:$0xf]
  %v296 = vld [vmem:[%s1 + $0x24c] sm:$0xf]
  %v297 = vld [vmem:[%s1 + $0x250] sm:$0xf]
  %v298 = vld [vmem:[%s1 + $0x254] sm:$0xf]
  %v299 = vld [vmem:[%s1 + $0x258] sm:$0xf]
  %v300 = vld [vmem:[%s1 + $0x25c] sm:$0xf]
  %v301 = vld [vmem:[%s1 + $0x260] sm:$0xf]
  %v302 = vld [vmem:[%s1 + $0x264] sm:$0xf]
  %v303 = vld [vmem:[%s1 + $0x268] sm:$0xf]
  %v304 = vld [vmem:[%s1 + $0x26c] sm:$0xf]
  %v305 = vld [vmem:[%s1 + $0x270] sm:$0xf]
  %v306 = vld [vmem:[%s1 + $0x274] sm:$0xf]
  %v307 = vld [vmem:[%s1 + $0x278] sm:$0xf]
  %v308 = vld [vmem:[%s1 + $0x27c] sm:$0xf]
  %v309 = vld [vmem:[%s1 + $0x280] sm:$0xf]
  %v310 = vld [vmem:[%s1 + $0x284] sm:$0xf]
  %v311 = vld [vmem:[%s1 + $0x288] sm:$0xf]
  %v312 = vld [vmem:[%s1 + $0x28c] sm:$0xf]
  %v313 = vld [vmem:[%s1 + $0x290] sm:$0xf]
  %v314 = vld [vmem:[%s1 + $0x294] sm:$0xf]
  %v315 = vld [vmem:[%s1 + $0x298] sm:$0xf]
  %v316 = vld [vmem:[%s1 + $0x29c] sm:$0xf]
  %v317 = vld [vmem:[%s1 + $0x2a0] sm:$0xf]
  %v318 = vld [vmem:[%s1 + $0x2a4] sm:$0xf]
  %v319 = vld [vmem:[%s1 + $0x2a8] sm:$0xf]
  %v320 = vld [vmem:[%s1 + $0x2ac] sm:$0xf]
  %v321 = vld [vmem:[%s1 + $0x2b0] sm:$0xf]
  %v322 = vld [vmem:[%s1 + $0x2b4] sm:$0xf]
  %v323 = vld [vmem:[%s1 + $0x2b8] sm:$0xf]
  %v324 = vld [vmem:[%s1 + $0x2bc] sm:$0xf]
  %v325 = vld [vmem:[%s1 + $0x2c0] sm:$0xf]
  %v326 = vld [vmem:[%s1 + $0x2c4] sm:$0xf]
  %v327 = vld [vmem:[%s1 + $0x2c8] sm:$0xf]
  %v328 = vld [vmem:[%s1 + $0x2cc] sm:$0xf]
  %v329 = vld [vmem:[%s1 + $0x2d0] sm:$0xf]
  %v330 = vld [vmem:[%s1 + $0x2d4] sm:$0xf]
  %v331 = vld [vmem:[%s1 + $0x2d8] sm:$0xf]
  %v332 = vld [vmem:[%s1 + $0x2dc] sm:$0xf]
  %v333 = vld [vmem:[%s1 + $0x2e0] sm:$0xf]
  %v334 = vld [vmem:[%s1 + $0x2e4] sm:$0xf]
  %v335 = vld [vmem:[%s1 + $0x2e8] sm:$0xf]
  %v336 = vld [vmem:[%s1 + $0x2ec] sm:$0xf]
  %v337 = vld [vmem:[%s1 + $0x2f0] sm:$0xf]
  %v338 = vld [vmem:[%s1 + $0x2f4] sm:$0xf]
  %v339 = vld [vmem:[%s1 + $0x2f8] sm:$0xf]
  %v340 = vld [vmem:[%s1 + $0x2fc] sm:$0xf]
  %v341 = vld [vmem:[%s1 + $0x300] sm:$0xf]
  %v342 = vld [vmem:[%s1 + $0x304] sm:$0xf]
  %v343 = vld [vmem:[%s1 + $0x308] sm:$0xf]
  %v344 = vld [vmem:[%s1 + $0x30c] sm:$0xf]
  %v345 = vld [vmem:[%s1 + $0x310] sm:$0xf]
  %v346 = vld [vmem:[%s1 + $0x314] sm:$0xf]
  %v347 = vld [vmem:[%s1 + $0x318] sm:$0xf]
  %v348 = vld [vmem:[%s1 + $0x31c] sm:$0xf]
  %v349 = vld [vmem:[%s1 + $0x320] sm:$0xf]
  %v350 = vld [vmem:[%s1 + $0x324] sm:$0xf]
  %v351 = vld [vmem:[%s1 + $0x328] sm:$0xf]
  %v352 = vld [vmem:[%s1 + $0x32c] sm:$0xf]
  %v353 = vld [vmem:[%s1 + $0x330] sm:$0xf]
  %v354 = vld [vmem:[%s1 + $0x334] sm:$0xf]
  %v355 = vld [vmem:[%s1 + $0x338] sm:$0xf]
  %v356 = vld [vmem:[%s1 + $0x33c] sm:$0xf]
  %v357 = vld [vmem:[%s1 + $0x340] sm:$0xf]
  %v358 = vld [vmem:[%s1 + $0x344] sm:$0xf]
  %v359 = vld [vmem:[%s1 + $0x348] sm:$0xf]
  %v360 = vld [vmem:[%s1 + $0x34c] sm:$0xf]
  %v361 = vld [vmem:[%s1 + $0x350] sm:$0xf]
  %v362 = vld [vmem:[%s1 + $0x354] sm:$0xf]
  %v363 = vld [vmem:[%s1 + $0x358] sm:$0xf]
  %v364 = vld [vmem:[%s1 + $0x35c] sm:$0xf]
  %v365 = vld [vmem:[%s1 + $0x360] sm:$0xf]
  %v366 = vld [vmem:[%s1 + $0x364] sm:$0xf]
  %v367 = vld [vmem:[%s1 + $0x368] sm:$0xf]
  %v368 = vld [vmem:[%s1 + $0x36c] sm:$0xf]
  %v369 = vld [vmem:[%s1 + $0x370] sm:$0xf]
  %v370 = vld [vmem:[%s1 + $0x374] sm:$0xf]
  %v371 = vld [vmem:[%s1 + $0x378] sm:$0xf]
  %v372 = vld [vmem:[%s1 + $0x37c] sm:$0xf]
  %v373 = vld [vmem:[%s1 + $0x380] sm:$0xf]
  %v374 = vld [vmem:[%s1 + $0x384] sm:$0xf]
  %v375 = vld [vmem:[%s1 + $0x388] sm:$0xf]
  %v376 = vld [vmem:[%s1 + $0x38c] sm:$0xf]
  %v377 = vld [vmem:[%s1 + $0x390] sm:$0xf]
  %v378 = vld [vmem:[%s1 + $0x394] sm:$0xf]
  %v379 = vld [vmem:[%s1 + $0x398] sm:$0xf]
  %v380 = vld [vmem:[%s1 + $0x39c] sm:$0xf]
  %v381 = vld [vmem:[%s1 + $0x3a0] sm:$0xf]
  %v382 = vld [vmem:[%s1 + $0x3a4] sm:$0xf]
  %v383 = vld [vmem:[%s1 + $0x3a8] sm:$0xf]
  %v384 = vld [vmem:[%s1 + $0x3ac] sm:$0xf]
  %v385 = vld [vmem:[%s1 + $0x3b0] sm:$0xf]
  %v386 = vld [vmem:[%s1 + $0x3b4] sm:$0xf]
  %v387 = vld [vmem:[%s1 + $0x3b8] sm:$0xf]
  %v388 = vld [vmem:[%s1 + $0x3bc] sm:$0xf]
  %v389 = vld [vmem:[%s1 + $0x3c0] sm:$0xf]
  %v390 = vld [vmem:[%s1 + $0x3c4] sm:$0xf]
  %v391 = vld [vmem:[%s1 + $0x3c8] sm:$0xf]
  %v392 = vld [vmem:[%s1 + $0x3cc] sm:$0xf]
  %v393 = vld [vmem:[%s1 + $0x3d0] sm:$0xf]
  %v394 = vld [vmem:[%s1 + $0x3d4] sm:$0xf]
  %v395 = vld [vmem:[%s1 + $0x3d8] sm:$0xf]
  %v396 = vld [vmem:[%s1 + $0x3dc] sm:$0xf]
  %v397 = vld [vmem:[%s1 + $0x3e0] sm:$0xf]
  %v398 = vld [vmem:[%s1 + $0x3e4] sm:$0xf]
  %v399 = vld [vmem:[%s1 + $0x3e8] sm:$0xf]
  %v400 = vld [vmem:[%s1 + $0x3ec] sm:$0xf]
  %v401 = vld [vmem:[%s1 + $0x3f0] sm:$0xf]
  %v402 = vld [vmem:[%s1 + $0x3f4] sm:$0xf]
  %v403 = vld [vmem:[%s1 + $0x3f8] sm:$0xf]
  %v404 = vld [vmem:[%s1 + $0x3fc] sm:$0xf]
  %v533 = vunpack.c.l.b16 %v21
  %v534 = vunpack.c.h.b16 %v21
  %v535 = vunpack.c.l.b16 %v22
  %v536 = vunpack.c.h.b16 %v22
  %v537 = vunpack.c.l.b16 %v23
  %v538 = vunpack.c.h.b16 %v23
  %v539 = vunpack.c.l.b16 %v24
  %v540 = vunpack.c.h.b16 %v24
  %v541 = vunpack.c.l.b16 %v25
  %v542 = vunpack.c.h.b16 %v25
  %v543 = vunpack.c.l.b16 %v26
  %v544 = vunpack.c.h.b16 %v26
  %v545 = vunpack.c.l.b16 %v27
  %v546 = vunpack.c.h.b16 %v27
  %v547 = vunpack.c.l.b16 %v28
  %v548 = vunpack.c.h.b16 %v28
  %v549 = vunpack.c.l.b16 %v29
  %v550 = vunpack.c.h.b16 %v29
  %v551 = vunpack.c.l.b16 %v30
  %v552 = vunpack.c.h.b16 %v30
  %v553 = vunpack.c.l.b16 %v31
  %v554 = vunpack.c.h.b16 %v31
  %v555 = vunpack.c.l.b16 %v32
  %v556 = vunpack.c.h.b16 %v32
  %v557 = vunpack.c.l.b16 %v33
  %v558 = vunpack.c.h.b16 %v33
  %v559 = vunpack.c.l.b16 %v34
  %v560 = vunpack.c.h.b16 %v34
  %v561 = vunpack.c.l.b16 %v35
  %v562 = vunpack.c.h.b16 %v35
  %v563 = vunpack.c.l.b16 %v36
  %v564 = vunpack.c.h.b16 %v36
  %v565 = vunpack.c.l.b16 %v37
  %v566 = vunpack.c.h.b16 %v37
  %v567 = vunpack.c.l.b16 %v38
  %v568 = vunpack.c.h.b16 %v38
  %v569 = vunpack.c.l.b16 %v39
  %v570 = vunpack.c.h.b16 %v39
  %v571 = vunpack.c.l.b16 %v40
  %v572 = vunpack.c.h.b16 %v40
  %v573 = vunpack.c.l.b16 %v41
  %v574 = vunpack.c.h.b16 %v41
  %v575 = vunpack.c.l.b16 %v42
  %v576 = vunpack.c.h.b16 %v42
  %v577 = vunpack.c.l.b16 %v43
  %v578 = vunpack.c.h.b16 %v43
  %v579 = vunpack.c.l.b16 %v44
  %v580 = vunpack.c.h.b16 %v44
  %v581 = vunpack.c.l.b16 %v45
  %v582 = vunpack.c.h.b16 %v45
  %v583 = vunpack.c.l.b16 %v46
  %v584 = vunpack.c.h.b16 %v46
  %v585 = vunpack.c.l.b16 %v47
  %v586 = vunpack.c.h.b16 %v47
  %v587 = vunpack.c.l.b16 %v48
  %v588 = vunpack.c.h.b16 %v48
  %v589 = vunpack.c.l.b16 %v49
  %v590 = vunpack.c.h.b16 %v49
  %v591 = vunpack.c.l.b16 %v50
  %v592 = vunpack.c.h.b16 %v50
  %v593 = vunpack.c.l.b16 %v51
  %v594 = vunpack.c.h.b16 %v51
  %v595 = vunpack.c.l.b16 %v52
  %v596 = vunpack.c.h.b16 %v52
  %v597 = vunpack.c.l.b16 %v53
  %v598 = vunpack.c.h.b16 %v53
  %v599 = vunpack.c.l.b16 %v54
  %v600 = vunpack.c.h.b16 %v54
  %v601 = vunpack.c.l.b16 %v55
  %v602 = vunpack.c.h.b16 %v55
  %v603 = vunpack.c.l.b16 %v56
  %v604 = vunpack.c.h.b16 %v56
  %v605 = vunpack.c.l.b16 %v57
  %v606 = vunpack.c.h.b16 %v57
  %v607 = vunpack.c.l.b16 %v58
  %v608 = vunpack.c.h.b16 %v58
  %v609 = vunpack.c.l.b16 %v59
  %v610 = vunpack.c.h.b16 %v59
  %v611 = vunpack.c.l.b16 %v60
  %v612 = vunpack.c.h.b16 %v60
  %v613 = vunpack.c.l.b16 %v61
  %v614 = vunpack.c.h.b16 %v61
  %v615 = vunpack.c.l.b16 %v62
  %v616 = vunpack.c.h.b16 %v62
  %v617 = vunpack.c.l.b16 %v63
  %v618 = vunpack.c.h.b16 %v63
  %v619 = vunpack.c.l.b16 %v64
  %v620 = vunpack.c.h.b16 %v64
  %v621 = vunpack.c.l.b16 %v65
  %v622 = vunpack.c.h.b16 %v65
  %v623 = vunpack.c.l.b16 %v66
  %v624 = vunpack.c.h.b16 %v66
  %v625 = vunpack.c.l.b16 %v67
  %v626 = vunpack.c.h.b16 %v67
  %v627 = vunpack.c.l.b16 %v68
  %v628 = vunpack.c.h.b16 %v68
  %v629 = vunpack.c.l.b16 %v69
  %v630 = vunpack.c.h.b16 %v69
  %v631 = vunpack.c.l.b16 %v70
  %v632 = vunpack.c.h.b16 %v70
  %v633 = vunpack.c.l.b16 %v71
  %v634 = vunpack.c.h.b16 %v71
  %v635 = vunpack.c.l.b16 %v72
  %v636 = vunpack.c.h.b16 %v72
  %v637 = vunpack.c.l.b16 %v73
  %v638 = vunpack.c.h.b16 %v73
  %v639 = vunpack.c.l.b16 %v74
  %v640 = vunpack.c.h.b16 %v74
  %v641 = vunpack.c.l.b16 %v75
  %v642 = vunpack.c.h.b16 %v75
  %v643 = vunpack.c.l.b16 %v76
  %v644 = vunpack.c.h.b16 %v76
  %v645 = vunpack.c.l.b16 %v77
  %v646 = vunpack.c.h.b16 %v77
  %v647 = vunpack.c.l.b16 %v78
  %v648 = vunpack.c.h.b16 %v78
  %v649 = vunpack.c.l.b16 %v79
  %v650 = vunpack.c.h.b16 %v79
  %v651 = vunpack.c.l.b16 %v80
  %v652 = vunpack.c.h.b16 %v80
  %v653 = vunpack.c.l.b16 %v81
  %v654 = vunpack.c.h.b16 %v81
  %v655 = vunpack.c.l.b16 %v82
  %v656 = vunpack.c.h.b16 %v82
  %v657 = vunpack.c.l.b16 %v83
  %v658 = vunpack.c.h.b16 %v83
  %v659 = vunpack.c.l.b16 %v84
  %v660 = vunpack.c.h.b16 %v84
  %v661 = vunpack.c.l.b16 %v85
  %v662 = vunpack.c.h.b16 %v85
  %v663 = vunpack.c.l.b16 %v86
  %v664 = vunpack.c.h.b16 %v86
  %v665 = vunpack.c.l.b16 %v87
  %v666 = vunpack.c.h.b16 %v87
  %v667 = vunpack.c.l.b16 %v88
  %v668 = vunpack.c.h.b16 %v88
  %v669 = vunpack.c.l.b16 %v89
  %v670 = vunpack.c.h.b16 %v89
  %v671 = vunpack.c.l.b16 %v90
  %v672 = vunpack.c.h.b16 %v90
  %v673 = vunpack.c.l.b16 %v91
  %v674 = vunpack.c.h.b16 %v91
  %v675 = vunpack.c.l.b16 %v92
  %v676 = vunpack.c.h.b16 %v92
  %v677 = vunpack.c.l.b16 %v93
  %v678 = vunpack.c.h.b16 %v93
  %v679 = vunpack.c.l.b16 %v94
  %v680 = vunpack.c.h.b16 %v94
  %v681 = vunpack.c.l.b16 %v95
  %v682 = vunpack.c.h.b16 %v95
  %v683 = vunpack.c.l.b16 %v96
  %v684 = vunpack.c.h.b16 %v96
  %v685 = vunpack.c.l.b16 %v97
  %v686 = vunpack.c.h.b16 %v97
  %v687 = vunpack.c.l.b16 %v98
  %v688 = vunpack.c.h.b16 %v98
  %v689 = vunpack.c.l.b16 %v99
  %v690 = vunpack.c.h.b16 %v99
  %v691 = vunpack.c.l.b16 %v100
  %v692 = vunpack.c.h.b16 %v100
  %v693 = vunpack.c.l.b16 %v101
  %v694 = vunpack.c.h.b16 %v101
  %v695 = vunpack.c.l.b16 %v102
  %v696 = vunpack.c.h.b16 %v102
  %v697 = vunpack.c.l.b16 %v103
  %v698 = vunpack.c.h.b16 %v103
  %v699 = vunpack.c.l.b16 %v104
  %v700 = vunpack.c.h.b16 %v104
  %v701 = vunpack.c.l.b16 %v105
  %v702 = vunpack.c.h.b16 %v105
  %v703 = vunpack.c.l.b16 %v106
  %v704 = vunpack.c.h.b16 %v106
  %v705 = vunpack.c.l.b16 %v107
  %v706 = vunpack.c.h.b16 %v107
  %v707 = vunpack.c.l.b16 %v108
  %v708 = vunpack.c.h.b16 %v108
  %v709 = vunpack.c.l.b16 %v109
  %v710 = vunpack.c.h.b16 %v109
  %v711 = vunpack.c.l.b16 %v110
  %v712 = vunpack.c.h.b16 %v110
  %v713 = vunpack.c.l.b16 %v111
  %v714 = vunpack.c.h.b16 %v111
  %v715 = vunpack.c.l.b16 %v112
  %v716 = vunpack.c.h.b16 %v112
  %v717 = vunpack.c.l.b16 %v113
  %v718 = vunpack.c.h.b16 %v113
  %v719 = vunpack.c.l.b16 %v114
  %v720 = vunpack.c.h.b16 %v114
  %v721 = vunpack.c.l.b16 %v115
  %v722 = vunpack.c.h.b16 %v115
  %v723 = vunpack.c.l.b16 %v116
  %v724 = vunpack.c.h.b16 %v116
  %v725 = vunpack.c.l.b16 %v117
  %v726 = vunpack.c.h.b16 %v117
  %v727 = vunpack.c.l.b16 %v118
  %v728 = vunpack.c.h.b16 %v118
  %v729 = vunpack.c.l.b16 %v119
  %v730 = vunpack.c.h.b16 %v119
  %v731 = vunpack.c.l.b16 %v120
  %v732 = vunpack.c.h.b16 %v120
  %v733 = vunpack.c.l.b16 %v121
  %v734 = vunpack.c.h.b16 %v121
  %v735 = vunpack.c.l.b16 %v122
  %v736 = vunpack.c.h.b16 %v122
  %v737 = vunpack.c.l.b16 %v123
  %v738 = vunpack.c.h.b16 %v123
  %v739 = vunpack.c.l.b16 %v124
  %v740 = vunpack.c.h.b16 %v124
  %v741 = vunpack.c.l.b16 %v125
  %v742 = vunpack.c.h.b16 %v125
  %v743 = vunpack.c.l.b16 %v126
  %v744 = vunpack.c.h.b16 %v126
  %v745 = vunpack.c.l.b16 %v127
  %v746 = vunpack.c.h.b16 %v127
  %v747 = vunpack.c.l.b16 %v128
  %v748 = vunpack.c.h.b16 %v128
  %v749 = vunpack.c.l.b16 %v129
  %v750 = vunpack.c.h.b16 %v129
  %v751 = vunpack.c.l.b16 %v130
  %v752 = vunpack.c.h.b16 %v130
  %v753 = vunpack.c.l.b16 %v131
  %v754 = vunpack.c.h.b16 %v131
  %v755 = vunpack.c.l.b16 %v132
  %v756 = vunpack.c.h.b16 %v132
  %v757 = vunpack.c.l.b16 %v133
  %v758 = vunpack.c.h.b16 %v133
  %v759 = vunpack.c.l.b16 %v134
  %v760 = vunpack.c.h.b16 %v134
  %v761 = vunpack.c.l.b16 %v135
  %v762 = vunpack.c.h.b16 %v135
  %v763 = vunpack.c.l.b16 %v136
  %v764 = vunpack.c.h.b16 %v136
  %v765 = vunpack.c.l.b16 %v137
  %v766 = vunpack.c.h.b16 %v137
  %v767 = vunpack.c.l.b16 %v138
  %v768 = vunpack.c.h.b16 %v138
  %v769 = vunpack.c.l.b16 %v139
  %v770 = vunpack.c.h.b16 %v139
  %v771 = vunpack.c.l.b16 %v140
  %v772 = vunpack.c.h.b16 %v140
  %v773 = vunpack.c.l.b16 %v141
  %v774 = vunpack.c.h.b16 %v141
  %v775 = vunpack.c.l.b16 %v142
  %v776 = vunpack.c.h.b16 %v142
  %v777 = vunpack.c.l.b16 %v143
  %v778 = vunpack.c.h.b16 %v143
  %v779 = vunpack.c.l.b16 %v144
  %v780 = vunpack.c.h.b16 %v144
  %v781 = vunpack.c.l.b16 %v145
  %v782 = vunpack.c.h.b16 %v145
  %v783 = vunpack.c.l.b16 %v146
  %v784 = vunpack.c.h.b16 %v146
  %v785 = vunpack.c.l.b16 %v147
  %v786 = vunpack.c.h.b16 %v147
  %v787 = vunpack.c.l.b16 %v148
  %v788 = vunpack.c.h.b16 %v148
  %v789 = vpack.c.b16 %v549, %v533
  %v790 = vpack.c.b16 %v550, %v534
  %v791 = vpack.c.b16 %v551, %v535
  %v792 = vpack.c.b16 %v552, %v536
  %v793 = vpack.c.b16 %v553, %v537
  %v794 = vpack.c.b16 %v554, %v538
  %v795 = vpack.c.b16 %v555, %v539
  %v796 = vpack.c.b16 %v556, %v540
  %v797 = vpack.c.b16 %v557, %v541
  %v798 = vpack.c.b16 %v558, %v542
  %v799 = vpack.c.b16 %v559, %v543
  %v800 = vpack.c.b16 %v560, %v544
  %v801 = vpack.c.b16 %v561, %v545
  %v802 = vpack.c.b16 %v562, %v546
  %v803 = vpack.c.b16 %v563, %v547
  %v804 = vpack.c.b16 %v564, %v548
  %v805 = vpack.c.b16 %v581, %v565
  %v806 = vpack.c.b16 %v582, %v566
  %v807 = vpack.c.b16 %v583, %v567
  %v808 = vpack.c.b16 %v584, %v568
  %v809 = vpack.c.b16 %v585, %v569
  %v810 = vpack.c.b16 %v586, %v570
  %v811 = vpack.c.b16 %v587, %v571
  %v812 = vpack.c.b16 %v588, %v572
  %v813 = vpack.c.b16 %v589, %v573
  %v814 = vpack.c.b16 %v590, %v574
  %v815 = vpack.c.b16 %v591, %v575
  %v816 = vpack.c.b16 %v592, %v576
  %v817 = vpack.c.b16 %v593, %v577
  %v818 = vpack.c.b16 %v594, %v578
  %v819 = vpack.c.b16 %v595, %v579
  %v820 = vpack.c.b16 %v596, %v580
  %v821 = vpack.c.b16 %v613, %v597
  %v822 = vpack.c.b16 %v614, %v598
  %v823 = vpack.c.b16 %v615, %v599
  %v824 = vpack.c.b16 %v616, %v600
  %v825 = vpack.c.b16 %v617, %v601
  %v826 = vpack.c.b16 %v618, %v602
  %v827 = vpack.c.b16 %v619, %v603
  %v828 = vpack.c.b16 %v620, %v604
  %v829 = vpack.c.b16 %v621, %v605
  %v830 = vpack.c.b16 %v622, %v606
  %v831 = vpack.c.b16 %v623, %v607
  %v832 = vpack.c.b16 %v624, %v608
  %v833 = vpack.c.b16 %v625, %v609
  %v834 = vpack.c.b16 %v626, %v610
  %v835 = vpack.c.b16 %v627, %v611
  %v836 = vpack.c.b16 %v628, %v612
  %v837 = vpack.c.b16 %v645, %v629
  %v838 = vpack.c.b16 %v646, %v630
  %v839 = vpack.c.b16 %v647, %v631
  %v840 = vpack.c.b16 %v648, %v632
  %v841 = vpack.c.b16 %v649, %v633
  %v842 = vpack.c.b16 %v650, %v634
  %v843 = vpack.c.b16 %v651, %v635
  %v844 = vpack.c.b16 %v652, %v636
  %v845 = vpack.c.b16 %v653, %v637
  %v846 = vpack.c.b16 %v654, %v638
  %v847 = vpack.c.b16 %v655, %v639
  %v848 = vpack.c.b16 %v656, %v640
  %v849 = vpack.c.b16 %v657, %v641
  %v850 = vpack.c.b16 %v658, %v642
  %v851 = vpack.c.b16 %v659, %v643
  %v852 = vpack.c.b16 %v660, %v644
  %v853 = vpack.c.b16 %v677, %v661
  %v854 = vpack.c.b16 %v678, %v662
  %v855 = vpack.c.b16 %v679, %v663
  %v856 = vpack.c.b16 %v680, %v664
  %v857 = vpack.c.b16 %v681, %v665
  %v858 = vpack.c.b16 %v682, %v666
  %v859 = vpack.c.b16 %v683, %v667
  %v860 = vpack.c.b16 %v684, %v668
  %v861 = vpack.c.b16 %v685, %v669
  %v862 = vpack.c.b16 %v686, %v670
  %v863 = vpack.c.b16 %v687, %v671
  %v864 = vpack.c.b16 %v688, %v672
  %v865 = vpack.c.b16 %v689, %v673
  %v866 = vpack.c.b16 %v690, %v674
  %v867 = vpack.c.b16 %v691, %v675
  %v868 = vpack.c.b16 %v692, %v676
  %v869 = vpack.c.b16 %v709, %v693
  %v870 = vpack.c.b16 %v710, %v694
  %v871 = vpack.c.b16 %v711, %v695
  %v872 = vpack.c.b16 %v712, %v696
  %v873 = vpack.c.b16 %v713, %v697
  %v874 = vpack.c.b16 %v714, %v698
  %v875 = vpack.c.b16 %v715, %v699
  %v876 = vpack.c.b16 %v716, %v700
  %v877 = vpack.c.b16 %v717, %v701
  %v878 = vpack.c.b16 %v718, %v702
  %v879 = vpack.c.b16 %v719, %v703
  %v880 = vpack.c.b16 %v720, %v704
  %v881 = vpack.c.b16 %v721, %v705
  %v882 = vpack.c.b16 %v722, %v706
  %v883 = vpack.c.b16 %v723, %v707
  %v884 = vpack.c.b16 %v724, %v708
  %v885 = vpack.c.b16 %v741, %v725
  %v886 = vpack.c.b16 %v742, %v726
  %v887 = vpack.c.b16 %v743, %v727
  %v888 = vpack.c.b16 %v744, %v728
  %v889 = vpack.c.b16 %v745, %v729
  %v890 = vpack.c.b16 %v746, %v730
  %v891 = vpack.c.b16 %v747, %v731
  %v892 = vpack.c.b16 %v748, %v732
  %v893 = vpack.c.b16 %v749, %v733
  %v894 = vpack.c.b16 %v750, %v734
  %v895 = vpack.c.b16 %v751, %v735
  %v896 = vpack.c.b16 %v752, %v736
  %v897 = vpack.c.b16 %v753, %v737
  %v898 = vpack.c.b16 %v754, %v738
  %v899 = vpack.c.b16 %v755, %v739
  %v900 = vpack.c.b16 %v756, %v740
  %v901 = vpack.c.b16 %v773, %v757
  %v902 = vpack.c.b16 %v774, %v758
  %v903 = vpack.c.b16 %v775, %v759
  %v904 = vpack.c.b16 %v776, %v760
  %v905 = vpack.c.b16 %v777, %v761
  %v906 = vpack.c.b16 %v778, %v762
  %v907 = vpack.c.b16 %v779, %v763
  %v908 = vpack.c.b16 %v780, %v764
  %v909 = vpack.c.b16 %v781, %v765
  %v910 = vpack.c.b16 %v782, %v766
  %v911 = vpack.c.b16 %v783, %v767
  %v912 = vpack.c.b16 %v784, %v768
  %v913 = vpack.c.b16 %v785, %v769
  %v914 = vpack.c.b16 %v786, %v770
  %v915 = vpack.c.b16 %v787, %v771
  %v916 = vpack.c.b16 %v788, %v772
  %v1301 = vunpack.c.l.b16 %v149
  %v1302 = vunpack.c.l.b16 %v150
  %v1303 = vunpack.c.l.b16 %v151
  %v1304 = vunpack.c.l.b16 %v152
  %v1305 = vunpack.c.l.b16 %v153
  %v1306 = vunpack.c.l.b16 %v154
  %v1307 = vunpack.c.l.b16 %v155
  %v1308 = vunpack.c.l.b16 %v156
  %v1309 = vunpack.c.l.b16 %v157
  %v1310 = vunpack.c.l.b16 %v158
  %v1311 = vunpack.c.l.b16 %v159
  %v1312 = vunpack.c.l.b16 %v160
  %v1313 = vunpack.c.l.b16 %v161
  %v1314 = vunpack.c.l.b16 %v162
  %v1315 = vunpack.c.l.b16 %v163
  %v1316 = vunpack.c.l.b16 %v164
  %v1317 = vunpack.c.l.b16 %v165
  %v1318 = vunpack.c.l.b16 %v166
  %v1319 = vunpack.c.l.b16 %v167
  %v1320 = vunpack.c.l.b16 %v168
  %v1321 = vunpack.c.l.b16 %v169
  %v1322 = vunpack.c.l.b16 %v170
  %v1323 = vunpack.c.l.b16 %v171
  %v1324 = vunpack.c.l.b16 %v172
  %v1325 = vunpack.c.l.b16 %v173
  %v1326 = vunpack.c.l.b16 %v174
  %v1327 = vunpack.c.l.b16 %v175
  %v1328 = vunpack.c.l.b16 %v176
  %v1329 = vunpack.c.l.b16 %v177
  %v1330 = vunpack.c.l.b16 %v178
  %v1331 = vunpack.c.l.b16 %v179
  %v1332 = vunpack.c.l.b16 %v180
  %v1333 = vunpack.c.l.b16 %v181
  %v1334 = vunpack.c.l.b16 %v182
  %v1335 = vunpack.c.l.b16 %v183
  %v1336 = vunpack.c.l.b16 %v184
  %v1337 = vunpack.c.l.b16 %v185
  %v1338 = vunpack.c.l.b16 %v186
  %v1339 = vunpack.c.l.b16 %v187
  %v1340 = vunpack.c.l.b16 %v188
  %v1341 = vunpack.c.l.b16 %v189
  %v1342 = vunpack.c.l.b16 %v190
  %v1343 = vunpack.c.l.b16 %v191
  %v1344 = vunpack.c.l.b16 %v192
  %v1345 = vunpack.c.l.b16 %v193
  %v1346 = vunpack.c.l.b16 %v194
  %v1347 = vunpack.c.l.b16 %v195
  %v1348 = vunpack.c.l.b16 %v196
  %v1349 = vunpack.c.l.b16 %v197
  %v1350 = vunpack.c.l.b16 %v198
  %v1351 = vunpack.c.l.b16 %v199
  %v1352 = vunpack.c.l.b16 %v200
  %v1353 = vunpack.c.l.b16 %v201
  %v1354 = vunpack.c.l.b16 %v202
  %v1355 = vunpack.c.l.b16 %v203
  %v1356 = vunpack.c.l.b16 %v204
  %v1357 = vunpack.c.l.b16 %v205
  %v1358 = vunpack.c.l.b16 %v206
  %v1359 = vunpack.c.l.b16 %v207
  %v1360 = vunpack.c.l.b16 %v208
  %v1361 = vunpack.c.l.b16 %v209
  %v1362 = vunpack.c.l.b16 %v210
  %v1363 = vunpack.c.l.b16 %v211
  %v1364 = vunpack.c.l.b16 %v212
  %v1365 = vunpack.c.l.b16 %v213
  %v1366 = vunpack.c.l.b16 %v214
  %v1367 = vunpack.c.l.b16 %v215
  %v1368 = vunpack.c.l.b16 %v216
  %v1369 = vunpack.c.l.b16 %v217
  %v1370 = vunpack.c.l.b16 %v218
  %v1371 = vunpack.c.l.b16 %v219
  %v1372 = vunpack.c.l.b16 %v220
  %v1373 = vunpack.c.l.b16 %v221
  %v1374 = vunpack.c.l.b16 %v222
  %v1375 = vunpack.c.l.b16 %v223
  %v1376 = vunpack.c.l.b16 %v224
  %v1377 = vunpack.c.l.b16 %v225
  %v1378 = vunpack.c.l.b16 %v226
  %v1379 = vunpack.c.l.b16 %v227
  %v1380 = vunpack.c.l.b16 %v228
  %v1381 = vunpack.c.l.b16 %v229
  %v1382 = vunpack.c.l.b16 %v230
  %v1383 = vunpack.c.l.b16 %v231
  %v1384 = vunpack.c.l.b16 %v232
  %v1385 = vunpack.c.l.b16 %v233
  %v1386 = vunpack.c.l.b16 %v234
  %v1387 = vunpack.c.l.b16 %v235
  %v1388 = vunpack.c.l.b16 %v236
  %v1389 = vunpack.c.l.b16 %v237
  %v1390 = vunpack.c.l.b16 %v238
  %v1391 = vunpack.c.l.b16 %v239
  %v1392 = vunpack.c.l.b16 %v240
  %v1393 = vunpack.c.l.b16 %v241
  %v1394 = vunpack.c.l.b16 %v242
  %v1395 = vunpack.c.l.b16 %v243
  %v1396 = vunpack.c.l.b16 %v244
  %v1397 = vunpack.c.l.b16 %v245
  %v1398 = vunpack.c.l.b16 %v246
  %v1399 = vunpack.c.l.b16 %v247
  %v1400 = vunpack.c.l.b16 %v248
  %v1401 = vunpack.c.l.b16 %v249
  %v1402 = vunpack.c.l.b16 %v250
  %v1403 = vunpack.c.l.b16 %v251
  %v1404 = vunpack.c.l.b16 %v252
  %v1405 = vunpack.c.l.b16 %v253
  %v1406 = vunpack.c.l.b16 %v254
  %v1407 = vunpack.c.l.b16 %v255
  %v1408 = vunpack.c.l.b16 %v256
  %v1409 = vunpack.c.l.b16 %v257
  %v1410 = vunpack.c.l.b16 %v258
  %v1411 = vunpack.c.l.b16 %v259
  %v1412 = vunpack.c.l.b16 %v260
  %v1413 = vunpack.c.l.b16 %v261
  %v1414 = vunpack.c.l.b16 %v262
  %v1415 = vunpack.c.l.b16 %v263
  %v1416 = vunpack.c.l.b16 %v264
  %v1417 = vunpack.c.l.b16 %v265
  %v1418 = vunpack.c.l.b16 %v266
  %v1419 = vunpack.c.l.b16 %v267
  %v1420 = vunpack.c.l.b16 %v268
  %v1421 = vunpack.c.l.b16 %v269
  %v1422 = vunpack.c.l.b16 %v270
  %v1423 = vunpack.c.l.b16 %v271
  %v1424 = vunpack.c.l.b16 %v272
  %v1425 = vunpack.c.l.b16 %v273
  %v1426 = vunpack.c.l.b16 %v274
  %v1427 = vunpack.c.l.b16 %v275
  %v1428 = vunpack.c.l.b16 %v276
  %v1429 = vunpack.c.l.b16 %v277
  %v1430 = vunpack.c.l.b16 %v278
  %v1431 = vunpack.c.l.b16 %v279
  %v1432 = vunpack.c.l.b16 %v280
  %v1433 = vunpack.c.l.b16 %v281
  %v1434 = vunpack.c.l.b16 %v282
  %v1435 = vunpack.c.l.b16 %v283
  %v1436 = vunpack.c.l.b16 %v284
  %v1437 = vunpack.c.l.b16 %v285
  %v1438 = vunpack.c.l.b16 %v286
  %v1439 = vunpack.c.l.b16 %v287
  %v1440 = vunpack.c.l.b16 %v288
  %v1441 = vunpack.c.l.b16 %v289
  %v1442 = vunpack.c.l.b16 %v290
  %v1443 = vunpack.c.l.b16 %v291
  %v1444 = vunpack.c.l.b16 %v292
  %v1445 = vunpack.c.l.b16 %v293
  %v1446 = vunpack.c.l.b16 %v294
  %v1447 = vunpack.c.l.b16 %v295
  %v1448 = vunpack.c.l.b16 %v296
  %v1449 = vunpack.c.l.b16 %v297
  %v1450 = vunpack.c.l.b16 %v298
  %v1451 = vunpack.c.l.b16 %v299
  %v1452 = vunpack.c.l.b16 %v300
  %v1453 = vunpack.c.l.b16 %v301
  %v1454 = vunpack.c.l.b16 %v302
  %v1455 = vunpack.c.l.b16 %v303
  %v1456 = vunpack.c.l.b16 %v304
  %v1457 = vunpack.c.l.b16 %v305
  %v1458 = vunpack.c.l.b16 %v306
  %v1459 = vunpack.c.l.b16 %v307
  %v1460 = vunpack.c.l.b16 %v308
  %v1461 = vunpack.c.l.b16 %v309
  %v1462 = vunpack.c.l.b16 %v310
  %v1463 = vunpack.c.l.b16 %v311
  %v1464 = vunpack.c.l.b16 %v312
  %v1465 = vunpack.c.l.b16 %v313
  %v1466 = vunpack.c.l.b16 %v314
  %v1467 = vunpack.c.l.b16 %v315
  %v1468 = vunpack.c.l.b16 %v316
  %v1469 = vunpack.c.l.b16 %v317
  %v1470 = vunpack.c.l.b16 %v318
  %v1471 = vunpack.c.l.b16 %v319
  %v1472 = vunpack.c.l.b16 %v320
  %v1473 = vunpack.c.l.b16 %v321
  %v1474 = vunpack.c.l.b16 %v322
  %v1475 = vunpack.c.l.b16 %v323
  %v1476 = vunpack.c.l.b16 %v324
  %v1477 = vunpack.c.l.b16 %v325
  %v1478 = vunpack.c.l.b16 %v326
  %v1479 = vunpack.c.l.b16 %v327
  %v1480 = vunpack.c.l.b16 %v328
  %v1481 = vunpack.c.l.b16 %v329
  %v1482 = vunpack.c.l.b16 %v330
  %v1483 = vunpack.c.l.b16 %v331
  %v1484 = vunpack.c.l.b16 %v332
  %v1485 = vunpack.c.l.b16 %v333
  %v1486 = vunpack.c.l.b16 %v334
  %v1487 = vunpack.c.l.b16 %v335
  %v1488 = vunpack.c.l.b16 %v336
  %v1489 = vunpack.c.l.b16 %v337
  %v1490 = vunpack.c.l.b16 %v338
  %v1491 = vunpack.c.l.b16 %v339
  %v1492 = vunpack.c.l.b16 %v340
  %v1493 = vunpack.c.l.b16 %v341
  %v1494 = vunpack.c.l.b16 %v342
  %v1495 = vunpack.c.l.b16 %v343
  %v1496 = vunpack.c.l.b16 %v344
  %v1497 = vunpack.c.l.b16 %v345
  %v1498 = vunpack.c.l.b16 %v346
  %v1499 = vunpack.c.l.b16 %v347
  %v1500 = vunpack.c.l.b16 %v348
  %v1501 = vunpack.c.l.b16 %v349
  %v1502 = vunpack.c.l.b16 %v350
  %v1503 = vunpack.c.l.b16 %v351
  %v1504 = vunpack.c.l.b16 %v352
  %v1505 = vunpack.c.l.b16 %v353
  %v1506 = vunpack.c.l.b16 %v354
  %v1507 = vunpack.c.l.b16 %v355
  %v1508 = vunpack.c.l.b16 %v356
  %v1509 = vunpack.c.l.b16 %v357
  %v1510 = vunpack.c.l.b16 %v358
  %v1511 = vunpack.c.l.b16 %v359
  %v1512 = vunpack.c.l.b16 %v360
  %v1513 = vunpack.c.l.b16 %v361
  %v1514 = vunpack.c.l.b16 %v362
  %v1515 = vunpack.c.l.b16 %v363
  %v1516 = vunpack.c.l.b16 %v364
  %v1517 = vunpack.c.l.b16 %v365
  %v1518 = vunpack.c.l.b16 %v366
  %v1519 = vunpack.c.l.b16 %v367
  %v1520 = vunpack.c.l.b16 %v368
  %v1521 = vunpack.c.l.b16 %v369
  %v1522 = vunpack.c.l.b16 %v370
  %v1523 = vunpack.c.l.b16 %v371
  %v1524 = vunpack.c.l.b16 %v372
  %v1525 = vunpack.c.l.b16 %v373
  %v1526 = vunpack.c.l.b16 %v374
  %v1527 = vunpack.c.l.b16 %v375
  %v1528 = vunpack.c.l.b16 %v376
  %v1529 = vunpack.c.l.b16 %v377
  %v1530 = vunpack.c.l.b16 %v378
  %v1531 = vunpack.c.l.b16 %v379
  %v1532 = vunpack.c.l.b16 %v380
  %v1533 = vunpack.c.l.b16 %v381
  %v1534 = vunpack.c.l.b16 %v382
  %v1535 = vunpack.c.l.b16 %v383
  %v1536 = vunpack.c.l.b16 %v384
  %v1537 = vunpack.c.l.b16 %v385
  %v1538 = vunpack.c.l.b16 %v386
  %v1539 = vunpack.c.l.b16 %v387
  %v1540 = vunpack.c.l.b16 %v388
  %v1541 = vunpack.c.l.b16 %v389
  %v1542 = vunpack.c.l.b16 %v390
  %v1543 = vunpack.c.l.b16 %v391
  %v1544 = vunpack.c.l.b16 %v392
  %v1545 = vunpack.c.l.b16 %v393
  %v1546 = vunpack.c.l.b16 %v394
  %v1547 = vunpack.c.l.b16 %v395
  %v1548 = vunpack.c.l.b16 %v396
  %v1549 = vunpack.c.l.b16 %v397
  %v1550 = vunpack.c.l.b16 %v398
  %v1551 = vunpack.c.l.b16 %v399
  %v1552 = vunpack.c.l.b16 %v400
  %v1553 = vunpack.c.l.b16 %v401
  %v1554 = vunpack.c.l.b16 %v402
  %v1555 = vunpack.c.l.b16 %v403
  %v1556 = vunpack.c.l.b16 %v404
  %v1557 = vpack.c.b16 %v1302, %v1301
  %v1558 = vpack.c.b16 %v1304, %v1303
  %v1559 = vpack.c.b16 %v1306, %v1305
  %v1560 = vpack.c.b16 %v1308, %v1307
  %v1561 = vpack.c.b16 %v1310, %v1309
  %v1562 = vpack.c.b16 %v1312, %v1311
  %v1563 = vpack.c.b16 %v1314, %v1313
  %v1564 = vpack.c.b16 %v1316, %v1315
  %v1565 = vpack.c.b16 %v1318, %v1317
  %v1566 = vpack.c.b16 %v1320, %v1319
  %v1567 = vpack.c.b16 %v1322, %v1321
  %v1568 = vpack.c.b16 %v1324, %v1323
  %v1569 = vpack.c.b16 %v1326, %v1325
  %v1570 = vpack.c.b16 %v1328, %v1327
  %v1571 = vpack.c.b16 %v1330, %v1329
  %v1572 = vpack.c.b16 %v1332, %v1331
  %v1573 = vpack.c.b16 %v1334, %v1333
  %v1574 = vpack.c.b16 %v1336, %v1335
  %v1575 = vpack.c.b16 %v1338, %v1337
  %v1576 = vpack.c.b16 %v1340, %v1339
  %v1577 = vpack.c.b16 %v1342, %v1341
  %v1578 = vpack.c.b16 %v1344, %v1343
  %v1579 = vpack.c.b16 %v1346, %v1345
  %v1580 = vpack.c.b16 %v1348, %v1347
  %v1581 = vpack.c.b16 %v1350, %v1349
  %v1582 = vpack.c.b16 %v1352, %v1351
  %v1583 = vpack.c.b16 %v1354, %v1353
  %v1584 = vpack.c.b16 %v1356, %v1355
  %v1585 = vpack.c.b16 %v1358, %v1357
  %v1586 = vpack.c.b16 %v1360, %v1359
  %v1587 = vpack.c.b16 %v1362, %v1361
  %v1588 = vpack.c.b16 %v1364, %v1363
  %v1589 = vpack.c.b16 %v1366, %v1365
  %v1590 = vpack.c.b16 %v1368, %v1367
  %v1591 = vpack.c.b16 %v1370, %v1369
  %v1592 = vpack.c.b16 %v1372, %v1371
  %v1593 = vpack.c.b16 %v1374, %v1373
  %v1594 = vpack.c.b16 %v1376, %v1375
  %v1595 = vpack.c.b16 %v1378, %v1377
  %v1596 = vpack.c.b16 %v1380, %v1379
  %v1597 = vpack.c.b16 %v1382, %v1381
  %v1598 = vpack.c.b16 %v1384, %v1383
  %v1599 = vpack.c.b16 %v1386, %v1385
  %v1600 = vpack.c.b16 %v1388, %v1387
  %v1601 = vpack.c.b16 %v1390, %v1389
  %v1602 = vpack.c.b16 %v1392, %v1391
  %v1603 = vpack.c.b16 %v1394, %v1393
  %v1604 = vpack.c.b16 %v1396, %v1395
  %v1605 = vpack.c.b16 %v1398, %v1397
  %v1606 = vpack.c.b16 %v1400, %v1399
  %v1607 = vpack.c.b16 %v1402, %v1401
  %v1608 = vpack.c.b16 %v1404, %v1403
  %v1609 = vpack.c.b16 %v1406, %v1405
  %v1610 = vpack.c.b16 %v1408, %v1407
  %v1611 = vpack.c.b16 %v1410, %v1409
  %v1612 = vpack.c.b16 %v1412, %v1411
  %v1613 = vpack.c.b16 %v1414, %v1413
  %v1614 = vpack.c.b16 %v1416, %v1415
  %v1615 = vpack.c.b16 %v1418, %v1417
  %v1616 = vpack.c.b16 %v1420, %v1419
  %v1617 = vpack.c.b16 %v1422, %v1421
  %v1618 = vpack.c.b16 %v1424, %v1423
  %v1619 = vpack.c.b16 %v1426, %v1425
  %v1620 = vpack.c.b16 %v1428, %v1427
  %v1621 = vpack.c.b16 %v1430, %v1429
  %v1622 = vpack.c.b16 %v1432, %v1431
  %v1623 = vpack.c.b16 %v1434, %v1433
  %v1624 = vpack.c.b16 %v1436, %v1435
  %v1625 = vpack.c.b16 %v1438, %v1437
  %v1626 = vpack.c.b16 %v1440, %v1439
  %v1627 = vpack.c.b16 %v1442, %v1441
  %v1628 = vpack.c.b16 %v1444, %v1443
  %v1629 = vpack.c.b16 %v1446, %v1445
  %v1630 = vpack.c.b16 %v1448, %v1447
  %v1631 = vpack.c.b16 %v1450, %v1449
  %v1632 = vpack.c.b16 %v1452, %v1451
  %v1633 = vpack.c.b16 %v1454, %v1453
  %v1634 = vpack.c.b16 %v1456, %v1455
  %v1635 = vpack.c.b16 %v1458, %v1457
  %v1636 = vpack.c.b16 %v1460, %v1459
  %v1637 = vpack.c.b16 %v1462, %v1461
  %v1638 = vpack.c.b16 %v1464, %v1463
  %v1639 = vpack.c.b16 %v1466, %v1465
  %v1640 = vpack.c.b16 %v1468, %v1467
  %v1641 = vpack.c.b16 %v1470, %v1469
  %v1642 = vpack.c.b16 %v1472, %v1471
  %v1643 = vpack.c.b16 %v1474, %v1473
  %v1644 = vpack.c.b16 %v1476, %v1475
  %v1645 = vpack.c.b16 %v1478, %v1477
  %v1646 = vpack.c.b16 %v1480, %v1479
  %v1647 = vpack.c.b16 %v1482, %v1481
  %v1648 = vpack.c.b16 %v1484, %v1483
  %v1649 = vpack.c.b16 %v1486, %v1485
  %v1650 = vpack.c.b16 %v1488, %v1487
  %v1651 = vpack.c.b16 %v1490, %v1489
  %v1652 = vpack.c.b16 %v1492, %v1491
  %v1653 = vpack.c.b16 %v1494, %v1493
  %v1654 = vpack.c.b16 %v1496, %v1495
  %v1655 = vpack.c.b16 %v1498, %v1497
  %v1656 = vpack.c.b16 %v1500, %v1499
  %v1657 = vpack.c.b16 %v1502, %v1501
  %v1658 = vpack.c.b16 %v1504, %v1503
  %v1659 = vpack.c.b16 %v1506, %v1505
  %v1660 = vpack.c.b16 %v1508, %v1507
  %v1661 = vpack.c.b16 %v1510, %v1509
  %v1662 = vpack.c.b16 %v1512, %v1511
  %v1663 = vpack.c.b16 %v1514, %v1513
  %v1664 = vpack.c.b16 %v1516, %v1515
  %v1665 = vpack.c.b16 %v1518, %v1517
  %v1666 = vpack.c.b16 %v1520, %v1519
  %v1667 = vpack.c.b16 %v1522, %v1521
  %v1668 = vpack.c.b16 %v1524, %v1523
  %v1669 = vpack.c.b16 %v1526, %v1525
  %v1670 = vpack.c.b16 %v1528, %v1527
  %v1671 = vpack.c.b16 %v1530, %v1529
  %v1672 = vpack.c.b16 %v1532, %v1531
  %v1673 = vpack.c.b16 %v1534, %v1533
  %v1674 = vpack.c.b16 %v1536, %v1535
  %v1675 = vpack.c.b16 %v1538, %v1537
  %v1676 = vpack.c.b16 %v1540, %v1539
  %v1677 = vpack.c.b16 %v1542, %v1541
  %v1678 = vpack.c.b16 %v1544, %v1543
  %v1679 = vpack.c.b16 %v1546, %v1545
  %v1680 = vpack.c.b16 %v1548, %v1547
  %v1681 = vpack.c.b16 %v1550, %v1549
  %v1682 = vpack.c.b16 %v1552, %v1551
  %v1683 = vpack.c.b16 %v1554, %v1553
  %v1684 = vpack.c.b16 %v1556, %v1555
  %1813 = vmatprep.subr.bf16.mxu0 0
  %1814 = vmatpush1.bf16.msra.mxu0 %v1557
  %1815 = vmatprep.subr.bf16.mxu0 0
  %1816 = vmatpush1.bf16.msra.mxu0 %v1558
  %1817 = vmatprep.subr.bf16.mxu0 0
  %1818 = vmatpush1.bf16.msra.mxu0 %v1559
  %1819 = vmatprep.subr.bf16.mxu0 0
  %1820 = vmatpush1.bf16.msra.mxu0 %v1560
  %1821 = vmatprep.subr.bf16.mxu0 0
  %1822 = vmatpush1.bf16.msra.mxu0 %v1561
  %1823 = vmatprep.subr.bf16.mxu0 0
  %1824 = vmatpush1.bf16.msra.mxu0 %v1562
  %1825 = vmatprep.subr.bf16.mxu0 0
  %1826 = vmatpush1.bf16.msra.mxu0 %v1563
  %1827 = vmatprep.subr.bf16.mxu0 0
  %1828 = vmatpush1.bf16.msra.mxu0 %v1564
  %1829 = vmatprep.subr.bf16.mxu0 0
  %1830 = vmatpush1.bf16.msra.mxu0 %v1565
  %1831 = vmatprep.subr.bf16.mxu0 0
  %1832 = vmatpush1.bf16.msra.mxu0 %v1566
  %1833 = vmatprep.subr.bf16.mxu0 0
  %1834 = vmatpush1.bf16.msra.mxu0 %v1567
  %1835 = vmatprep.subr.bf16.mxu0 0
  %1836 = vmatpush1.bf16.msra.mxu0 %v1568
  %1837 = vmatprep.subr.bf16.mxu0 0
  %1838 = vmatpush1.bf16.msra.mxu0 %v1569
  %1839 = vmatprep.subr.bf16.mxu0 0
  %1840 = vmatpush1.bf16.msra.mxu0 %v1570
  %1841 = vmatprep.subr.bf16.mxu0 0
  %1842 = vmatpush1.bf16.msra.mxu0 %v1571
  %1843 = vmatprep.subr.bf16.mxu0 0
  %1844 = vmatpush1.bf16.msra.mxu0 %v1572
  %1845 = vmatprep.mubr.bf16.mxu0 %v790
  %1846 = vmatmul.mubr.bf16.gmra.mrb[0].mxu0 %v789
  %v1847 = vpop.f32.mrb[0].mxu0
  %v1848 = vadd.f32 0.0, %v1847
  %v1849 = vpop.f32.mrb[0].mxu0
  %v1850 = vpop.f32.mrb[0].mxu0
  %v1851 = vadd.f32 0.0, %v1850
  %v1852 = vpop.f32.mrb[0].mxu0
  %1853 = vmatprep.mubr.bf16.mxu0 %v806
  %1854 = vmatmul.mubr.bf16.gmra.mrb[0].mxu0 %v805
  %v1855 = vpop.f32.mrb[0].mxu0
  %v1856 = vadd.f32 0.0, %v1855
  %v1857 = vpop.f32.mrb[0].mxu0
  %v1858 = vpop.f32.mrb[0].mxu0
  %v1859 = vadd.f32 0.0, %v1858
  %v1860 = vpop.f32.mrb[0].mxu0
  %1861 = vmatprep.mubr.bf16.mxu0 %v822
  %1862 = vmatmul.mubr.bf16.gmra.mrb[0].mxu0 %v821
  %v1863 = vpop.f32.mrb[0].mxu0
  %v1864 = vadd.f32 0.0, %v1863
  %v1865 = vpop.f32.mrb[0].mxu0
  %v1866 = vpop.f32.mrb[0].mxu0
  %v1867 = vadd.f32 0.0, %v1866
  %v1868 = vpop.f32.mrb[0].mxu0
  %1869 = vmatprep.mubr.bf16.mxu0 %v838
  %1870 = vmatmul.mubr.bf16.gmra.mrb[0].mxu0 %v837
  %v1871 = vpop.f32.mrb[0].mxu0
  %v1872 = vadd.f32 0.0, %v1871
  %v1873 = vpop.f32.mrb[0].mxu0
  %v1874 = vpop.f32.mrb[0].mxu0
  %v1875 = vadd.f32 0.0, %v1874
  %v1876 = vpop.f32.mrb[0].mxu0
  %1877 = vmatprep.mubr.bf16.mxu0 %v854
  %1878 = vmatmul.mubr.bf16.gmra.mrb[0].mxu0 %v853
  %v1879 = vpop.f32.mrb[0].mxu0
  %v1880 = vadd.f32 0.0, %v1879
  %v1881 = vpop.f32.mrb[0].mxu0
  %v1882 = vpop.f32.mrb[0].mxu0
  %v1883 = vadd.f32 0.0, %v1882
  %v1884 = vpop.f32.mrb[0].mxu0
  %1885 = vmatprep.mubr.bf16.mxu0 %v870
  %1886 = vmatmul.mubr.bf16.gmra.mrb[0].mxu0 %v869
  %v1887 = vpop.f32.mrb[0].mxu0
  %v1888 = vadd.f32 0.0, %v1887
  %v1889 = vpop.f32.mrb[0].mxu0
  %v1890 = vpop.f32.mrb[0].mxu0
  %v1891 = vadd.f32 0.0, %v1890
  %v1892 = vpop.f32.mrb[0].mxu0
  %1893 = vmatprep.mubr.bf16.mxu0 %v886
  %1894 = vmatmul.mubr.bf16.gmra.mrb[0].mxu0 %v885
  %v1895 = vpop.f32.mrb[0].mxu0
  %v1896 = vadd.f32 0.0, %v1895
  %v1897 = vpop.f32.mrb[0].mxu0
  %v1898 = vpop.f32.mrb[0].mxu0
  %v1899 = vadd.f32 0.0, %v1898
  %v1900 = vpop.f32.mrb[0].mxu0
  %1901 = vmatprep.mubr.bf16.mxu0 %v902
  %1902 = vmatmul.mubr.bf16.gmra.mrb[0].mxu0 %v901
  %v1903 = vpop.f32.mrb[0].mxu0
  %v1904 = vadd.f32 0.0, %v1903
  %v1905 = vpop.f32.mrb[0].mxu0
  %v1906 = vpop.f32.mrb[0].mxu0
  %v1907 = vadd.f32 0.0, %v1906
  %v1908 = vpop.f32.mrb[0].mxu0
  %1909 = vdwg.mxu0
  %1910 = vmatprep.subr.bf16.mxu0 0
  %1911 = vmatpush1.bf16.msra.mxu0 %v1573
  %1912 = vmatprep.subr.bf16.mxu0 0
  %1913 = vmatpush1.bf16.msra.mxu0 %v1574
  %1914 = vmatprep.subr.bf16.mxu0 0
  %1915 = vmatpush1.bf16.msra.mxu0 %v1575
  %1916 = vmatprep.subr.bf16.mxu0 0
  %1917 = vmatpush1.bf16.msra.mxu0 %v1576
  %1918 = vmatprep.subr.bf16.mxu0 0
  %1919 = vmatpush1.bf16.msra.mxu0 %v1577
  %1920 = vmatprep.subr.bf16.mxu0 0
  %1921 = vmatpush1.bf16.msra.mxu0 %v1578
  %1922 = vmatprep.subr.bf16.mxu0 0
  %1923 = vmatpush1.bf16.msra.mxu0 %v1579
  %1924 = vmatprep.subr.bf16.mxu0 0
  %1925 = vmatpush1.bf16.msra.mxu0 %v1580
  %1926 = vmatprep.subr.bf16.mxu0 0
  %1927 = vmatpush1.bf16.msra.mxu0 %v1581
  %1928 = vmatprep.subr.bf16.mxu0 0
  %1929 = vmatpush1.bf16.msra.mxu0 %v1582
  %1930 = vmatprep.subr.bf16.mxu0 0
  %1931 = vmatpush1.bf16.msra.mxu0 %v1583
  %1932 = vmatprep.subr.bf16.mxu0 0
  %1933 = vmatpush1.bf16.msra.mxu0 %v1584
  %1934 = vmatprep.subr.bf16.mxu0 0
  %1935 = vmatpush1.bf16.msra.mxu0 %v1585
  %1936 = vmatprep.subr.bf16.mxu0 0
  %1937 = vmatpush1.bf16.msra.mxu0 %v1586
  %1938 = vmatprep.subr.bf16.mxu0 0
  %1939 = vmatpush1.bf16.msra.mxu0 %v1587
  %1940 = vmatprep.subr.bf16.mxu0 0
  %1941 = vmatpush1.bf16.msra.mxu0 %v1588
  %1942 = vmatprep.mubr.bf16.mxu0 %v792
  %1943 = vmatmul.mubr.bf16.gmra.mrb[0].mxu0 %v791
  %v1944 = vpop.f32.mrb[0].mxu0
  %v1945 = vadd.f32 %v1848, %v1944
  %v1946 = vpop.f32.mrb[0].mxu0
  %v1947 = vpop.f32.mrb[0].mxu0
  %v1948 = vadd.f32 %v1851, %v1947
  %v1949 = vpop.f32.mrb[0].mxu0
  %1950 = vmatprep.mubr.bf16.mxu0 %v808
  %1951 = vmatmul.mubr.bf16.gmra.mrb[0].mxu0 %v807
  %v1952 = vpop.f32.mrb[0].mxu0
  %v1953 = vadd.f32 %v1856, %v1952
  %v1954 = vpop.f32.mrb[0].mxu0
  %v1955 = vpop.f32.mrb[0].mxu0
  %v1956 = vadd.f32 %v1859, %v1955
  %v1957 = vpop.f32.mrb[0].mxu0
  %1958 = vmatprep.mubr.bf16.mxu0 %v824
  %1959 = vmatmul.mubr.bf16.gmra.mrb[0].mxu0 %v823
  %v1960 = vpop.f32.mrb[0].mxu0
  %v1961 = vadd.f32 %v1864, %v1960
  %v1962 = vpop.f32.mrb[0].mxu0
  %v1963 = vpop.f32.mrb[0].mxu0
  %v1964 = vadd.f32 %v1867, %v1963
  %v1965 = vpop.f32.mrb[0].mxu0
  %1966 = vmatprep.mubr.bf16.mxu0 %v840
  %1967 = vmatmul.mubr.bf16.gmra.mrb[0].mxu0 %v839
  %v1968 = vpop.f32.mrb[0].mxu0
  %v1969 = vadd.f32 %v1872, %v1968
  %v1970 = vpop.f32.mrb[0].mxu0
  %v1971 = vpop.f32.mrb[0].mxu0
  %v1972 = vadd.f32 %v1875, %v1971
  %v1973 = vpop.f32.mrb[0].mxu0
  %1974 = vmatprep.mubr.bf16.mxu0 %v856
  %1975 = vmatmul.mubr.bf16.gmra.mrb[0].mxu0 %v855
  %v1976 = vpop.f32.mrb[0].mxu0
  %v1977 = vadd.f32 %v1880, %v1976
  %v1978 = vpop.f32.mrb[0].mxu0
  %v1979 = vpop.f32.mrb[0].mxu0
  %v1980 = vadd.f32 %v1883, %v1979
  %v1981 = vpop.f32.mrb[0].mxu0
  %1982 = vmatprep.mubr.bf16.mxu0 %v872
  %1983 = vmatmul.mubr.bf16.gmra.mrb[0].mxu0 %v871
  %v1984 = vpop.f32.mrb[0].mxu0
  %v1985 = vadd.f32 %v1888, %v1984
  %v1986 = vpop.f32.mrb[0].mxu0
  %v1987 = vpop.f32.mrb[0].mxu0
  %v1988 = vadd.f32 %v1891, %v1987
  %v1989 = vpop.f32.mrb[0].mxu0
  %1990 = vmatprep.mubr.bf16.mxu0 %v888
  %1991 = vmatmul.mubr.bf16.gmra.mrb[0].mxu0 %v887
  %v1992 = vpop.f32.mrb[0].mxu0
  %v1993 = vadd.f32 %v1896, %v1992
  %v1994 = vpop.f32.mrb[0].mxu0
  %v1995 = vpop.f32.mrb[0].mxu0
  %v1996 = vadd.f32 %v1899, %v1995
  %v1997 = vpop.f32.mrb[0].mxu0
  %1998 = vmatprep.mubr.bf16.mxu0 %v904
  %1999 = vmatmul.mubr.bf16.gmra.mrb[0].mxu0 %v903
  %v2000 = vpop.f32.mrb[0].mxu0
  %v2001 = vadd.f32 %v1904, %v2000
  %v2002 = vpop.f32.mrb[0].mxu0
  %v2003 = vpop.f32.mrb[0].mxu0
  %v2004 = vadd.f32 %v1907, %v2003
  %v2005 = vpop.f32.mrb[0].mxu0
  %2006 = vdwg.mxu0
  %2007 = vmatprep.subr.bf16.mxu0 0
  %2008 = vmatpush1.bf16.msra.mxu0 %v1589
  %2009 = vmatprep.subr.bf16.mxu0 0
  %2010 = vmatpush1.bf16.msra.mxu0 %v1590
  %2011 = vmatprep.subr.bf16.mxu0 0
  %2012 = vmatpush1.bf16.msra.mxu0 %v1591
  %2013 = vmatprep.subr.bf16.mxu0 0
  %2014 = vmatpush1.bf16.msra.mxu0 %v1592
  %2015 = vmatprep.subr.bf16.mxu0 0
  %2016 = vmatpush1.bf16.msra.mxu0 %v1593
  %2017 = vmatprep.subr.bf16.mxu0 0
  %2018 = vmatpush1.bf16.msra.mxu0 %v1594
  %2019 = vmatprep.subr.bf16.mxu0 0
  %2020 = vmatpush1.bf16.msra.mxu0 %v1595
  %2021 = vmatprep.subr.bf16.mxu0 0
  %2022 = vmatpush1.bf16.msra.mxu0 %v1596
  %2023 = vmatprep.subr.bf16.mxu0 0
  %2024 = vmatpush1.bf16.msra.mxu0 %v1597
  %2025 = vmatprep.subr.bf16.mxu0 0
  %2026 = vmatpush1.bf16.msra.mxu0 %v1598
  %2027 = vmatprep.subr.bf16.mxu0 0
  %2028 = vmatpush1.bf16.msra.mxu0 %v1599
  %2029 = vmatprep.subr.bf16.mxu0 0
  %2030 = vmatpush1.bf16.msra.mxu0 %v1600
  %2031 = vmatprep.subr.bf16.mxu0 0
  %2032 = vmatpush1.bf16.msra.mxu0 %v1601
  %2033 = vmatprep.subr.bf16.mxu0 0
  %2034 = vmatpush1.bf16.msra.mxu0 %v1602
  %2035 = vmatprep.subr.bf16.mxu0 0
  %2036 = vmatpush1.bf16.msra.mxu0 %v1603
  %2037 = vmatprep.subr.bf16.mxu0 0
  %2038 = vmatpush1.bf16.msra.mxu0 %v1604
  %2039 = vmatprep.mubr.bf16.mxu0 %v794
  %2040 = vmatmul.mubr.bf16.gmra.mrb[0].mxu0 %v793
  %v2041 = vpop.f32.mrb[0].mxu0
  %v2042 = vadd.f32 %v1945, %v2041
  %v2043 = vpop.f32.mrb[0].mxu0
  %v2044 = vpop.f32.mrb[0].mxu0
  %v2045 = vadd.f32 %v1948, %v2044
  %v2046 = vpop.f32.mrb[0].mxu0
  %2047 = vmatprep.mubr.bf16.mxu0 %v810
  %2048 = vmatmul.mubr.bf16.gmra.mrb[0].mxu0 %v809
  %v2049 = vpop.f32.mrb[0].mxu0
  %v2050 = vadd.f32 %v1953, %v2049
  %v2051 = vpop.f32.mrb[0].mxu0
  %v2052 = vpop.f32.mrb[0].mxu0
  %v2053 = vadd.f32 %v1956, %v2052
  %v2054 = vpop.f32.mrb[0].mxu0
  %2055 = vmatprep.mubr.bf16.mxu0 %v826
  %2056 = vmatmul.mubr.bf16.gmra.mrb[0].mxu0 %v825
  %v2057 = vpop.f32.mrb[0].mxu0
  %v2058 = vadd.f32 %v1961, %v2057
  %v2059 = vpop.f32.mrb[0].mxu0
  %v2060 = vpop.f32.mrb[0].mxu0
  %v2061 = vadd.f32 %v1964, %v2060
  %v2062 = vpop.f32.mrb[0].mxu0
  %2063 = vmatprep.mubr.bf16.mxu0 %v842
  %2064 = vmatmul.mubr.bf16.gmra.mrb[0].mxu0 %v841
  %v2065 = vpop.f32.mrb[0].mxu0
  %v2066 = vadd.f32 %v1969, %v2065
  %v2067 = vpop.f32.mrb[0].mxu0
  %v2068 = vpop.f32.mrb[0].mxu0
  %v2069 = vadd.f32 %v1972, %v2068
  %v2070 = vpop.f32.mrb[0].mxu0
  %2071 = vmatprep.mubr.bf16.mxu0 %v858
  %2072 = vmatmul.mubr.bf16.gmra.mrb[0].mxu0 %v857
  %v2073 = vpop.f32.mrb[0].mxu0
  %v2074 = vadd.f32 %v1977, %v2073
  %v2075 = vpop.f32.mrb[0].mxu0
  %v2076 = vpop.f32.mrb[0].mxu0
  %v2077 = vadd.f32 %v1980, %v2076
  %v2078 = vpop.f32.mrb[0].mxu0
  %2079 = vmatprep.mubr.bf16.mxu0 %v874
  %2080 = vmatmul.mubr.bf16.gmra.mrb[0].mxu0 %v873
  %v2081 = vpop.f32.mrb[0].mxu0
  %v2082 = vadd.f32 %v1985, %v2081
  %v2083 = vpop.f32.mrb[0].mxu0
  %v2084 = vpop.f32.mrb[0].mxu0
  %v2085 = vadd.f32 %v1988, %v2084
  %v2086 = vpop.f32.mrb[0].mxu0
  %2087 = vmatprep.mubr.bf16.mxu0 %v890
  %2088 = vmatmul.mubr.bf16.gmra.mrb[0].mxu0 %v889
  %v2089 = vpop.f32.mrb[0].mxu0
  %v2090 = vadd.f32 %v1993, %v2089
  %v2091 = vpop.f32.mrb[0].mxu0
  %v2092 = vpop.f32.mrb[0].mxu0
  %v2093 = vadd.f32 %v1996, %v2092
  %v2094 = vpop.f32.mrb[0].mxu0
  %2095 = vmatprep.mubr.bf16.mxu0 %v906
  %2096 = vmatmul.mubr.bf16.gmra.mrb[0].mxu0 %v905
  %v2097 = vpop.f32.mrb[0].mxu0
  %v2098 = vadd.f32 %v2001, %v2097
  %v2099 = vpop.f32.mrb[0].mxu0
  %v2100 = vpop.f32.mrb[0].mxu0
  %v2101 = vadd.f32 %v2004, %v2100
  %v2102 = vpop.f32.mrb[0].mxu0
  %2103 = vdwg.mxu0
  %2104 = vmatprep.subr.bf16.mxu0 0
  %2105 = vmatpush1.bf16.msra.mxu0 %v1605
  %2106 = vmatprep.subr.bf16.mxu0 0
  %2107 = vmatpush1.bf16.msra.mxu0 %v1606
  %2108 = vmatprep.subr.bf16.mxu0 0
  %2109 = vmatpush1.bf16.msra.mxu0 %v1607
  %2110 = vmatprep.subr.bf16.mxu0 0
  %2111 = vmatpush1.bf16.msra.mxu0 %v1608
  %2112 = vmatprep.subr.bf16.mxu0 0
  %2113 = vmatpush1.bf16.msra.mxu0 %v1609
  %2114 = vmatprep.subr.bf16.mxu0 0
  %2115 = vmatpush1.bf16.msra.mxu0 %v1610
  %2116 = vmatprep.subr.bf16.mxu0 0
  %2117 = vmatpush1.bf16.msra.mxu0 %v1611
  %2118 = vmatprep.subr.bf16.mxu0 0
  %2119 = vmatpush1.bf16.msra.mxu0 %v1612
  %2120 = vmatprep.subr.bf16.mxu0 0
  %2121 = vmatpush1.bf16.msra.mxu0 %v1613
  %2122 = vmatprep.subr.bf16.mxu0 0
  %2123 = vmatpush1.bf16.msra.mxu0 %v1614
  %2124 = vmatprep.subr.bf16.mxu0 0
  %2125 = vmatpush1.bf16.msra.mxu0 %v1615
  %2126 = vmatprep.subr.bf16.mxu0 0
  %2127 = vmatpush1.bf16.msra.mxu0 %v1616
  %2128 = vmatprep.subr.bf16.mxu0 0
  %2129 = vmatpush1.bf16.msra.mxu0 %v1617
  %2130 = vmatprep.subr.bf16.mxu0 0
  %2131 = vmatpush1.bf16.msra.mxu0 %v1618
  %2132 = vmatprep.subr.bf16.mxu0 0
  %2133 = vmatpush1.bf16.msra.mxu0 %v1619
  %2134 = vmatprep.subr.bf16.mxu0 0
  %2135 = vmatpush1.bf16.msra.mxu0 %v1620
  %2136 = vmatprep.mubr.bf16.mxu0 %v796
  %2137 = vmatmul.mubr.bf16.gmra.mrb[0].mxu0 %v795
  %v2138 = vpop.f32.mrb[0].mxu0
  %v2139 = vadd.f32 %v2042, %v2138
  %v2140 = vpop.f32.mrb[0].mxu0
  %v2141 = vpop.f32.mrb[0].mxu0
  %v2142 = vadd.f32 %v2045, %v2141
  %v2143 = vpop.f32.mrb[0].mxu0
  %2144 = vmatprep.mubr.bf16.mxu0 %v812
  %2145 = vmatmul.mubr.bf16.gmra.mrb[0].mxu0 %v811
  %v2146 = vpop.f32.mrb[0].mxu0
  %v2147 = vadd.f32 %v2050, %v2146
  %v2148 = vpop.f32.mrb[0].mxu0
  %v2149 = vpop.f32.mrb[0].mxu0
  %v2150 = vadd.f32 %v2053, %v2149
  %v2151 = vpop.f32.mrb[0].mxu0
  %2152 = vmatprep.mubr.bf16.mxu0 %v828
  %2153 = vmatmul.mubr.bf16.gmra.mrb[0].mxu0 %v827
  %v2154 = vpop.f32.mrb[0].mxu0
  %v2155 = vadd.f32 %v2058, %v2154
  %v2156 = vpop.f32.mrb[0].mxu0
  %v2157 = vpop.f32.mrb[0].mxu0
  %v2158 = vadd.f32 %v2061, %v2157
  %v2159 = vpop.f32.mrb[0].mxu0
  %2160 = vmatprep.mubr.bf16.mxu0 %v844
  %2161 = vmatmul.mubr.bf16.gmra.mrb[0].mxu0 %v843
  %v2162 = vpop.f32.mrb[0].mxu0
  %v2163 = vadd.f32 %v2066, %v2162
  %v2164 = vpop.f32.mrb[0].mxu0
  %v2165 = vpop.f32.mrb[0].mxu0
  %v2166 = vadd.f32 %v2069, %v2165
  %v2167 = vpop.f32.mrb[0].mxu0
  %2168 = vmatprep.mubr.bf16.mxu0 %v860
  %2169 = vmatmul.mubr.bf16.gmra.mrb[0].mxu0 %v859
  %v2170 = vpop.f32.mrb[0].mxu0
  %v2171 = vadd.f32 %v2074, %v2170
  %v2172 = vpop.f32.mrb[0].mxu0
  %v2173 = vpop.f32.mrb[0].mxu0
  %v2174 = vadd.f32 %v2077, %v2173
  %v2175 = vpop.f32.mrb[0].mxu0
  %2176 = vmatprep.mubr.bf16.mxu0 %v876
  %2177 = vmatmul.mubr.bf16.gmra.mrb[0].mxu0 %v875
  %v2178 = vpop.f32.mrb[0].mxu0
  %v2179 = vadd.f32 %v2082, %v2178
  %v2180 = vpop.f32.mrb[0].mxu0
  %v2181 = vpop.f32.mrb[0].mxu0
  %v2182 = vadd.f32 %v2085, %v2181
  %v2183 = vpop.f32.mrb[0].mxu0
  %2184 = vmatprep.mubr.bf16.mxu0 %v892
  %2185 = vmatmul.mubr.bf16.gmra.mrb[0].mxu0 %v891
  %v2186 = vpop.f32.mrb[0].mxu0
  %v2187 = vadd.f32 %v2090, %v2186
  %v2188 = vpop.f32.mrb[0].mxu0
  %v2189 = vpop.f32.mrb[0].mxu0
  %v2190 = vadd.f32 %v2093, %v2189
  %v2191 = vpop.f32.mrb[0].mxu0
  %2192 = vmatprep.mubr.bf16.mxu0 %v908
  %2193 = vmatmul.mubr.bf16.gmra.mrb[0].mxu0 %v907
  %v2194 = vpop.f32.mrb[0].mxu0
  %v2195 = vadd.f32 %v2098, %v2194
  %v2196 = vpop.f32.mrb[0].mxu0
  %v2197 = vpop.f32.mrb[0].mxu0
  %v2198 = vadd.f32 %v2101, %v2197
  %v2199 = vpop.f32.mrb[0].mxu0
  %2200 = vdwg.mxu0
  %2201 = vmatprep.subr.bf16.mxu0 0
  %2202 = vmatpush1.bf16.msra.mxu0 %v1621
  %2203 = vmatprep.subr.bf16.mxu0 0
  %2204 = vmatpush1.bf16.msra.mxu0 %v1622
  %2205 = vmatprep.subr.bf16.mxu0 0
  %2206 = vmatpush1.bf16.msra.mxu0 %v1623
  %2207 = vmatprep.subr.bf16.mxu0 0
  %2208 = vmatpush1.bf16.msra.mxu0 %v1624
  %2209 = vmatprep.subr.bf16.mxu0 0
  %2210 = vmatpush1.bf16.msra.mxu0 %v1625
  %2211 = vmatprep.subr.bf16.mxu0 0
  %2212 = vmatpush1.bf16.msra.mxu0 %v1626
  %2213 = vmatprep.subr.bf16.mxu0 0
  %2214 = vmatpush1.bf16.msra.mxu0 %v1627
  %2215 = vmatprep.subr.bf16.mxu0 0
  %2216 = vmatpush1.bf16.msra.mxu0 %v1628
  %2217 = vmatprep.subr.bf16.mxu0 0
  %2218 = vmatpush1.bf16.msra.mxu0 %v1629
  %2219 = vmatprep.subr.bf16.mxu0 0
  %2220 = vmatpush1.bf16.msra.mxu0 %v1630
  %2221 = vmatprep.subr.bf16.mxu0 0
  %2222 = vmatpush1.bf16.msra.mxu0 %v1631
  %2223 = vmatprep.subr.bf16.mxu0 0
  %2224 = vmatpush1.bf16.msra.mxu0 %v1632
  %2225 = vmatprep.subr.bf16.mxu0 0
  %2226 = vmatpush1.bf16.msra.mxu0 %v1633
  %2227 = vmatprep.subr.bf16.mxu0 0
  %2228 = vmatpush1.bf16.msra.mxu0 %v1634
  %2229 = vmatprep.subr.bf16.mxu0 0
  %2230 = vmatpush1.bf16.msra.mxu0 %v1635
  %2231 = vmatprep.subr.bf16.mxu0 0
  %2232 = vmatpush1.bf16.msra.mxu0 %v1636
  %2233 = vmatprep.mubr.bf16.mxu0 %v798
  %2234 = vmatmul.mubr.bf16.gmra.mrb[0].mxu0 %v797
  %v2235 = vpop.f32.mrb[0].mxu0
  %v2236 = vadd.f32 %v2139, %v2235
  %v2237 = vpop.f32.mrb[0].mxu0
  %v2238 = vpop.f32.mrb[0].mxu0
  %v2239 = vadd.f32 %v2142, %v2238
  %v2240 = vpop.f32.mrb[0].mxu0
  %2241 = vmatprep.mubr.bf16.mxu0 %v814
  %2242 = vmatmul.mubr.bf16.gmra.mrb[0].mxu0 %v813
  %v2243 = vpop.f32.mrb[0].mxu0
  %v2244 = vadd.f32 %v2147, %v2243
  %v2245 = vpop.f32.mrb[0].mxu0
  %v2246 = vpop.f32.mrb[0].mxu0
  %v2247 = vadd.f32 %v2150, %v2246
  %v2248 = vpop.f32.mrb[0].mxu0
  %2249 = vmatprep.mubr.bf16.mxu0 %v830
  %2250 = vmatmul.mubr.bf16.gmra.mrb[0].mxu0 %v829
  %v2251 = vpop.f32.mrb[0].mxu0
  %v2252 = vadd.f32 %v2155, %v2251
  %v2253 = vpop.f32.mrb[0].mxu0
  %v2254 = vpop.f32.mrb[0].mxu0
  %v2255 = vadd.f32 %v2158, %v2254
  %v2256 = vpop.f32.mrb[0].mxu0
  %2257 = vmatprep.mubr.bf16.mxu0 %v846
  %2258 = vmatmul.mubr.bf16.gmra.mrb[0].mxu0 %v845
  %v2259 = vpop.f32.mrb[0].mxu0
  %v2260 = vadd.f32 %v2163, %v2259
  %v2261 = vpop.f32.mrb[0].mxu0
  %v2262 = vpop.f32.mrb[0].mxu0
  %v2263 = vadd.f32 %v2166, %v2262
  %v2264 = vpop.f32.mrb[0].mxu0
  %2265 = vmatprep.mubr.bf16.mxu0 %v862
  %2266 = vmatmul.mubr.bf16.gmra.mrb[0].mxu0 %v861
  %v2267 = vpop.f32.mrb[0].mxu0
  %v2268 = vadd.f32 %v2171, %v2267
  %v2269 = vpop.f32.mrb[0].mxu0
  %v2270 = vpop.f32.mrb[0].mxu0
  %v2271 = vadd.f32 %v2174, %v2270
  %v2272 = vpop.f32.mrb[0].mxu0
  %2273 = vmatprep.mubr.bf16.mxu0 %v878
  %2274 = vmatmul.mubr.bf16.gmra.mrb[0].mxu0 %v877
  %v2275 = vpop.f32.mrb[0].mxu0
  %v2276 = vadd.f32 %v2179, %v2275
  %v2277 = vpop.f32.mrb[0].mxu0
  %v2278 = vpop.f32.mrb[0].mxu0
  %v2279 = vadd.f32 %v2182, %v2278
  %v2280 = vpop.f32.mrb[0].mxu0
  %2281 = vmatprep.mubr.bf16.mxu0 %v894
  %2282 = vmatmul.mubr.bf16.gmra.mrb[0].mxu0 %v893
  %v2283 = vpop.f32.mrb[0].mxu0
  %v2284 = vadd.f32 %v2187, %v2283
  %v2285 = vpop.f32.mrb[0].mxu0
  %v2286 = vpop.f32.mrb[0].mxu0
  %v2287 = vadd.f32 %v2190, %v2286
  %v2288 = vpop.f32.mrb[0].mxu0
  %2289 = vmatprep.mubr.bf16.mxu0 %v910
  %2290 = vmatmul.mubr.bf16.gmra.mrb[0].mxu0 %v909
  %v2291 = vpop.f32.mrb[0].mxu0
  %v2292 = vadd.f32 %v2195, %v2291
  %v2293 = vpop.f32.mrb[0].mxu0
  %v2294 = vpop.f32.mrb[0].mxu0
  %v2295 = vadd.f32 %v2198, %v2294
  %v2296 = vpop.f32.mrb[0].mxu0
  %2297 = vdwg.mxu0
  %2298 = vmatprep.subr.bf16.mxu0 0
  %2299 = vmatpush1.bf16.msra.mxu0 %v1637
  %2300 = vmatprep.subr.bf16.mxu0 0
  %2301 = vmatpush1.bf16.msra.mxu0 %v1638
  %2302 = vmatprep.subr.bf16.mxu0 0
  %2303 = vmatpush1.bf16.msra.mxu0 %v1639
  %2304 = vmatprep.subr.bf16.mxu0 0
  %2305 = vmatpush1.bf16.msra.mxu0 %v1640
  %2306 = vmatprep.subr.bf16.mxu0 0
  %2307 = vmatpush1.bf16.msra.mxu0 %v1641
  %2308 = vmatprep.subr.bf16.mxu0 0
  %2309 = vmatpush1.bf16.msra.mxu0 %v1642
  %2310 = vmatprep.subr.bf16.mxu0 0
  %2311 = vmatpush1.bf16.msra.mxu0 %v1643
  %2312 = vmatprep.subr.bf16.mxu0 0
  %2313 = vmatpush1.bf16.msra.mxu0 %v1644
  %2314 = vmatprep.subr.bf16.mxu0 0
  %2315 = vmatpush1.bf16.msra.mxu0 %v1645
  %2316 = vmatprep.subr.bf16.mxu0 0
  %2317 = vmatpush1.bf16.msra.mxu0 %v1646
  %2318 = vmatprep.subr.bf16.mxu0 0
  %2319 = vmatpush1.bf16.msra.mxu0 %v1647
  %2320 = vmatprep.subr.bf16.mxu0 0
  %2321 = vmatpush1.bf16.msra.mxu0 %v1648
  %2322 = vmatprep.subr.bf16.mxu0 0
  %2323 = vmatpush1.bf16.msra.mxu0 %v1649
  %2324 = vmatprep.subr.bf16.mxu0 0
  %2325 = vmatpush1.bf16.msra.mxu0 %v1650
  %2326 = vmatprep.subr.bf16.mxu0 0
  %2327 = vmatpush1.bf16.msra.mxu0 %v1651
  %2328 = vmatprep.subr.bf16.mxu0 0
  %2329 = vmatpush1.bf16.msra.mxu0 %v1652
  %2330 = vmatprep.mubr.bf16.mxu0 %v800
  %2331 = vmatmul.mubr.bf16.gmra.mrb[0].mxu0 %v799
  %v2332 = vpop.f32.mrb[0].mxu0
  %v2333 = vadd.f32 %v2236, %v2332
  %v2334 = vpop.f32.mrb[0].mxu0
  %v2335 = vpop.f32.mrb[0].mxu0
  %v2336 = vadd.f32 %v2239, %v2335
  %v2337 = vpop.f32.mrb[0].mxu0
  %2338 = vmatprep.mubr.bf16.mxu0 %v816
  %2339 = vmatmul.mubr.bf16.gmra.mrb[0].mxu0 %v815
  %v2340 = vpop.f32.mrb[0].mxu0
  %v2341 = vadd.f32 %v2244, %v2340
  %v2342 = vpop.f32.mrb[0].mxu0
  %v2343 = vpop.f32.mrb[0].mxu0
  %v2344 = vadd.f32 %v2247, %v2343
  %v2345 = vpop.f32.mrb[0].mxu0
  %2346 = vmatprep.mubr.bf16.mxu0 %v832
  %2347 = vmatmul.mubr.bf16.gmra.mrb[0].mxu0 %v831
  %v2348 = vpop.f32.mrb[0].mxu0
  %v2349 = vadd.f32 %v2252, %v2348
  %v2350 = vpop.f32.mrb[0].mxu0
  %v2351 = vpop.f32.mrb[0].mxu0
  %v2352 = vadd.f32 %v2255, %v2351
  %v2353 = vpop.f32.mrb[0].mxu0
  %2354 = vmatprep.mubr.bf16.mxu0 %v848
  %2355 = vmatmul.mubr.bf16.gmra.mrb[0].mxu0 %v847
  %v2356 = vpop.f32.mrb[0].mxu0
  %v2357 = vadd.f32 %v2260, %v2356
  %v2358 = vpop.f32.mrb[0].mxu0
  %v2359 = vpop.f32.mrb[0].mxu0
  %v2360 = vadd.f32 %v2263, %v2359
  %v2361 = vpop.f32.mrb[0].mxu0
  %2362 = vmatprep.mubr.bf16.mxu0 %v864
  %2363 = vmatmul.mubr.bf16.gmra.mrb[0].mxu0 %v863
  %v2364 = vpop.f32.mrb[0].mxu0
  %v2365 = vadd.f32 %v2268, %v2364
  %v2366 = vpop.f32.mrb[0].mxu0
  %v2367 = vpop.f32.mrb[0].mxu0
  %v2368 = vadd.f32 %v2271, %v2367
  %v2369 = vpop.f32.mrb[0].mxu0
  %2370 = vmatprep.mubr.bf16.mxu0 %v880
  %2371 = vmatmul.mubr.bf16.gmra.mrb[0].mxu0 %v879
  %v2372 = vpop.f32.mrb[0].mxu0
  %v2373 = vadd.f32 %v2276, %v2372
  %v2374 = vpop.f32.mrb[0].mxu0
  %v2375 = vpop.f32.mrb[0].mxu0
  %v2376 = vadd.f32 %v2279, %v2375
  %v2377 = vpop.f32.mrb[0].mxu0
  %2378 = vmatprep.mubr.bf16.mxu0 %v896
  %2379 = vmatmul.mubr.bf16.gmra.mrb[0].mxu0 %v895
  %v2380 = vpop.f32.mrb[0].mxu0
  %v2381 = vadd.f32 %v2284, %v2380
  %v2382 = vpop.f32.mrb[0].mxu0
  %v2383 = vpop.f32.mrb[0].mxu0
  %v2384 = vadd.f32 %v2287, %v2383
  %v2385 = vpop.f32.mrb[0].mxu0
  %2386 = vmatprep.mubr.bf16.mxu0 %v912
  %2387 = vmatmul.mubr.bf16.gmra.mrb[0].mxu0 %v911
  %v2388 = vpop.f32.mrb[0].mxu0
  %v2389 = vadd.f32 %v2292, %v2388
  %v2390 = vpop.f32.mrb[0].mxu0
  %v2391 = vpop.f32.mrb[0].mxu0
  %v2392 = vadd.f32 %v2295, %v2391
  %v2393 = vpop.f32.mrb[0].mxu0
  %2394 = vdwg.mxu0
  %2395 = vmatprep.subr.bf16.mxu0 0
  %2396 = vmatpush1.bf16.msra.mxu0 %v1653
  %2397 = vmatprep.subr.bf16.mxu0 0
  %2398 = vmatpush1.bf16.msra.mxu0 %v1654
  %2399 = vmatprep.subr.bf16.mxu0 0
  %2400 = vmatpush1.bf16.msra.mxu0 %v1655
  %2401 = vmatprep.subr.bf16.mxu0 0
  %2402 = vmatpush1.bf16.msra.mxu0 %v1656
  %2403 = vmatprep.subr.bf16.mxu0 0
  %2404 = vmatpush1.bf16.msra.mxu0 %v1657
  %2405 = vmatprep.subr.bf16.mxu0 0
  %2406 = vmatpush1.bf16.msra.mxu0 %v1658
  %2407 = vmatprep.subr.bf16.mxu0 0
  %2408 = vmatpush1.bf16.msra.mxu0 %v1659
  %2409 = vmatprep.subr.bf16.mxu0 0
  %2410 = vmatpush1.bf16.msra.mxu0 %v1660
  %2411 = vmatprep.subr.bf16.mxu0 0
  %2412 = vmatpush1.bf16.msra.mxu0 %v1661
  %2413 = vmatprep.subr.bf16.mxu0 0
  %2414 = vmatpush1.bf16.msra.mxu0 %v1662
  %2415 = vmatprep.subr.bf16.mxu0 0
  %2416 = vmatpush1.bf16.msra.mxu0 %v1663
  %2417 = vmatprep.subr.bf16.mxu0 0
  %2418 = vmatpush1.bf16.msra.mxu0 %v1664
  %2419 = vmatprep.subr.bf16.mxu0 0
  %2420 = vmatpush1.bf16.msra.mxu0 %v1665
  %2421 = vmatprep.subr.bf16.mxu0 0
  %2422 = vmatpush1.bf16.msra.mxu0 %v1666
  %2423 = vmatprep.subr.bf16.mxu0 0
  %2424 = vmatpush1.bf16.msra.mxu0 %v1667
  %2425 = vmatprep.subr.bf16.mxu0 0
  %2426 = vmatpush1.bf16.msra.mxu0 %v1668
  %2427 = vmatprep.mubr.bf16.mxu0 %v802
  %2428 = vmatmul.mubr.bf16.gmra.mrb[0].mxu0 %v801
  %v2429 = vpop.f32.mrb[0].mxu0
  %v2430 = vadd.f32 %v2333, %v2429
  %v2431 = vpop.f32.mrb[0].mxu0
  %v2432 = vpop.f32.mrb[0].mxu0
  %v2433 = vadd.f32 %v2336, %v2432
  %v2434 = vpop.f32.mrb[0].mxu0
  %2435 = vmatprep.mubr.bf16.mxu0 %v818
  %2436 = vmatmul.mubr.bf16.gmra.mrb[0].mxu0 %v817
  %v2437 = vpop.f32.mrb[0].mxu0
  %v2438 = vadd.f32 %v2341, %v2437
  %v2439 = vpop.f32.mrb[0].mxu0
  %v2440 = vpop.f32.mrb[0].mxu0
  %v2441 = vadd.f32 %v2344, %v2440
  %v2442 = vpop.f32.mrb[0].mxu0
  %2443 = vmatprep.mubr.bf16.mxu0 %v834
  %2444 = vmatmul.mubr.bf16.gmra.mrb[0].mxu0 %v833
  %v2445 = vpop.f32.mrb[0].mxu0
  %v2446 = vadd.f32 %v2349, %v2445
  %v2447 = vpop.f32.mrb[0].mxu0
  %v2448 = vpop.f32.mrb[0].mxu0
  %v2449 = vadd.f32 %v2352, %v2448
  %v2450 = vpop.f32.mrb[0].mxu0
  %2451 = vmatprep.mubr.bf16.mxu0 %v850
  %2452 = vmatmul.mubr.bf16.gmra.mrb[0].mxu0 %v849
  %v2453 = vpop.f32.mrb[0].mxu0
  %v2454 = vadd.f32 %v2357, %v2453
  %v2455 = vpop.f32.mrb[0].mxu0
  %v2456 = vpop.f32.mrb[0].mxu0
  %v2457 = vadd.f32 %v2360, %v2456
  %v2458 = vpop.f32.mrb[0].mxu0
  %2459 = vmatprep.mubr.bf16.mxu0 %v866
  %2460 = vmatmul.mubr.bf16.gmra.mrb[0].mxu0 %v865
  %v2461 = vpop.f32.mrb[0].mxu0
  %v2462 = vadd.f32 %v2365, %v2461
  %v2463 = vpop.f32.mrb[0].mxu0
  %v2464 = vpop.f32.mrb[0].mxu0
  %v2465 = vadd.f32 %v2368, %v2464
  %v2466 = vpop.f32.mrb[0].mxu0
  %2467 = vmatprep.mubr.bf16.mxu0 %v882
  %2468 = vmatmul.mubr.bf16.gmra.mrb[0].mxu0 %v881
  %v2469 = vpop.f32.mrb[0].mxu0
  %v2470 = vadd.f32 %v2373, %v2469
  %v2471 = vpop.f32.mrb[0].mxu0
  %v2472 = vpop.f32.mrb[0].mxu0
  %v2473 = vadd.f32 %v2376, %v2472
  %v2474 = vpop.f32.mrb[0].mxu0
  %2475 = vmatprep.mubr.bf16.mxu0 %v898
  %2476 = vmatmul.mubr.bf16.gmra.mrb[0].mxu0 %v897
  %v2477 = vpop.f32.mrb[0].mxu0
  %v2478 = vadd.f32 %v2381, %v2477
  %v2479 = vpop.f32.mrb[0].mxu0
  %v2480 = vpop.f32.mrb[0].mxu0
  %v2481 = vadd.f32 %v2384, %v2480
  %v2482 = vpop.f32.mrb[0].mxu0
  %2483 = vmatprep.mubr.bf16.mxu0 %v914
  %2484 = vmatmul.mubr.bf16.gmra.mrb[0].mxu0 %v913
  %v2485 = vpop.f32.mrb[0].mxu0
  %v2486 = vadd.f32 %v2389, %v2485
  %v2487 = vpop.f32.mrb[0].mxu0
  %v2488 = vpop.f32.mrb[0].mxu0
  %v2489 = vadd.f32 %v2392, %v2488
  %v2490 = vpop.f32.mrb[0].mxu0
  %2491 = vdwg.mxu0
  %2492 = vmatprep.subr.bf16.mxu0 0
  %2493 = vmatpush1.bf16.msra.mxu0 %v1669
  %2494 = vmatprep.subr.bf16.mxu0 0
  %2495 = vmatpush1.bf16.msra.mxu0 %v1670
  %2496 = vmatprep.subr.bf16.mxu0 0
  %2497 = vmatpush1.bf16.msra.mxu0 %v1671
  %2498 = vmatprep.subr.bf16.mxu0 0
  %2499 = vmatpush1.bf16.msra.mxu0 %v1672
  %2500 = vmatprep.subr.bf16.mxu0 0
  %2501 = vmatpush1.bf16.msra.mxu0 %v1673
  %2502 = vmatprep.subr.bf16.mxu0 0
  %2503 = vmatpush1.bf16.msra.mxu0 %v1674
  %2504 = vmatprep.subr.bf16.mxu0 0
  %2505 = vmatpush1.bf16.msra.mxu0 %v1675
  %2506 = vmatprep.subr.bf16.mxu0 0
  %2507 = vmatpush1.bf16.msra.mxu0 %v1676
  %2508 = vmatprep.subr.bf16.mxu0 0
  %2509 = vmatpush1.bf16.msra.mxu0 %v1677
  %2510 = vmatprep.subr.bf16.mxu0 0
  %2511 = vmatpush1.bf16.msra.mxu0 %v1678
  %2512 = vmatprep.subr.bf16.mxu0 0
  %2513 = vmatpush1.bf16.msra.mxu0 %v1679
  %2514 = vmatprep.subr.bf16.mxu0 0
  %2515 = vmatpush1.bf16.msra.mxu0 %v1680
  %2516 = vmatprep.subr.bf16.mxu0 0
  %2517 = vmatpush1.bf16.msra.mxu0 %v1681
  %2518 = vmatprep.subr.bf16.mxu0 0
  %2519 = vmatpush1.bf16.msra.mxu0 %v1682
  %2520 = vmatprep.subr.bf16.mxu0 0
  %2521 = vmatpush1.bf16.msra.mxu0 %v1683
  %2522 = vmatprep.subr.bf16.mxu0 0
  %2523 = vmatpush1.bf16.msra.mxu0 %v1684
  %2524 = vmatprep.mubr.bf16.mxu0 %v804
  %2525 = vmatmul.mubr.bf16.gmra.mrb[0].mxu0 %v803
  %v2526 = vpop.f32.mrb[0].mxu0
  %v2527 = vadd.f32 %v2430, %v2526
  %v2528 = vpop.f32.mrb[0].mxu0
  %v2529 = vpop.f32.mrb[0].mxu0
  %v2530 = vadd.f32 %v2433, %v2529
  %v2531 = vpop.f32.mrb[0].mxu0
  %2532 = vmatprep.mubr.bf16.mxu0 %v820
  %2533 = vmatmul.mubr.bf16.gmra.mrb[0].mxu0 %v819
  %v2534 = vpop.f32.mrb[0].mxu0
  %v2535 = vadd.f32 %v2438, %v2534
  %v2536 = vpop.f32.mrb[0].mxu0
  %v2537 = vpop.f32.mrb[0].mxu0
  %v2538 = vadd.f32 %v2441, %v2537
  %v2539 = vpop.f32.mrb[0].mxu0
  %2540 = vmatprep.mubr.bf16.mxu0 %v836
  %2541 = vmatmul.mubr.bf16.gmra.mrb[0].mxu0 %v835
  %v2542 = vpop.f32.mrb[0].mxu0
  %v2543 = vadd.f32 %v2446, %v2542
  %v2544 = vpop.f32.mrb[0].mxu0
  %v2545 = vpop.f32.mrb[0].mxu0
  %v2546 = vadd.f32 %v2449, %v2545
  %v2547 = vpop.f32.mrb[0].mxu0
  %2548 = vmatprep.mubr.bf16.mxu0 %v852
  %2549 = vmatmul.mubr.bf16.gmra.mrb[0].mxu0 %v851
  %v2550 = vpop.f32.mrb[0].mxu0
  %v2551 = vadd.f32 %v2454, %v2550
  %v2552 = vpop.f32.mrb[0].mxu0
  %v2553 = vpop.f32.mrb[0].mxu0
  %v2554 = vadd.f32 %v2457, %v2553
  %v2555 = vpop.f32.mrb[0].mxu0
  %2556 = vmatprep.mubr.bf16.mxu0 %v868
  %2557 = vmatmul.mubr.bf16.gmra.mrb[0].mxu0 %v867
  %v2558 = vpop.f32.mrb[0].mxu0
  %v2559 = vadd.f32 %v2462, %v2558
  %v2560 = vpop.f32.mrb[0].mxu0
  %v2561 = vpop.f32.mrb[0].mxu0
  %v2562 = vadd.f32 %v2465, %v2561
  %v2563 = vpop.f32.mrb[0].mxu0
  %2564 = vmatprep.mubr.bf16.mxu0 %v884
  %2565 = vmatmul.mubr.bf16.gmra.mrb[0].mxu0 %v883
  %v2566 = vpop.f32.mrb[0].mxu0
  %v2567 = vadd.f32 %v2470, %v2566
  %v2568 = vpop.f32.mrb[0].mxu0
  %v2569 = vpop.f32.mrb[0].mxu0
  %v2570 = vadd.f32 %v2473, %v2569
  %v2571 = vpop.f32.mrb[0].mxu0
  %2572 = vmatprep.mubr.bf16.mxu0 %v900
  %2573 = vmatmul.mubr.bf16.gmra.mrb[0].mxu0 %v899
  %v2574 = vpop.f32.mrb[0].mxu0
  %v2575 = vadd.f32 %v2478, %v2574
  %v2576 = vpop.f32.mrb[0].mxu0
  %v2577 = vpop.f32.mrb[0].mxu0
  %v2578 = vadd.f32 %v2481, %v2577
  %v2579 = vpop.f32.mrb[0].mxu0
  %2580 = vmatprep.mubr.bf16.mxu0 %v916
  %2581 = vmatmul.mubr.bf16.gmra.mrb[0].mxu0 %v915
  %v2582 = vpop.f32.mrb[0].mxu0
  %v2583 = vadd.f32 %v2486, %v2582
  %v2584 = vpop.f32.mrb[0].mxu0
  %v2585 = vpop.f32.mrb[0].mxu0
  %v2586 = vadd.f32 %v2489, %v2585
  %v2587 = vpop.f32.mrb[0].mxu0
  %2588 = vdwg.mxu0
  %2589 = vst [vmem:[%s2] sm:$0xff] %v2527
  %2590 = vst [vmem:[%s2 + $0x8] sm:$0xff] %v2530
  %2591 = vst [vmem:[%s2 + $0x10] sm:$0xff] %v2535
  %2592 = vst [vmem:[%s2 + $0x18] sm:$0xff] %v2538
  %2593 = vst [vmem:[%s2 + $0x20] sm:$0xff] %v2543
  %2594 = vst [vmem:[%s2 + $0x28] sm:$0xff] %v2546
  %2595 = vst [vmem:[%s2 + $0x30] sm:$0xff] %v2551
  %2596 = vst [vmem:[%s2 + $0x38] sm:$0xff] %v2554
  %2597 = vst [vmem:[%s2 + $0x40] sm:$0xff] %v2559
  %2598 = vst [vmem:[%s2 + $0x48] sm:$0xff] %v2562
  %2599 = vst [vmem:[%s2 + $0x50] sm:$0xff] %v2567
  %2600 = vst [vmem:[%s2 + $0x58] sm:$0xff] %v2570
  %2601 = vst [vmem:[%s2 + $0x60] sm:$0xff] %v2575
  %2602 = vst [vmem:[%s2 + $0x68] sm:$0xff] %v2578
  %2603 = vst [vmem:[%s2 + $0x70] sm:$0xff] %v2583
  %2604 = vst [vmem:[%s2 + $0x78] sm:$0xff] %v2586
  %v2605 = vld [vmem:[%s3] sm:$0x1]
  %v2606 = vadd.f32 %v2527, %v2530
  %v2607 = vadd.f32 %v2606, %v2535
  %v2608 = vadd.f32 %v2607, %v2538
  %v2609 = vadd.f32 %v2608, %v2543
  %v2610 = vadd.f32 %v2609, %v2546
  %v2611 = vadd.f32 %v2610, %v2551
  %v2612 = vadd.f32 %v2611, %v2554
  %v2613 = vadd.f32 %v2612, %v2559
  %v2614 = vadd.f32 %v2613, %v2562
  %v2615 = vadd.f32 %v2614, %v2567
  %v2616 = vadd.f32 %v2615, %v2570
  %v2617 = vadd.f32 %v2616, %v2575
  %v2618 = vadd.f32 %v2617, %v2578
  %v2619 = vadd.f32 %v2618, %v2583
  %v2620 = vadd.f32 %v2619, %v2586
  %v2621 = vrot.slane %v2620, 4
  %v2622 = vadd.f32 %v2620, %v2621
  %v2623 = vrot.slane %v2622, 2
  %v2624 = vadd.f32 %v2622, %v2623
  %v2625 = vrot.slane %v2624, 1
  %v2626 = vadd.f32 %v2624, %v2625
  %v2627 = vadd.f32 %v2605, %v2626
  %2628 = vst [vmem:[%s3] sm:$0x1] %v2627
  %v2629 = vld [vmem:[%s4] sm:$0x1]
  %v2630 = vmul.f32 %v2527, %v2527
  %v2631 = vmul.f32 %v2530, %v2530
  %v2632 = vmul.f32 %v2535, %v2535
  %v2633 = vmul.f32 %v2538, %v2538
  %v2634 = vmul.f32 %v2543, %v2543
  %v2635 = vmul.f32 %v2546, %v2546
  %v2636 = vmul.f32 %v2551, %v2551
  %v2637 = vmul.f32 %v2554, %v2554
  %v2638 = vmul.f32 %v2559, %v2559
  %v2639 = vmul.f32 %v2562, %v2562
  %v2640 = vmul.f32 %v2567, %v2567
  %v2641 = vmul.f32 %v2570, %v2570
  %v2642 = vmul.f32 %v2575, %v2575
  %v2643 = vmul.f32 %v2578, %v2578
  %v2644 = vmul.f32 %v2583, %v2583
  %v2645 = vmul.f32 %v2586, %v2586
  %v2646 = vadd.f32 %v2630, %v2631
  %v2647 = vadd.f32 %v2646, %v2632
  %v2648 = vadd.f32 %v2647, %v2633
  %v2649 = vadd.f32 %v2648, %v2634
  %v2650 = vadd.f32 %v2649, %v2635
  %v2651 = vadd.f32 %v2650, %v2636
  %v2652 = vadd.f32 %v2651, %v2637
  %v2653 = vadd.f32 %v2652, %v2638
  %v2654 = vadd.f32 %v2653, %v2639
  %v2655 = vadd.f32 %v2654, %v2640
  %v2656 = vadd.f32 %v2655, %v2641
  %v2657 = vadd.f32 %v2656, %v2642
  %v2658 = vadd.f32 %v2657, %v2643
  %v2659 = vadd.f32 %v2658, %v2644
  %v2660 = vadd.f32 %v2659, %v2645
  %v2661 = vrot.slane %v2660, 4
  %v2662 = vadd.f32 %v2660, %v2661
  %v2663 = vrot.slane %v2662, 2
  %v2664 = vadd.f32 %v2662, %v2663
  %v2665 = vrot.slane %v2664, 1
  %v2666 = vadd.f32 %v2664, %v2665
  %v2667 = vadd.f32 %v2629, %v2666
  %2668 = vst [vmem:[%s4] sm:$0x1] %v2667
  // Predicated region
  $region14: #{img_discriminator_forward.15} parent=0 // pred_check
    _
  $region15: #{img_discriminator_forward.15} parent=0 // pred_check_branch
    %2670 = sbr.rel (0) target = $region17
  $region16: #{img_discriminator_forward.15} parent=0 // pred_region
    _
  $region17: #{img_discriminator_forward.15} parent=0 // pred_fallthru
    _
  // Predicated region
  $region18: #{img_discriminator_forward.15} parent=0 // pred_check
    _
  $region19: #{img_discriminator_forward.15} parent=0 // pred_check_branch
    %2672 = sbr.rel (0) target = $region21
  $region20: #{img_discriminator_forward.15} parent=0 // pred_region
    _
  $region21: #{img_discriminator_forward.15} parent=0 // pred_fallthru
    _
  // Predicated region
  $region22: #{img_discriminator_forward.15} parent=0 // pred_check
    _
  $region23: #{img_discriminator_forward.15} parent=0 // pred_check_branch
    %2674 = sbr.rel (0) target = $region25
  $region24: #{img_discriminator_forward.15} parent=0 // pred_region
    _
  $region25: #{img_discriminator_forward.15} parent=0 // pred_fallthru
    _
  // Predicated region
  $region26: #{img_discriminator_forward.15} parent=0 // pred_check
    _
  $region27: #{img_discriminator_forward.15} parent=0 // pred_check_branch
    %2676 = sbr.rel (0) target = $region29
  $region28: #{img_discriminator_forward.15} parent=0 // pred_region
    _
  $region29: #{img_discriminator_forward.15} parent=0 // pred_fallthru
    _
  // Predicated region
  $region30: #{img_discriminator_forward.15} parent=0 // pred_check
    _
  $region31: #{img_discriminator_forward.15} parent=0 // pred_check_branch
    %2678 = sbr.rel (0) target = $region33
  $region32: #{img_discriminator_forward.15} parent=0 // pred_region
    _
  $region33: #{img_discriminator_forward.15} parent=0 // pred_fallthru
    _
  // Predicated region
  $region34: #{img_discriminator_forward.15} parent=0 // pred_check
    _
  $region35: #{img_discriminator_forward.15} parent=0 // pred_check_branch
    %2680 = sbr.rel (0) target = $region37
  $region36: #{img_discriminator_forward.15} parent=0 // pred_region
    _
  $region37: #{img_discriminator_forward.15} parent=0 // pred_fallthru
    _

// kernel: img_discriminator_forward.20
$region0: #{img_discriminator_forward.20}
  #allocation0 [shape = 'u32[]', space=smem, size = 0x4, offset = 0x4, fixed_abs, tag = 'smem constant byte address 0x4 - core index']
  #allocation1 [shape = 'u32[144,128]{1,0:T(1,128)}', space=vmem, size = 0x12000, scoped, tag = 'internal scratch']
  %s0 = inlined_call_operand.vmem [shape: f32[32,128], index: 0, kind: input, shape index: {}]
  %s1 = inlined_call_operand.vmem [shape: f32[1,128], index: 1, kind: input, shape index: {}]
  %s2 = inlined_call_operand.vmem [shape: f32[1,128], index: 2, kind: input, shape index: {}]
  %s3 = inlined_call_operand.vmem [shape: bf16[32,128], index: 3, kind: output, shape index: {}]
  %s4 = sld [smem:[#allocation0]]
  $region22: #{img_discriminator_forward.20} parent=0
    _
  %s6 = ssub.s32 1, %s4
  %s7 = scalar_select 0, %s6, %s4
  // Predicated region
  $region2: #{img_discriminator_forward.20} parent=0 // pred_check
    _
  $region3: #{img_discriminator_forward.20} parent=0 // pred_check_branch
    %9 = sbr.rel (0) target = $region5
  $region4: #{img_discriminator_forward.20} parent=0 // pred_region
    _
  $region5: #{img_discriminator_forward.20} parent=0 // pred_fallthru
    _
  // Predicated region
  $region6: #{img_discriminator_forward.20} parent=0 // pred_check
    _
  $region7: #{img_discriminator_forward.20} parent=0 // pred_check_branch
    %11 = sbr.rel (0) target = $region9
  $region8: #{img_discriminator_forward.20} parent=0 // pred_region
    _
  $region9: #{img_discriminator_forward.20} parent=0 // pred_fallthru
    _
  // Predicated region
  $region10: #{img_discriminator_forward.20} parent=0 // pred_check
    _
  $region11: #{img_discriminator_forward.20} parent=0 // pred_check_branch
    %13 = sbr.rel (0) target = $region13
  $region12: #{img_discriminator_forward.20} parent=0 // pred_region
    _
  $region13: #{img_discriminator_forward.20} parent=0 // pred_fallthru
    _
  %v14 = vld [vmem:[%s0] sm:$0xff]
  %v15 = vld [vmem:[%s0 + $0x8] sm:$0xff]
  %v16 = vld [vmem:[%s0 + $0x10] sm:$0xff]
  %v17 = vld [vmem:[%s0 + $0x18] sm:$0xff]
  %v18 = vld [vmem:[%s1] sm:$0x1]
  %v20 = vlaneseq
  %v21 = vshrl.u32 %v20, 7
  %v22 = vsub.s32 0, %v21
  %v23 = vrot.slane %v18, %v22
  %v25 = vmul.f32 %v14, %v23
  %v26 = vmul.f32 %v15, %v23
  %v27 = vmul.f32 %v16, %v23
  %v28 = vmul.f32 %v17, %v23
  %v29 = vld [vmem:[%s2] sm:$0x1]
  %v31 = vlaneseq
  %v32 = vshrl.u32 %v31, 7
  %v33 = vsub.s32 0, %v32
  %v34 = vrot.slane %v29, %v33
  %v36 = vadd.f32 %v25, %v34
  %v37 = vadd.f32 %v26, %v34
  %v38 = vadd.f32 %v27, %v34
  %v39 = vadd.f32 %v28, %v34
  %vm40 = vcmp.ge.f32.partialorder %v36, 0.0
  %vm41 = vcmp.ge.f32.partialorder %v37, 0.0
  %vm42 = vcmp.ge.f32.partialorder %v38, 0.0
  %vm43 = vcmp.ge.f32.partialorder %v39, 0.0
  %v44 = vmul.f32 %v36, 0.2
  %v45 = vmul.f32 %v37, 0.2
  %v46 = vmul.f32 %v38, 0.2
  %v47 = vmul.f32 %v39, 0.2
  %v48 = vsel %vm40, %v36, %v44
  %v49 = vsel %vm41, %v37, %v45
  %v50 = vsel %vm42, %v38, %v46
  %v51 = vsel %vm43, %v39, %v47
  %v52 = vpack.c.bf16 %v49, %v48
  %v53 = vpack.c.bf16 %v51, %v50
  %v56 = vunpack.c.l.b16 %v52
  %v57 = vunpack.c.h.b16 %v52
  %v58 = vunpack.c.l.b16 %v53
  %v59 = vunpack.c.h.b16 %v53
  %v60 = vpack.c.b16 %v56, %v56
  %v61 = vpack.c.b16 %v57, %v57
  %v62 = vpack.c.b16 %v58, %v58
  %v63 = vpack.c.b16 %v59, %v59
  %68 = vst [vmem:[%s3] sm:$0xf] %v60
  %69 = vst [vmem:[%s3 + $0x4] sm:$0xf] %v61
  %70 = vst [vmem:[%s3 + $0x8] sm:$0xf] %v62
  %71 = vst [vmem:[%s3 + $0xc] sm:$0xf] %v63
  // Predicated region
  $region14: #{img_discriminator_forward.20} parent=0 // pred_check
    _
  $region15: #{img_discriminator_forward.20} parent=0 // pred_check_branch
    %73 = sbr.rel (0) target = $region17
  $region16: #{img_discriminator_forward.20} parent=0 // pred_region
    _
  $region17: #{img_discriminator_forward.20} parent=0 // pred_fallthru
    _
  // Predicated region
  $region18: #{img_discriminator_forward.20} parent=0 // pred_check
    _
  $region19: #{img_discriminator_forward.20} parent=0 // pred_check_branch
    %75 = sbr.rel (0) target = $region21
  $region20: #{img_discriminator_forward.20} parent=0 // pred_region
    _
  $region21: #{img_discriminator_forward.20} parent=0 // pred_fallthru
    _

// kernel: img_discriminator_forward.21
$region0: #{img_discriminator_forward.21}
  #allocation0 [shape = 'u32[]', space=smem, size = 0x4, offset = 0x4, fixed_abs, tag = 'smem constant byte address 0x4 - core index']
  #allocation1 [shape = 'u32[144,128]{1,0:T(1,128)}', space=vmem, size = 0x12000, scoped, tag = 'internal scratch']
  %s0 = inlined_call_operand.vmem [shape: bf16[32,1152], index: 0, kind: input, shape index: {}]
  %s1 = inlined_call_operand.vmem [shape: bf16[1152,128], index: 1, kind: input, shape index: {}]
  %s2 = inlined_call_operand.vmem [shape: f32[32,128], index: 2, kind: output, shape index: {0}]
  %s3 = inlined_call_operand.vmem [shape: f32[1,128], index: 3, kind: output, shape index: {1}]
  %s4 = inlined_call_operand.vmem [shape: f32[1,128], index: 4, kind: output, shape index: {2}]
  %5 = xla_tuple %s2, %s3, %s4
  %s6 = sld [smem:[#allocation0]]
  $region38: #{img_discriminator_forward.21} parent=0
    _
  %s8 = ssub.s32 1, %s6
  %s9 = scalar_select 0, %s8, %s6
  // Predicated region
  $region2: #{img_discriminator_forward.21} parent=0 // pred_check
    _
  $region3: #{img_discriminator_forward.21} parent=0 // pred_check_branch
    %11 = sbr.rel (0) target = $region5
  $region4: #{img_discriminator_forward.21} parent=0 // pred_region
    _
  $region5: #{img_discriminator_forward.21} parent=0 // pred_fallthru
    _
  // Predicated region
  $region6: #{img_discriminator_forward.21} parent=0 // pred_check
    _
  $region7: #{img_discriminator_forward.21} parent=0 // pred_check_branch
    %13 = sbr.rel (0) target = $region9
  $region8: #{img_discriminator_forward.21} parent=0 // pred_region
    _
  $region9: #{img_discriminator_forward.21} parent=0 // pred_fallthru
    _
  %p15 = scmp.eq.s32.totalorder 0, 0
  // Predicated region
  $region10: #{img_discriminator_forward.21} parent=0 // pred_check
    %p16 = pneg %p15
  $region11: #{img_discriminator_forward.21} parent=0 // pred_check_branch
    %18 = sbr.rel (%p16) target = $region13
  $region12: #{img_discriminator_forward.21} parent=0 // pred_region
    %19 = vst [vmem:[%s3] sm:$0x1] 0.0
    %20 = vst [vmem:[%s4] sm:$0x1] 0.0
  $region13: #{img_discriminator_forward.21} parent=0 // pred_fallthru
    _
  %v21 = vld [vmem:[%s0] sm:$0xff]
  %v22 = vld [vmem:[%s0 + $0x8] sm:$0xff]
  %v23 = vld [vmem:[%s0 + $0x10] sm:$0xff]
  %v24 = vld [vmem:[%s0 + $0x18] sm:$0xff]
  %v25 = vld [vmem:[%s0 + $0x20] sm:$0xf]
  %v26 = vld [vmem:[%s0 + $0x24] sm:$0xff]
  %v27 = vld [vmem:[%s0 + $0x2c] sm:$0xff]
  %v28 = vld [vmem:[%s0 + $0x34] sm:$0xff]
  %v29 = vld [vmem:[%s0 + $0x3c] sm:$0xff]
  %v30 = vld [vmem:[%s0 + $0x44] sm:$0xf]
  %v31 = vld [vmem:[%s0 + $0x48] sm:$0xff]
  %v32 = vld [vmem:[%s0 + $0x50] sm:$0xff]
  %v33 = vld [vmem:[%s0 + $0x58] sm:$0xff]
  %v34 = vld [vmem:[%s0 + $0x60] sm:$0xff]
  %v35 = vld [vmem:[%s0 + $0x68] sm:$0xf]
  %v36 = vld [vmem:[%s0 + $0x6c] sm:$0xff]
  %v37 = vld [vmem:[%s0 + $0x74] sm:$0xff]
  %v38 = vld [vmem:[%s0 + $0x7c] sm:$0xff]
  %v39 = vld [vmem:[%s0 + $0x84] sm:$0xff]
  %v40 = vld [vmem:[%s0 + $0x8c] sm:$0xf]
  %v41 = vld [vmem:[%s1] sm:$0xf]
  %v42 = vld [vmem:[%s1 + $0x4] sm:$0xf]
  %v43 = vld [vmem:[%s1 + $0x8] sm:$0xf]
  %v44 = vld [vmem:[%s1 + $0xc] sm:$0xf]
  %v45 = vld [vmem:[%s1 + $0x10] sm:$0xf]
  %v46 = vld [vmem:[%s1 + $0x14] sm:$0xf]
  %v47 = vld [vmem:[%s1 + $0x18] sm:$0xf]
  %v48 = vld [vmem:[%s1 + $0x1c] sm:$0xf]
  %v49 = vld [vmem:[%s1 + $0x20] sm:$0xf]
  %v50 = vld [vmem:[%s1 + $0x24] sm:$0xf]
  %v51 = vld [vmem:[%s1 + $0x28] sm:$0xf]
  %v52 = vld [vmem:[%s1 + $0x2c] sm:$0xf]
  %v53 = vld [vmem:[%s1 + $0x30] sm:$0xf]
  %v54 = vld [vmem:[%s1 + $0x34] sm:$0xf]
  %v55 = vld [vmem:[%s1 + $0x38] sm:$0xf]
  %v56 = vld [vmem:[%s1 + $0x3c] sm:$0xf]
  %v57 = vld [vmem:[%s1 + $0x40] sm:$0xf]
  %v58 = vld [vmem:[%s1 + $0x44] sm:$0xf]
  %v59 = vld [vmem:[%s1 + $0x48] sm:$0xf]
  %v60 = vld [vmem:[%s1 + $0x4c] sm:$0xf]
  %v61 = vld [vmem:[%s1 + $0x50] sm:$0xf]
  %v62 = vld [vmem:[%s1 + $0x54] sm:$0xf]
  %v63 = vld [vmem:[%s1 + $0x58] sm:$0xf]
  %v64 = vld [vmem:[%s1 + $0x5c] sm:$0xf]
  %v65 = vld [vmem:[%s1 + $0x60] sm:$0xf]
  %v66 = vld [vmem:[%s1 + $0x64] sm:$0xf]
  %v67 = vld [vmem:[%s1 + $0x68] sm:$0xf]
  %v68 = vld [vmem:[%s1 + $0x6c] sm:$0xf]
  %v69 = vld [vmem:[%s1 + $0x70] sm:$0xf]
  %v70 = vld [vmem:[%s1 + $0x74] sm:$0xf]
  %v71 = vld [vmem:[%s1 + $0x78] sm:$0xf]
  %v72 = vld [vmem:[%s1 + $0x7c] sm:$0xf]
  %v73 = vld [vmem:[%s1 + $0x80] sm:$0xf]
  %v74 = vld [vmem:[%s1 + $0x84] sm:$0xf]
  %v75 = vld [vmem:[%s1 + $0x88] sm:$0xf]
  %v76 = vld [vmem:[%s1 + $0x8c] sm:$0xf]
  %v77 = vld [vmem:[%s1 + $0x90] sm:$0xf]
  %v78 = vld [vmem:[%s1 + $0x94] sm:$0xf]
  %v79 = vld [vmem:[%s1 + $0x98] sm:$0xf]
  %v80 = vld [vmem:[%s1 + $0x9c] sm:$0xf]
  %v81 = vld [vmem:[%s1 + $0xa0] sm:$0xf]
  %v82 = vld [vmem:[%s1 + $0xa4] sm:$0xf]
  %v83 = vld [vmem:[%s1 + $0xa8] sm:$0xf]
  %v84 = vld [vmem:[%s1 + $0xac] sm:$0xf]
  %v85 = vld [vmem:[%s1 + $0xb0] sm:$0xf]
  %v86 = vld [vmem:[%s1 + $0xb4] sm:$0xf]
  %v87 = vld [vmem:[%s1 + $0xb8] sm:$0xf]
  %v88 = vld [vmem:[%s1 + $0xbc] sm:$0xf]
  %v89 = vld [vmem:[%s1 + $0xc0] sm:$0xf]
  %v90 = vld [vmem:[%s1 + $0xc4] sm:$0xf]
  %v91 = vld [vmem:[%s1 + $0xc8] sm:$0xf]
  %v92 = vld [vmem:[%s1 + $0xcc] sm:$0xf]
  %v93 = vld [vmem:[%s1 + $0xd0] sm:$0xf]
  %v94 = vld [vmem:[%s1 + $0xd4] sm:$0xf]
  %v95 = vld [vmem:[%s1 + $0xd8] sm:$0xf]
  %v96 = vld [vmem:[%s1 + $0xdc] sm:$0xf]
  %v97 = vld [vmem:[%s1 + $0xe0] sm:$0xf]
  %v98 = vld [vmem:[%s1 + $0xe4] sm:$0xf]
  %v99 = vld [vmem:[%s1 + $0xe8] sm:$0xf]
  %v100 = vld [vmem:[%s1 + $0xec] sm:$0xf]
  %v101 = vld [vmem:[%s1 + $0xf0] sm:$0xf]
  %v102 = vld [vmem:[%s1 + $0xf4] sm:$0xf]
  %v103 = vld [vmem:[%s1 + $0xf8] sm:$0xf]
  %v104 = vld [vmem:[%s1 + $0xfc] sm:$0xf]
  %v105 = vld [vmem:[%s1 + $0x100] sm:$0xf]
  %v106 = vld [vmem:[%s1 + $0x104] sm:$0xf]
  %v107 = vld [vmem:[%s1 + $0x108] sm:$0xf]
  %v108 = vld [vmem:[%s1 + $0x10c] sm:$0xf]
  %v109 = vld [vmem:[%s1 + $0x110] sm:$0xf]
  %v110 = vld [vmem:[%s1 + $0x114] sm:$0xf]
  %v111 = vld [vmem:[%s1 + $0x118] sm:$0xf]
  %v112 = vld [vmem:[%s1 + $0x11c] sm:$0xf]
  %v113 = vld [vmem:[%s1 + $0x120] sm:$0xf]
  %v114 = vld [vmem:[%s1 + $0x124] sm:$0xf]
  %v115 = vld [vmem:[%s1 + $0x128] sm:$0xf]
  %v116 = vld [vmem:[%s1 + $0x12c] sm:$0xf]
  %v117 = vld [vmem:[%s1 + $0x130] sm:$0xf]
  %v118 = vld [vmem:[%s1 + $0x134] sm:$0xf]
  %v119 = vld [vmem:[%s1 + $0x138] sm:$0xf]
  %v120 = vld [vmem:[%s1 + $0x13c] sm:$0xf]
  %v121 = vld [vmem:[%s1 + $0x140] sm:$0xf]
  %v122 = vld [vmem:[%s1 + $0x144] sm:$0xf]
  %v123 = vld [vmem:[%s1 + $0x148] sm:$0xf]
  %v124 = vld [vmem:[%s1 + $0x14c] sm:$0xf]
  %v125 = vld [vmem:[%s1 + $0x150] sm:$0xf]
  %v126 = vld [vmem:[%s1 + $0x154] sm:$0xf]
  %v127 = vld [vmem:[%s1 + $0x158] sm:$0xf]
  %v128 = vld [vmem:[%s1 + $0x15c] sm:$0xf]
  %v129 = vld [vmem:[%s1 + $0x160] sm:$0xf]
  %v130 = vld [vmem:[%s1 + $0x164] sm:$0xf]
  %v131 = vld [vmem:[%s1 + $0x168] sm:$0xf]
  %v132 = vld [vmem:[%s1 + $0x16c] sm:$0xf]
  %v133 = vld [vmem:[%s1 + $0x170] sm:$0xf]
  %v134 = vld [vmem:[%s1 + $0x174] sm:$0xf]
  %v135 = vld [vmem:[%s1 + $0x178] sm:$0xf]
  %v136 = vld [vmem:[%s1 + $0x17c] sm:$0xf]
  %v137 = vld [vmem:[%s1 + $0x180] sm:$0xf]
  %v138 = vld [vmem:[%s1 + $0x184] sm:$0xf]
  %v139 = vld [vmem:[%s1 + $0x188] sm:$0xf]
  %v140 = vld [vmem:[%s1 + $0x18c] sm:$0xf]
  %v141 = vld [vmem:[%s1 + $0x190] sm:$0xf]
  %v142 = vld [vmem:[%s1 + $0x194] sm:$0xf]
  %v143 = vld [vmem:[%s1 + $0x198] sm:$0xf]
  %v144 = vld [vmem:[%s1 + $0x19c] sm:$0xf]
  %v145 = vld [vmem:[%s1 + $0x1a0] sm:$0xf]
  %v146 = vld [vmem:[%s1 + $0x1a4] sm:$0xf]
  %v147 = vld [vmem:[%s1 + $0x1a8] sm:$0xf]
  %v148 = vld [vmem:[%s1 + $0x1ac] sm:$0xf]
  %v149 = vld [vmem:[%s1 + $0x1b0] sm:$0xf]
  %v150 = vld [vmem:[%s1 + $0x1b4] sm:$0xf]
  %v151 = vld [vmem:[%s1 + $0x1b8] sm:$0xf]
  %v152 = vld [vmem:[%s1 + $0x1bc] sm:$0xf]
  %v153 = vld [vmem:[%s1 + $0x1c0] sm:$0xf]
  %v154 = vld [vmem:[%s1 + $0x1c4] sm:$0xf]
  %v155 = vld [vmem:[%s1 + $0x1c8] sm:$0xf]
  %v156 = vld [vmem:[%s1 + $0x1cc] sm:$0xf]
  %v157 = vld [vmem:[%s1 + $0x1d0] sm:$0xf]
  %v158 = vld [vmem:[%s1 + $0x1d4] sm:$0xf]
  %v159 = vld [vmem:[%s1 + $0x1d8] sm:$0xf]
  %v160 = vld [vmem:[%s1 + $0x1dc] sm:$0xf]
  %v161 = vld [vmem:[%s1 + $0x1e0] sm:$0xf]
  %v162 = vld [vmem:[%s1 + $0x1e4] sm:$0xf]
  %v163 = vld [vmem:[%s1 + $0x1e8] sm:$0xf]
  %v164 = vld [vmem:[%s1 + $0x1ec] sm:$0xf]
  %v165 = vld [vmem:[%s1 + $0x1f0] sm:$0xf]
  %v166 = vld [vmem:[%s1 + $0x1f4] sm:$0xf]
  %v167 = vld [vmem:[%s1 + $0x1f8] sm:$0xf]
  %v168 = vld [vmem:[%s1 + $0x1fc] sm:$0xf]
  %v169 = vld [vmem:[%s1 + $0x200] sm:$0xf]
  %v170 = vld [vmem:[%s1 + $0x204] sm:$0xf]
  %v171 = vld [vmem:[%s1 + $0x208] sm:$0xf]
  %v172 = vld [vmem:[%s1 + $0x20c] sm:$0xf]
  %v173 = vld [vmem:[%s1 + $0x210] sm:$0xf]
  %v174 = vld [vmem:[%s1 + $0x214] sm:$0xf]
  %v175 = vld [vmem:[%s1 + $0x218] sm:$0xf]
  %v176 = vld [vmem:[%s1 + $0x21c] sm:$0xf]
  %v177 = vld [vmem:[%s1 + $0x220] sm:$0xf]
  %v178 = vld [vmem:[%s1 + $0x224] sm:$0xf]
  %v179 = vld [vmem:[%s1 + $0x228] sm:$0xf]
  %v180 = vld [vmem:[%s1 + $0x22c] sm:$0xf]
  %v181 = vld [vmem:[%s1 + $0x230] sm:$0xf]
  %v182 = vld [vmem:[%s1 + $0x234] sm:$0xf]
  %v183 = vld [vmem:[%s1 + $0x238] sm:$0xf]
  %v184 = vld [vmem:[%s1 + $0x23c] sm:$0xf]
  %v205 = vunpack.c.l.b16 %v21
  %v206 = vunpack.c.h.b16 %v21
  %v207 = vunpack.c.l.b16 %v22
  %v208 = vunpack.c.h.b16 %v22
  %v209 = vunpack.c.l.b16 %v23
  %v210 = vunpack.c.h.b16 %v23
  %v211 = vunpack.c.l.b16 %v24
  %v212 = vunpack.c.h.b16 %v24
  %v213 = vunpack.c.l.b16 %v25
  %v214 = vunpack.c.l.b16 %v26
  %v215 = vunpack.c.h.b16 %v26
  %v216 = vunpack.c.l.b16 %v27
  %v217 = vunpack.c.h.b16 %v27
  %v218 = vunpack.c.l.b16 %v28
  %v219 = vunpack.c.h.b16 %v28
  %v220 = vunpack.c.l.b16 %v29
  %v221 = vunpack.c.h.b16 %v29
  %v222 = vunpack.c.l.b16 %v30
  %v223 = vunpack.c.l.b16 %v31
  %v224 = vunpack.c.h.b16 %v31
  %v225 = vunpack.c.l.b16 %v32
  %v226 = vunpack.c.h.b16 %v32
  %v227 = vunpack.c.l.b16 %v33
  %v228 = vunpack.c.h.b16 %v33
  %v229 = vunpack.c.l.b16 %v34
  %v230 = vunpack.c.h.b16 %v34
  %v231 = vunpack.c.l.b16 %v35
  %v232 = vunpack.c.l.b16 %v36
  %v233 = vunpack.c.h.b16 %v36
  %v234 = vunpack.c.l.b16 %v37
  %v235 = vunpack.c.h.b16 %v37
  %v236 = vunpack.c.l.b16 %v38
  %v237 = vunpack.c.h.b16 %v38
  %v238 = vunpack.c.l.b16 %v39
  %v239 = vunpack.c.h.b16 %v39
  %v240 = vunpack.c.l.b16 %v40
  %v241 = vpack.c.b16 %v214, %v205
  %v242 = vpack.c.b16 %v215, %v206
  %v243 = vpack.c.b16 %v216, %v207
  %v244 = vpack.c.b16 %v217, %v208
  %v245 = vpack.c.b16 %v218, %v209
  %v246 = vpack.c.b16 %v219, %v210
  %v247 = vpack.c.b16 %v220, %v211
  %v248 = vpack.c.b16 %v221, %v212
  %v249 = vpack.c.b16 %v222, %v213
  %v250 = vpack.c.b16 %v232, %v223
  %v251 = vpack.c.b16 %v233, %v224
  %v252 = vpack.c.b16 %v234, %v225
  %v253 = vpack.c.b16 %v235, %v226
  %v254 = vpack.c.b16 %v236, %v227
  %v255 = vpack.c.b16 %v237, %v228
  %v256 = vpack.c.b16 %v238, %v229
  %v257 = vpack.c.b16 %v239, %v230
  %v258 = vpack.c.b16 %v240, %v231
  %v421 = vunpack.c.l.b16 %v41
  %v422 = vunpack.c.l.b16 %v42
  %v423 = vunpack.c.l.b16 %v43
  %v424 = vunpack.c.l.b16 %v44
  %v425 = vunpack.c.l.b16 %v45
  %v426 = vunpack.c.l.b16 %v46
  %v427 = vunpack.c.l.b16 %v47
  %v428 = vunpack.c.l.b16 %v48
  %v429 = vunpack.c.l.b16 %v49
  %v430 = vunpack.c.l.b16 %v50
  %v431 = vunpack.c.l.b16 %v51
  %v432 = vunpack.c.l.b16 %v52
  %v433 = vunpack.c.l.b16 %v53
  %v434 = vunpack.c.l.b16 %v54
  %v435 = vunpack.c.l.b16 %v55
  %v436 = vunpack.c.l.b16 %v56
  %v437 = vunpack.c.l.b16 %v57
  %v438 = vunpack.c.l.b16 %v58
  %v439 = vunpack.c.l.b16 %v59
  %v440 = vunpack.c.l.b16 %v60
  %v441 = vunpack.c.l.b16 %v61
  %v442 = vunpack.c.l.b16 %v62
  %v443 = vunpack.c.l.b16 %v63
  %v444 = vunpack.c.l.b16 %v64
  %v445 = vunpack.c.l.b16 %v65
  %v446 = vunpack.c.l.b16 %v66
  %v447 = vunpack.c.l.b16 %v67
  %v448 = vunpack.c.l.b16 %v68
  %v449 = vunpack.c.l.b16 %v69
  %v450 = vunpack.c.l.b16 %v70
  %v451 = vunpack.c.l.b16 %v71
  %v452 = vunpack.c.l.b16 %v72
  %v453 = vunpack.c.l.b16 %v73
  %v454 = vunpack.c.l.b16 %v74
  %v455 = vunpack.c.l.b16 %v75
  %v456 = vunpack.c.l.b16 %v76
  %v457 = vunpack.c.l.b16 %v77
  %v458 = vunpack.c.l.b16 %v78
  %v459 = vunpack.c.l.b16 %v79
  %v460 = vunpack.c.l.b16 %v80
  %v461 = vunpack.c.l.b16 %v81
  %v462 = vunpack.c.l.b16 %v82
  %v463 = vunpack.c.l.b16 %v83
  %v464 = vunpack.c.l.b16 %v84
  %v465 = vunpack.c.l.b16 %v85
  %v466 = vunpack.c.l.b16 %v86
  %v467 = vunpack.c.l.b16 %v87
  %v468 = vunpack.c.l.b16 %v88
  %v469 = vunpack.c.l.b16 %v89
  %v470 = vunpack.c.l.b16 %v90
  %v471 = vunpack.c.l.b16 %v91
  %v472 = vunpack.c.l.b16 %v92
  %v473 = vunpack.c.l.b16 %v93
  %v474 = vunpack.c.l.b16 %v94
  %v475 = vunpack.c.l.b16 %v95
  %v476 = vunpack.c.l.b16 %v96
  %v477 = vunpack.c.l.b16 %v97
  %v478 = vunpack.c.l.b16 %v98
  %v479 = vunpack.c.l.b16 %v99
  %v480 = vunpack.c.l.b16 %v100
  %v481 = vunpack.c.l.b16 %v101
  %v482 = vunpack.c.l.b16 %v102
  %v483 = vunpack.c.l.b16 %v103
  %v484 = vunpack.c.l.b16 %v104
  %v485 = vunpack.c.l.b16 %v105
  %v486 = vunpack.c.l.b16 %v106
  %v487 = vunpack.c.l.b16 %v107
  %v488 = vunpack.c.l.b16 %v108
  %v489 = vunpack.c.l.b16 %v109
  %v490 = vunpack.c.l.b16 %v110
  %v491 = vunpack.c.l.b16 %v111
  %v492 = vunpack.c.l.b16 %v112
  %v493 = vunpack.c.l.b16 %v113
  %v494 = vunpack.c.l.b16 %v114
  %v495 = vunpack.c.l.b16 %v115
  %v496 = vunpack.c.l.b16 %v116
  %v497 = vunpack.c.l.b16 %v117
  %v498 = vunpack.c.l.b16 %v118
  %v499 = vunpack.c.l.b16 %v119
  %v500 = vunpack.c.l.b16 %v120
  %v501 = vunpack.c.l.b16 %v121
  %v502 = vunpack.c.l.b16 %v122
  %v503 = vunpack.c.l.b16 %v123
  %v504 = vunpack.c.l.b16 %v124
  %v505 = vunpack.c.l.b16 %v125
  %v506 = vunpack.c.l.b16 %v126
  %v507 = vunpack.c.l.b16 %v127
  %v508 = vunpack.c.l.b16 %v128
  %v509 = vunpack.c.l.b16 %v129
  %v510 = vunpack.c.l.b16 %v130
  %v511 = vunpack.c.l.b16 %v131
  %v512 = vunpack.c.l.b16 %v132
  %v513 = vunpack.c.l.b16 %v133
  %v514 = vunpack.c.l.b16 %v134
  %v515 = vunpack.c.l.b16 %v135
  %v516 = vunpack.c.l.b16 %v136
  %v517 = vunpack.c.l.b16 %v137
  %v518 = vunpack.c.l.b16 %v138
  %v519 = vunpack.c.l.b16 %v139
  %v520 = vunpack.c.l.b16 %v140
  %v521 = vunpack.c.l.b16 %v141
  %v522 = vunpack.c.l.b16 %v142
  %v523 = vunpack.c.l.b16 %v143
  %v524 = vunpack.c.l.b16 %v144
  %v525 = vunpack.c.l.b16 %v145
  %v526 = vunpack.c.l.b16 %v146
  %v527 = vunpack.c.l.b16 %v147
  %v528 = vunpack.c.l.b16 %v148
  %v529 = vunpack.c.l.b16 %v149
  %v530 = vunpack.c.l.b16 %v150
  %v531 = vunpack.c.l.b16 %v151
  %v532 = vunpack.c.l.b16 %v152
  %v533 = vunpack.c.l.b16 %v153
  %v534 = vunpack.c.l.b16 %v154
  %v535 = vunpack.c.l.b16 %v155
  %v536 = vunpack.c.l.b16 %v156
  %v537 = vunpack.c.l.b16 %v157
  %v538 = vunpack.c.l.b16 %v158
  %v539 = vunpack.c.l.b16 %v159
  %v540 = vunpack.c.l.b16 %v160
  %v541 = vunpack.c.l.b16 %v161
  %v542 = vunpack.c.l.b16 %v162
  %v543 = vunpack.c.l.b16 %v163
  %v544 = vunpack.c.l.b16 %v164
  %v545 = vunpack.c.l.b16 %v165
  %v546 = vunpack.c.l.b16 %v166
  %v547 = vunpack.c.l.b16 %v167
  %v548 = vunpack.c.l.b16 %v168
  %v549 = vunpack.c.l.b16 %v169
  %v550 = vunpack.c.l.b16 %v170
  %v551 = vunpack.c.l.b16 %v171
  %v552 = vunpack.c.l.b16 %v172
  %v553 = vunpack.c.l.b16 %v173
  %v554 = vunpack.c.l.b16 %v174
  %v555 = vunpack.c.l.b16 %v175
  %v556 = vunpack.c.l.b16 %v176
  %v557 = vunpack.c.l.b16 %v177
  %v558 = vunpack.c.l.b16 %v178
  %v559 = vunpack.c.l.b16 %v179
  %v560 = vunpack.c.l.b16 %v180
  %v561 = vunpack.c.l.b16 %v181
  %v562 = vunpack.c.l.b16 %v182
  %v563 = vunpack.c.l.b16 %v183
  %v564 = vunpack.c.l.b16 %v184
  %v565 = vpack.c.b16 %v422, %v421
  %v566 = vpack.c.b16 %v424, %v423
  %v567 = vpack.c.b16 %v426, %v425
  %v568 = vpack.c.b16 %v428, %v427
  %v569 = vpack.c.b16 %v430, %v429
  %v570 = vpack.c.b16 %v432, %v431
  %v571 = vpack.c.b16 %v434, %v433
  %v572 = vpack.c.b16 %v436, %v435
  %v573 = vpack.c.b16 %v438, %v437
  %v574 = vpack.c.b16 %v440, %v439
  %v575 = vpack.c.b16 %v442, %v441
  %v576 = vpack.c.b16 %v444, %v443
  %v577 = vpack.c.b16 %v446, %v445
  %v578 = vpack.c.b16 %v448, %v447
  %v579 = vpack.c.b16 %v450, %v449
  %v580 = vpack.c.b16 %v452, %v451
  %v581 = vpack.c.b16 %v454, %v453
  %v582 = vpack.c.b16 %v456, %v455
  %v583 = vpack.c.b16 %v458, %v457
  %v584 = vpack.c.b16 %v460, %v459
  %v585 = vpack.c.b16 %v462, %v461
  %v586 = vpack.c.b16 %v464, %v463
  %v587 = vpack.c.b16 %v466, %v465
  %v588 = vpack.c.b16 %v468, %v467
  %v589 = vpack.c.b16 %v470, %v469
  %v590 = vpack.c.b16 %v472, %v471
  %v591 = vpack.c.b16 %v474, %v473
  %v592 = vpack.c.b16 %v476, %v475
  %v593 = vpack.c.b16 %v478, %v477
  %v594 = vpack.c.b16 %v480, %v479
  %v595 = vpack.c.b16 %v482, %v481
  %v596 = vpack.c.b16 %v484, %v483
  %v597 = vpack.c.b16 %v486, %v485
  %v598 = vpack.c.b16 %v488, %v487
  %v599 = vpack.c.b16 %v490, %v489
  %v600 = vpack.c.b16 %v492, %v491
  %v601 = vpack.c.b16 %v494, %v493
  %v602 = vpack.c.b16 %v496, %v495
  %v603 = vpack.c.b16 %v498, %v497
  %v604 = vpack.c.b16 %v500, %v499
  %v605 = vpack.c.b16 %v502, %v501
  %v606 = vpack.c.b16 %v504, %v503
  %v607 = vpack.c.b16 %v506, %v505
  %v608 = vpack.c.b16 %v508, %v507
  %v609 = vpack.c.b16 %v510, %v509
  %v610 = vpack.c.b16 %v512, %v511
  %v611 = vpack.c.b16 %v514, %v513
  %v612 = vpack.c.b16 %v516, %v515
  %v613 = vpack.c.b16 %v518, %v517
  %v614 = vpack.c.b16 %v520, %v519
  %v615 = vpack.c.b16 %v522, %v521
  %v616 = vpack.c.b16 %v524, %v523
  %v617 = vpack.c.b16 %v526, %v525
  %v618 = vpack.c.b16 %v528, %v527
  %v619 = vpack.c.b16 %v530, %v529
  %v620 = vpack.c.b16 %v532, %v531
  %v621 = vpack.c.b16 %v534, %v533
  %v622 = vpack.c.b16 %v536, %v535
  %v623 = vpack.c.b16 %v538, %v537
  %v624 = vpack.c.b16 %v540, %v539
  %v625 = vpack.c.b16 %v542, %v541
  %v626 = vpack.c.b16 %v544, %v543
  %v627 = vpack.c.b16 %v546, %v545
  %v628 = vpack.c.b16 %v548, %v547
  %v629 = vpack.c.b16 %v550, %v549
  %v630 = vpack.c.b16 %v552, %v551
  %v631 = vpack.c.b16 %v554, %v553
  %v632 = vpack.c.b16 %v556, %v555
  %v633 = vpack.c.b16 %v558, %v557
  %v634 = vpack.c.b16 %v560, %v559
  %v635 = vpack.c.b16 %v562, %v561
  %v636 = vpack.c.b16 %v564, %v563
  %709 = vmatprep.subr.bf16.mxu0 0
  %710 = vmatpush1.bf16.msra.mxu0 %v565
  %711 = vmatprep.subr.bf16.mxu0 0
  %712 = vmatpush1.bf16.msra.mxu0 %v566
  %713 = vmatprep.subr.bf16.mxu0 0
  %714 = vmatpush1.bf16.msra.mxu0 %v567
  %715 = vmatprep.subr.bf16.mxu0 0
  %716 = vmatpush1.bf16.msra.mxu0 %v568
  %717 = vmatprep.subr.bf16.mxu0 0
  %718 = vmatpush1.bf16.msra.mxu0 %v569
  %719 = vmatprep.subr.bf16.mxu0 0
  %720 = vmatpush1.bf16.msra.mxu0 %v570
  %721 = vmatprep.subr.bf16.mxu0 0
  %722 = vmatpush1.bf16.msra.mxu0 %v571
  %723 = vmatprep.subr.bf16.mxu0 0
  %724 = vmatpush1.bf16.msra.mxu0 %v572
  %725 = vmatprep.subr.bf16.mxu0 0
  %726 = vmatpush1.bf16.msra.mxu0 %v573
  %727 = vmatprep.subr.bf16.mxu0 0
  %728 = vmatpush1.bf16.msra.mxu0 %v574
  %729 = vmatprep.subr.bf16.mxu0 0
  %730 = vmatpush1.bf16.msra.mxu0 %v575
  %731 = vmatprep.subr.bf16.mxu0 0
  %732 = vmatpush1.bf16.msra.mxu0 %v576
  %733 = vmatprep.subr.bf16.mxu0 0
  %734 = vmatpush1.bf16.msra.mxu0 %v577
  %735 = vmatprep.subr.bf16.mxu0 0
  %736 = vmatpush1.bf16.msra.mxu0 %v578
  %737 = vmatprep.subr.bf16.mxu0 0
  %738 = vmatpush1.bf16.msra.mxu0 %v579
  %739 = vmatprep.subr.bf16.mxu0 0
  %740 = vmatpush1.bf16.msra.mxu0 %v580
  %741 = vmatprep.mubr.bf16.mxu0 %v242
  %742 = vmatmul.mubr.bf16.gmra.mrb[0].mxu0 %v241
  %v743 = vpop.f32.mrb[0].mxu0
  %v744 = vadd.f32 0.0, %v743
  %v745 = vpop.f32.mrb[0].mxu0
  %v746 = vpop.f32.mrb[0].mxu0
  %v747 = vadd.f32 0.0, %v746
  %v748 = vpop.f32.mrb[0].mxu0
  %749 = vmatprep.mubr.bf16.mxu0 %v251
  %750 = vmatmul.mubr.bf16.gmra.mrb[0].mxu0 %v250
  %v751 = vpop.f32.mrb[0].mxu0
  %v752 = vadd.f32 0.0, %v751
  %v753 = vpop.f32.mrb[0].mxu0
  %v754 = vpop.f32.mrb[0].mxu0
  %v755 = vadd.f32 0.0, %v754
  %v756 = vpop.f32.mrb[0].mxu0
  %757 = vdwg.mxu0
  %758 = vmatprep.subr.bf16.mxu0 0
  %759 = vmatpush1.bf16.msra.mxu0 %v581
  %760 = vmatprep.subr.bf16.mxu0 0
  %761 = vmatpush1.bf16.msra.mxu0 %v582
  %762 = vmatprep.subr.bf16.mxu0 0
  %763 = vmatpush1.bf16.msra.mxu0 %v583
  %764 = vmatprep.subr.bf16.mxu0 0
  %765 = vmatpush1.bf16.msra.mxu0 %v584
  %766 = vmatprep.subr.bf16.mxu0 0
  %767 = vmatpush1.bf16.msra.mxu0 %v585
  %768 = vmatprep.subr.bf16.mxu0 0
  %769 = vmatpush1.bf16.msra.mxu0 %v586
  %770 = vmatprep.subr.bf16.mxu0 0
  %771 = vmatpush1.bf16.msra.mxu0 %v587
  %772 = vmatprep.subr.bf16.mxu0 0
  %773 = vmatpush1.bf16.msra.mxu0 %v588
  %774 = vmatprep.subr.bf16.mxu0 0
  %775 = vmatpush1.bf16.msra.mxu0 %v589
  %776 = vmatprep.subr.bf16.mxu0 0
  %777 = vmatpush1.bf16.msra.mxu0 %v590
  %778 = vmatprep.subr.bf16.mxu0 0
  %779 = vmatpush1.bf16.msra.mxu0 %v591
  %780 = vmatprep.subr.bf16.mxu0 0
  %781 = vmatpush1.bf16.msra.mxu0 %v592
  %782 = vmatprep.subr.bf16.mxu0 0
  %783 = vmatpush1.bf16.msra.mxu0 %v593
  %784 = vmatprep.subr.bf16.mxu0 0
  %785 = vmatpush1.bf16.msra.mxu0 %v594
  %786 = vmatprep.subr.bf16.mxu0 0
  %787 = vmatpush1.bf16.msra.mxu0 %v595
  %788 = vmatprep.subr.bf16.mxu0 0
  %789 = vmatpush1.bf16.msra.mxu0 %v596
  %790 = vmatprep.mubr.bf16.mxu0 %v244
  %791 = vmatmul.mubr.bf16.gmra.mrb[0].mxu0 %v243
  %v792 = vpop.f32.mrb[0].mxu0
  %v793 = vadd.f32 %v744, %v792
  %v794 = vpop.f32.mrb[0].mxu0
  %v795 = vpop.f32.mrb[0].mxu0
  %v796 = vadd.f32 %v747, %v795
  %v797 = vpop.f32.mrb[0].mxu0
  %798 = vmatprep.mubr.bf16.mxu0 %v253
  %799 = vmatmul.mubr.bf16.gmra.mrb[0].mxu0 %v252
  %v800 = vpop.f32.mrb[0].mxu0
  %v801 = vadd.f32 %v752, %v800
  %v802 = vpop.f32.mrb[0].mxu0
  %v803 = vpop.f32.mrb[0].mxu0
  %v804 = vadd.f32 %v755, %v803
  %v805 = vpop.f32.mrb[0].mxu0
  %806 = vdwg.mxu0
  %807 = vmatprep.subr.bf16.mxu0 0
  %808 = vmatpush1.bf16.msra.mxu0 %v597
  %809 = vmatprep.subr.bf16.mxu0 0
  %810 = vmatpush1.bf16.msra.mxu0 %v598
  %811 = vmatprep.subr.bf16.mxu0 0
  %812 = vmatpush1.bf16.msra.mxu0 %v599
  %813 = vmatprep.subr.bf16.mxu0 0
  %814 = vmatpush1.bf16.msra.mxu0 %v600
  %815 = vmatprep.subr.bf16.mxu0 0
  %816 = vmatpush1.bf16.msra.mxu0 %v601
  %817 = vmatprep.subr.bf16.mxu0 0
  %818 = vmatpush1.bf16.msra.mxu0 %v602
  %819 = vmatprep.subr.bf16.mxu0 0
  %820 = vmatpush1.bf16.msra.mxu0 %v603
  %821 = vmatprep.subr.bf16.mxu0 0
  %822 = vmatpush1.bf16.msra.mxu0 %v604
  %823 = vmatprep.subr.bf16.mxu0 0
  %824 = vmatpush1.bf16.msra.mxu0 %v605
  %825 = vmatprep.subr.bf16.mxu0 0
  %826 = vmatpush1.bf16.msra.mxu0 %v606
  %827 = vmatprep.subr.bf16.mxu0 0
  %828 = vmatpush1.bf16.msra.mxu0 %v607
  %829 = vmatprep.subr.bf16.mxu0 0
  %830 = vmatpush1.bf16.msra.mxu0 %v608
  %831 = vmatprep.subr.bf16.mxu0 0
  %832 = vmatpush1.bf16.msra.mxu0 %v609
  %833 = vmatprep.subr.bf16.mxu0 0
  %834 = vmatpush1.bf16.msra.mxu0 %v610
  %835 = vmatprep.subr.bf16.mxu0 0
  %836 = vmatpush1.bf16.msra.mxu0 %v611
  %837 = vmatprep.subr.bf16.mxu0 0
  %838 = vmatpush1.bf16.msra.mxu0 %v612
  %839 = vmatprep.mubr.bf16.mxu0 %v246
  %840 = vmatmul.mubr.bf16.gmra.mrb[0].mxu0 %v245
  %v841 = vpop.f32.mrb[0].mxu0
  %v842 = vadd.f32 %v793, %v841
  %v843 = vpop.f32.mrb[0].mxu0
  %v844 = vpop.f32.mrb[0].mxu0
  %v845 = vadd.f32 %v796, %v844
  %v846 = vpop.f32.mrb[0].mxu0
  %847 = vmatprep.mubr.bf16.mxu0 %v255
  %848 = vmatmul.mubr.bf16.gmra.mrb[0].mxu0 %v254
  %v849 = vpop.f32.mrb[0].mxu0
  %v850 = vadd.f32 %v801, %v849
  %v851 = vpop.f32.mrb[0].mxu0
  %v852 = vpop.f32.mrb[0].mxu0
  %v853 = vadd.f32 %v804, %v852
  %v854 = vpop.f32.mrb[0].mxu0
  %855 = vdwg.mxu0
  %856 = vmatprep.subr.bf16.mxu0 0
  %857 = vmatpush1.bf16.msra.mxu0 %v613
  %858 = vmatprep.subr.bf16.mxu0 0
  %859 = vmatpush1.bf16.msra.mxu0 %v614
  %860 = vmatprep.subr.bf16.mxu0 0
  %861 = vmatpush1.bf16.msra.mxu0 %v615
  %862 = vmatprep.subr.bf16.mxu0 0
  %863 = vmatpush1.bf16.msra.mxu0 %v616
  %864 = vmatprep.subr.bf16.mxu0 0
  %865 = vmatpush1.bf16.msra.mxu0 %v617
  %866 = vmatprep.subr.bf16.mxu0 0
  %867 = vmatpush1.bf16.msra.mxu0 %v618
  %868 = vmatprep.subr.bf16.mxu0 0
  %869 = vmatpush1.bf16.msra.mxu0 %v619
  %870 = vmatprep.subr.bf16.mxu0 0
  %871 = vmatpush1.bf16.msra.mxu0 %v620
  %872 = vmatprep.subr.bf16.mxu0 0
  %873 = vmatpush1.bf16.msra.mxu0 %v621
  %874 = vmatprep.subr.bf16.mxu0 0
  %875 = vmatpush1.bf16.msra.mxu0 %v622
  %876 = vmatprep.subr.bf16.mxu0 0
  %877 = vmatpush1.bf16.msra.mxu0 %v623
  %878 = vmatprep.subr.bf16.mxu0 0
  %879 = vmatpush1.bf16.msra.mxu0 %v624
  %880 = vmatprep.subr.bf16.mxu0 0
  %881 = vmatpush1.bf16.msra.mxu0 %v625
  %882 = vmatprep.subr.bf16.mxu0 0
  %883 = vmatpush1.bf16.msra.mxu0 %v626
  %884 = vmatprep.subr.bf16.mxu0 0
  %885 = vmatpush1.bf16.msra.mxu0 %v627
  %886 = vmatprep.subr.bf16.mxu0 0
  %887 = vmatpush1.bf16.msra.mxu0 %v628
  %888 = vmatprep.mubr.bf16.mxu0 %v248
  %889 = vmatmul.mubr.bf16.gmra.mrb[0].mxu0 %v247
  %v890 = vpop.f32.mrb[0].mxu0
  %v891 = vadd.f32 %v842, %v890
  %v892 = vpop.f32.mrb[0].mxu0
  %v893 = vpop.f32.mrb[0].mxu0
  %v894 = vadd.f32 %v845, %v893
  %v895 = vpop.f32.mrb[0].mxu0
  %896 = vmatprep.mubr.bf16.mxu0 %v257
  %897 = vmatmul.mubr.bf16.gmra.mrb[0].mxu0 %v256
  %v898 = vpop.f32.mrb[0].mxu0
  %v899 = vadd.f32 %v850, %v898
  %v900 = vpop.f32.mrb[0].mxu0
  %v901 = vpop.f32.mrb[0].mxu0
  %v902 = vadd.f32 %v853, %v901
  %v903 = vpop.f32.mrb[0].mxu0
  %904 = vdwg.mxu0
  %905 = vmatprep.subr.bf16.mxu0 0
  %906 = vmatpush1.bf16.msra.mxu0 %v629
  %907 = vmatprep.subr.bf16.mxu0 0
  %908 = vmatpush1.bf16.msra.mxu0 %v630
  %909 = vmatprep.subr.bf16.mxu0 0
  %910 = vmatpush1.bf16.msra.mxu0 %v631
  %911 = vmatprep.subr.bf16.mxu0 0
  %912 = vmatpush1.bf16.msra.mxu0 %v632
  %913 = vmatprep.subr.bf16.mxu0 0
  %914 = vmatpush1.bf16.msra.mxu0 %v633
  %915 = vmatprep.subr.bf16.mxu0 0
  %916 = vmatpush1.bf16.msra.mxu0 %v634
  %917 = vmatprep.subr.bf16.mxu0 0
  %918 = vmatpush1.bf16.msra.mxu0 %v635
  %919 = vmatprep.subr.bf16.mxu0 0
  %920 = vmatpush1.bf16.msra.mxu0 %v636
  %921 = vmatprep.subr.bf16.mxu0 0
  %922 = vmatpush1.bf16.msra.mxu0 0
  %923 = vmatprep.subr.bf16.mxu0 0
  %924 = vmatpush1.bf16.msra.mxu0 0
  %925 = vmatprep.subr.bf16.mxu0 0
  %926 = vmatpush1.bf16.msra.mxu0 0
  %927 = vmatprep.subr.bf16.mxu0 0
  %928 = vmatpush1.bf16.msra.mxu0 0
  %929 = vmatprep.subr.bf16.mxu0 0
  %930 = vmatpush1.bf16.msra.mxu0 0
  %931 = vmatprep.subr.bf16.mxu0 0
  %932 = vmatpush1.bf16.msra.mxu0 0
  %933 = vmatprep.subr.bf16.mxu0 0
  %934 = vmatpush1.bf16.msra.mxu0 0
  %935 = vmatprep.subr.bf16.mxu0 0
  %936 = vmatpush1.bf16.msra.mxu0 0
  %937 = vmatprep.mubr.bf16.mxu0 0
  %938 = vmatmul.mubr.bf16.gmra.mrb[0].mxu0 %v249
  %v939 = vpop.f32.mrb[0].mxu0
  %v940 = vadd.f32 %v891, %v939
  %v941 = vpop.f32.mrb[0].mxu0
  %v942 = vpop.f32.mrb[0].mxu0
  %v943 = vadd.f32 %v894, %v942
  %v944 = vpop.f32.mrb[0].mxu0
  %945 = vmatprep.mubr.bf16.mxu0 0
  %946 = vmatmul.mubr.bf16.gmra.mrb[0].mxu0 %v258
  %v947 = vpop.f32.mrb[0].mxu0
  %v948 = vadd.f32 %v899, %v947
  %v949 = vpop.f32.mrb[0].mxu0
  %v950 = vpop.f32.mrb[0].mxu0
  %v951 = vadd.f32 %v902, %v950
  %v952 = vpop.f32.mrb[0].mxu0
  %953 = vdwg.mxu0
  %954 = vst [vmem:[%s2] sm:$0xff] %v940
  %955 = vst [vmem:[%s2 + $0x8] sm:$0xff] %v943
  %956 = vst [vmem:[%s2 + $0x10] sm:$0xff] %v948
  %957 = vst [vmem:[%s2 + $0x18] sm:$0xff] %v951
  %v958 = vld [vmem:[%s3] sm:$0x1]
  %v959 = vadd.f32 %v940, %v943
  %v960 = vadd.f32 %v959, %v948
  %v961 = vadd.f32 %v960, %v951
  %v962 = vrot.slane %v961, 4
  %v963 = vadd.f32 %v961, %v962
  %v964 = vrot.slane %v963, 2
  %v965 = vadd.f32 %v963, %v964
  %v966 = vrot.slane %v965, 1
  %v967 = vadd.f32 %v965, %v966
  %v968 = vadd.f32 %v958, %v967
  %969 = vst [vmem:[%s3] sm:$0x1] %v968
  %v970 = vld [vmem:[%s4] sm:$0x1]
  %v971 = vmul.f32 %v940, %v940
  %v972 = vmul.f32 %v943, %v943
  %v973 = vmul.f32 %v948, %v948
  %v974 = vmul.f32 %v951, %v951
  %v975 = vadd.f32 %v971, %v972
  %v976 = vadd.f32 %v975, %v973
  %v977 = vadd.f32 %v976, %v974
  %v978 = vrot.slane %v977, 4
  %v979 = vadd.f32 %v977, %v978
  %v980 = vrot.slane %v979, 2
  %v981 = vadd.f32 %v979, %v980
  %v982 = vrot.slane %v981, 1
  %v983 = vadd.f32 %v981, %v982
  %v984 = vadd.f32 %v970, %v983
  %985 = vst [vmem:[%s4] sm:$0x1] %v984
  // Predicated region
  $region14: #{img_discriminator_forward.21} parent=0 // pred_check
    _
  $region15: #{img_discriminator_forward.21} parent=0 // pred_check_branch
    %987 = sbr.rel (0) target = $region17
  $region16: #{img_discriminator_forward.21} parent=0 // pred_region
    _
  $region17: #{img_discriminator_forward.21} parent=0 // pred_fallthru
    _
  // Predicated region
  $region18: #{img_discriminator_forward.21} parent=0 // pred_check
    _
  $region19: #{img_discriminator_forward.21} parent=0 // pred_check_branch
    %989 = sbr.rel (0) target = $region21
  $region20: #{img_discriminator_forward.21} parent=0 // pred_region
    _
  $region21: #{img_discriminator_forward.21} parent=0 // pred_fallthru
    _
  // Predicated region
  $region22: #{img_discriminator_forward.21} parent=0 // pred_check
    _
  $region23: #{img_discriminator_forward.21} parent=0 // pred_check_branch
    %991 = sbr.rel (0) target = $region25
  $region24: #{img_discriminator_forward.21} parent=0 // pred_region
    _
  $region25: #{img_discriminator_forward.21} parent=0 // pred_fallthru
    _
  // Predicated region
  $region26: #{img_discriminator_forward.21} parent=0 // pred_check
    _
  $region27: #{img_discriminator_forward.21} parent=0 // pred_check_branch
    %993 = sbr.rel (0) target = $region29
  $region28: #{img_discriminator_forward.21} parent=0 // pred_region
    _
  $region29: #{img_discriminator_forward.21} parent=0 // pred_fallthru
    _
  // Predicated region
  $region30: #{img_discriminator_forward.21} parent=0 // pred_check
    _
  $region31: #{img_discriminator_forward.21} parent=0 // pred_check_branch
    %995 = sbr.rel (0) target = $region33
  $region32: #{img_discriminator_forward.21} parent=0 // pred_region
    _
  $region33: #{img_discriminator_forward.21} parent=0 // pred_fallthru
    _
  // Predicated region
  $region34: #{img_discriminator_forward.21} parent=0 // pred_check
    _
  $region35: #{img_discriminator_forward.21} parent=0 // pred_check_branch
    %997 = sbr.rel (0) target = $region37
  $region36: #{img_discriminator_forward.21} parent=0 // pred_region
    _
  $region37: #{img_discriminator_forward.21} parent=0 // pred_fallthru
    _

// kernel: img_discriminator_forward.19
$region0: #{img_discriminator_forward.19}
  #allocation0 [shape = 'u32[]', space=smem, size = 0x4, offset = 0x4, fixed_abs, tag = 'smem constant byte address 0x4 - core index']
  #allocation1 [shape = 'u32[144,128]{1,0:T(1,128)}', space=vmem, size = 0x12000, scoped, tag = 'internal scratch']
  %s0 = inlined_call_operand.vmem [shape: bf16[32,2048], index: 0, kind: input, shape index: {}]
  %s1 = inlined_call_operand.vmem [shape: bf16[2048,128], index: 1, kind: input, shape index: {}]
  %s2 = inlined_call_operand.vmem [shape: f32[32,128], index: 2, kind: output, shape index: {0}]
  %s3 = inlined_call_operand.vmem [shape: f32[1,128], index: 3, kind: output, shape index: {1}]
  %s4 = inlined_call_operand.vmem [shape: f32[1,128], index: 4, kind: output, shape index: {2}]
  %5 = xla_tuple %s2, %s3, %s4
  %s6 = sld [smem:[#allocation0]]
  $region38: #{img_discriminator_forward.19} parent=0
    _
  %s8 = ssub.s32 1, %s6
  %s9 = scalar_select 0, %s8, %s6
  // Predicated region
  $region2: #{img_discriminator_forward.19} parent=0 // pred_check
    _
  $region3: #{img_discriminator_forward.19} parent=0 // pred_check_branch
    %11 = sbr.rel (0) target = $region5
  $region4: #{img_discriminator_forward.19} parent=0 // pred_region
    _
  $region5: #{img_discriminator_forward.19} parent=0 // pred_fallthru
    _
  // Predicated region
  $region6: #{img_discriminator_forward.19} parent=0 // pred_check
    _
  $region7: #{img_discriminator_forward.19} parent=0 // pred_check_branch
    %13 = sbr.rel (0) target = $region9
  $region8: #{img_discriminator_forward.19} parent=0 // pred_region
    _
  $region9: #{img_discriminator_forward.19} parent=0 // pred_fallthru
    _
  %p15 = scmp.eq.s32.totalorder 0, 0
  // Predicated region
  $region10: #{img_discriminator_forward.19} parent=0 // pred_check
    %p16 = pneg %p15
  $region11: #{img_discriminator_forward.19} parent=0 // pred_check_branch
    %18 = sbr.rel (%p16) target = $region13
  $region12: #{img_discriminator_forward.19} parent=0 // pred_region
    %19 = vst [vmem:[%s3] sm:$0x1] 0.0
    %20 = vst [vmem:[%s4] sm:$0x1] 0.0
  $region13: #{img_discriminator_forward.19} parent=0 // pred_fallthru
    _
  %v21 = vld [vmem:[%s0] sm:$0xff]
  %v22 = vld [vmem:[%s0 + $0x8] sm:$0xff]
  %v23 = vld [vmem:[%s0 + $0x10] sm:$0xff]
  %v24 = vld [vmem:[%s0 + $0x18] sm:$0xff]
  %v25 = vld [vmem:[%s0 + $0x20] sm:$0xff]
  %v26 = vld [vmem:[%s0 + $0x28] sm:$0xff]
  %v27 = vld [vmem:[%s0 + $0x30] sm:$0xff]
  %v28 = vld [vmem:[%s0 + $0x38] sm:$0xff]
  %v29 = vld [vmem:[%s0 + $0x40] sm:$0xff]
  %v30 = vld [vmem:[%s0 + $0x48] sm:$0xff]
  %v31 = vld [vmem:[%s0 + $0x50] sm:$0xff]
  %v32 = vld [vmem:[%s0 + $0x58] sm:$0xff]
  %v33 = vld [vmem:[%s0 + $0x60] sm:$0xff]
  %v34 = vld [vmem:[%s0 + $0x68] sm:$0xff]
  %v35 = vld [vmem:[%s0 + $0x70] sm:$0xff]
  %v36 = vld [vmem:[%s0 + $0x78] sm:$0xff]
  %v37 = vld [vmem:[%s0 + $0x80] sm:$0xff]
  %v38 = vld [vmem:[%s0 + $0x88] sm:$0xff]
  %v39 = vld [vmem:[%s0 + $0x90] sm:$0xff]
  %v40 = vld [vmem:[%s0 + $0x98] sm:$0xff]
  %v41 = vld [vmem:[%s0 + $0xa0] sm:$0xff]
  %v42 = vld [vmem:[%s0 + $0xa8] sm:$0xff]
  %v43 = vld [vmem:[%s0 + $0xb0] sm:$0xff]
  %v44 = vld [vmem:[%s0 + $0xb8] sm:$0xff]
  %v45 = vld [vmem:[%s0 + $0xc0] sm:$0xff]
  %v46 = vld [vmem:[%s0 + $0xc8] sm:$0xff]
  %v47 = vld [vmem:[%s0 + $0xd0] sm:$0xff]
  %v48 = vld [vmem:[%s0 + $0xd8] sm:$0xff]
  %v49 = vld [vmem:[%s0 + $0xe0] sm:$0xff]
  %v50 = vld [vmem:[%s0 + $0xe8] sm:$0xff]
  %v51 = vld [vmem:[%s0 + $0xf0] sm:$0xff]
  %v52 = vld [vmem:[%s0 + $0xf8] sm:$0xff]
  %v53 = vld [vmem:[%s1] sm:$0xf]
  %v54 = vld [vmem:[%s1 + $0x4] sm:$0xf]
  %v55 = vld [vmem:[%s1 + $0x8] sm:$0xf]
  %v56 = vld [vmem:[%s1 + $0xc] sm:$0xf]
  %v57 = vld [vmem:[%s1 + $0x10] sm:$0xf]
  %v58 = vld [vmem:[%s1 + $0x14] sm:$0xf]
  %v59 = vld [vmem:[%s1 + $0x18] sm:$0xf]
  %v60 = vld [vmem:[%s1 + $0x1c] sm:$0xf]
  %v61 = vld [vmem:[%s1 + $0x20] sm:$0xf]
  %v62 = vld [vmem:[%s1 + $0x24] sm:$0xf]
  %v63 = vld [vmem:[%s1 + $0x28] sm:$0xf]
  %v64 = vld [vmem:[%s1 + $0x2c] sm:$0xf]
  %v65 = vld [vmem:[%s1 + $0x30] sm:$0xf]
  %v66 = vld [vmem:[%s1 + $0x34] sm:$0xf]
  %v67 = vld [vmem:[%s1 + $0x38] sm:$0xf]
  %v68 = vld [vmem:[%s1 + $0x3c] sm:$0xf]
  %v69 = vld [vmem:[%s1 + $0x40] sm:$0xf]
  %v70 = vld [vmem:[%s1 + $0x44] sm:$0xf]
  %v71 = vld [vmem:[%s1 + $0x48] sm:$0xf]
  %v72 = vld [vmem:[%s1 + $0x4c] sm:$0xf]
  %v73 = vld [vmem:[%s1 + $0x50] sm:$0xf]
  %v74 = vld [vmem:[%s1 + $0x54] sm:$0xf]
  %v75 = vld [vmem:[%s1 + $0x58] sm:$0xf]
  %v76 = vld [vmem:[%s1 + $0x5c] sm:$0xf]
  %v77 = vld [vmem:[%s1 + $0x60] sm:$0xf]
  %v78 = vld [vmem:[%s1 + $0x64] sm:$0xf]
  %v79 = vld [vmem:[%s1 + $0x68] sm:$0xf]
  %v80 = vld [vmem:[%s1 + $0x6c] sm:$0xf]
  %v81 = vld [vmem:[%s1 + $0x70] sm:$0xf]
  %v82 = vld [vmem:[%s1 + $0x74] sm:$0xf]
  %v83 = vld [vmem:[%s1 + $0x78] sm:$0xf]
  %v84 = vld [vmem:[%s1 + $0x7c] sm:$0xf]
  %v85 = vld [vmem:[%s1 + $0x80] sm:$0xf]
  %v86 = vld [vmem:[%s1 + $0x84] sm:$0xf]
  %v87 = vld [vmem:[%s1 + $0x88] sm:$0xf]
  %v88 = vld [vmem:[%s1 + $0x8c] sm:$0xf]
  %v89 = vld [vmem:[%s1 + $0x90] sm:$0xf]
  %v90 = vld [vmem:[%s1 + $0x94] sm:$0xf]
  %v91 = vld [vmem:[%s1 + $0x98] sm:$0xf]
  %v92 = vld [vmem:[%s1 + $0x9c] sm:$0xf]
  %v93 = vld [vmem:[%s1 + $0xa0] sm:$0xf]
  %v94 = vld [vmem:[%s1 + $0xa4] sm:$0xf]
  %v95 = vld [vmem:[%s1 + $0xa8] sm:$0xf]
  %v96 = vld [vmem:[%s1 + $0xac] sm:$0xf]
  %v97 = vld [vmem:[%s1 + $0xb0] sm:$0xf]
  %v98 = vld [vmem:[%s1 + $0xb4] sm:$0xf]
  %v99 = vld [vmem:[%s1 + $0xb8] sm:$0xf]
  %v100 = vld [vmem:[%s1 + $0xbc] sm:$0xf]
  %v101 = vld [vmem:[%s1 + $0xc0] sm:$0xf]
  %v102 = vld [vmem:[%s1 + $0xc4] sm:$0xf]
  %v103 = vld [vmem:[%s1 + $0xc8] sm:$0xf]
  %v104 = vld [vmem:[%s1 + $0xcc] sm:$0xf]
  %v105 = vld [vmem:[%s1 + $0xd0] sm:$0xf]
  %v106 = vld [vmem:[%s1 + $0xd4] sm:$0xf]
  %v107 = vld [vmem:[%s1 + $0xd8] sm:$0xf]
  %v108 = vld [vmem:[%s1 + $0xdc] sm:$0xf]
  %v109 = vld [vmem:[%s1 + $0xe0] sm:$0xf]
  %v110 = vld [vmem:[%s1 + $0xe4] sm:$0xf]
  %v111 = vld [vmem:[%s1 + $0xe8] sm:$0xf]
  %v112 = vld [vmem:[%s1 + $0xec] sm:$0xf]
  %v113 = vld [vmem:[%s1 + $0xf0] sm:$0xf]
  %v114 = vld [vmem:[%s1 + $0xf4] sm:$0xf]
  %v115 = vld [vmem:[%s1 + $0xf8] sm:$0xf]
  %v116 = vld [vmem:[%s1 + $0xfc] sm:$0xf]
  %v117 = vld [vmem:[%s1 + $0x100] sm:$0xf]
  %v118 = vld [vmem:[%s1 + $0x104] sm:$0xf]
  %v119 = vld [vmem:[%s1 + $0x108] sm:$0xf]
  %v120 = vld [vmem:[%s1 + $0x10c] sm:$0xf]
  %v121 = vld [vmem:[%s1 + $0x110] sm:$0xf]
  %v122 = vld [vmem:[%s1 + $0x114] sm:$0xf]
  %v123 = vld [vmem:[%s1 + $0x118] sm:$0xf]
  %v124 = vld [vmem:[%s1 + $0x11c] sm:$0xf]
  %v125 = vld [vmem:[%s1 + $0x120] sm:$0xf]
  %v126 = vld [vmem:[%s1 + $0x124] sm:$0xf]
  %v127 = vld [vmem:[%s1 + $0x128] sm:$0xf]
  %v128 = vld [vmem:[%s1 + $0x12c] sm:$0xf]
  %v129 = vld [vmem:[%s1 + $0x130] sm:$0xf]
  %v130 = vld [vmem:[%s1 + $0x134] sm:$0xf]
  %v131 = vld [vmem:[%s1 + $0x138] sm:$0xf]
  %v132 = vld [vmem:[%s1 + $0x13c] sm:$0xf]
  %v133 = vld [vmem:[%s1 + $0x140] sm:$0xf]
  %v134 = vld [vmem:[%s1 + $0x144] sm:$0xf]
  %v135 = vld [vmem:[%s1 + $0x148] sm:$0xf]
  %v136 = vld [vmem:[%s1 + $0x14c] sm:$0xf]
  %v137 = vld [vmem:[%s1 + $0x150] sm:$0xf]
  %v138 = vld [vmem:[%s1 + $0x154] sm:$0xf]
  %v139 = vld [vmem:[%s1 + $0x158] sm:$0xf]
  %v140 = vld [vmem:[%s1 + $0x15c] sm:$0xf]
  %v141 = vld [vmem:[%s1 + $0x160] sm:$0xf]
  %v142 = vld [vmem:[%s1 + $0x164] sm:$0xf]
  %v143 = vld [vmem:[%s1 + $0x168] sm:$0xf]
  %v144 = vld [vmem:[%s1 + $0x16c] sm:$0xf]
  %v145 = vld [vmem:[%s1 + $0x170] sm:$0xf]
  %v146 = vld [vmem:[%s1 + $0x174] sm:$0xf]
  %v147 = vld [vmem:[%s1 + $0x178] sm:$0xf]
  %v148 = vld [vmem:[%s1 + $0x17c] sm:$0xf]
  %v149 = vld [vmem:[%s1 + $0x180] sm:$0xf]
  %v150 = vld [vmem:[%s1 + $0x184] sm:$0xf]
  %v151 = vld [vmem:[%s1 + $0x188] sm:$0xf]
  %v152 = vld [vmem:[%s1 + $0x18c] sm:$0xf]
  %v153 = vld [vmem:[%s1 + $0x190] sm:$0xf]
  %v154 = vld [vmem:[%s1 + $0x194] sm:$0xf]
  %v155 = vld [vmem:[%s1 + $0x198] sm:$0xf]
  %v156 = vld [vmem:[%s1 + $0x19c] sm:$0xf]
  %v157 = vld [vmem:[%s1 + $0x1a0] sm:$0xf]
  %v158 = vld [vmem:[%s1 + $0x1a4] sm:$0xf]
  %v159 = vld [vmem:[%s1 + $0x1a8] sm:$0xf]
  %v160 = vld [vmem:[%s1 + $0x1ac] sm:$0xf]
  %v161 = vld [vmem:[%s1 + $0x1b0] sm:$0xf]
  %v162 = vld [vmem:[%s1 + $0x1b4] sm:$0xf]
  %v163 = vld [vmem:[%s1 + $0x1b8] sm:$0xf]
  %v164 = vld [vmem:[%s1 + $0x1bc] sm:$0xf]
  %v165 = vld [vmem:[%s1 + $0x1c0] sm:$0xf]
  %v166 = vld [vmem:[%s1 + $0x1c4] sm:$0xf]
  %v167 = vld [vmem:[%s1 + $0x1c8] sm:$0xf]
  %v168 = vld [vmem:[%s1 + $0x1cc] sm:$0xf]
  %v169 = vld [vmem:[%s1 + $0x1d0] sm:$0xf]
  %v170 = vld [vmem:[%s1 + $0x1d4] sm:$0xf]
  %v171 = vld [vmem:[%s1 + $0x1d8] sm:$0xf]
  %v172 = vld [vmem:[%s1 + $0x1dc] sm:$0xf]
  %v173 = vld [vmem:[%s1 + $0x1e0] sm:$0xf]
  %v174 = vld [vmem:[%s1 + $0x1e4] sm:$0xf]
  %v175 = vld [vmem:[%s1 + $0x1e8] sm:$0xf]
  %v176 = vld [vmem:[%s1 + $0x1ec] sm:$0xf]
  %v177 = vld [vmem:[%s1 + $0x1f0] sm:$0xf]
  %v178 = vld [vmem:[%s1 + $0x1f4] sm:$0xf]
  %v179 = vld [vmem:[%s1 + $0x1f8] sm:$0xf]
  %v180 = vld [vmem:[%s1 + $0x1fc] sm:$0xf]
  %v181 = vld [vmem:[%s1 + $0x200] sm:$0xf]
  %v182 = vld [vmem:[%s1 + $0x204] sm:$0xf]
  %v183 = vld [vmem:[%s1 + $0x208] sm:$0xf]
  %v184 = vld [vmem:[%s1 + $0x20c] sm:$0xf]
  %v185 = vld [vmem:[%s1 + $0x210] sm:$0xf]
  %v186 = vld [vmem:[%s1 + $0x214] sm:$0xf]
  %v187 = vld [vmem:[%s1 + $0x218] sm:$0xf]
  %v188 = vld [vmem:[%s1 + $0x21c] sm:$0xf]
  %v189 = vld [vmem:[%s1 + $0x220] sm:$0xf]
  %v190 = vld [vmem:[%s1 + $0x224] sm:$0xf]
  %v191 = vld [vmem:[%s1 + $0x228] sm:$0xf]
  %v192 = vld [vmem:[%s1 + $0x22c] sm:$0xf]
  %v193 = vld [vmem:[%s1 + $0x230] sm:$0xf]
  %v194 = vld [vmem:[%s1 + $0x234] sm:$0xf]
  %v195 = vld [vmem:[%s1 + $0x238] sm:$0xf]
  %v196 = vld [vmem:[%s1 + $0x23c] sm:$0xf]
  %v197 = vld [vmem:[%s1 + $0x240] sm:$0xf]
  %v198 = vld [vmem:[%s1 + $0x244] sm:$0xf]
  %v199 = vld [vmem:[%s1 + $0x248] sm:$0xf]
  %v200 = vld [vmem:[%s1 + $0x24c] sm:$0xf]
  %v201 = vld [vmem:[%s1 + $0x250] sm:$0xf]
  %v202 = vld [vmem:[%s1 + $0x254] sm:$0xf]
  %v203 = vld [vmem:[%s1 + $0x258] sm:$0xf]
  %v204 = vld [vmem:[%s1 + $0x25c] sm:$0xf]
  %v205 = vld [vmem:[%s1 + $0x260] sm:$0xf]
  %v206 = vld [vmem:[%s1 + $0x264] sm:$0xf]
  %v207 = vld [vmem:[%s1 + $0x268] sm:$0xf]
  %v208 = vld [vmem:[%s1 + $0x26c] sm:$0xf]
  %v209 = vld [vmem:[%s1 + $0x270] sm:$0xf]
  %v210 = vld [vmem:[%s1 + $0x274] sm:$0xf]
  %v211 = vld [vmem:[%s1 + $0x278] sm:$0xf]
  %v212 = vld [vmem:[%s1 + $0x27c] sm:$0xf]
  %v213 = vld [vmem:[%s1 + $0x280] sm:$0xf]
  %v214 = vld [vmem:[%s1 + $0x284] sm:$0xf]
  %v215 = vld [vmem:[%s1 + $0x288] sm:$0xf]
  %v216 = vld [vmem:[%s1 + $0x28c] sm:$0xf]
  %v217 = vld [vmem:[%s1 + $0x290] sm:$0xf]
  %v218 = vld [vmem:[%s1 + $0x294] sm:$0xf]
  %v219 = vld [vmem:[%s1 + $0x298] sm:$0xf]
  %v220 = vld [vmem:[%s1 + $0x29c] sm:$0xf]
  %v221 = vld [vmem:[%s1 + $0x2a0] sm:$0xf]
  %v222 = vld [vmem:[%s1 + $0x2a4] sm:$0xf]
  %v223 = vld [vmem:[%s1 + $0x2a8] sm:$0xf]
  %v224 = vld [vmem:[%s1 + $0x2ac] sm:$0xf]
  %v225 = vld [vmem:[%s1 + $0x2b0] sm:$0xf]
  %v226 = vld [vmem:[%s1 + $0x2b4] sm:$0xf]
  %v227 = vld [vmem:[%s1 + $0x2b8] sm:$0xf]
  %v228 = vld [vmem:[%s1 + $0x2bc] sm:$0xf]
  %v229 = vld [vmem:[%s1 + $0x2c0] sm:$0xf]
  %v230 = vld [vmem:[%s1 + $0x2c4] sm:$0xf]
  %v231 = vld [vmem:[%s1 + $0x2c8] sm:$0xf]
  %v232 = vld [vmem:[%s1 + $0x2cc] sm:$0xf]
  %v233 = vld [vmem:[%s1 + $0x2d0] sm:$0xf]
  %v234 = vld [vmem:[%s1 + $0x2d4] sm:$0xf]
  %v235 = vld [vmem:[%s1 + $0x2d8] sm:$0xf]
  %v236 = vld [vmem:[%s1 + $0x2dc] sm:$0xf]
  %v237 = vld [vmem:[%s1 + $0x2e0] sm:$0xf]
  %v238 = vld [vmem:[%s1 + $0x2e4] sm:$0xf]
  %v239 = vld [vmem:[%s1 + $0x2e8] sm:$0xf]
  %v240 = vld [vmem:[%s1 + $0x2ec] sm:$0xf]
  %v241 = vld [vmem:[%s1 + $0x2f0] sm:$0xf]
  %v242 = vld [vmem:[%s1 + $0x2f4] sm:$0xf]
  %v243 = vld [vmem:[%s1 + $0x2f8] sm:$0xf]
  %v244 = vld [vmem:[%s1 + $0x2fc] sm:$0xf]
  %v245 = vld [vmem:[%s1 + $0x300] sm:$0xf]
  %v246 = vld [vmem:[%s1 + $0x304] sm:$0xf]
  %v247 = vld [vmem:[%s1 + $0x308] sm:$0xf]
  %v248 = vld [vmem:[%s1 + $0x30c] sm:$0xf]
  %v249 = vld [vmem:[%s1 + $0x310] sm:$0xf]
  %v250 = vld [vmem:[%s1 + $0x314] sm:$0xf]
  %v251 = vld [vmem:[%s1 + $0x318] sm:$0xf]
  %v252 = vld [vmem:[%s1 + $0x31c] sm:$0xf]
  %v253 = vld [vmem:[%s1 + $0x320] sm:$0xf]
  %v254 = vld [vmem:[%s1 + $0x324] sm:$0xf]
  %v255 = vld [vmem:[%s1 + $0x328] sm:$0xf]
  %v256 = vld [vmem:[%s1 + $0x32c] sm:$0xf]
  %v257 = vld [vmem:[%s1 + $0x330] sm:$0xf]
  %v258 = vld [vmem:[%s1 + $0x334] sm:$0xf]
  %v259 = vld [vmem:[%s1 + $0x338] sm:$0xf]
  %v260 = vld [vmem:[%s1 + $0x33c] sm:$0xf]
  %v261 = vld [vmem:[%s1 + $0x340] sm:$0xf]
  %v262 = vld [vmem:[%s1 + $0x344] sm:$0xf]
  %v263 = vld [vmem:[%s1 + $0x348] sm:$0xf]
  %v264 = vld [vmem:[%s1 + $0x34c] sm:$0xf]
  %v265 = vld [vmem:[%s1 + $0x350] sm:$0xf]
  %v266 = vld [vmem:[%s1 + $0x354] sm:$0xf]
  %v267 = vld [vmem:[%s1 + $0x358] sm:$0xf]
  %v268 = vld [vmem:[%s1 + $0x35c] sm:$0xf]
  %v269 = vld [vmem:[%s1 + $0x360] sm:$0xf]
  %v270 = vld [vmem:[%s1 + $0x364] sm:$0xf]
  %v271 = vld [vmem:[%s1 + $0x368] sm:$0xf]
  %v272 = vld [vmem:[%s1 + $0x36c] sm:$0xf]
  %v273 = vld [vmem:[%s1 + $0x370] sm:$0xf]
  %v274 = vld [vmem:[%s1 + $0x374] sm:$0xf]
  %v275 = vld [vmem:[%s1 + $0x378] sm:$0xf]
  %v276 = vld [vmem:[%s1 + $0x37c] sm:$0xf]
  %v277 = vld [vmem:[%s1 + $0x380] sm:$0xf]
  %v278 = vld [vmem:[%s1 + $0x384] sm:$0xf]
  %v279 = vld [vmem:[%s1 + $0x388] sm:$0xf]
  %v280 = vld [vmem:[%s1 + $0x38c] sm:$0xf]
  %v281 = vld [vmem:[%s1 + $0x390] sm:$0xf]
  %v282 = vld [vmem:[%s1 + $0x394] sm:$0xf]
  %v283 = vld [vmem:[%s1 + $0x398] sm:$0xf]
  %v284 = vld [vmem:[%s1 + $0x39c] sm:$0xf]
  %v285 = vld [vmem:[%s1 + $0x3a0] sm:$0xf]
  %v286 = vld [vmem:[%s1 + $0x3a4] sm:$0xf]
  %v287 = vld [vmem:[%s1 + $0x3a8] sm:$0xf]
  %v288 = vld [vmem:[%s1 + $0x3ac] sm:$0xf]
  %v289 = vld [vmem:[%s1 + $0x3b0] sm:$0xf]
  %v290 = vld [vmem:[%s1 + $0x3b4] sm:$0xf]
  %v291 = vld [vmem:[%s1 + $0x3b8] sm:$0xf]
  %v292 = vld [vmem:[%s1 + $0x3bc] sm:$0xf]
  %v293 = vld [vmem:[%s1 + $0x3c0] sm:$0xf]
  %v294 = vld [vmem:[%s1 + $0x3c4] sm:$0xf]
  %v295 = vld [vmem:[%s1 + $0x3c8] sm:$0xf]
  %v296 = vld [vmem:[%s1 + $0x3cc] sm:$0xf]
  %v297 = vld [vmem:[%s1 + $0x3d0] sm:$0xf]
  %v298 = vld [vmem:[%s1 + $0x3d4] sm:$0xf]
  %v299 = vld [vmem:[%s1 + $0x3d8] sm:$0xf]
  %v300 = vld [vmem:[%s1 + $0x3dc] sm:$0xf]
  %v301 = vld [vmem:[%s1 + $0x3e0] sm:$0xf]
  %v302 = vld [vmem:[%s1 + $0x3e4] sm:$0xf]
  %v303 = vld [vmem:[%s1 + $0x3e8] sm:$0xf]
  %v304 = vld [vmem:[%s1 + $0x3ec] sm:$0xf]
  %v305 = vld [vmem:[%s1 + $0x3f0] sm:$0xf]
  %v306 = vld [vmem:[%s1 + $0x3f4] sm:$0xf]
  %v307 = vld [vmem:[%s1 + $0x3f8] sm:$0xf]
  %v308 = vld [vmem:[%s1 + $0x3fc] sm:$0xf]
  %v341 = vunpack.c.l.b16 %v21
  %v342 = vunpack.c.h.b16 %v21
  %v343 = vunpack.c.l.b16 %v22
  %v344 = vunpack.c.h.b16 %v22
  %v345 = vunpack.c.l.b16 %v23
  %v346 = vunpack.c.h.b16 %v23
  %v347 = vunpack.c.l.b16 %v24
  %v348 = vunpack.c.h.b16 %v24
  %v349 = vunpack.c.l.b16 %v25
  %v350 = vunpack.c.h.b16 %v25
  %v351 = vunpack.c.l.b16 %v26
  %v352 = vunpack.c.h.b16 %v26
  %v353 = vunpack.c.l.b16 %v27
  %v354 = vunpack.c.h.b16 %v27
  %v355 = vunpack.c.l.b16 %v28
  %v356 = vunpack.c.h.b16 %v28
  %v357 = vunpack.c.l.b16 %v29
  %v358 = vunpack.c.h.b16 %v29
  %v359 = vunpack.c.l.b16 %v30
  %v360 = vunpack.c.h.b16 %v30
  %v361 = vunpack.c.l.b16 %v31
  %v362 = vunpack.c.h.b16 %v31
  %v363 = vunpack.c.l.b16 %v32
  %v364 = vunpack.c.h.b16 %v32
  %v365 = vunpack.c.l.b16 %v33
  %v366 = vunpack.c.h.b16 %v33
  %v367 = vunpack.c.l.b16 %v34
  %v368 = vunpack.c.h.b16 %v34
  %v369 = vunpack.c.l.b16 %v35
  %v370 = vunpack.c.h.b16 %v35
  %v371 = vunpack.c.l.b16 %v36
  %v372 = vunpack.c.h.b16 %v36
  %v373 = vunpack.c.l.b16 %v37
  %v374 = vunpack.c.h.b16 %v37
  %v375 = vunpack.c.l.b16 %v38
  %v376 = vunpack.c.h.b16 %v38
  %v377 = vunpack.c.l.b16 %v39
  %v378 = vunpack.c.h.b16 %v39
  %v379 = vunpack.c.l.b16 %v40
  %v380 = vunpack.c.h.b16 %v40
  %v381 = vunpack.c.l.b16 %v41
  %v382 = vunpack.c.h.b16 %v41
  %v383 = vunpack.c.l.b16 %v42
  %v384 = vunpack.c.h.b16 %v42
  %v385 = vunpack.c.l.b16 %v43
  %v386 = vunpack.c.h.b16 %v43
  %v387 = vunpack.c.l.b16 %v44
  %v388 = vunpack.c.h.b16 %v44
  %v389 = vunpack.c.l.b16 %v45
  %v390 = vunpack.c.h.b16 %v45
  %v391 = vunpack.c.l.b16 %v46
  %v392 = vunpack.c.h.b16 %v46
  %v393 = vunpack.c.l.b16 %v47
  %v394 = vunpack.c.h.b16 %v47
  %v395 = vunpack.c.l.b16 %v48
  %v396 = vunpack.c.h.b16 %v48
  %v397 = vunpack.c.l.b16 %v49
  %v398 = vunpack.c.h.b16 %v49
  %v399 = vunpack.c.l.b16 %v50
  %v400 = vunpack.c.h.b16 %v50
  %v401 = vunpack.c.l.b16 %v51
  %v402 = vunpack.c.h.b16 %v51
  %v403 = vunpack.c.l.b16 %v52
  %v404 = vunpack.c.h.b16 %v52
  %v405 = vpack.c.b16 %v357, %v341
  %v406 = vpack.c.b16 %v358, %v342
  %v407 = vpack.c.b16 %v359, %v343
  %v408 = vpack.c.b16 %v360, %v344
  %v409 = vpack.c.b16 %v361, %v345
  %v410 = vpack.c.b16 %v362, %v346
  %v411 = vpack.c.b16 %v363, %v347
  %v412 = vpack.c.b16 %v364, %v348
  %v413 = vpack.c.b16 %v365, %v349
  %v414 = vpack.c.b16 %v366, %v350
  %v415 = vpack.c.b16 %v367, %v351
  %v416 = vpack.c.b16 %v368, %v352
  %v417 = vpack.c.b16 %v369, %v353
  %v418 = vpack.c.b16 %v370, %v354
  %v419 = vpack.c.b16 %v371, %v355
  %v420 = vpack.c.b16 %v372, %v356
  %v421 = vpack.c.b16 %v389, %v373
  %v422 = vpack.c.b16 %v390, %v374
  %v423 = vpack.c.b16 %v391, %v375
  %v424 = vpack.c.b16 %v392, %v376
  %v425 = vpack.c.b16 %v393, %v377
  %v426 = vpack.c.b16 %v394, %v378
  %v427 = vpack.c.b16 %v395, %v379
  %v428 = vpack.c.b16 %v396, %v380
  %v429 = vpack.c.b16 %v397, %v381
  %v430 = vpack.c.b16 %v398, %v382
  %v431 = vpack.c.b16 %v399, %v383
  %v432 = vpack.c.b16 %v400, %v384
  %v433 = vpack.c.b16 %v401, %v385
  %v434 = vpack.c.b16 %v402, %v386
  %v435 = vpack.c.b16 %v403, %v387
  %v436 = vpack.c.b16 %v404, %v388
  %v725 = vunpack.c.l.b16 %v53
  %v726 = vunpack.c.l.b16 %v54
  %v727 = vunpack.c.l.b16 %v55
  %v728 = vunpack.c.l.b16 %v56
  %v729 = vunpack.c.l.b16 %v57
  %v730 = vunpack.c.l.b16 %v58
  %v731 = vunpack.c.l.b16 %v59
  %v732 = vunpack.c.l.b16 %v60
  %v733 = vunpack.c.l.b16 %v61
  %v734 = vunpack.c.l.b16 %v62
  %v735 = vunpack.c.l.b16 %v63
  %v736 = vunpack.c.l.b16 %v64
  %v737 = vunpack.c.l.b16 %v65
  %v738 = vunpack.c.l.b16 %v66
  %v739 = vunpack.c.l.b16 %v67
  %v740 = vunpack.c.l.b16 %v68
  %v741 = vunpack.c.l.b16 %v69
  %v742 = vunpack.c.l.b16 %v70
  %v743 = vunpack.c.l.b16 %v71
  %v744 = vunpack.c.l.b16 %v72
  %v745 = vunpack.c.l.b16 %v73
  %v746 = vunpack.c.l.b16 %v74
  %v747 = vunpack.c.l.b16 %v75
  %v748 = vunpack.c.l.b16 %v76
  %v749 = vunpack.c.l.b16 %v77
  %v750 = vunpack.c.l.b16 %v78
  %v751 = vunpack.c.l.b16 %v79
  %v752 = vunpack.c.l.b16 %v80
  %v753 = vunpack.c.l.b16 %v81
  %v754 = vunpack.c.l.b16 %v82
  %v755 = vunpack.c.l.b16 %v83
  %v756 = vunpack.c.l.b16 %v84
  %v757 = vunpack.c.l.b16 %v85
  %v758 = vunpack.c.l.b16 %v86
  %v759 = vunpack.c.l.b16 %v87
  %v760 = vunpack.c.l.b16 %v88
  %v761 = vunpack.c.l.b16 %v89
  %v762 = vunpack.c.l.b16 %v90
  %v763 = vunpack.c.l.b16 %v91
  %v764 = vunpack.c.l.b16 %v92
  %v765 = vunpack.c.l.b16 %v93
  %v766 = vunpack.c.l.b16 %v94
  %v767 = vunpack.c.l.b16 %v95
  %v768 = vunpack.c.l.b16 %v96
  %v769 = vunpack.c.l.b16 %v97
  %v770 = vunpack.c.l.b16 %v98
  %v771 = vunpack.c.l.b16 %v99
  %v772 = vunpack.c.l.b16 %v100
  %v773 = vunpack.c.l.b16 %v101
  %v774 = vunpack.c.l.b16 %v102
  %v775 = vunpack.c.l.b16 %v103
  %v776 = vunpack.c.l.b16 %v104
  %v777 = vunpack.c.l.b16 %v105
  %v778 = vunpack.c.l.b16 %v106
  %v779 = vunpack.c.l.b16 %v107
  %v780 = vunpack.c.l.b16 %v108
  %v781 = vunpack.c.l.b16 %v109
  %v782 = vunpack.c.l.b16 %v110
  %v783 = vunpack.c.l.b16 %v111
  %v784 = vunpack.c.l.b16 %v112
  %v785 = vunpack.c.l.b16 %v113
  %v786 = vunpack.c.l.b16 %v114
  %v787 = vunpack.c.l.b16 %v115
  %v788 = vunpack.c.l.b16 %v116
  %v789 = vunpack.c.l.b16 %v117
  %v790 = vunpack.c.l.b16 %v118
  %v791 = vunpack.c.l.b16 %v119
  %v792 = vunpack.c.l.b16 %v120
  %v793 = vunpack.c.l.b16 %v121
  %v794 = vunpack.c.l.b16 %v122
  %v795 = vunpack.c.l.b16 %v123
  %v796 = vunpack.c.l.b16 %v124
  %v797 = vunpack.c.l.b16 %v125
  %v798 = vunpack.c.l.b16 %v126
  %v799 = vunpack.c.l.b16 %v127
  %v800 = vunpack.c.l.b16 %v128
  %v801 = vunpack.c.l.b16 %v129
  %v802 = vunpack.c.l.b16 %v130
  %v803 = vunpack.c.l.b16 %v131
  %v804 = vunpack.c.l.b16 %v132
  %v805 = vunpack.c.l.b16 %v133
  %v806 = vunpack.c.l.b16 %v134
  %v807 = vunpack.c.l.b16 %v135
  %v808 = vunpack.c.l.b16 %v136
  %v809 = vunpack.c.l.b16 %v137
  %v810 = vunpack.c.l.b16 %v138
  %v811 = vunpack.c.l.b16 %v139
  %v812 = vunpack.c.l.b16 %v140
  %v813 = vunpack.c.l.b16 %v141
  %v814 = vunpack.c.l.b16 %v142
  %v815 = vunpack.c.l.b16 %v143
  %v816 = vunpack.c.l.b16 %v144
  %v817 = vunpack.c.l.b16 %v145
  %v818 = vunpack.c.l.b16 %v146
  %v819 = vunpack.c.l.b16 %v147
  %v820 = vunpack.c.l.b16 %v148
  %v821 = vunpack.c.l.b16 %v149
  %v822 = vunpack.c.l.b16 %v150
  %v823 = vunpack.c.l.b16 %v151
  %v824 = vunpack.c.l.b16 %v152
  %v825 = vunpack.c.l.b16 %v153
  %v826 = vunpack.c.l.b16 %v154
  %v827 = vunpack.c.l.b16 %v155
  %v828 = vunpack.c.l.b16 %v156
  %v829 = vunpack.c.l.b16 %v157
  %v830 = vunpack.c.l.b16 %v158
  %v831 = vunpack.c.l.b16 %v159
  %v832 = vunpack.c.l.b16 %v160
  %v833 = vunpack.c.l.b16 %v161
  %v834 = vunpack.c.l.b16 %v162
  %v835 = vunpack.c.l.b16 %v163
  %v836 = vunpack.c.l.b16 %v164
  %v837 = vunpack.c.l.b16 %v165
  %v838 = vunpack.c.l.b16 %v166
  %v839 = vunpack.c.l.b16 %v167
  %v840 = vunpack.c.l.b16 %v168
  %v841 = vunpack.c.l.b16 %v169
  %v842 = vunpack.c.l.b16 %v170
  %v843 = vunpack.c.l.b16 %v171
  %v844 = vunpack.c.l.b16 %v172
  %v845 = vunpack.c.l.b16 %v173
  %v846 = vunpack.c.l.b16 %v174
  %v847 = vunpack.c.l.b16 %v175
  %v848 = vunpack.c.l.b16 %v176
  %v849 = vunpack.c.l.b16 %v177
  %v850 = vunpack.c.l.b16 %v178
  %v851 = vunpack.c.l.b16 %v179
  %v852 = vunpack.c.l.b16 %v180
  %v853 = vunpack.c.l.b16 %v181
  %v854 = vunpack.c.l.b16 %v182
  %v855 = vunpack.c.l.b16 %v183
  %v856 = vunpack.c.l.b16 %v184
  %v857 = vunpack.c.l.b16 %v185
  %v858 = vunpack.c.l.b16 %v186
  %v859 = vunpack.c.l.b16 %v187
  %v860 = vunpack.c.l.b16 %v188
  %v861 = vunpack.c.l.b16 %v189
  %v862 = vunpack.c.l.b16 %v190
  %v863 = vunpack.c.l.b16 %v191
  %v864 = vunpack.c.l.b16 %v192
  %v865 = vunpack.c.l.b16 %v193
  %v866 = vunpack.c.l.b16 %v194
  %v867 = vunpack.c.l.b16 %v195
  %v868 = vunpack.c.l.b16 %v196
  %v869 = vunpack.c.l.b16 %v197
  %v870 = vunpack.c.l.b16 %v198
  %v871 = vunpack.c.l.b16 %v199
  %v872 = vunpack.c.l.b16 %v200
  %v873 = vunpack.c.l.b16 %v201
  %v874 = vunpack.c.l.b16 %v202
  %v875 = vunpack.c.l.b16 %v203
  %v876 = vunpack.c.l.b16 %v204
  %v877 = vunpack.c.l.b16 %v205
  %v878 = vunpack.c.l.b16 %v206
  %v879 = vunpack.c.l.b16 %v207
  %v880 = vunpack.c.l.b16 %v208
  %v881 = vunpack.c.l.b16 %v209
  %v882 = vunpack.c.l.b16 %v210
  %v883 = vunpack.c.l.b16 %v211
  %v884 = vunpack.c.l.b16 %v212
  %v885 = vunpack.c.l.b16 %v213
  %v886 = vunpack.c.l.b16 %v214
  %v887 = vunpack.c.l.b16 %v215
  %v888 = vunpack.c.l.b16 %v216
  %v889 = vunpack.c.l.b16 %v217
  %v890 = vunpack.c.l.b16 %v218
  %v891 = vunpack.c.l.b16 %v219
  %v892 = vunpack.c.l.b16 %v220
  %v893 = vunpack.c.l.b16 %v221
  %v894 = vunpack.c.l.b16 %v222
  %v895 = vunpack.c.l.b16 %v223
  %v896 = vunpack.c.l.b16 %v224
  %v897 = vunpack.c.l.b16 %v225
  %v898 = vunpack.c.l.b16 %v226
  %v899 = vunpack.c.l.b16 %v227
  %v900 = vunpack.c.l.b16 %v228
  %v901 = vunpack.c.l.b16 %v229
  %v902 = vunpack.c.l.b16 %v230
  %v903 = vunpack.c.l.b16 %v231
  %v904 = vunpack.c.l.b16 %v232
  %v905 = vunpack.c.l.b16 %v233
  %v906 = vunpack.c.l.b16 %v234
  %v907 = vunpack.c.l.b16 %v235
  %v908 = vunpack.c.l.b16 %v236
  %v909 = vunpack.c.l.b16 %v237
  %v910 = vunpack.c.l.b16 %v238
  %v911 = vunpack.c.l.b16 %v239
  %v912 = vunpack.c.l.b16 %v240
  %v913 = vunpack.c.l.b16 %v241
  %v914 = vunpack.c.l.b16 %v242
  %v915 = vunpack.c.l.b16 %v243
  %v916 = vunpack.c.l.b16 %v244
  %v917 = vunpack.c.l.b16 %v245
  %v918 = vunpack.c.l.b16 %v246
  %v919 = vunpack.c.l.b16 %v247
  %v920 = vunpack.c.l.b16 %v248
  %v921 = vunpack.c.l.b16 %v249
  %v922 = vunpack.c.l.b16 %v250
  %v923 = vunpack.c.l.b16 %v251
  %v924 = vunpack.c.l.b16 %v252
  %v925 = vunpack.c.l.b16 %v253
  %v926 = vunpack.c.l.b16 %v254
  %v927 = vunpack.c.l.b16 %v255
  %v928 = vunpack.c.l.b16 %v256
  %v929 = vunpack.c.l.b16 %v257
  %v930 = vunpack.c.l.b16 %v258
  %v931 = vunpack.c.l.b16 %v259
  %v932 = vunpack.c.l.b16 %v260
  %v933 = vunpack.c.l.b16 %v261
  %v934 = vunpack.c.l.b16 %v262
  %v935 = vunpack.c.l.b16 %v263
  %v936 = vunpack.c.l.b16 %v264
  %v937 = vunpack.c.l.b16 %v265
  %v938 = vunpack.c.l.b16 %v266
  %v939 = vunpack.c.l.b16 %v267
  %v940 = vunpack.c.l.b16 %v268
  %v941 = vunpack.c.l.b16 %v269
  %v942 = vunpack.c.l.b16 %v270
  %v943 = vunpack.c.l.b16 %v271
  %v944 = vunpack.c.l.b16 %v272
  %v945 = vunpack.c.l.b16 %v273
  %v946 = vunpack.c.l.b16 %v274
  %v947 = vunpack.c.l.b16 %v275
  %v948 = vunpack.c.l.b16 %v276
  %v949 = vunpack.c.l.b16 %v277
  %v950 = vunpack.c.l.b16 %v278
  %v951 = vunpack.c.l.b16 %v279
  %v952 = vunpack.c.l.b16 %v280
  %v953 = vunpack.c.l.b16 %v281
  %v954 = vunpack.c.l.b16 %v282
  %v955 = vunpack.c.l.b16 %v283
  %v956 = vunpack.c.l.b16 %v284
  %v957 = vunpack.c.l.b16 %v285
  %v958 = vunpack.c.l.b16 %v286
  %v959 = vunpack.c.l.b16 %v287
  %v960 = vunpack.c.l.b16 %v288
  %v961 = vunpack.c.l.b16 %v289
  %v962 = vunpack.c.l.b16 %v290
  %v963 = vunpack.c.l.b16 %v291
  %v964 = vunpack.c.l.b16 %v292
  %v965 = vunpack.c.l.b16 %v293
  %v966 = vunpack.c.l.b16 %v294
  %v967 = vunpack.c.l.b16 %v295
  %v968 = vunpack.c.l.b16 %v296
  %v969 = vunpack.c.l.b16 %v297
  %v970 = vunpack.c.l.b16 %v298
  %v971 = vunpack.c.l.b16 %v299
  %v972 = vunpack.c.l.b16 %v300
  %v973 = vunpack.c.l.b16 %v301
  %v974 = vunpack.c.l.b16 %v302
  %v975 = vunpack.c.l.b16 %v303
  %v976 = vunpack.c.l.b16 %v304
  %v977 = vunpack.c.l.b16 %v305
  %v978 = vunpack.c.l.b16 %v306
  %v979 = vunpack.c.l.b16 %v307
  %v980 = vunpack.c.l.b16 %v308
  %v981 = vpack.c.b16 %v726, %v725
  %v982 = vpack.c.b16 %v728, %v727
  %v983 = vpack.c.b16 %v730, %v729
  %v984 = vpack.c.b16 %v732, %v731
  %v985 = vpack.c.b16 %v734, %v733
  %v986 = vpack.c.b16 %v736, %v735
  %v987 = vpack.c.b16 %v738, %v737
  %v988 = vpack.c.b16 %v740, %v739
  %v989 = vpack.c.b16 %v742, %v741
  %v990 = vpack.c.b16 %v744, %v743
  %v991 = vpack.c.b16 %v746, %v745
  %v992 = vpack.c.b16 %v748, %v747
  %v993 = vpack.c.b16 %v750, %v749
  %v994 = vpack.c.b16 %v752, %v751
  %v995 = vpack.c.b16 %v754, %v753
  %v996 = vpack.c.b16 %v756, %v755
  %v997 = vpack.c.b16 %v758, %v757
  %v998 = vpack.c.b16 %v760, %v759
  %v999 = vpack.c.b16 %v762, %v761
  %v1000 = vpack.c.b16 %v764, %v763
  %v1001 = vpack.c.b16 %v766, %v765
  %v1002 = vpack.c.b16 %v768, %v767
  %v1003 = vpack.c.b16 %v770, %v769
  %v1004 = vpack.c.b16 %v772, %v771
  %v1005 = vpack.c.b16 %v774, %v773
  %v1006 = vpack.c.b16 %v776, %v775
  %v1007 = vpack.c.b16 %v778, %v777
  %v1008 = vpack.c.b16 %v780, %v779
  %v1009 = vpack.c.b16 %v782, %v781
  %v1010 = vpack.c.b16 %v784, %v783
  %v1011 = vpack.c.b16 %v786, %v785
  %v1012 = vpack.c.b16 %v788, %v787
  %v1013 = vpack.c.b16 %v790, %v789
  %v1014 = vpack.c.b16 %v792, %v791
  %v1015 = vpack.c.b16 %v794, %v793
  %v1016 = vpack.c.b16 %v796, %v795
  %v1017 = vpack.c.b16 %v798, %v797
  %v1018 = vpack.c.b16 %v800, %v799
  %v1019 = vpack.c.b16 %v802, %v801
  %v1020 = vpack.c.b16 %v804, %v803
  %v1021 = vpack.c.b16 %v806, %v805
  %v1022 = vpack.c.b16 %v808, %v807
  %v1023 = vpack.c.b16 %v810, %v809
  %v1024 = vpack.c.b16 %v812, %v811
  %v1025 = vpack.c.b16 %v814, %v813
  %v1026 = vpack.c.b16 %v816, %v815
  %v1027 = vpack.c.b16 %v818, %v817
  %v1028 = vpack.c.b16 %v820, %v819
  %v1029 = vpack.c.b16 %v822, %v821
  %v1030 = vpack.c.b16 %v824, %v823
  %v1031 = vpack.c.b16 %v826, %v825
  %v1032 = vpack.c.b16 %v828, %v827
  %v1033 = vpack.c.b16 %v830, %v829
  %v1034 = vpack.c.b16 %v832, %v831
  %v1035 = vpack.c.b16 %v834, %v833
  %v1036 = vpack.c.b16 %v836, %v835
  %v1037 = vpack.c.b16 %v838, %v837
  %v1038 = vpack.c.b16 %v840, %v839
  %v1039 = vpack.c.b16 %v842, %v841
  %v1040 = vpack.c.b16 %v844, %v843
  %v1041 = vpack.c.b16 %v846, %v845
  %v1042 = vpack.c.b16 %v848, %v847
  %v1043 = vpack.c.b16 %v850, %v849
  %v1044 = vpack.c.b16 %v852, %v851
  %v1045 = vpack.c.b16 %v854, %v853
  %v1046 = vpack.c.b16 %v856, %v855
  %v1047 = vpack.c.b16 %v858, %v857
  %v1048 = vpack.c.b16 %v860, %v859
  %v1049 = vpack.c.b16 %v862, %v861
  %v1050 = vpack.c.b16 %v864, %v863
  %v1051 = vpack.c.b16 %v866, %v865
  %v1052 = vpack.c.b16 %v868, %v867
  %v1053 = vpack.c.b16 %v870, %v869
  %v1054 = vpack.c.b16 %v872, %v871
  %v1055 = vpack.c.b16 %v874, %v873
  %v1056 = vpack.c.b16 %v876, %v875
  %v1057 = vpack.c.b16 %v878, %v877
  %v1058 = vpack.c.b16 %v880, %v879
  %v1059 = vpack.c.b16 %v882, %v881
  %v1060 = vpack.c.b16 %v884, %v883
  %v1061 = vpack.c.b16 %v886, %v885
  %v1062 = vpack.c.b16 %v888, %v887
  %v1063 = vpack.c.b16 %v890, %v889
  %v1064 = vpack.c.b16 %v892, %v891
  %v1065 = vpack.c.b16 %v894, %v893
  %v1066 = vpack.c.b16 %v896, %v895
  %v1067 = vpack.c.b16 %v898, %v897
  %v1068 = vpack.c.b16 %v900, %v899
  %v1069 = vpack.c.b16 %v902, %v901
  %v1070 = vpack.c.b16 %v904, %v903
  %v1071 = vpack.c.b16 %v906, %v905
  %v1072 = vpack.c.b16 %v908, %v907
  %v1073 = vpack.c.b16 %v910, %v909
  %v1074 = vpack.c.b16 %v912, %v911
  %v1075 = vpack.c.b16 %v914, %v913
  %v1076 = vpack.c.b16 %v916, %v915
  %v1077 = vpack.c.b16 %v918, %v917
  %v1078 = vpack.c.b16 %v920, %v919
  %v1079 = vpack.c.b16 %v922, %v921
  %v1080 = vpack.c.b16 %v924, %v923
  %v1081 = vpack.c.b16 %v926, %v925
  %v1082 = vpack.c.b16 %v928, %v927
  %v1083 = vpack.c.b16 %v930, %v929
  %v1084 = vpack.c.b16 %v932, %v931
  %v1085 = vpack.c.b16 %v934, %v933
  %v1086 = vpack.c.b16 %v936, %v935
  %v1087 = vpack.c.b16 %v938, %v937
  %v1088 = vpack.c.b16 %v940, %v939
  %v1089 = vpack.c.b16 %v942, %v941
  %v1090 = vpack.c.b16 %v944, %v943
  %v1091 = vpack.c.b16 %v946, %v945
  %v1092 = vpack.c.b16 %v948, %v947
  %v1093 = vpack.c.b16 %v950, %v949
  %v1094 = vpack.c.b16 %v952, %v951
  %v1095 = vpack.c.b16 %v954, %v953
  %v1096 = vpack.c.b16 %v956, %v955
  %v1097 = vpack.c.b16 %v958, %v957
  %v1098 = vpack.c.b16 %v960, %v959
  %v1099 = vpack.c.b16 %v962, %v961
  %v1100 = vpack.c.b16 %v964, %v963
  %v1101 = vpack.c.b16 %v966, %v965
  %v1102 = vpack.c.b16 %v968, %v967
  %v1103 = vpack.c.b16 %v970, %v969
  %v1104 = vpack.c.b16 %v972, %v971
  %v1105 = vpack.c.b16 %v974, %v973
  %v1106 = vpack.c.b16 %v976, %v975
  %v1107 = vpack.c.b16 %v978, %v977
  %v1108 = vpack.c.b16 %v980, %v979
  %1237 = vmatprep.subr.bf16.mxu0 0
  %1238 = vmatpush1.bf16.msra.mxu0 %v981
  %1239 = vmatprep.subr.bf16.mxu0 0
  %1240 = vmatpush1.bf16.msra.mxu0 %v982
  %1241 = vmatprep.subr.bf16.mxu0 0
  %1242 = vmatpush1.bf16.msra.mxu0 %v983
  %1243 = vmatprep.subr.bf16.mxu0 0
  %1244 = vmatpush1.bf16.msra.mxu0 %v984
  %1245 = vmatprep.subr.bf16.mxu0 0
  %1246 = vmatpush1.bf16.msra.mxu0 %v985
  %1247 = vmatprep.subr.bf16.mxu0 0
  %1248 = vmatpush1.bf16.msra.mxu0 %v986
  %1249 = vmatprep.subr.bf16.mxu0 0
  %1250 = vmatpush1.bf16.msra.mxu0 %v987
  %1251 = vmatprep.subr.bf16.mxu0 0
  %1252 = vmatpush1.bf16.msra.mxu0 %v988
  %1253 = vmatprep.subr.bf16.mxu0 0
  %1254 = vmatpush1.bf16.msra.mxu0 %v989
  %1255 = vmatprep.subr.bf16.mxu0 0
  %1256 = vmatpush1.bf16.msra.mxu0 %v990
  %1257 = vmatprep.subr.bf16.mxu0 0
  %1258 = vmatpush1.bf16.msra.mxu0 %v991
  %1259 = vmatprep.subr.bf16.mxu0 0
  %1260 = vmatpush1.bf16.msra.mxu0 %v992
  %1261 = vmatprep.subr.bf16.mxu0 0
  %1262 = vmatpush1.bf16.msra.mxu0 %v993
  %1263 = vmatprep.subr.bf16.mxu0 0
  %1264 = vmatpush1.bf16.msra.mxu0 %v994
  %1265 = vmatprep.subr.bf16.mxu0 0
  %1266 = vmatpush1.bf16.msra.mxu0 %v995
  %1267 = vmatprep.subr.bf16.mxu0 0
  %1268 = vmatpush1.bf16.msra.mxu0 %v996
  %1269 = vmatprep.mubr.bf16.mxu0 %v406
  %1270 = vmatmul.mubr.bf16.gmra.mrb[0].mxu0 %v405
  %v1271 = vpop.f32.mrb[0].mxu0
  %v1272 = vadd.f32 0.0, %v1271
  %v1273 = vpop.f32.mrb[0].mxu0
  %v1274 = vpop.f32.mrb[0].mxu0
  %v1275 = vadd.f32 0.0, %v1274
  %v1276 = vpop.f32.mrb[0].mxu0
  %1277 = vmatprep.mubr.bf16.mxu0 %v422
  %1278 = vmatmul.mubr.bf16.gmra.mrb[0].mxu0 %v421
  %v1279 = vpop.f32.mrb[0].mxu0
  %v1280 = vadd.f32 0.0, %v1279
  %v1281 = vpop.f32.mrb[0].mxu0
  %v1282 = vpop.f32.mrb[0].mxu0
  %v1283 = vadd.f32 0.0, %v1282
  %v1284 = vpop.f32.mrb[0].mxu0
  %1285 = vdwg.mxu0
  %1286 = vmatprep.subr.bf16.mxu0 0
  %1287 = vmatpush1.bf16.msra.mxu0 %v997
  %1288 = vmatprep.subr.bf16.mxu0 0
  %1289 = vmatpush1.bf16.msra.mxu0 %v998
  %1290 = vmatprep.subr.bf16.mxu0 0
  %1291 = vmatpush1.bf16.msra.mxu0 %v999
  %1292 = vmatprep.subr.bf16.mxu0 0
  %1293 = vmatpush1.bf16.msra.mxu0 %v1000
  %1294 = vmatprep.subr.bf16.mxu0 0
  %1295 = vmatpush1.bf16.msra.mxu0 %v1001
  %1296 = vmatprep.subr.bf16.mxu0 0
  %1297 = vmatpush1.bf16.msra.mxu0 %v1002
  %1298 = vmatprep.subr.bf16.mxu0 0
  %1299 = vmatpush1.bf16.msra.mxu0 %v1003
  %1300 = vmatprep.subr.bf16.mxu0 0
  %1301 = vmatpush1.bf16.msra.mxu0 %v1004
  %1302 = vmatprep.subr.bf16.mxu0 0
  %1303 = vmatpush1.bf16.msra.mxu0 %v1005
  %1304 = vmatprep.subr.bf16.mxu0 0
  %1305 = vmatpush1.bf16.msra.mxu0 %v1006
  %1306 = vmatprep.subr.bf16.mxu0 0
  %1307 = vmatpush1.bf16.msra.mxu0 %v1007
  %1308 = vmatprep.subr.bf16.mxu0 0
  %1309 = vmatpush1.bf16.msra.mxu0 %v1008
  %1310 = vmatprep.subr.bf16.mxu0 0
  %1311 = vmatpush1.bf16.msra.mxu0 %v1009
  %1312 = vmatprep.subr.bf16.mxu0 0
  %1313 = vmatpush1.bf16.msra.mxu0 %v1010
  %1314 = vmatprep.subr.bf16.mxu0 0
  %1315 = vmatpush1.bf16.msra.mxu0 %v1011
  %1316 = vmatprep.subr.bf16.mxu0 0
  %1317 = vmatpush1.bf16.msra.mxu0 %v1012
  %1318 = vmatprep.mubr.bf16.mxu0 %v408
  %1319 = vmatmul.mubr.bf16.gmra.mrb[0].mxu0 %v407
  %v1320 = vpop.f32.mrb[0].mxu0
  %v1321 = vadd.f32 %v1272, %v1320
  %v1322 = vpop.f32.mrb[0].mxu0
  %v1323 = vpop.f32.mrb[0].mxu0
  %v1324 = vadd.f32 %v1275, %v1323
  %v1325 = vpop.f32.mrb[0].mxu0
  %1326 = vmatprep.mubr.bf16.mxu0 %v424
  %1327 = vmatmul.mubr.bf16.gmra.mrb[0].mxu0 %v423
  %v1328 = vpop.f32.mrb[0].mxu0
  %v1329 = vadd.f32 %v1280, %v1328
  %v1330 = vpop.f32.mrb[0].mxu0
  %v1331 = vpop.f32.mrb[0].mxu0
  %v1332 = vadd.f32 %v1283, %v1331
  %v1333 = vpop.f32.mrb[0].mxu0
  %1334 = vdwg.mxu0
  %1335 = vmatprep.subr.bf16.mxu0 0
  %1336 = vmatpush1.bf16.msra.mxu0 %v1013
  %1337 = vmatprep.subr.bf16.mxu0 0
  %1338 = vmatpush1.bf16.msra.mxu0 %v1014
  %1339 = vmatprep.subr.bf16.mxu0 0
  %1340 = vmatpush1.bf16.msra.mxu0 %v1015
  %1341 = vmatprep.subr.bf16.mxu0 0
  %1342 = vmatpush1.bf16.msra.mxu0 %v1016
  %1343 = vmatprep.subr.bf16.mxu0 0
  %1344 = vmatpush1.bf16.msra.mxu0 %v1017
  %1345 = vmatprep.subr.bf16.mxu0 0
  %1346 = vmatpush1.bf16.msra.mxu0 %v1018
  %1347 = vmatprep.subr.bf16.mxu0 0
  %1348 = vmatpush1.bf16.msra.mxu0 %v1019
  %1349 = vmatprep.subr.bf16.mxu0 0
  %1350 = vmatpush1.bf16.msra.mxu0 %v1020
  %1351 = vmatprep.subr.bf16.mxu0 0
  %1352 = vmatpush1.bf16.msra.mxu0 %v1021
  %1353 = vmatprep.subr.bf16.mxu0 0
  %1354 = vmatpush1.bf16.msra.mxu0 %v1022
  %1355 = vmatprep.subr.bf16.mxu0 0
  %1356 = vmatpush1.bf16.msra.mxu0 %v1023
  %1357 = vmatprep.subr.bf16.mxu0 0
  %1358 = vmatpush1.bf16.msra.mxu0 %v1024
  %1359 = vmatprep.subr.bf16.mxu0 0
  %1360 = vmatpush1.bf16.msra.mxu0 %v1025
  %1361 = vmatprep.subr.bf16.mxu0 0
  %1362 = vmatpush1.bf16.msra.mxu0 %v1026
  %1363 = vmatprep.subr.bf16.mxu0 0
  %1364 = vmatpush1.bf16.msra.mxu0 %v1027
  %1365 = vmatprep.subr.bf16.mxu0 0
  %1366 = vmatpush1.bf16.msra.mxu0 %v1028
  %1367 = vmatprep.mubr.bf16.mxu0 %v410
  %1368 = vmatmul.mubr.bf16.gmra.mrb[0].mxu0 %v409
  %v1369 = vpop.f32.mrb[0].mxu0
  %v1370 = vadd.f32 %v1321, %v1369
  %v1371 = vpop.f32.mrb[0].mxu0
  %v1372 = vpop.f32.mrb[0].mxu0
  %v1373 = vadd.f32 %v1324, %v1372
  %v1374 = vpop.f32.mrb[0].mxu0
  %1375 = vmatprep.mubr.bf16.mxu0 %v426
  %1376 = vmatmul.mubr.bf16.gmra.mrb[0].mxu0 %v425
  %v1377 = vpop.f32.mrb[0].mxu0
  %v1378 = vadd.f32 %v1329, %v1377
  %v1379 = vpop.f32.mrb[0].mxu0
  %v1380 = vpop.f32.mrb[0].mxu0
  %v1381 = vadd.f32 %v1332, %v1380
  %v1382 = vpop.f32.mrb[0].mxu0
  %1383 = vdwg.mxu0
  %1384 = vmatprep.subr.bf16.mxu0 0
  %1385 = vmatpush1.bf16.msra.mxu0 %v1029
  %1386 = vmatprep.subr.bf16.mxu0 0
  %1387 = vmatpush1.bf16.msra.mxu0 %v1030
  %1388 = vmatprep.subr.bf16.mxu0 0
  %1389 = vmatpush1.bf16.msra.mxu0 %v1031
  %1390 = vmatprep.subr.bf16.mxu0 0
  %1391 = vmatpush1.bf16.msra.mxu0 %v1032
  %1392 = vmatprep.subr.bf16.mxu0 0
  %1393 = vmatpush1.bf16.msra.mxu0 %v1033
  %1394 = vmatprep.subr.bf16.mxu0 0
  %1395 = vmatpush1.bf16.msra.mxu0 %v1034
  %1396 = vmatprep.subr.bf16.mxu0 0
  %1397 = vmatpush1.bf16.msra.mxu0 %v1035
  %1398 = vmatprep.subr.bf16.mxu0 0
  %1399 = vmatpush1.bf16.msra.mxu0 %v1036
  %1400 = vmatprep.subr.bf16.mxu0 0
  %1401 = vmatpush1.bf16.msra.mxu0 %v1037
  %1402 = vmatprep.subr.bf16.mxu0 0
  %1403 = vmatpush1.bf16.msra.mxu0 %v1038
  %1404 = vmatprep.subr.bf16.mxu0 0
  %1405 = vmatpush1.bf16.msra.mxu0 %v1039
  %1406 = vmatprep.subr.bf16.mxu0 0
  %1407 = vmatpush1.bf16.msra.mxu0 %v1040
  %1408 = vmatprep.subr.bf16.mxu0 0
  %1409 = vmatpush1.bf16.msra.mxu0 %v1041
  %1410 = vmatprep.subr.bf16.mxu0 0
  %1411 = vmatpush1.bf16.msra.mxu0 %v1042
  %1412 = vmatprep.subr.bf16.mxu0 0
  %1413 = vmatpush1.bf16.msra.mxu0 %v1043
  %1414 = vmatprep.subr.bf16.mxu0 0
  %1415 = vmatpush1.bf16.msra.mxu0 %v1044
  %1416 = vmatprep.mubr.bf16.mxu0 %v412
  %1417 = vmatmul.mubr.bf16.gmra.mrb[0].mxu0 %v411
  %v1418 = vpop.f32.mrb[0].mxu0
  %v1419 = vadd.f32 %v1370, %v1418
  %v1420 = vpop.f32.mrb[0].mxu0
  %v1421 = vpop.f32.mrb[0].mxu0
  %v1422 = vadd.f32 %v1373, %v1421
  %v1423 = vpop.f32.mrb[0].mxu0
  %1424 = vmatprep.mubr.bf16.mxu0 %v428
  %1425 = vmatmul.mubr.bf16.gmra.mrb[0].mxu0 %v427
  %v1426 = vpop.f32.mrb[0].mxu0
  %v1427 = vadd.f32 %v1378, %v1426
  %v1428 = vpop.f32.mrb[0].mxu0
  %v1429 = vpop.f32.mrb[0].mxu0
  %v1430 = vadd.f32 %v1381, %v1429
  %v1431 = vpop.f32.mrb[0].mxu0
  %1432 = vdwg.mxu0
  %1433 = vmatprep.subr.bf16.mxu0 0
  %1434 = vmatpush1.bf16.msra.mxu0 %v1045
  %1435 = vmatprep.subr.bf16.mxu0 0
  %1436 = vmatpush1.bf16.msra.mxu0 %v1046
  %1437 = vmatprep.subr.bf16.mxu0 0
  %1438 = vmatpush1.bf16.msra.mxu0 %v1047
  %1439 = vmatprep.subr.bf16.mxu0 0
  %1440 = vmatpush1.bf16.msra.mxu0 %v1048
  %1441 = vmatprep.subr.bf16.mxu0 0
  %1442 = vmatpush1.bf16.msra.mxu0 %v1049
  %1443 = vmatprep.subr.bf16.mxu0 0
  %1444 = vmatpush1.bf16.msra.mxu0 %v1050
  %1445 = vmatprep.subr.bf16.mxu0 0
  %1446 = vmatpush1.bf16.msra.mxu0 %v1051
  %1447 = vmatprep.subr.bf16.mxu0 0
  %1448 = vmatpush1.bf16.msra.mxu0 %v1052
  %1449 = vmatprep.subr.bf16.mxu0 0
  %1450 = vmatpush1.bf16.msra.mxu0 %v1053
  %1451 = vmatprep.subr.bf16.mxu0 0
  %1452 = vmatpush1.bf16.msra.mxu0 %v1054
  %1453 = vmatprep.subr.bf16.mxu0 0
  %1454 = vmatpush1.bf16.msra.mxu0 %v1055
  %1455 = vmatprep.subr.bf16.mxu0 0
  %1456 = vmatpush1.bf16.msra.mxu0 %v1056
  %1457 = vmatprep.subr.bf16.mxu0 0
  %1458 = vmatpush1.bf16.msra.mxu0 %v1057
  %1459 = vmatprep.subr.bf16.mxu0 0
  %1460 = vmatpush1.bf16.msra.mxu0 %v1058
  %1461 = vmatprep.subr.bf16.mxu0 0
  %1462 = vmatpush1.bf16.msra.mxu0 %v1059
  %1463 = vmatprep.subr.bf16.mxu0 0
  %1464 = vmatpush1.bf16.msra.mxu0 %v1060
  %1465 = vmatprep.mubr.bf16.mxu0 %v414
  %1466 = vmatmul.mubr.bf16.gmra.mrb[0].mxu0 %v413
  %v1467 = vpop.f32.mrb[0].mxu0
  %v1468 = vadd.f32 %v1419, %v1467
  %v1469 = vpop.f32.mrb[0].mxu0
  %v1470 = vpop.f32.mrb[0].mxu0
  %v1471 = vadd.f32 %v1422, %v1470
  %v1472 = vpop.f32.mrb[0].mxu0
  %1473 = vmatprep.mubr.bf16.mxu0 %v430
  %1474 = vmatmul.mubr.bf16.gmra.mrb[0].mxu0 %v429
  %v1475 = vpop.f32.mrb[0].mxu0
  %v1476 = vadd.f32 %v1427, %v1475
  %v1477 = vpop.f32.mrb[0].mxu0
  %v1478 = vpop.f32.mrb[0].mxu0
  %v1479 = vadd.f32 %v1430, %v1478
  %v1480 = vpop.f32.mrb[0].mxu0
  %1481 = vdwg.mxu0
  %1482 = vmatprep.subr.bf16.mxu0 0
  %1483 = vmatpush1.bf16.msra.mxu0 %v1061
  %1484 = vmatprep.subr.bf16.mxu0 0
  %1485 = vmatpush1.bf16.msra.mxu0 %v1062
  %1486 = vmatprep.subr.bf16.mxu0 0
  %1487 = vmatpush1.bf16.msra.mxu0 %v1063
  %1488 = vmatprep.subr.bf16.mxu0 0
  %1489 = vmatpush1.bf16.msra.mxu0 %v1064
  %1490 = vmatprep.subr.bf16.mxu0 0
  %1491 = vmatpush1.bf16.msra.mxu0 %v1065
  %1492 = vmatprep.subr.bf16.mxu0 0
  %1493 = vmatpush1.bf16.msra.mxu0 %v1066
  %1494 = vmatprep.subr.bf16.mxu0 0
  %1495 = vmatpush1.bf16.msra.mxu0 %v1067
  %1496 = vmatprep.subr.bf16.mxu0 0
  %1497 = vmatpush1.bf16.msra.mxu0 %v1068
  %1498 = vmatprep.subr.bf16.mxu0 0
  %1499 = vmatpush1.bf16.msra.mxu0 %v1069
  %1500 = vmatprep.subr.bf16.mxu0 0
  %1501 = vmatpush1.bf16.msra.mxu0 %v1070
  %1502 = vmatprep.subr.bf16.mxu0 0
  %1503 = vmatpush1.bf16.msra.mxu0 %v1071
  %1504 = vmatprep.subr.bf16.mxu0 0
  %1505 = vmatpush1.bf16.msra.mxu0 %v1072
  %1506 = vmatprep.subr.bf16.mxu0 0
  %1507 = vmatpush1.bf16.msra.mxu0 %v1073
  %1508 = vmatprep.subr.bf16.mxu0 0
  %1509 = vmatpush1.bf16.msra.mxu0 %v1074
  %1510 = vmatprep.subr.bf16.mxu0 0
  %1511 = vmatpush1.bf16.msra.mxu0 %v1075
  %1512 = vmatprep.subr.bf16.mxu0 0
  %1513 = vmatpush1.bf16.msra.mxu0 %v1076
  %1514 = vmatprep.mubr.bf16.mxu0 %v416
  %1515 = vmatmul.mubr.bf16.gmra.mrb[0].mxu0 %v415
  %v1516 = vpop.f32.mrb[0].mxu0
  %v1517 = vadd.f32 %v1468, %v1516
  %v1518 = vpop.f32.mrb[0].mxu0
  %v1519 = vpop.f32.mrb[0].mxu0
  %v1520 = vadd.f32 %v1471, %v1519
  %v1521 = vpop.f32.mrb[0].mxu0
  %1522 = vmatprep.mubr.bf16.mxu0 %v432
  %1523 = vmatmul.mubr.bf16.gmra.mrb[0].mxu0 %v431
  %v1524 = vpop.f32.mrb[0].mxu0
  %v1525 = vadd.f32 %v1476, %v1524
  %v1526 = vpop.f32.mrb[0].mxu0
  %v1527 = vpop.f32.mrb[0].mxu0
  %v1528 = vadd.f32 %v1479, %v1527
  %v1529 = vpop.f32.mrb[0].mxu0
  %1530 = vdwg.mxu0
  %1531 = vmatprep.subr.bf16.mxu0 0
  %1532 = vmatpush1.bf16.msra.mxu0 %v1077
  %1533 = vmatprep.subr.bf16.mxu0 0
  %1534 = vmatpush1.bf16.msra.mxu0 %v1078
  %1535 = vmatprep.subr.bf16.mxu0 0
  %1536 = vmatpush1.bf16.msra.mxu0 %v1079
  %1537 = vmatprep.subr.bf16.mxu0 0
  %1538 = vmatpush1.bf16.msra.mxu0 %v1080
  %1539 = vmatprep.subr.bf16.mxu0 0
  %1540 = vmatpush1.bf16.msra.mxu0 %v1081
  %1541 = vmatprep.subr.bf16.mxu0 0
  %1542 = vmatpush1.bf16.msra.mxu0 %v1082
  %1543 = vmatprep.subr.bf16.mxu0 0
  %1544 = vmatpush1.bf16.msra.mxu0 %v1083
  %1545 = vmatprep.subr.bf16.mxu0 0
  %1546 = vmatpush1.bf16.msra.mxu0 %v1084
  %1547 = vmatprep.subr.bf16.mxu0 0
  %1548 = vmatpush1.bf16.msra.mxu0 %v1085
  %1549 = vmatprep.subr.bf16.mxu0 0
  %1550 = vmatpush1.bf16.msra.mxu0 %v1086
  %1551 = vmatprep.subr.bf16.mxu0 0
  %1552 = vmatpush1.bf16.msra.mxu0 %v1087
  %1553 = vmatprep.subr.bf16.mxu0 0
  %1554 = vmatpush1.bf16.msra.mxu0 %v1088
  %1555 = vmatprep.subr.bf16.mxu0 0
  %1556 = vmatpush1.bf16.msra.mxu0 %v1089
  %1557 = vmatprep.subr.bf16.mxu0 0
  %1558 = vmatpush1.bf16.msra.mxu0 %v1090
  %1559 = vmatprep.subr.bf16.mxu0 0
  %1560 = vmatpush1.bf16.msra.mxu0 %v1091
  %1561 = vmatprep.subr.bf16.mxu0 0
  %1562 = vmatpush1.bf16.msra.mxu0 %v1092
  %1563 = vmatprep.mubr.bf16.mxu0 %v418
  %1564 = vmatmul.mubr.bf16.gmra.mrb[0].mxu0 %v417
  %v1565 = vpop.f32.mrb[0].mxu0
  %v1566 = vadd.f32 %v1517, %v1565
  %v1567 = vpop.f32.mrb[0].mxu0
  %v1568 = vpop.f32.mrb[0].mxu0
  %v1569 = vadd.f32 %v1520, %v1568
  %v1570 = vpop.f32.mrb[0].mxu0
  %1571 = vmatprep.mubr.bf16.mxu0 %v434
  %1572 = vmatmul.mubr.bf16.gmra.mrb[0].mxu0 %v433
  %v1573 = vpop.f32.mrb[0].mxu0
  %v1574 = vadd.f32 %v1525, %v1573
  %v1575 = vpop.f32.mrb[0].mxu0
  %v1576 = vpop.f32.mrb[0].mxu0
  %v1577 = vadd.f32 %v1528, %v1576
  %v1578 = vpop.f32.mrb[0].mxu0
  %1579 = vdwg.mxu0
  %1580 = vmatprep.subr.bf16.mxu0 0
  %1581 = vmatpush1.bf16.msra.mxu0 %v1093
  %1582 = vmatprep.subr.bf16.mxu0 0
  %1583 = vmatpush1.bf16.msra.mxu0 %v1094
  %1584 = vmatprep.subr.bf16.mxu0 0
  %1585 = vmatpush1.bf16.msra.mxu0 %v1095
  %1586 = vmatprep.subr.bf16.mxu0 0
  %1587 = vmatpush1.bf16.msra.mxu0 %v1096
  %1588 = vmatprep.subr.bf16.mxu0 0
  %1589 = vmatpush1.bf16.msra.mxu0 %v1097
  %1590 = vmatprep.subr.bf16.mxu0 0
  %1591 = vmatpush1.bf16.msra.mxu0 %v1098
  %1592 = vmatprep.subr.bf16.mxu0 0
  %1593 = vmatpush1.bf16.msra.mxu0 %v1099
  %1594 = vmatprep.subr.bf16.mxu0 0
  %1595 = vmatpush1.bf16.msra.mxu0 %v1100
  %1596 = vmatprep.subr.bf16.mxu0 0
  %1597 = vmatpush1.bf16.msra.mxu0 %v1101
  %1598 = vmatprep.subr.bf16.mxu0 0
  %1599 = vmatpush1.bf16.msra.mxu0 %v1102
  %1600 = vmatprep.subr.bf16.mxu0 0
  %1601 = vmatpush1.bf16.msra.mxu0 %v1103
  %1602 = vmatprep.subr.bf16.mxu0 0
  %1603 = vmatpush1.bf16.msra.mxu0 %v1104
  %1604 = vmatprep.subr.bf16.mxu0 0
  %1605 = vmatpush1.bf16.msra.mxu0 %v1105
  %1606 = vmatprep.subr.bf16.mxu0 0
  %1607 = vmatpush1.bf16.msra.mxu0 %v1106
  %1608 = vmatprep.subr.bf16.mxu0 0
  %1609 = vmatpush1.bf16.msra.mxu0 %v1107
  %1610 = vmatprep.subr.bf16.mxu0 0
  %1611 = vmatpush1.bf16.msra.mxu0 %v1108
  %1612 = vmatprep.mubr.bf16.mxu0 %v420
  %1613 = vmatmul.mubr.bf16.gmra.mrb[0].mxu0 %v419
  %v1614 = vpop.f32.mrb[0].mxu0
  %v1615 = vadd.f32 %v1566, %v1614
  %v1616 = vpop.f32.mrb[0].mxu0
  %v1617 = vpop.f32.mrb[0].mxu0
  %v1618 = vadd.f32 %v1569, %v1617
  %v1619 = vpop.f32.mrb[0].mxu0
  %1620 = vmatprep.mubr.bf16.mxu0 %v436
  %1621 = vmatmul.mubr.bf16.gmra.mrb[0].mxu0 %v435
  %v1622 = vpop.f32.mrb[0].mxu0
  %v1623 = vadd.f32 %v1574, %v1622
  %v1624 = vpop.f32.mrb[0].mxu0
  %v1625 = vpop.f32.mrb[0].mxu0
  %v1626 = vadd.f32 %v1577, %v1625
  %v1627 = vpop.f32.mrb[0].mxu0
  %1628 = vdwg.mxu0
  %1629 = vst [vmem:[%s2] sm:$0xff] %v1615
  %1630 = vst [vmem:[%s2 + $0x8] sm:$0xff] %v1618
  %1631 = vst [vmem:[%s2 + $0x10] sm:$0xff] %v1623
  %1632 = vst [vmem:[%s2 + $0x18] sm:$0xff] %v1626
  %v1633 = vld [vmem:[%s3] sm:$0x1]
  %v1634 = vadd.f32 %v1615, %v1618
  %v1635 = vadd.f32 %v1634, %v1623
  %v1636 = vadd.f32 %v1635, %v1626
  %v1637 = vrot.slane %v1636, 4
  %v1638 = vadd.f32 %v1636, %v1637
  %v1639 = vrot.slane %v1638, 2
  %v1640 = vadd.f32 %v1638, %v1639
  %v1641 = vrot.slane %v1640, 1
  %v1642 = vadd.f32 %v1640, %v1641
  %v1643 = vadd.f32 %v1633, %v1642
  %1644 = vst [vmem:[%s3] sm:$0x1] %v1643
  %v1645 = vld [vmem:[%s4] sm:$0x1]
  %v1646 = vmul.f32 %v1615, %v1615
  %v1647 = vmul.f32 %v1618, %v1618
  %v1648 = vmul.f32 %v1623, %v1623
  %v1649 = vmul.f32 %v1626, %v1626
  %v1650 = vadd.f32 %v1646, %v1647
  %v1651 = vadd.f32 %v1650, %v1648
  %v1652 = vadd.f32 %v1651, %v1649
  %v1653 = vrot.slane %v1652, 4
  %v1654 = vadd.f32 %v1652, %v1653
  %v1655 = vrot.slane %v1654, 2
  %v1656 = vadd.f32 %v1654, %v1655
  %v1657 = vrot.slane %v1656, 1
  %v1658 = vadd.f32 %v1656, %v1657
  %v1659 = vadd.f32 %v1645, %v1658
  %1660 = vst [vmem:[%s4] sm:$0x1] %v1659
  // Predicated region
  $region14: #{img_discriminator_forward.19} parent=0 // pred_check
    _
  $region15: #{img_discriminator_forward.19} parent=0 // pred_check_branch
    %1662 = sbr.rel (0) target = $region17
  $region16: #{img_discriminator_forward.19} parent=0 // pred_region
    _
  $region17: #{img_discriminator_forward.19} parent=0 // pred_fallthru
    _
  // Predicated region
  $region18: #{img_discriminator_forward.19} parent=0 // pred_check
    _
  $region19: #{img_discriminator_forward.19} parent=0 // pred_check_branch
    %1664 = sbr.rel (0) target = $region21
  $region20: #{img_discriminator_forward.19} parent=0 // pred_region
    _
  $region21: #{img_discriminator_forward.19} parent=0 // pred_fallthru
    _
  // Predicated region
  $region22: #{img_discriminator_forward.19} parent=0 // pred_check
    _
  $region23: #{img_discriminator_forward.19} parent=0 // pred_check_branch
    %1666 = sbr.rel (0) target = $region25
  $region24: #{img_discriminator_forward.19} parent=0 // pred_region
    _
  $region25: #{img_discriminator_forward.19} parent=0 // pred_fallthru
    _
  // Predicated region
  $region26: #{img_discriminator_forward.19} parent=0 // pred_check
    _
  $region27: #{img_discriminator_forward.19} parent=0 // pred_check_branch
    %1668 = sbr.rel (0) target = $region29
  $region28: #{img_discriminator_forward.19} parent=0 // pred_region
    _
  $region29: #{img_discriminator_forward.19} parent=0 // pred_fallthru
    _
  // Predicated region
  $region30: #{img_discriminator_forward.19} parent=0 // pred_check
    _
  $region31: #{img_discriminator_forward.19} parent=0 // pred_check_branch
    %1670 = sbr.rel (0) target = $region33
  $region32: #{img_discriminator_forward.19} parent=0 // pred_region
    _
  $region33: #{img_discriminator_forward.19} parent=0 // pred_fallthru
    _
  // Predicated region
  $region34: #{img_discriminator_forward.19} parent=0 // pred_check
    _
  $region35: #{img_discriminator_forward.19} parent=0 // pred_check_branch
    %1672 = sbr.rel (0) target = $region37
  $region36: #{img_discriminator_forward.19} parent=0 // pred_region
    _
  $region37: #{img_discriminator_forward.19} parent=0 // pred_fallthru
    _

// kernel: img_discriminator_forward.24
$region0: #{img_discriminator_forward.24}
  #allocation0 [shape = 'u32[]', space=smem, size = 0x4, offset = 0x4, fixed_abs, tag = 'smem constant byte address 0x4 - core index']
  #allocation1 [shape = 'u32[144,128]{1,0:T(1,128)}', space=vmem, size = 0x12000, scoped, tag = 'internal scratch']
  %s0 = inlined_call_operand.vmem [shape: f32[8,128], index: 0, kind: input, shape index: {}]
  %s1 = inlined_call_operand.vmem [shape: f32[1,128], index: 1, kind: input, shape index: {}]
  %s2 = inlined_call_operand.vmem [shape: f32[1,128], index: 2, kind: input, shape index: {}]
  %s3 = inlined_call_operand.vmem [shape: bf16[8,128], index: 3, kind: output, shape index: {}]
  %s4 = sld [smem:[#allocation0]]
  $region22: #{img_discriminator_forward.24} parent=0
    _
  %s6 = ssub.s32 1, %s4
  %s7 = scalar_select 0, %s6, %s4
  // Predicated region
  $region2: #{img_discriminator_forward.24} parent=0 // pred_check
    _
  $region3: #{img_discriminator_forward.24} parent=0 // pred_check_branch
    %9 = sbr.rel (0) target = $region5
  $region4: #{img_discriminator_forward.24} parent=0 // pred_region
    _
  $region5: #{img_discriminator_forward.24} parent=0 // pred_fallthru
    _
  // Predicated region
  $region6: #{img_discriminator_forward.24} parent=0 // pred_check
    _
  $region7: #{img_discriminator_forward.24} parent=0 // pred_check_branch
    %11 = sbr.rel (0) target = $region9
  $region8: #{img_discriminator_forward.24} parent=0 // pred_region
    _
  $region9: #{img_discriminator_forward.24} parent=0 // pred_fallthru
    _
  // Predicated region
  $region10: #{img_discriminator_forward.24} parent=0 // pred_check
    _
  $region11: #{img_discriminator_forward.24} parent=0 // pred_check_branch
    %13 = sbr.rel (0) target = $region13
  $region12: #{img_discriminator_forward.24} parent=0 // pred_region
    _
  $region13: #{img_discriminator_forward.24} parent=0 // pred_fallthru
    _
  %v14 = vld [vmem:[%s0] sm:$0xff]
  %v15 = vld [vmem:[%s1] sm:$0x1]
  %v17 = vlaneseq
  %v18 = vshrl.u32 %v17, 7
  %v19 = vsub.s32 0, %v18
  %v20 = vrot.slane %v15, %v19
  %v22 = vmul.f32 %v14, %v20
  %v23 = vld [vmem:[%s2] sm:$0x1]
  %v25 = vlaneseq
  %v26 = vshrl.u32 %v25, 7
  %v27 = vsub.s32 0, %v26
  %v28 = vrot.slane %v23, %v27
  %v30 = vadd.f32 %v22, %v28
  %vm31 = vcmp.ge.f32.partialorder %v30, 0.0
  %v32 = vmul.f32 %v30, 0.2
  %v33 = vsel %vm31, %v30, %v32
  %v34 = vpack.c.bf16 %v33, %v33
  %35 = vst [vmem:[%s3] sm:$0xf] %v34
  // Predicated region
  $region14: #{img_discriminator_forward.24} parent=0 // pred_check
    _
  $region15: #{img_discriminator_forward.24} parent=0 // pred_check_branch
    %37 = sbr.rel (0) target = $region17
  $region16: #{img_discriminator_forward.24} parent=0 // pred_region
    _
  $region17: #{img_discriminator_forward.24} parent=0 // pred_fallthru
    _
  // Predicated region
  $region18: #{img_discriminator_forward.24} parent=0 // pred_check
    _
  $region19: #{img_discriminator_forward.24} parent=0 // pred_check_branch
    %39 = sbr.rel (0) target = $region21
  $region20: #{img_discriminator_forward.24} parent=0 // pred_region
    _
  $region21: #{img_discriminator_forward.24} parent=0 // pred_fallthru
    _

// kernel: img_discriminator_forward.25
$region0: #{img_discriminator_forward.25}
  #allocation0 [shape = 'u32[]', space=smem, size = 0x4, offset = 0x4, fixed_abs, tag = 'smem constant byte address 0x4 - core index']
  #allocation1 [shape = 'u32[144,128]{1,0:T(1,128)}', space=vmem, size = 0x12000, scoped, tag = 'internal scratch']
  %s0 = inlined_call_operand.vmem [shape: bf16[8,512], index: 0, kind: input, shape index: {}]
  %s1 = inlined_call_operand.vmem [shape: bf16[512,128], index: 1, kind: input, shape index: {}]
  %s2 = inlined_call_operand.vmem [shape: f32[1,128], index: 2, kind: input, shape index: {}]
  %s3 = inlined_call_operand.vmem [shape: f32[8,128], index: 3, kind: output, shape index: {}]
  %s4 = sld [smem:[#allocation0]]
  $region30: #{img_discriminator_forward.25} parent=0
    _
  %s6 = ssub.s32 1, %s4
  %s7 = scalar_select 0, %s6, %s4
  // Predicated region
  $region2: #{img_discriminator_forward.25} parent=0 // pred_check
    _
  $region3: #{img_discriminator_forward.25} parent=0 // pred_check_branch
    %9 = sbr.rel (0) target = $region5
  $region4: #{img_discriminator_forward.25} parent=0 // pred_region
    _
  $region5: #{img_discriminator_forward.25} parent=0 // pred_fallthru
    _
  // Predicated region
  $region6: #{img_discriminator_forward.25} parent=0 // pred_check
    _
  $region7: #{img_discriminator_forward.25} parent=0 // pred_check_branch
    %11 = sbr.rel (0) target = $region9
  $region8: #{img_discriminator_forward.25} parent=0 // pred_region
    _
  $region9: #{img_discriminator_forward.25} parent=0 // pred_fallthru
    _
  // Predicated region
  $region10: #{img_discriminator_forward.25} parent=0 // pred_check
    _
  $region11: #{img_discriminator_forward.25} parent=0 // pred_check_branch
    %13 = sbr.rel (0) target = $region13
  $region12: #{img_discriminator_forward.25} parent=0 // pred_region
    _
  $region13: #{img_discriminator_forward.25} parent=0 // pred_fallthru
    _
  %p15 = scmp.eq.s32.totalorder 0, 0
  // Predicated region
  $region14: #{img_discriminator_forward.25} parent=0 // pred_check
    %p16 = pneg %p15
  $region15: #{img_discriminator_forward.25} parent=0 // pred_check_branch
    %18 = sbr.rel (%p16) target = $region17
  $region16: #{img_discriminator_forward.25} parent=0 // pred_region
    %19 = vst [vmem:[%s3] sm:$0xff] 0.0
  $region17: #{img_discriminator_forward.25} parent=0 // pred_fallthru
    _
  %v20 = vld [vmem:[%s3] sm:$0xff]
  %v21 = vld [vmem:[%s0] sm:$0xff]
  %v22 = vld [vmem:[%s0 + $0x8] sm:$0xff]
  %v23 = vld [vmem:[%s1] sm:$0xf]
  %v24 = vld [vmem:[%s1 + $0x4] sm:$0xf]
  %v25 = vld [vmem:[%s1 + $0x8] sm:$0xf]
  %v26 = vld [vmem:[%s1 + $0xc] sm:$0xf]
  %v27 = vld [vmem:[%s1 + $0x10] sm:$0xf]
  %v28 = vld [vmem:[%s1 + $0x14] sm:$0xf]
  %v29 = vld [vmem:[%s1 + $0x18] sm:$0xf]
  %v30 = vld [vmem:[%s1 + $0x1c] sm:$0xf]
  %v31 = vld [vmem:[%s1 + $0x20] sm:$0xf]
  %v32 = vld [vmem:[%s1 + $0x24] sm:$0xf]
  %v33 = vld [vmem:[%s1 + $0x28] sm:$0xf]
  %v34 = vld [vmem:[%s1 + $0x2c] sm:$0xf]
  %v35 = vld [vmem:[%s1 + $0x30] sm:$0xf]
  %v36 = vld [vmem:[%s1 + $0x34] sm:$0xf]
  %v37 = vld [vmem:[%s1 + $0x38] sm:$0xf]
  %v38 = vld [vmem:[%s1 + $0x3c] sm:$0xf]
  %v39 = vld [vmem:[%s1 + $0x40] sm:$0xf]
  %v40 = vld [vmem:[%s1 + $0x44] sm:$0xf]
  %v41 = vld [vmem:[%s1 + $0x48] sm:$0xf]
  %v42 = vld [vmem:[%s1 + $0x4c] sm:$0xf]
  %v43 = vld [vmem:[%s1 + $0x50] sm:$0xf]
  %v44 = vld [vmem:[%s1 + $0x54] sm:$0xf]
  %v45 = vld [vmem:[%s1 + $0x58] sm:$0xf]
  %v46 = vld [vmem:[%s1 + $0x5c] sm:$0xf]
  %v47 = vld [vmem:[%s1 + $0x60] sm:$0xf]
  %v48 = vld [vmem:[%s1 + $0x64] sm:$0xf]
  %v49 = vld [vmem:[%s1 + $0x68] sm:$0xf]
  %v50 = vld [vmem:[%s1 + $0x6c] sm:$0xf]
  %v51 = vld [vmem:[%s1 + $0x70] sm:$0xf]
  %v52 = vld [vmem:[%s1 + $0x74] sm:$0xf]
  %v53 = vld [vmem:[%s1 + $0x78] sm:$0xf]
  %v54 = vld [vmem:[%s1 + $0x7c] sm:$0xf]
  %v55 = vld [vmem:[%s1 + $0x80] sm:$0xf]
  %v56 = vld [vmem:[%s1 + $0x84] sm:$0xf]
  %v57 = vld [vmem:[%s1 + $0x88] sm:$0xf]
  %v58 = vld [vmem:[%s1 + $0x8c] sm:$0xf]
  %v59 = vld [vmem:[%s1 + $0x90] sm:$0xf]
  %v60 = vld [vmem:[%s1 + $0x94] sm:$0xf]
  %v61 = vld [vmem:[%s1 + $0x98] sm:$0xf]
  %v62 = vld [vmem:[%s1 + $0x9c] sm:$0xf]
  %v63 = vld [vmem:[%s1 + $0xa0] sm:$0xf]
  %v64 = vld [vmem:[%s1 + $0xa4] sm:$0xf]
  %v65 = vld [vmem:[%s1 + $0xa8] sm:$0xf]
  %v66 = vld [vmem:[%s1 + $0xac] sm:$0xf]
  %v67 = vld [vmem:[%s1 + $0xb0] sm:$0xf]
  %v68 = vld [vmem:[%s1 + $0xb4] sm:$0xf]
  %v69 = vld [vmem:[%s1 + $0xb8] sm:$0xf]
  %v70 = vld [vmem:[%s1 + $0xbc] sm:$0xf]
  %v71 = vld [vmem:[%s1 + $0xc0] sm:$0xf]
  %v72 = vld [vmem:[%s1 + $0xc4] sm:$0xf]
  %v73 = vld [vmem:[%s1 + $0xc8] sm:$0xf]
  %v74 = vld [vmem:[%s1 + $0xcc] sm:$0xf]
  %v75 = vld [vmem:[%s1 + $0xd0] sm:$0xf]
  %v76 = vld [vmem:[%s1 + $0xd4] sm:$0xf]
  %v77 = vld [vmem:[%s1 + $0xd8] sm:$0xf]
  %v78 = vld [vmem:[%s1 + $0xdc] sm:$0xf]
  %v79 = vld [vmem:[%s1 + $0xe0] sm:$0xf]
  %v80 = vld [vmem:[%s1 + $0xe4] sm:$0xf]
  %v81 = vld [vmem:[%s1 + $0xe8] sm:$0xf]
  %v82 = vld [vmem:[%s1 + $0xec] sm:$0xf]
  %v83 = vld [vmem:[%s1 + $0xf0] sm:$0xf]
  %v84 = vld [vmem:[%s1 + $0xf4] sm:$0xf]
  %v85 = vld [vmem:[%s1 + $0xf8] sm:$0xf]
  %v86 = vld [vmem:[%s1 + $0xfc] sm:$0xf]
  %v89 = vunpack.c.l.b16 %v21
  %v90 = vunpack.c.h.b16 %v21
  %v91 = vunpack.c.l.b16 %v22
  %v92 = vunpack.c.h.b16 %v22
  %v93 = vpack.c.b16 %v89, %v89
  %v94 = vpack.c.b16 %v90, %v90
  %v95 = vpack.c.b16 %v91, %v91
  %v96 = vpack.c.b16 %v92, %v92
  %v165 = vunpack.c.l.b16 %v23
  %v166 = vunpack.c.l.b16 %v24
  %v167 = vunpack.c.l.b16 %v25
  %v168 = vunpack.c.l.b16 %v26
  %v169 = vunpack.c.l.b16 %v27
  %v170 = vunpack.c.l.b16 %v28
  %v171 = vunpack.c.l.b16 %v29
  %v172 = vunpack.c.l.b16 %v30
  %v173 = vunpack.c.l.b16 %v31
  %v174 = vunpack.c.l.b16 %v32
  %v175 = vunpack.c.l.b16 %v33
  %v176 = vunpack.c.l.b16 %v34
  %v177 = vunpack.c.l.b16 %v35
  %v178 = vunpack.c.l.b16 %v36
  %v179 = vunpack.c.l.b16 %v37
  %v180 = vunpack.c.l.b16 %v38
  %v181 = vunpack.c.l.b16 %v39
  %v182 = vunpack.c.l.b16 %v40
  %v183 = vunpack.c.l.b16 %v41
  %v184 = vunpack.c.l.b16 %v42
  %v185 = vunpack.c.l.b16 %v43
  %v186 = vunpack.c.l.b16 %v44
  %v187 = vunpack.c.l.b16 %v45
  %v188 = vunpack.c.l.b16 %v46
  %v189 = vunpack.c.l.b16 %v47
  %v190 = vunpack.c.l.b16 %v48
  %v191 = vunpack.c.l.b16 %v49
  %v192 = vunpack.c.l.b16 %v50
  %v193 = vunpack.c.l.b16 %v51
  %v194 = vunpack.c.l.b16 %v52
  %v195 = vunpack.c.l.b16 %v53
  %v196 = vunpack.c.l.b16 %v54
  %v197 = vunpack.c.l.b16 %v55
  %v198 = vunpack.c.l.b16 %v56
  %v199 = vunpack.c.l.b16 %v57
  %v200 = vunpack.c.l.b16 %v58
  %v201 = vunpack.c.l.b16 %v59
  %v202 = vunpack.c.l.b16 %v60
  %v203 = vunpack.c.l.b16 %v61
  %v204 = vunpack.c.l.b16 %v62
  %v205 = vunpack.c.l.b16 %v63
  %v206 = vunpack.c.l.b16 %v64
  %v207 = vunpack.c.l.b16 %v65
  %v208 = vunpack.c.l.b16 %v66
  %v209 = vunpack.c.l.b16 %v67
  %v210 = vunpack.c.l.b16 %v68
  %v211 = vunpack.c.l.b16 %v69
  %v212 = vunpack.c.l.b16 %v70
  %v213 = vunpack.c.l.b16 %v71
  %v214 = vunpack.c.l.b16 %v72
  %v215 = vunpack.c.l.b16 %v73
  %v216 = vunpack.c.l.b16 %v74
  %v217 = vunpack.c.l.b16 %v75
  %v218 = vunpack.c.l.b16 %v76
  %v219 = vunpack.c.l.b16 %v77
  %v220 = vunpack.c.l.b16 %v78
  %v221 = vunpack.c.l.b16 %v79
  %v222 = vunpack.c.l.b16 %v80
  %v223 = vunpack.c.l.b16 %v81
  %v224 = vunpack.c.l.b16 %v82
  %v225 = vunpack.c.l.b16 %v83
  %v226 = vunpack.c.l.b16 %v84
  %v227 = vunpack.c.l.b16 %v85
  %v228 = vunpack.c.l.b16 %v86
  %v229 = vpack.c.b16 %v166, %v165
  %v230 = vpack.c.b16 %v168, %v167
  %v231 = vpack.c.b16 %v170, %v169
  %v232 = vpack.c.b16 %v172, %v171
  %v233 = vpack.c.b16 %v174, %v173
  %v234 = vpack.c.b16 %v176, %v175
  %v235 = vpack.c.b16 %v178, %v177
  %v236 = vpack.c.b16 %v180, %v179
  %v237 = vpack.c.b16 %v182, %v181
  %v238 = vpack.c.b16 %v184, %v183
  %v239 = vpack.c.b16 %v186, %v185
  %v240 = vpack.c.b16 %v188, %v187
  %v241 = vpack.c.b16 %v190, %v189
  %v242 = vpack.c.b16 %v192, %v191
  %v243 = vpack.c.b16 %v194, %v193
  %v244 = vpack.c.b16 %v196, %v195
  %v245 = vpack.c.b16 %v198, %v197
  %v246 = vpack.c.b16 %v200, %v199
  %v247 = vpack.c.b16 %v202, %v201
  %v248 = vpack.c.b16 %v204, %v203
  %v249 = vpack.c.b16 %v206, %v205
  %v250 = vpack.c.b16 %v208, %v207
  %v251 = vpack.c.b16 %v210, %v209
  %v252 = vpack.c.b16 %v212, %v211
  %v253 = vpack.c.b16 %v214, %v213
  %v254 = vpack.c.b16 %v216, %v215
  %v255 = vpack.c.b16 %v218, %v217
  %v256 = vpack.c.b16 %v220, %v219
  %v257 = vpack.c.b16 %v222, %v221
  %v258 = vpack.c.b16 %v224, %v223
  %v259 = vpack.c.b16 %v226, %v225
  %v260 = vpack.c.b16 %v228, %v227
  %293 = vmatprep.subr.bf16.mxu0 0
  %294 = vmatpush1.bf16.msra.mxu0 %v229
  %295 = vmatprep.subr.bf16.mxu0 0
  %296 = vmatpush1.bf16.msra.mxu0 %v230
  %297 = vmatprep.subr.bf16.mxu0 0
  %298 = vmatpush1.bf16.msra.mxu0 %v231
  %299 = vmatprep.subr.bf16.mxu0 0
  %300 = vmatpush1.bf16.msra.mxu0 %v232
  %301 = vmatprep.subr.bf16.mxu0 0
  %302 = vmatpush1.bf16.msra.mxu0 %v233
  %303 = vmatprep.subr.bf16.mxu0 0
  %304 = vmatpush1.bf16.msra.mxu0 %v234
  %305 = vmatprep.subr.bf16.mxu0 0
  %306 = vmatpush1.bf16.msra.mxu0 %v235
  %307 = vmatprep.subr.bf16.mxu0 0
  %308 = vmatpush1.bf16.msra.mxu0 %v236
  %309 = vmatprep.subr.bf16.mxu0 0
  %310 = vmatpush1.bf16.msra.mxu0 %v237
  %311 = vmatprep.subr.bf16.mxu0 0
  %312 = vmatpush1.bf16.msra.mxu0 %v238
  %313 = vmatprep.subr.bf16.mxu0 0
  %314 = vmatpush1.bf16.msra.mxu0 %v239
  %315 = vmatprep.subr.bf16.mxu0 0
  %316 = vmatpush1.bf16.msra.mxu0 %v240
  %317 = vmatprep.subr.bf16.mxu0 0
  %318 = vmatpush1.bf16.msra.mxu0 %v241
  %319 = vmatprep.subr.bf16.mxu0 0
  %320 = vmatpush1.bf16.msra.mxu0 %v242
  %321 = vmatprep.subr.bf16.mxu0 0
  %322 = vmatpush1.bf16.msra.mxu0 %v243
  %323 = vmatprep.subr.bf16.mxu0 0
  %324 = vmatpush1.bf16.msra.mxu0 %v244
  %325 = vmatprep.mubr.bf16.mxu0 %v94
  %326 = vmatmul.mubr.bf16.gmra.mrb[0].mxu0 %v93
  %v327 = vpop.f32.mrb[0].mxu0
  %v328 = vadd.f32 0.0, %v327
  %v329 = vpop.f32.mrb[0].mxu0
  %v330 = vpop.f32.mrb[0].mxu0
  %v331 = vpop.f32.mrb[0].mxu0
  %332 = vdwg.mxu0
  %333 = vmatprep.subr.bf16.mxu0 0
  %334 = vmatpush1.bf16.msra.mxu0 %v245
  %335 = vmatprep.subr.bf16.mxu0 0
  %336 = vmatpush1.bf16.msra.mxu0 %v246
  %337 = vmatprep.subr.bf16.mxu0 0
  %338 = vmatpush1.bf16.msra.mxu0 %v247
  %339 = vmatprep.subr.bf16.mxu0 0
  %340 = vmatpush1.bf16.msra.mxu0 %v248
  %341 = vmatprep.subr.bf16.mxu0 0
  %342 = vmatpush1.bf16.msra.mxu0 %v249
  %343 = vmatprep.subr.bf16.mxu0 0
  %344 = vmatpush1.bf16.msra.mxu0 %v250
  %345 = vmatprep.subr.bf16.mxu0 0
  %346 = vmatpush1.bf16.msra.mxu0 %v251
  %347 = vmatprep.subr.bf16.mxu0 0
  %348 = vmatpush1.bf16.msra.mxu0 %v252
  %349 = vmatprep.subr.bf16.mxu0 0
  %350 = vmatpush1.bf16.msra.mxu0 %v253
  %351 = vmatprep.subr.bf16.mxu0 0
  %352 = vmatpush1.bf16.msra.mxu0 %v254
  %353 = vmatprep.subr.bf16.mxu0 0
  %354 = vmatpush1.bf16.msra.mxu0 %v255
  %355 = vmatprep.subr.bf16.mxu0 0
  %356 = vmatpush1.bf16.msra.mxu0 %v256
  %357 = vmatprep.subr.bf16.mxu0 0
  %358 = vmatpush1.bf16.msra.mxu0 %v257
  %359 = vmatprep.subr.bf16.mxu0 0
  %360 = vmatpush1.bf16.msra.mxu0 %v258
  %361 = vmatprep.subr.bf16.mxu0 0
  %362 = vmatpush1.bf16.msra.mxu0 %v259
  %363 = vmatprep.subr.bf16.mxu0 0
  %364 = vmatpush1.bf16.msra.mxu0 %v260
  %365 = vmatprep.mubr.bf16.mxu0 %v96
  %366 = vmatmul.mubr.bf16.gmra.mrb[0].mxu0 %v95
  %v367 = vpop.f32.mrb[0].mxu0
  %v368 = vadd.f32 %v328, %v367
  %v369 = vpop.f32.mrb[0].mxu0
  %v370 = vpop.f32.mrb[0].mxu0
  %v371 = vpop.f32.mrb[0].mxu0
  %372 = vdwg.mxu0
  %v373 = vadd.f32 %v20, %v368
  %374 = vst [vmem:[%s3] sm:$0xff] %v373
  // Predicated region
  $region18: #{img_discriminator_forward.25} parent=0 // pred_check
    %p375 = pneg %p15
  $region19: #{img_discriminator_forward.25} parent=0 // pred_check_branch
    %377 = sbr.rel (%p375) target = $region21
  $region20: #{img_discriminator_forward.25} parent=0 // pred_region
    %v378 = vld [vmem:[%s3] sm:$0xff]
    %v379 = vld [vmem:[%s2] sm:$0x1]
    %v381 = vlaneseq
    %v382 = vshrl.u32 %v381, 7
    %v383 = vsub.s32 0, %v382
    %v384 = vrot.slane %v379, %v383
    %v386 = vadd.f32 %v378, %v384
    %387 = vst [vmem:[%s3] sm:$0xff] %v386
  $region21: #{img_discriminator_forward.25} parent=0 // pred_fallthru
    _
  // Predicated region
  $region22: #{img_discriminator_forward.25} parent=0 // pred_check
    _
  $region23: #{img_discriminator_forward.25} parent=0 // pred_check_branch
    %389 = sbr.rel (0) target = $region25
  $region24: #{img_discriminator_forward.25} parent=0 // pred_region
    _
  $region25: #{img_discriminator_forward.25} parent=0 // pred_fallthru
    _
  // Predicated region
  $region26: #{img_discriminator_forward.25} parent=0 // pred_check
    _
  $region27: #{img_discriminator_forward.25} parent=0 // pred_check_branch
    %391 = sbr.rel (0) target = $region29
  $region28: #{img_discriminator_forward.25} parent=0 // pred_region
    _
  $region29: #{img_discriminator_forward.25} parent=0 // pred_fallthru
    _

// kernel: img_discriminator_forward.23
$region0: #{img_discriminator_forward.23}
  #allocation0 [shape = 'u32[]', space=smem, size = 0x4, offset = 0x4, fixed_abs, tag = 'smem constant byte address 0x4 - core index']
  #allocation1 [shape = 'u32[144,128]{1,0:T(1,128)}', space=vmem, size = 0x12000, scoped, tag = 'internal scratch']
  %s0 = inlined_call_operand.vmem [shape: bf16[8,2048], index: 0, kind: input, shape index: {}]
  %s1 = inlined_call_operand.vmem [shape: bf16[2048,128], index: 1, kind: input, shape index: {}]
  %s2 = inlined_call_operand.vmem [shape: f32[8,128], index: 2, kind: output, shape index: {0}]
  %s3 = inlined_call_operand.vmem [shape: f32[1,128], index: 3, kind: output, shape index: {1}]
  %s4 = inlined_call_operand.vmem [shape: f32[1,128], index: 4, kind: output, shape index: {2}]
  %5 = xla_tuple %s2, %s3, %s4
  %s6 = sld [smem:[#allocation0]]
  $region38: #{img_discriminator_forward.23} parent=0
    _
  %s8 = ssub.s32 1, %s6
  %s9 = scalar_select 0, %s8, %s6
  // Predicated region
  $region2: #{img_discriminator_forward.23} parent=0 // pred_check
    _
  $region3: #{img_discriminator_forward.23} parent=0 // pred_check_branch
    %11 = sbr.rel (0) target = $region5
  $region4: #{img_discriminator_forward.23} parent=0 // pred_region
    _
  $region5: #{img_discriminator_forward.23} parent=0 // pred_fallthru
    _
  // Predicated region
  $region6: #{img_discriminator_forward.23} parent=0 // pred_check
    _
  $region7: #{img_discriminator_forward.23} parent=0 // pred_check_branch
    %13 = sbr.rel (0) target = $region9
  $region8: #{img_discriminator_forward.23} parent=0 // pred_region
    _
  $region9: #{img_discriminator_forward.23} parent=0 // pred_fallthru
    _
  %p15 = scmp.eq.s32.totalorder 0, 0
  // Predicated region
  $region10: #{img_discriminator_forward.23} parent=0 // pred_check
    %p16 = pneg %p15
  $region11: #{img_discriminator_forward.23} parent=0 // pred_check_branch
    %18 = sbr.rel (%p16) target = $region13
  $region12: #{img_discriminator_forward.23} parent=0 // pred_region
    %19 = vst [vmem:[%s3] sm:$0x1] 0.0
    %20 = vst [vmem:[%s4] sm:$0x1] 0.0
  $region13: #{img_discriminator_forward.23} parent=0 // pred_fallthru
    _
  %v21 = vld [vmem:[%s0] sm:$0xff]
  %v22 = vld [vmem:[%s0 + $0x8] sm:$0xff]
  %v23 = vld [vmem:[%s0 + $0x10] sm:$0xff]
  %v24 = vld [vmem:[%s0 + $0x18] sm:$0xff]
  %v25 = vld [vmem:[%s0 + $0x20] sm:$0xff]
  %v26 = vld [vmem:[%s0 + $0x28] sm:$0xff]
  %v27 = vld [vmem:[%s0 + $0x30] sm:$0xff]
  %v28 = vld [vmem:[%s0 + $0x38] sm:$0xff]
  %v29 = vld [vmem:[%s1] sm:$0xf]
  %v30 = vld [vmem:[%s1 + $0x4] sm:$0xf]
  %v31 = vld [vmem:[%s1 + $0x8] sm:$0xf]
  %v32 = vld [vmem:[%s1 + $0xc] sm:$0xf]
  %v33 = vld [vmem:[%s1 + $0x10] sm:$0xf]
  %v34 = vld [vmem:[%s1 + $0x14] sm:$0xf]
  %v35 = vld [vmem:[%s1 + $0x18] sm:$0xf]
  %v36 = vld [vmem:[%s1 + $0x1c] sm:$0xf]
  %v37 = vld [vmem:[%s1 + $0x20] sm:$0xf]
  %v38 = vld [vmem:[%s1 + $0x24] sm:$0xf]
  %v39 = vld [vmem:[%s1 + $0x28] sm:$0xf]
  %v40 = vld [vmem:[%s1 + $0x2c] sm:$0xf]
  %v41 = vld [vmem:[%s1 + $0x30] sm:$0xf]
  %v42 = vld [vmem:[%s1 + $0x34] sm:$0xf]
  %v43 = vld [vmem:[%s1 + $0x38] sm:$0xf]
  %v44 = vld [vmem:[%s1 + $0x3c] sm:$0xf]
  %v45 = vld [vmem:[%s1 + $0x40] sm:$0xf]
  %v46 = vld [vmem:[%s1 + $0x44] sm:$0xf]
  %v47 = vld [vmem:[%s1 + $0x48] sm:$0xf]
  %v48 = vld [vmem:[%s1 + $0x4c] sm:$0xf]
  %v49 = vld [vmem:[%s1 + $0x50] sm:$0xf]
  %v50 = vld [vmem:[%s1 + $0x54] sm:$0xf]
  %v51 = vld [vmem:[%s1 + $0x58] sm:$0xf]
  %v52 = vld [vmem:[%s1 + $0x5c] sm:$0xf]
  %v53 = vld [vmem:[%s1 + $0x60] sm:$0xf]
  %v54 = vld [vmem:[%s1 + $0x64] sm:$0xf]
  %v55 = vld [vmem:[%s1 + $0x68] sm:$0xf]
  %v56 = vld [vmem:[%s1 + $0x6c] sm:$0xf]
  %v57 = vld [vmem:[%s1 + $0x70] sm:$0xf]
  %v58 = vld [vmem:[%s1 + $0x74] sm:$0xf]
  %v59 = vld [vmem:[%s1 + $0x78] sm:$0xf]
  %v60 = vld [vmem:[%s1 + $0x7c] sm:$0xf]
  %v61 = vld [vmem:[%s1 + $0x80] sm:$0xf]
  %v62 = vld [vmem:[%s1 + $0x84] sm:$0xf]
  %v63 = vld [vmem:[%s1 + $0x88] sm:$0xf]
  %v64 = vld [vmem:[%s1 + $0x8c] sm:$0xf]
  %v65 = vld [vmem:[%s1 + $0x90] sm:$0xf]
  %v66 = vld [vmem:[%s1 + $0x94] sm:$0xf]
  %v67 = vld [vmem:[%s1 + $0x98] sm:$0xf]
  %v68 = vld [vmem:[%s1 + $0x9c] sm:$0xf]
  %v69 = vld [vmem:[%s1 + $0xa0] sm:$0xf]
  %v70 = vld [vmem:[%s1 + $0xa4] sm:$0xf]
  %v71 = vld [vmem:[%s1 + $0xa8] sm:$0xf]
  %v72 = vld [vmem:[%s1 + $0xac] sm:$0xf]
  %v73 = vld [vmem:[%s1 + $0xb0] sm:$0xf]
  %v74 = vld [vmem:[%s1 + $0xb4] sm:$0xf]
  %v75 = vld [vmem:[%s1 + $0xb8] sm:$0xf]
  %v76 = vld [vmem:[%s1 + $0xbc] sm:$0xf]
  %v77 = vld [vmem:[%s1 + $0xc0] sm:$0xf]
  %v78 = vld [vmem:[%s1 + $0xc4] sm:$0xf]
  %v79 = vld [vmem:[%s1 + $0xc8] sm:$0xf]
  %v80 = vld [vmem:[%s1 + $0xcc] sm:$0xf]
  %v81 = vld [vmem:[%s1 + $0xd0] sm:$0xf]
  %v82 = vld [vmem:[%s1 + $0xd4] sm:$0xf]
  %v83 = vld [vmem:[%s1 + $0xd8] sm:$0xf]
  %v84 = vld [vmem:[%s1 + $0xdc] sm:$0xf]
  %v85 = vld [vmem:[%s1 + $0xe0] sm:$0xf]
  %v86 = vld [vmem:[%s1 + $0xe4] sm:$0xf]
  %v87 = vld [vmem:[%s1 + $0xe8] sm:$0xf]
  %v88 = vld [vmem:[%s1 + $0xec] sm:$0xf]
  %v89 = vld [vmem:[%s1 + $0xf0] sm:$0xf]
  %v90 = vld [vmem:[%s1 + $0xf4] sm:$0xf]
  %v91 = vld [vmem:[%s1 + $0xf8] sm:$0xf]
  %v92 = vld [vmem:[%s1 + $0xfc] sm:$0xf]
  %v93 = vld [vmem:[%s1 + $0x100] sm:$0xf]
  %v94 = vld [vmem:[%s1 + $0x104] sm:$0xf]
  %v95 = vld [vmem:[%s1 + $0x108] sm:$0xf]
  %v96 = vld [vmem:[%s1 + $0x10c] sm:$0xf]
  %v97 = vld [vmem:[%s1 + $0x110] sm:$0xf]
  %v98 = vld [vmem:[%s1 + $0x114] sm:$0xf]
  %v99 = vld [vmem:[%s1 + $0x118] sm:$0xf]
  %v100 = vld [vmem:[%s1 + $0x11c] sm:$0xf]
  %v101 = vld [vmem:[%s1 + $0x120] sm:$0xf]
  %v102 = vld [vmem:[%s1 + $0x124] sm:$0xf]
  %v103 = vld [vmem:[%s1 + $0x128] sm:$0xf]
  %v104 = vld [vmem:[%s1 + $0x12c] sm:$0xf]
  %v105 = vld [vmem:[%s1 + $0x130] sm:$0xf]
  %v106 = vld [vmem:[%s1 + $0x134] sm:$0xf]
  %v107 = vld [vmem:[%s1 + $0x138] sm:$0xf]
  %v108 = vld [vmem:[%s1 + $0x13c] sm:$0xf]
  %v109 = vld [vmem:[%s1 + $0x140] sm:$0xf]
  %v110 = vld [vmem:[%s1 + $0x144] sm:$0xf]
  %v111 = vld [vmem:[%s1 + $0x148] sm:$0xf]
  %v112 = vld [vmem:[%s1 + $0x14c] sm:$0xf]
  %v113 = vld [vmem:[%s1 + $0x150] sm:$0xf]
  %v114 = vld [vmem:[%s1 + $0x154] sm:$0xf]
  %v115 = vld [vmem:[%s1 + $0x158] sm:$0xf]
  %v116 = vld [vmem:[%s1 + $0x15c] sm:$0xf]
  %v117 = vld [vmem:[%s1 + $0x160] sm:$0xf]
  %v118 = vld [vmem:[%s1 + $0x164] sm:$0xf]
  %v119 = vld [vmem:[%s1 + $0x168] sm:$0xf]
  %v120 = vld [vmem:[%s1 + $0x16c] sm:$0xf]
  %v121 = vld [vmem:[%s1 + $0x170] sm:$0xf]
  %v122 = vld [vmem:[%s1 + $0x174] sm:$0xf]
  %v123 = vld [vmem:[%s1 + $0x178] sm:$0xf]
  %v124 = vld [vmem:[%s1 + $0x17c] sm:$0xf]
  %v125 = vld [vmem:[%s1 + $0x180] sm:$0xf]
  %v126 = vld [vmem:[%s1 + $0x184] sm:$0xf]
  %v127 = vld [vmem:[%s1 + $0x188] sm:$0xf]
  %v128 = vld [vmem:[%s1 + $0x18c] sm:$0xf]
  %v129 = vld [vmem:[%s1 + $0x190] sm:$0xf]
  %v130 = vld [vmem:[%s1 + $0x194] sm:$0xf]
  %v131 = vld [vmem:[%s1 + $0x198] sm:$0xf]
  %v132 = vld [vmem:[%s1 + $0x19c] sm:$0xf]
  %v133 = vld [vmem:[%s1 + $0x1a0] sm:$0xf]
  %v134 = vld [vmem:[%s1 + $0x1a4] sm:$0xf]
  %v135 = vld [vmem:[%s1 + $0x1a8] sm:$0xf]
  %v136 = vld [vmem:[%s1 + $0x1ac] sm:$0xf]
  %v137 = vld [vmem:[%s1 + $0x1b0] sm:$0xf]
  %v138 = vld [vmem:[%s1 + $0x1b4] sm:$0xf]
  %v139 = vld [vmem:[%s1 + $0x1b8] sm:$0xf]
  %v140 = vld [vmem:[%s1 + $0x1bc] sm:$0xf]
  %v141 = vld [vmem:[%s1 + $0x1c0] sm:$0xf]
  %v142 = vld [vmem:[%s1 + $0x1c4] sm:$0xf]
  %v143 = vld [vmem:[%s1 + $0x1c8] sm:$0xf]
  %v144 = vld [vmem:[%s1 + $0x1cc] sm:$0xf]
  %v145 = vld [vmem:[%s1 + $0x1d0] sm:$0xf]
  %v146 = vld [vmem:[%s1 + $0x1d4] sm:$0xf]
  %v147 = vld [vmem:[%s1 + $0x1d8] sm:$0xf]
  %v148 = vld [vmem:[%s1 + $0x1dc] sm:$0xf]
  %v149 = vld [vmem:[%s1 + $0x1e0] sm:$0xf]
  %v150 = vld [vmem:[%s1 + $0x1e4] sm:$0xf]
  %v151 = vld [vmem:[%s1 + $0x1e8] sm:$0xf]
  %v152 = vld [vmem:[%s1 + $0x1ec] sm:$0xf]
  %v153 = vld [vmem:[%s1 + $0x1f0] sm:$0xf]
  %v154 = vld [vmem:[%s1 + $0x1f4] sm:$0xf]
  %v155 = vld [vmem:[%s1 + $0x1f8] sm:$0xf]
  %v156 = vld [vmem:[%s1 + $0x1fc] sm:$0xf]
  %v157 = vld [vmem:[%s1 + $0x200] sm:$0xf]
  %v158 = vld [vmem:[%s1 + $0x204] sm:$0xf]
  %v159 = vld [vmem:[%s1 + $0x208] sm:$0xf]
  %v160 = vld [vmem:[%s1 + $0x20c] sm:$0xf]
  %v161 = vld [vmem:[%s1 + $0x210] sm:$0xf]
  %v162 = vld [vmem:[%s1 + $0x214] sm:$0xf]
  %v163 = vld [vmem:[%s1 + $0x218] sm:$0xf]
  %v164 = vld [vmem:[%s1 + $0x21c] sm:$0xf]
  %v165 = vld [vmem:[%s1 + $0x220] sm:$0xf]
  %v166 = vld [vmem:[%s1 + $0x224] sm:$0xf]
  %v167 = vld [vmem:[%s1 + $0x228] sm:$0xf]
  %v168 = vld [vmem:[%s1 + $0x22c] sm:$0xf]
  %v169 = vld [vmem:[%s1 + $0x230] sm:$0xf]
  %v170 = vld [vmem:[%s1 + $0x234] sm:$0xf]
  %v171 = vld [vmem:[%s1 + $0x238] sm:$0xf]
  %v172 = vld [vmem:[%s1 + $0x23c] sm:$0xf]
  %v173 = vld [vmem:[%s1 + $0x240] sm:$0xf]
  %v174 = vld [vmem:[%s1 + $0x244] sm:$0xf]
  %v175 = vld [vmem:[%s1 + $0x248] sm:$0xf]
  %v176 = vld [vmem:[%s1 + $0x24c] sm:$0xf]
  %v177 = vld [vmem:[%s1 + $0x250] sm:$0xf]
  %v178 = vld [vmem:[%s1 + $0x254] sm:$0xf]
  %v179 = vld [vmem:[%s1 + $0x258] sm:$0xf]
  %v180 = vld [vmem:[%s1 + $0x25c] sm:$0xf]
  %v181 = vld [vmem:[%s1 + $0x260] sm:$0xf]
  %v182 = vld [vmem:[%s1 + $0x264] sm:$0xf]
  %v183 = vld [vmem:[%s1 + $0x268] sm:$0xf]
  %v184 = vld [vmem:[%s1 + $0x26c] sm:$0xf]
  %v185 = vld [vmem:[%s1 + $0x270] sm:$0xf]
  %v186 = vld [vmem:[%s1 + $0x274] sm:$0xf]
  %v187 = vld [vmem:[%s1 + $0x278] sm:$0xf]
  %v188 = vld [vmem:[%s1 + $0x27c] sm:$0xf]
  %v189 = vld [vmem:[%s1 + $0x280] sm:$0xf]
  %v190 = vld [vmem:[%s1 + $0x284] sm:$0xf]
  %v191 = vld [vmem:[%s1 + $0x288] sm:$0xf]
  %v192 = vld [vmem:[%s1 + $0x28c] sm:$0xf]
  %v193 = vld [vmem:[%s1 + $0x290] sm:$0xf]
  %v194 = vld [vmem:[%s1 + $0x294] sm:$0xf]
  %v195 = vld [vmem:[%s1 + $0x298] sm:$0xf]
  %v196 = vld [vmem:[%s1 + $0x29c] sm:$0xf]
  %v197 = vld [vmem:[%s1 + $0x2a0] sm:$0xf]
  %v198 = vld [vmem:[%s1 + $0x2a4] sm:$0xf]
  %v199 = vld [vmem:[%s1 + $0x2a8] sm:$0xf]
  %v200 = vld [vmem:[%s1 + $0x2ac] sm:$0xf]
  %v201 = vld [vmem:[%s1 + $0x2b0] sm:$0xf]
  %v202 = vld [vmem:[%s1 + $0x2b4] sm:$0xf]
  %v203 = vld [vmem:[%s1 + $0x2b8] sm:$0xf]
  %v204 = vld [vmem:[%s1 + $0x2bc] sm:$0xf]
  %v205 = vld [vmem:[%s1 + $0x2c0] sm:$0xf]
  %v206 = vld [vmem:[%s1 + $0x2c4] sm:$0xf]
  %v207 = vld [vmem:[%s1 + $0x2c8] sm:$0xf]
  %v208 = vld [vmem:[%s1 + $0x2cc] sm:$0xf]
  %v209 = vld [vmem:[%s1 + $0x2d0] sm:$0xf]
  %v210 = vld [vmem:[%s1 + $0x2d4] sm:$0xf]
  %v211 = vld [vmem:[%s1 + $0x2d8] sm:$0xf]
  %v212 = vld [vmem:[%s1 + $0x2dc] sm:$0xf]
  %v213 = vld [vmem:[%s1 + $0x2e0] sm:$0xf]
  %v214 = vld [vmem:[%s1 + $0x2e4] sm:$0xf]
  %v215 = vld [vmem:[%s1 + $0x2e8] sm:$0xf]
  %v216 = vld [vmem:[%s1 + $0x2ec] sm:$0xf]
  %v217 = vld [vmem:[%s1 + $0x2f0] sm:$0xf]
  %v218 = vld [vmem:[%s1 + $0x2f4] sm:$0xf]
  %v219 = vld [vmem:[%s1 + $0x2f8] sm:$0xf]
  %v220 = vld [vmem:[%s1 + $0x2fc] sm:$0xf]
  %v221 = vld [vmem:[%s1 + $0x300] sm:$0xf]
  %v222 = vld [vmem:[%s1 + $0x304] sm:$0xf]
  %v223 = vld [vmem:[%s1 + $0x308] sm:$0xf]
  %v224 = vld [vmem:[%s1 + $0x30c] sm:$0xf]
  %v225 = vld [vmem:[%s1 + $0x310] sm:$0xf]
  %v226 = vld [vmem:[%s1 + $0x314] sm:$0xf]
  %v227 = vld [vmem:[%s1 + $0x318] sm:$0xf]
  %v228 = vld [vmem:[%s1 + $0x31c] sm:$0xf]
  %v229 = vld [vmem:[%s1 + $0x320] sm:$0xf]
  %v230 = vld [vmem:[%s1 + $0x324] sm:$0xf]
  %v231 = vld [vmem:[%s1 + $0x328] sm:$0xf]
  %v232 = vld [vmem:[%s1 + $0x32c] sm:$0xf]
  %v233 = vld [vmem:[%s1 + $0x330] sm:$0xf]
  %v234 = vld [vmem:[%s1 + $0x334] sm:$0xf]
  %v235 = vld [vmem:[%s1 + $0x338] sm:$0xf]
  %v236 = vld [vmem:[%s1 + $0x33c] sm:$0xf]
  %v237 = vld [vmem:[%s1 + $0x340] sm:$0xf]
  %v238 = vld [vmem:[%s1 + $0x344] sm:$0xf]
  %v239 = vld [vmem:[%s1 + $0x348] sm:$0xf]
  %v240 = vld [vmem:[%s1 + $0x34c] sm:$0xf]
  %v241 = vld [vmem:[%s1 + $0x350] sm:$0xf]
  %v242 = vld [vmem:[%s1 + $0x354] sm:$0xf]
  %v243 = vld [vmem:[%s1 + $0x358] sm:$0xf]
  %v244 = vld [vmem:[%s1 + $0x35c] sm:$0xf]
  %v245 = vld [vmem:[%s1 + $0x360] sm:$0xf]
  %v246 = vld [vmem:[%s1 + $0x364] sm:$0xf]
  %v247 = vld [vmem:[%s1 + $0x368] sm:$0xf]
  %v248 = vld [vmem:[%s1 + $0x36c] sm:$0xf]
  %v249 = vld [vmem:[%s1 + $0x370] sm:$0xf]
  %v250 = vld [vmem:[%s1 + $0x374] sm:$0xf]
  %v251 = vld [vmem:[%s1 + $0x378] sm:$0xf]
  %v252 = vld [vmem:[%s1 + $0x37c] sm:$0xf]
  %v253 = vld [vmem:[%s1 + $0x380] sm:$0xf]
  %v254 = vld [vmem:[%s1 + $0x384] sm:$0xf]
  %v255 = vld [vmem:[%s1 + $0x388] sm:$0xf]
  %v256 = vld [vmem:[%s1 + $0x38c] sm:$0xf]
  %v257 = vld [vmem:[%s1 + $0x390] sm:$0xf]
  %v258 = vld [vmem:[%s1 + $0x394] sm:$0xf]
  %v259 = vld [vmem:[%s1 + $0x398] sm:$0xf]
  %v260 = vld [vmem:[%s1 + $0x39c] sm:$0xf]
  %v261 = vld [vmem:[%s1 + $0x3a0] sm:$0xf]
  %v262 = vld [vmem:[%s1 + $0x3a4] sm:$0xf]
  %v263 = vld [vmem:[%s1 + $0x3a8] sm:$0xf]
  %v264 = vld [vmem:[%s1 + $0x3ac] sm:$0xf]
  %v265 = vld [vmem:[%s1 + $0x3b0] sm:$0xf]
  %v266 = vld [vmem:[%s1 + $0x3b4] sm:$0xf]
  %v267 = vld [vmem:[%s1 + $0x3b8] sm:$0xf]
  %v268 = vld [vmem:[%s1 + $0x3bc] sm:$0xf]
  %v269 = vld [vmem:[%s1 + $0x3c0] sm:$0xf]
  %v270 = vld [vmem:[%s1 + $0x3c4] sm:$0xf]
  %v271 = vld [vmem:[%s1 + $0x3c8] sm:$0xf]
  %v272 = vld [vmem:[%s1 + $0x3cc] sm:$0xf]
  %v273 = vld [vmem:[%s1 + $0x3d0] sm:$0xf]
  %v274 = vld [vmem:[%s1 + $0x3d4] sm:$0xf]
  %v275 = vld [vmem:[%s1 + $0x3d8] sm:$0xf]
  %v276 = vld [vmem:[%s1 + $0x3dc] sm:$0xf]
  %v277 = vld [vmem:[%s1 + $0x3e0] sm:$0xf]
  %v278 = vld [vmem:[%s1 + $0x3e4] sm:$0xf]
  %v279 = vld [vmem:[%s1 + $0x3e8] sm:$0xf]
  %v280 = vld [vmem:[%s1 + $0x3ec] sm:$0xf]
  %v281 = vld [vmem:[%s1 + $0x3f0] sm:$0xf]
  %v282 = vld [vmem:[%s1 + $0x3f4] sm:$0xf]
  %v283 = vld [vmem:[%s1 + $0x3f8] sm:$0xf]
  %v284 = vld [vmem:[%s1 + $0x3fc] sm:$0xf]
  %v293 = vunpack.c.l.b16 %v21
  %v294 = vunpack.c.h.b16 %v21
  %v295 = vunpack.c.l.b16 %v22
  %v296 = vunpack.c.h.b16 %v22
  %v297 = vunpack.c.l.b16 %v23
  %v298 = vunpack.c.h.b16 %v23
  %v299 = vunpack.c.l.b16 %v24
  %v300 = vunpack.c.h.b16 %v24
  %v301 = vunpack.c.l.b16 %v25
  %v302 = vunpack.c.h.b16 %v25
  %v303 = vunpack.c.l.b16 %v26
  %v304 = vunpack.c.h.b16 %v26
  %v305 = vunpack.c.l.b16 %v27
  %v306 = vunpack.c.h.b16 %v27
  %v307 = vunpack.c.l.b16 %v28
  %v308 = vunpack.c.h.b16 %v28
  %v309 = vpack.c.b16 %v293, %v293
  %v310 = vpack.c.b16 %v294, %v294
  %v311 = vpack.c.b16 %v295, %v295
  %v312 = vpack.c.b16 %v296, %v296
  %v313 = vpack.c.b16 %v297, %v297
  %v314 = vpack.c.b16 %v298, %v298
  %v315 = vpack.c.b16 %v299, %v299
  %v316 = vpack.c.b16 %v300, %v300
  %v317 = vpack.c.b16 %v301, %v301
  %v318 = vpack.c.b16 %v302, %v302
  %v319 = vpack.c.b16 %v303, %v303
  %v320 = vpack.c.b16 %v304, %v304
  %v321 = vpack.c.b16 %v305, %v305
  %v322 = vpack.c.b16 %v306, %v306
  %v323 = vpack.c.b16 %v307, %v307
  %v324 = vpack.c.b16 %v308, %v308
  %v597 = vunpack.c.l.b16 %v29
  %v598 = vunpack.c.l.b16 %v30
  %v599 = vunpack.c.l.b16 %v31
  %v600 = vunpack.c.l.b16 %v32
  %v601 = vunpack.c.l.b16 %v33
  %v602 = vunpack.c.l.b16 %v34
  %v603 = vunpack.c.l.b16 %v35
  %v604 = vunpack.c.l.b16 %v36
  %v605 = vunpack.c.l.b16 %v37
  %v606 = vunpack.c.l.b16 %v38
  %v607 = vunpack.c.l.b16 %v39
  %v608 = vunpack.c.l.b16 %v40
  %v609 = vunpack.c.l.b16 %v41
  %v610 = vunpack.c.l.b16 %v42
  %v611 = vunpack.c.l.b16 %v43
  %v612 = vunpack.c.l.b16 %v44
  %v613 = vunpack.c.l.b16 %v45
  %v614 = vunpack.c.l.b16 %v46
  %v615 = vunpack.c.l.b16 %v47
  %v616 = vunpack.c.l.b16 %v48
  %v617 = vunpack.c.l.b16 %v49
  %v618 = vunpack.c.l.b16 %v50
  %v619 = vunpack.c.l.b16 %v51
  %v620 = vunpack.c.l.b16 %v52
  %v621 = vunpack.c.l.b16 %v53
  %v622 = vunpack.c.l.b16 %v54
  %v623 = vunpack.c.l.b16 %v55
  %v624 = vunpack.c.l.b16 %v56
  %v625 = vunpack.c.l.b16 %v57
  %v626 = vunpack.c.l.b16 %v58
  %v627 = vunpack.c.l.b16 %v59
  %v628 = vunpack.c.l.b16 %v60
  %v629 = vunpack.c.l.b16 %v61
  %v630 = vunpack.c.l.b16 %v62
  %v631 = vunpack.c.l.b16 %v63
  %v632 = vunpack.c.l.b16 %v64
  %v633 = vunpack.c.l.b16 %v65
  %v634 = vunpack.c.l.b16 %v66
  %v635 = vunpack.c.l.b16 %v67
  %v636 = vunpack.c.l.b16 %v68
  %v637 = vunpack.c.l.b16 %v69
  %v638 = vunpack.c.l.b16 %v70
  %v639 = vunpack.c.l.b16 %v71
  %v640 = vunpack.c.l.b16 %v72
  %v641 = vunpack.c.l.b16 %v73
  %v642 = vunpack.c.l.b16 %v74
  %v643 = vunpack.c.l.b16 %v75
  %v644 = vunpack.c.l.b16 %v76
  %v645 = vunpack.c.l.b16 %v77
  %v646 = vunpack.c.l.b16 %v78
  %v647 = vunpack.c.l.b16 %v79
  %v648 = vunpack.c.l.b16 %v80
  %v649 = vunpack.c.l.b16 %v81
  %v650 = vunpack.c.l.b16 %v82
  %v651 = vunpack.c.l.b16 %v83
  %v652 = vunpack.c.l.b16 %v84
  %v653 = vunpack.c.l.b16 %v85
  %v654 = vunpack.c.l.b16 %v86
  %v655 = vunpack.c.l.b16 %v87
  %v656 = vunpack.c.l.b16 %v88
  %v657 = vunpack.c.l.b16 %v89
  %v658 = vunpack.c.l.b16 %v90
  %v659 = vunpack.c.l.b16 %v91
  %v660 = vunpack.c.l.b16 %v92
  %v661 = vunpack.c.l.b16 %v93
  %v662 = vunpack.c.l.b16 %v94
  %v663 = vunpack.c.l.b16 %v95
  %v664 = vunpack.c.l.b16 %v96
  %v665 = vunpack.c.l.b16 %v97
  %v666 = vunpack.c.l.b16 %v98
  %v667 = vunpack.c.l.b16 %v99
  %v668 = vunpack.c.l.b16 %v100
  %v669 = vunpack.c.l.b16 %v101
  %v670 = vunpack.c.l.b16 %v102
  %v671 = vunpack.c.l.b16 %v103
  %v672 = vunpack.c.l.b16 %v104
  %v673 = vunpack.c.l.b16 %v105
  %v674 = vunpack.c.l.b16 %v106
  %v675 = vunpack.c.l.b16 %v107
  %v676 = vunpack.c.l.b16 %v108
  %v677 = vunpack.c.l.b16 %v109
  %v678 = vunpack.c.l.b16 %v110
  %v679 = vunpack.c.l.b16 %v111
  %v680 = vunpack.c.l.b16 %v112
  %v681 = vunpack.c.l.b16 %v113
  %v682 = vunpack.c.l.b16 %v114
  %v683 = vunpack.c.l.b16 %v115
  %v684 = vunpack.c.l.b16 %v116
  %v685 = vunpack.c.l.b16 %v117
  %v686 = vunpack.c.l.b16 %v118
  %v687 = vunpack.c.l.b16 %v119
  %v688 = vunpack.c.l.b16 %v120
  %v689 = vunpack.c.l.b16 %v121
  %v690 = vunpack.c.l.b16 %v122
  %v691 = vunpack.c.l.b16 %v123
  %v692 = vunpack.c.l.b16 %v124
  %v693 = vunpack.c.l.b16 %v125
  %v694 = vunpack.c.l.b16 %v126
  %v695 = vunpack.c.l.b16 %v127
  %v696 = vunpack.c.l.b16 %v128
  %v697 = vunpack.c.l.b16 %v129
  %v698 = vunpack.c.l.b16 %v130
  %v699 = vunpack.c.l.b16 %v131
  %v700 = vunpack.c.l.b16 %v132
  %v701 = vunpack.c.l.b16 %v133
  %v702 = vunpack.c.l.b16 %v134
  %v703 = vunpack.c.l.b16 %v135
  %v704 = vunpack.c.l.b16 %v136
  %v705 = vunpack.c.l.b16 %v137
  %v706 = vunpack.c.l.b16 %v138
  %v707 = vunpack.c.l.b16 %v139
  %v708 = vunpack.c.l.b16 %v140
  %v709 = vunpack.c.l.b16 %v141
  %v710 = vunpack.c.l.b16 %v142
  %v711 = vunpack.c.l.b16 %v143
  %v712 = vunpack.c.l.b16 %v144
  %v713 = vunpack.c.l.b16 %v145
  %v714 = vunpack.c.l.b16 %v146
  %v715 = vunpack.c.l.b16 %v147
  %v716 = vunpack.c.l.b16 %v148
  %v717 = vunpack.c.l.b16 %v149
  %v718 = vunpack.c.l.b16 %v150
  %v719 = vunpack.c.l.b16 %v151
  %v720 = vunpack.c.l.b16 %v152
  %v721 = vunpack.c.l.b16 %v153
  %v722 = vunpack.c.l.b16 %v154
  %v723 = vunpack.c.l.b16 %v155
  %v724 = vunpack.c.l.b16 %v156
  %v725 = vunpack.c.l.b16 %v157
  %v726 = vunpack.c.l.b16 %v158
  %v727 = vunpack.c.l.b16 %v159
  %v728 = vunpack.c.l.b16 %v160
  %v729 = vunpack.c.l.b16 %v161
  %v730 = vunpack.c.l.b16 %v162
  %v731 = vunpack.c.l.b16 %v163
  %v732 = vunpack.c.l.b16 %v164
  %v733 = vunpack.c.l.b16 %v165
  %v734 = vunpack.c.l.b16 %v166
  %v735 = vunpack.c.l.b16 %v167
  %v736 = vunpack.c.l.b16 %v168
  %v737 = vunpack.c.l.b16 %v169
  %v738 = vunpack.c.l.b16 %v170
  %v739 = vunpack.c.l.b16 %v171
  %v740 = vunpack.c.l.b16 %v172
  %v741 = vunpack.c.l.b16 %v173
  %v742 = vunpack.c.l.b16 %v174
  %v743 = vunpack.c.l.b16 %v175
  %v744 = vunpack.c.l.b16 %v176
  %v745 = vunpack.c.l.b16 %v177
  %v746 = vunpack.c.l.b16 %v178
  %v747 = vunpack.c.l.b16 %v179
  %v748 = vunpack.c.l.b16 %v180
  %v749 = vunpack.c.l.b16 %v181
  %v750 = vunpack.c.l.b16 %v182
  %v751 = vunpack.c.l.b16 %v183
  %v752 = vunpack.c.l.b16 %v184
  %v753 = vunpack.c.l.b16 %v185
  %v754 = vunpack.c.l.b16 %v186
  %v755 = vunpack.c.l.b16 %v187
  %v756 = vunpack.c.l.b16 %v188
  %v757 = vunpack.c.l.b16 %v189
  %v758 = vunpack.c.l.b16 %v190
  %v759 = vunpack.c.l.b16 %v191
  %v760 = vunpack.c.l.b16 %v192
  %v761 = vunpack.c.l.b16 %v193
  %v762 = vunpack.c.l.b16 %v194
  %v763 = vunpack.c.l.b16 %v195
  %v764 = vunpack.c.l.b16 %v196
  %v765 = vunpack.c.l.b16 %v197
  %v766 = vunpack.c.l.b16 %v198
  %v767 = vunpack.c.l.b16 %v199
  %v768 = vunpack.c.l.b16 %v200
  %v769 = vunpack.c.l.b16 %v201
  %v770 = vunpack.c.l.b16 %v202
  %v771 = vunpack.c.l.b16 %v203
  %v772 = vunpack.c.l.b16 %v204
  %v773 = vunpack.c.l.b16 %v205
  %v774 = vunpack.c.l.b16 %v206
  %v775 = vunpack.c.l.b16 %v207
  %v776 = vunpack.c.l.b16 %v208
  %v777 = vunpack.c.l.b16 %v209
  %v778 = vunpack.c.l.b16 %v210
  %v779 = vunpack.c.l.b16 %v211
  %v780 = vunpack.c.l.b16 %v212
  %v781 = vunpack.c.l.b16 %v213
  %v782 = vunpack.c.l.b16 %v214
  %v783 = vunpack.c.l.b16 %v215
  %v784 = vunpack.c.l.b16 %v216
  %v785 = vunpack.c.l.b16 %v217
  %v786 = vunpack.c.l.b16 %v218
  %v787 = vunpack.c.l.b16 %v219
  %v788 = vunpack.c.l.b16 %v220
  %v789 = vunpack.c.l.b16 %v221
  %v790 = vunpack.c.l.b16 %v222
  %v791 = vunpack.c.l.b16 %v223
  %v792 = vunpack.c.l.b16 %v224
  %v793 = vunpack.c.l.b16 %v225
  %v794 = vunpack.c.l.b16 %v226
  %v795 = vunpack.c.l.b16 %v227
  %v796 = vunpack.c.l.b16 %v228
  %v797 = vunpack.c.l.b16 %v229
  %v798 = vunpack.c.l.b16 %v230
  %v799 = vunpack.c.l.b16 %v231
  %v800 = vunpack.c.l.b16 %v232
  %v801 = vunpack.c.l.b16 %v233
  %v802 = vunpack.c.l.b16 %v234
  %v803 = vunpack.c.l.b16 %v235
  %v804 = vunpack.c.l.b16 %v236
  %v805 = vunpack.c.l.b16 %v237
  %v806 = vunpack.c.l.b16 %v238
  %v807 = vunpack.c.l.b16 %v239
  %v808 = vunpack.c.l.b16 %v240
  %v809 = vunpack.c.l.b16 %v241
  %v810 = vunpack.c.l.b16 %v242
  %v811 = vunpack.c.l.b16 %v243
  %v812 = vunpack.c.l.b16 %v244
  %v813 = vunpack.c.l.b16 %v245
  %v814 = vunpack.c.l.b16 %v246
  %v815 = vunpack.c.l.b16 %v247
  %v816 = vunpack.c.l.b16 %v248
  %v817 = vunpack.c.l.b16 %v249
  %v818 = vunpack.c.l.b16 %v250
  %v819 = vunpack.c.l.b16 %v251
  %v820 = vunpack.c.l.b16 %v252
  %v821 = vunpack.c.l.b16 %v253
  %v822 = vunpack.c.l.b16 %v254
  %v823 = vunpack.c.l.b16 %v255
  %v824 = vunpack.c.l.b16 %v256
  %v825 = vunpack.c.l.b16 %v257
  %v826 = vunpack.c.l.b16 %v258
  %v827 = vunpack.c.l.b16 %v259
  %v828 = vunpack.c.l.b16 %v260
  %v829 = vunpack.c.l.b16 %v261
  %v830 = vunpack.c.l.b16 %v262
  %v831 = vunpack.c.l.b16 %v263
  %v832 = vunpack.c.l.b16 %v264
  %v833 = vunpack.c.l.b16 %v265
  %v834 = vunpack.c.l.b16 %v266
  %v835 = vunpack.c.l.b16 %v267
  %v836 = vunpack.c.l.b16 %v268
  %v837 = vunpack.c.l.b16 %v269
  %v838 = vunpack.c.l.b16 %v270
  %v839 = vunpack.c.l.b16 %v271
  %v840 = vunpack.c.l.b16 %v272
  %v841 = vunpack.c.l.b16 %v273
  %v842 = vunpack.c.l.b16 %v274
  %v843 = vunpack.c.l.b16 %v275
  %v844 = vunpack.c.l.b16 %v276
  %v845 = vunpack.c.l.b16 %v277
  %v846 = vunpack.c.l.b16 %v278
  %v847 = vunpack.c.l.b16 %v279
  %v848 = vunpack.c.l.b16 %v280
  %v849 = vunpack.c.l.b16 %v281
  %v850 = vunpack.c.l.b16 %v282
  %v851 = vunpack.c.l.b16 %v283
  %v852 = vunpack.c.l.b16 %v284
  %v853 = vpack.c.b16 %v598, %v597
  %v854 = vpack.c.b16 %v600, %v599
  %v855 = vpack.c.b16 %v602, %v601
  %v856 = vpack.c.b16 %v604, %v603
  %v857 = vpack.c.b16 %v606, %v605
  %v858 = vpack.c.b16 %v608, %v607
  %v859 = vpack.c.b16 %v610, %v609
  %v860 = vpack.c.b16 %v612, %v611
  %v861 = vpack.c.b16 %v614, %v613
  %v862 = vpack.c.b16 %v616, %v615
  %v863 = vpack.c.b16 %v618, %v617
  %v864 = vpack.c.b16 %v620, %v619
  %v865 = vpack.c.b16 %v622, %v621
  %v866 = vpack.c.b16 %v624, %v623
  %v867 = vpack.c.b16 %v626, %v625
  %v868 = vpack.c.b16 %v628, %v627
  %v869 = vpack.c.b16 %v630, %v629
  %v870 = vpack.c.b16 %v632, %v631
  %v871 = vpack.c.b16 %v634, %v633
  %v872 = vpack.c.b16 %v636, %v635
  %v873 = vpack.c.b16 %v638, %v637
  %v874 = vpack.c.b16 %v640, %v639
  %v875 = vpack.c.b16 %v642, %v641
  %v876 = vpack.c.b16 %v644, %v643
  %v877 = vpack.c.b16 %v646, %v645
  %v878 = vpack.c.b16 %v648, %v647
  %v879 = vpack.c.b16 %v650, %v649
  %v880 = vpack.c.b16 %v652, %v651
  %v881 = vpack.c.b16 %v654, %v653
  %v882 = vpack.c.b16 %v656, %v655
  %v883 = vpack.c.b16 %v658, %v657
  %v884 = vpack.c.b16 %v660, %v659
  %v885 = vpack.c.b16 %v662, %v661
  %v886 = vpack.c.b16 %v664, %v663
  %v887 = vpack.c.b16 %v666, %v665
  %v888 = vpack.c.b16 %v668, %v667
  %v889 = vpack.c.b16 %v670, %v669
  %v890 = vpack.c.b16 %v672, %v671
  %v891 = vpack.c.b16 %v674, %v673
  %v892 = vpack.c.b16 %v676, %v675
  %v893 = vpack.c.b16 %v678, %v677
  %v894 = vpack.c.b16 %v680, %v679
  %v895 = vpack.c.b16 %v682, %v681
  %v896 = vpack.c.b16 %v684, %v683
  %v897 = vpack.c.b16 %v686, %v685
  %v898 = vpack.c.b16 %v688, %v687
  %v899 = vpack.c.b16 %v690, %v689
  %v900 = vpack.c.b16 %v692, %v691
  %v901 = vpack.c.b16 %v694, %v693
  %v902 = vpack.c.b16 %v696, %v695
  %v903 = vpack.c.b16 %v698, %v697
  %v904 = vpack.c.b16 %v700, %v699
  %v905 = vpack.c.b16 %v702, %v701
  %v906 = vpack.c.b16 %v704, %v703
  %v907 = vpack.c.b16 %v706, %v705
  %v908 = vpack.c.b16 %v708, %v707
  %v909 = vpack.c.b16 %v710, %v709
  %v910 = vpack.c.b16 %v712, %v711
  %v911 = vpack.c.b16 %v714, %v713
  %v912 = vpack.c.b16 %v716, %v715
  %v913 = vpack.c.b16 %v718, %v717
  %v914 = vpack.c.b16 %v720, %v719
  %v915 = vpack.c.b16 %v722, %v721
  %v916 = vpack.c.b16 %v724, %v723
  %v917 = vpack.c.b16 %v726, %v725
  %v918 = vpack.c.b16 %v728, %v727
  %v919 = vpack.c.b16 %v730, %v729
  %v920 = vpack.c.b16 %v732, %v731
  %v921 = vpack.c.b16 %v734, %v733
  %v922 = vpack.c.b16 %v736, %v735
  %v923 = vpack.c.b16 %v738, %v737
  %v924 = vpack.c.b16 %v740, %v739
  %v925 = vpack.c.b16 %v742, %v741
  %v926 = vpack.c.b16 %v744, %v743
  %v927 = vpack.c.b16 %v746, %v745
  %v928 = vpack.c.b16 %v748, %v747
  %v929 = vpack.c.b16 %v750, %v749
  %v930 = vpack.c.b16 %v752, %v751
  %v931 = vpack.c.b16 %v754, %v753
  %v932 = vpack.c.b16 %v756, %v755
  %v933 = vpack.c.b16 %v758, %v757
  %v934 = vpack.c.b16 %v760, %v759
  %v935 = vpack.c.b16 %v762, %v761
  %v936 = vpack.c.b16 %v764, %v763
  %v937 = vpack.c.b16 %v766, %v765
  %v938 = vpack.c.b16 %v768, %v767
  %v939 = vpack.c.b16 %v770, %v769
  %v940 = vpack.c.b16 %v772, %v771
  %v941 = vpack.c.b16 %v774, %v773
  %v942 = vpack.c.b16 %v776, %v775
  %v943 = vpack.c.b16 %v778, %v777
  %v944 = vpack.c.b16 %v780, %v779
  %v945 = vpack.c.b16 %v782, %v781
  %v946 = vpack.c.b16 %v784, %v783
  %v947 = vpack.c.b16 %v786, %v785
  %v948 = vpack.c.b16 %v788, %v787
  %v949 = vpack.c.b16 %v790, %v789
  %v950 = vpack.c.b16 %v792, %v791
  %v951 = vpack.c.b16 %v794, %v793
  %v952 = vpack.c.b16 %v796, %v795
  %v953 = vpack.c.b16 %v798, %v797
  %v954 = vpack.c.b16 %v800, %v799
  %v955 = vpack.c.b16 %v802, %v801
  %v956 = vpack.c.b16 %v804, %v803
  %v957 = vpack.c.b16 %v806, %v805
  %v958 = vpack.c.b16 %v808, %v807
  %v959 = vpack.c.b16 %v810, %v809
  %v960 = vpack.c.b16 %v812, %v811
  %v961 = vpack.c.b16 %v814, %v813
  %v962 = vpack.c.b16 %v816, %v815
  %v963 = vpack.c.b16 %v818, %v817
  %v964 = vpack.c.b16 %v820, %v819
  %v965 = vpack.c.b16 %v822, %v821
  %v966 = vpack.c.b16 %v824, %v823
  %v967 = vpack.c.b16 %v826, %v825
  %v968 = vpack.c.b16 %v828, %v827
  %v969 = vpack.c.b16 %v830, %v829
  %v970 = vpack.c.b16 %v832, %v831
  %v971 = vpack.c.b16 %v834, %v833
  %v972 = vpack.c.b16 %v836, %v835
  %v973 = vpack.c.b16 %v838, %v837
  %v974 = vpack.c.b16 %v840, %v839
  %v975 = vpack.c.b16 %v842, %v841
  %v976 = vpack.c.b16 %v844, %v843
  %v977 = vpack.c.b16 %v846, %v845
  %v978 = vpack.c.b16 %v848, %v847
  %v979 = vpack.c.b16 %v850, %v849
  %v980 = vpack.c.b16 %v852, %v851
  %1109 = vmatprep.subr.bf16.mxu0 0
  %1110 = vmatpush1.bf16.msra.mxu0 %v853
  %1111 = vmatprep.subr.bf16.mxu0 0
  %1112 = vmatpush1.bf16.msra.mxu0 %v854
  %1113 = vmatprep.subr.bf16.mxu0 0
  %1114 = vmatpush1.bf16.msra.mxu0 %v855
  %1115 = vmatprep.subr.bf16.mxu0 0
  %1116 = vmatpush1.bf16.msra.mxu0 %v856
  %1117 = vmatprep.subr.bf16.mxu0 0
  %1118 = vmatpush1.bf16.msra.mxu0 %v857
  %1119 = vmatprep.subr.bf16.mxu0 0
  %1120 = vmatpush1.bf16.msra.mxu0 %v858
  %1121 = vmatprep.subr.bf16.mxu0 0
  %1122 = vmatpush1.bf16.msra.mxu0 %v859
  %1123 = vmatprep.subr.bf16.mxu0 0
  %1124 = vmatpush1.bf16.msra.mxu0 %v860
  %1125 = vmatprep.subr.bf16.mxu0 0
  %1126 = vmatpush1.bf16.msra.mxu0 %v861
  %1127 = vmatprep.subr.bf16.mxu0 0
  %1128 = vmatpush1.bf16.msra.mxu0 %v862
  %1129 = vmatprep.subr.bf16.mxu0 0
  %1130 = vmatpush1.bf16.msra.mxu0 %v863
  %1131 = vmatprep.subr.bf16.mxu0 0
  %1132 = vmatpush1.bf16.msra.mxu0 %v864
  %1133 = vmatprep.subr.bf16.mxu0 0
  %1134 = vmatpush1.bf16.msra.mxu0 %v865
  %1135 = vmatprep.subr.bf16.mxu0 0
  %1136 = vmatpush1.bf16.msra.mxu0 %v866
  %1137 = vmatprep.subr.bf16.mxu0 0
  %1138 = vmatpush1.bf16.msra.mxu0 %v867
  %1139 = vmatprep.subr.bf16.mxu0 0
  %1140 = vmatpush1.bf16.msra.mxu0 %v868
  %1141 = vmatprep.mubr.bf16.mxu0 %v310
  %1142 = vmatmul.mubr.bf16.gmra.mrb[0].mxu0 %v309
  %v1143 = vpop.f32.mrb[0].mxu0
  %v1144 = vadd.f32 0.0, %v1143
  %v1145 = vpop.f32.mrb[0].mxu0
  %v1146 = vpop.f32.mrb[0].mxu0
  %v1147 = vpop.f32.mrb[0].mxu0
  %1148 = vdwg.mxu0
  %1149 = vmatprep.subr.bf16.mxu0 0
  %1150 = vmatpush1.bf16.msra.mxu0 %v869
  %1151 = vmatprep.subr.bf16.mxu0 0
  %1152 = vmatpush1.bf16.msra.mxu0 %v870
  %1153 = vmatprep.subr.bf16.mxu0 0
  %1154 = vmatpush1.bf16.msra.mxu0 %v871
  %1155 = vmatprep.subr.bf16.mxu0 0
  %1156 = vmatpush1.bf16.msra.mxu0 %v872
  %1157 = vmatprep.subr.bf16.mxu0 0
  %1158 = vmatpush1.bf16.msra.mxu0 %v873
  %1159 = vmatprep.subr.bf16.mxu0 0
  %1160 = vmatpush1.bf16.msra.mxu0 %v874
  %1161 = vmatprep.subr.bf16.mxu0 0
  %1162 = vmatpush1.bf16.msra.mxu0 %v875
  %1163 = vmatprep.subr.bf16.mxu0 0
  %1164 = vmatpush1.bf16.msra.mxu0 %v876
  %1165 = vmatprep.subr.bf16.mxu0 0
  %1166 = vmatpush1.bf16.msra.mxu0 %v877
  %1167 = vmatprep.subr.bf16.mxu0 0
  %1168 = vmatpush1.bf16.msra.mxu0 %v878
  %1169 = vmatprep.subr.bf16.mxu0 0
  %1170 = vmatpush1.bf16.msra.mxu0 %v879
  %1171 = vmatprep.subr.bf16.mxu0 0
  %1172 = vmatpush1.bf16.msra.mxu0 %v880
  %1173 = vmatprep.subr.bf16.mxu0 0
  %1174 = vmatpush1.bf16.msra.mxu0 %v881
  %1175 = vmatprep.subr.bf16.mxu0 0
  %1176 = vmatpush1.bf16.msra.mxu0 %v882
  %1177 = vmatprep.subr.bf16.mxu0 0
  %1178 = vmatpush1.bf16.msra.mxu0 %v883
  %1179 = vmatprep.subr.bf16.mxu0 0
  %1180 = vmatpush1.bf16.msra.mxu0 %v884
  %1181 = vmatprep.mubr.bf16.mxu0 %v312
  %1182 = vmatmul.mubr.bf16.gmra.mrb[0].mxu0 %v311
  %v1183 = vpop.f32.mrb[0].mxu0
  %v1184 = vadd.f32 %v1144, %v1183
  %v1185 = vpop.f32.mrb[0].mxu0
  %v1186 = vpop.f32.mrb[0].mxu0
  %v1187 = vpop.f32.mrb[0].mxu0
  %1188 = vdwg.mxu0
  %1189 = vmatprep.subr.bf16.mxu0 0
  %1190 = vmatpush1.bf16.msra.mxu0 %v885
  %1191 = vmatprep.subr.bf16.mxu0 0
  %1192 = vmatpush1.bf16.msra.mxu0 %v886
  %1193 = vmatprep.subr.bf16.mxu0 0
  %1194 = vmatpush1.bf16.msra.mxu0 %v887
  %1195 = vmatprep.subr.bf16.mxu0 0
  %1196 = vmatpush1.bf16.msra.mxu0 %v888
  %1197 = vmatprep.subr.bf16.mxu0 0
  %1198 = vmatpush1.bf16.msra.mxu0 %v889
  %1199 = vmatprep.subr.bf16.mxu0 0
  %1200 = vmatpush1.bf16.msra.mxu0 %v890
  %1201 = vmatprep.subr.bf16.mxu0 0
  %1202 = vmatpush1.bf16.msra.mxu0 %v891
  %1203 = vmatprep.subr.bf16.mxu0 0
  %1204 = vmatpush1.bf16.msra.mxu0 %v892
  %1205 = vmatprep.subr.bf16.mxu0 0
  %1206 = vmatpush1.bf16.msra.mxu0 %v893
  %1207 = vmatprep.subr.bf16.mxu0 0
  %1208 = vmatpush1.bf16.msra.mxu0 %v894
  %1209 = vmatprep.subr.bf16.mxu0 0
  %1210 = vmatpush1.bf16.msra.mxu0 %v895
  %1211 = vmatprep.subr.bf16.mxu0 0
  %1212 = vmatpush1.bf16.msra.mxu0 %v896
  %1213 = vmatprep.subr.bf16.mxu0 0
  %1214 = vmatpush1.bf16.msra.mxu0 %v897
  %1215 = vmatprep.subr.bf16.mxu0 0
  %1216 = vmatpush1.bf16.msra.mxu0 %v898
  %1217 = vmatprep.subr.bf16.mxu0 0
  %1218 = vmatpush1.bf16.msra.mxu0 %v899
  %1219 = vmatprep.subr.bf16.mxu0 0
  %1220 = vmatpush1.bf16.msra.mxu0 %v900
  %1221 = vmatprep.mubr.bf16.mxu0 %v314
  %1222 = vmatmul.mubr.bf16.gmra.mrb[0].mxu0 %v313
  %v1223 = vpop.f32.mrb[0].mxu0
  %v1224 = vadd.f32 %v1184, %v1223
  %v1225 = vpop.f32.mrb[0].mxu0
  %v1226 = vpop.f32.mrb[0].mxu0
  %v1227 = vpop.f32.mrb[0].mxu0
  %1228 = vdwg.mxu0
  %1229 = vmatprep.subr.bf16.mxu0 0
  %1230 = vmatpush1.bf16.msra.mxu0 %v901
  %1231 = vmatprep.subr.bf16.mxu0 0
  %1232 = vmatpush1.bf16.msra.mxu0 %v902
  %1233 = vmatprep.subr.bf16.mxu0 0
  %1234 = vmatpush1.bf16.msra.mxu0 %v903
  %1235 = vmatprep.subr.bf16.mxu0 0
  %1236 = vmatpush1.bf16.msra.mxu0 %v904
  %1237 = vmatprep.subr.bf16.mxu0 0
  %1238 = vmatpush1.bf16.msra.mxu0 %v905
  %1239 = vmatprep.subr.bf16.mxu0 0
  %1240 = vmatpush1.bf16.msra.mxu0 %v906
  %1241 = vmatprep.subr.bf16.mxu0 0
  %1242 = vmatpush1.bf16.msra.mxu0 %v907
  %1243 = vmatprep.subr.bf16.mxu0 0
  %1244 = vmatpush1.bf16.msra.mxu0 %v908
  %1245 = vmatprep.subr.bf16.mxu0 0
  %1246 = vmatpush1.bf16.msra.mxu0 %v909
  %1247 = vmatprep.subr.bf16.mxu0 0
  %1248 = vmatpush1.bf16.msra.mxu0 %v910
  %1249 = vmatprep.subr.bf16.mxu0 0
  %1250 = vmatpush1.bf16.msra.mxu0 %v911
  %1251 = vmatprep.subr.bf16.mxu0 0
  %1252 = vmatpush1.bf16.msra.mxu0 %v912
  %1253 = vmatprep.subr.bf16.mxu0 0
  %1254 = vmatpush1.bf16.msra.mxu0 %v913
  %1255 = vmatprep.subr.bf16.mxu0 0
  %1256 = vmatpush1.bf16.msra.mxu0 %v914
  %1257 = vmatprep.subr.bf16.mxu0 0
  %1258 = vmatpush1.bf16.msra.mxu0 %v915
  %1259 = vmatprep.subr.bf16.mxu0 0
  %1260 = vmatpush1.bf16.msra.mxu0 %v916
  %1261 = vmatprep.mubr.bf16.mxu0 %v316
  %1262 = vmatmul.mubr.bf16.gmra.mrb[0].mxu0 %v315
  %v1263 = vpop.f32.mrb[0].mxu0
  %v1264 = vadd.f32 %v1224, %v1263
  %v1265 = vpop.f32.mrb[0].mxu0
  %v1266 = vpop.f32.mrb[0].mxu0
  %v1267 = vpop.f32.mrb[0].mxu0
  %1268 = vdwg.mxu0
  %1269 = vmatprep.subr.bf16.mxu0 0
  %1270 = vmatpush1.bf16.msra.mxu0 %v917
  %1271 = vmatprep.subr.bf16.mxu0 0
  %1272 = vmatpush1.bf16.msra.mxu0 %v918
  %1273 = vmatprep.subr.bf16.mxu0 0
  %1274 = vmatpush1.bf16.msra.mxu0 %v919
  %1275 = vmatprep.subr.bf16.mxu0 0
  %1276 = vmatpush1.bf16.msra.mxu0 %v920
  %1277 = vmatprep.subr.bf16.mxu0 0
  %1278 = vmatpush1.bf16.msra.mxu0 %v921
  %1279 = vmatprep.subr.bf16.mxu0 0
  %1280 = vmatpush1.bf16.msra.mxu0 %v922
  %1281 = vmatprep.subr.bf16.mxu0 0
  %1282 = vmatpush1.bf16.msra.mxu0 %v923
  %1283 = vmatprep.subr.bf16.mxu0 0
  %1284 = vmatpush1.bf16.msra.mxu0 %v924
  %1285 = vmatprep.subr.bf16.mxu0 0
  %1286 = vmatpush1.bf16.msra.mxu0 %v925
  %1287 = vmatprep.subr.bf16.mxu0 0
  %1288 = vmatpush1.bf16.msra.mxu0 %v926
  %1289 = vmatprep.subr.bf16.mxu0 0
  %1290 = vmatpush1.bf16.msra.mxu0 %v927
  %1291 = vmatprep.subr.bf16.mxu0 0
  %1292 = vmatpush1.bf16.msra.mxu0 %v928
  %1293 = vmatprep.subr.bf16.mxu0 0
  %1294 = vmatpush1.bf16.msra.mxu0 %v929
  %1295 = vmatprep.subr.bf16.mxu0 0
  %1296 = vmatpush1.bf16.msra.mxu0 %v930
  %1297 = vmatprep.subr.bf16.mxu0 0
  %1298 = vmatpush1.bf16.msra.mxu0 %v931
  %1299 = vmatprep.subr.bf16.mxu0 0
  %1300 = vmatpush1.bf16.msra.mxu0 %v932
  %1301 = vmatprep.mubr.bf16.mxu0 %v318
  %1302 = vmatmul.mubr.bf16.gmra.mrb[0].mxu0 %v317
  %v1303 = vpop.f32.mrb[0].mxu0
  %v1304 = vadd.f32 %v1264, %v1303
  %v1305 = vpop.f32.mrb[0].mxu0
  %v1306 = vpop.f32.mrb[0].mxu0
  %v1307 = vpop.f32.mrb[0].mxu0
  %1308 = vdwg.mxu0
  %1309 = vmatprep.subr.bf16.mxu0 0
  %1310 = vmatpush1.bf16.msra.mxu0 %v933
  %1311 = vmatprep.subr.bf16.mxu0 0
  %1312 = vmatpush1.bf16.msra.mxu0 %v934
  %1313 = vmatprep.subr.bf16.mxu0 0
  %1314 = vmatpush1.bf16.msra.mxu0 %v935
  %1315 = vmatprep.subr.bf16.mxu0 0
  %1316 = vmatpush1.bf16.msra.mxu0 %v936
  %1317 = vmatprep.subr.bf16.mxu0 0
  %1318 = vmatpush1.bf16.msra.mxu0 %v937
  %1319 = vmatprep.subr.bf16.mxu0 0
  %1320 = vmatpush1.bf16.msra.mxu0 %v938
  %1321 = vmatprep.subr.bf16.mxu0 0
  %1322 = vmatpush1.bf16.msra.mxu0 %v939
  %1323 = vmatprep.subr.bf16.mxu0 0
  %1324 = vmatpush1.bf16.msra.mxu0 %v940
  %1325 = vmatprep.subr.bf16.mxu0 0
  %1326 = vmatpush1.bf16.msra.mxu0 %v941
  %1327 = vmatprep.subr.bf16.mxu0 0
  %1328 = vmatpush1.bf16.msra.mxu0 %v942
  %1329 = vmatprep.subr.bf16.mxu0 0
  %1330 = vmatpush1.bf16.msra.mxu0 %v943
  %1331 = vmatprep.subr.bf16.mxu0 0
  %1332 = vmatpush1.bf16.msra.mxu0 %v944
  %1333 = vmatprep.subr.bf16.mxu0 0
  %1334 = vmatpush1.bf16.msra.mxu0 %v945
  %1335 = vmatprep.subr.bf16.mxu0 0
  %1336 = vmatpush1.bf16.msra.mxu0 %v946
  %1337 = vmatprep.subr.bf16.mxu0 0
  %1338 = vmatpush1.bf16.msra.mxu0 %v947
  %1339 = vmatprep.subr.bf16.mxu0 0
  %1340 = vmatpush1.bf16.msra.mxu0 %v948
  %1341 = vmatprep.mubr.bf16.mxu0 %v320
  %1342 = vmatmul.mubr.bf16.gmra.mrb[0].mxu0 %v319
  %v1343 = vpop.f32.mrb[0].mxu0
  %v1344 = vadd.f32 %v1304, %v1343
  %v1345 = vpop.f32.mrb[0].mxu0
  %v1346 = vpop.f32.mrb[0].mxu0
  %v1347 = vpop.f32.mrb[0].mxu0
  %1348 = vdwg.mxu0
  %1349 = vmatprep.subr.bf16.mxu0 0
  %1350 = vmatpush1.bf16.msra.mxu0 %v949
  %1351 = vmatprep.subr.bf16.mxu0 0
  %1352 = vmatpush1.bf16.msra.mxu0 %v950
  %1353 = vmatprep.subr.bf16.mxu0 0
  %1354 = vmatpush1.bf16.msra.mxu0 %v951
  %1355 = vmatprep.subr.bf16.mxu0 0
  %1356 = vmatpush1.bf16.msra.mxu0 %v952
  %1357 = vmatprep.subr.bf16.mxu0 0
  %1358 = vmatpush1.bf16.msra.mxu0 %v953
  %1359 = vmatprep.subr.bf16.mxu0 0
  %1360 = vmatpush1.bf16.msra.mxu0 %v954
  %1361 = vmatprep.subr.bf16.mxu0 0
  %1362 = vmatpush1.bf16.msra.mxu0 %v955
  %1363 = vmatprep.subr.bf16.mxu0 0
  %1364 = vmatpush1.bf16.msra.mxu0 %v956
  %1365 = vmatprep.subr.bf16.mxu0 0
  %1366 = vmatpush1.bf16.msra.mxu0 %v957
  %1367 = vmatprep.subr.bf16.mxu0 0
  %1368 = vmatpush1.bf16.msra.mxu0 %v958
  %1369 = vmatprep.subr.bf16.mxu0 0
  %1370 = vmatpush1.bf16.msra.mxu0 %v959
  %1371 = vmatprep.subr.bf16.mxu0 0
  %1372 = vmatpush1.bf16.msra.mxu0 %v960
  %1373 = vmatprep.subr.bf16.mxu0 0
  %1374 = vmatpush1.bf16.msra.mxu0 %v961
  %1375 = vmatprep.subr.bf16.mxu0 0
  %1376 = vmatpush1.bf16.msra.mxu0 %v962
  %1377 = vmatprep.subr.bf16.mxu0 0
  %1378 = vmatpush1.bf16.msra.mxu0 %v963
  %1379 = vmatprep.subr.bf16.mxu0 0
  %1380 = vmatpush1.bf16.msra.mxu0 %v964
  %1381 = vmatprep.mubr.bf16.mxu0 %v322
  %1382 = vmatmul.mubr.bf16.gmra.mrb[0].mxu0 %v321
  %v1383 = vpop.f32.mrb[0].mxu0
  %v1384 = vadd.f32 %v1344, %v1383
  %v1385 = vpop.f32.mrb[0].mxu0
  %v1386 = vpop.f32.mrb[0].mxu0
  %v1387 = vpop.f32.mrb[0].mxu0
  %1388 = vdwg.mxu0
  %1389 = vmatprep.subr.bf16.mxu0 0
  %1390 = vmatpush1.bf16.msra.mxu0 %v965
  %1391 = vmatprep.subr.bf16.mxu0 0
  %1392 = vmatpush1.bf16.msra.mxu0 %v966
  %1393 = vmatprep.subr.bf16.mxu0 0
  %1394 = vmatpush1.bf16.msra.mxu0 %v967
  %1395 = vmatprep.subr.bf16.mxu0 0
  %1396 = vmatpush1.bf16.msra.mxu0 %v968
  %1397 = vmatprep.subr.bf16.mxu0 0
  %1398 = vmatpush1.bf16.msra.mxu0 %v969
  %1399 = vmatprep.subr.bf16.mxu0 0
  %1400 = vmatpush1.bf16.msra.mxu0 %v970
  %1401 = vmatprep.subr.bf16.mxu0 0
  %1402 = vmatpush1.bf16.msra.mxu0 %v971
  %1403 = vmatprep.subr.bf16.mxu0 0
  %1404 = vmatpush1.bf16.msra.mxu0 %v972
  %1405 = vmatprep.subr.bf16.mxu0 0
  %1406 = vmatpush1.bf16.msra.mxu0 %v973
  %1407 = vmatprep.subr.bf16.mxu0 0
  %1408 = vmatpush1.bf16.msra.mxu0 %v974
  %1409 = vmatprep.subr.bf16.mxu0 0
  %1410 = vmatpush1.bf16.msra.mxu0 %v975
  %1411 = vmatprep.subr.bf16.mxu0 0
  %1412 = vmatpush1.bf16.msra.mxu0 %v976
  %1413 = vmatprep.subr.bf16.mxu0 0
  %1414 = vmatpush1.bf16.msra.mxu0 %v977
  %1415 = vmatprep.subr.bf16.mxu0 0
  %1416 = vmatpush1.bf16.msra.mxu0 %v978
  %1417 = vmatprep.subr.bf16.mxu0 0
  %1418 = vmatpush1.bf16.msra.mxu0 %v979
  %1419 = vmatprep.subr.bf16.mxu0 0
  %1420 = vmatpush1.bf16.msra.mxu0 %v980
  %1421 = vmatprep.mubr.bf16.mxu0 %v324
  %1422 = vmatmul.mubr.bf16.gmra.mrb[0].mxu0 %v323
  %v1423 = vpop.f32.mrb[0].mxu0
  %v1424 = vadd.f32 %v1384, %v1423
  %v1425 = vpop.f32.mrb[0].mxu0
  %v1426 = vpop.f32.mrb[0].mxu0
  %v1427 = vpop.f32.mrb[0].mxu0
  %1428 = vdwg.mxu0
  %1429 = vst [vmem:[%s2] sm:$0xff] %v1424
  %v1430 = vld [vmem:[%s3] sm:$0x1]
  %v1431 = vrot.slane %v1424, 4
  %v1432 = vadd.f32 %v1424, %v1431
  %v1433 = vrot.slane %v1432, 2
  %v1434 = vadd.f32 %v1432, %v1433
  %v1435 = vrot.slane %v1434, 1
  %v1436 = vadd.f32 %v1434, %v1435
  %v1437 = vadd.f32 %v1430, %v1436
  %1438 = vst [vmem:[%s3] sm:$0x1] %v1437
  %v1439 = vld [vmem:[%s4] sm:$0x1]
  %v1440 = vmul.f32 %v1424, %v1424
  %v1441 = vrot.slane %v1440, 4
  %v1442 = vadd.f32 %v1440, %v1441
  %v1443 = vrot.slane %v1442, 2
  %v1444 = vadd.f32 %v1442, %v1443
  %v1445 = vrot.slane %v1444, 1
  %v1446 = vadd.f32 %v1444, %v1445
  %v1447 = vadd.f32 %v1439, %v1446
  %1448 = vst [vmem:[%s4] sm:$0x1] %v1447
  // Predicated region
  $region14: #{img_discriminator_forward.23} parent=0 // pred_check
    _
  $region15: #{img_discriminator_forward.23} parent=0 // pred_check_branch
    %1450 = sbr.rel (0) target = $region17
  $region16: #{img_discriminator_forward.23} parent=0 // pred_region
    _
  $region17: #{img_discriminator_forward.23} parent=0 // pred_fallthru
    _
  // Predicated region
  $region18: #{img_discriminator_forward.23} parent=0 // pred_check
    _
  $region19: #{img_discriminator_forward.23} parent=0 // pred_check_branch
    %1452 = sbr.rel (0) target = $region21
  $region20: #{img_discriminator_forward.23} parent=0 // pred_region
    _
  $region21: #{img_discriminator_forward.23} parent=0 // pred_fallthru
    _
  // Predicated region
  $region22: #{img_discriminator_forward.23} parent=0 // pred_check
    _
  $region23: #{img_discriminator_forward.23} parent=0 // pred_check_branch
    %1454 = sbr.rel (0) target = $region25
  $region24: #{img_discriminator_forward.23} parent=0 // pred_region
    _
  $region25: #{img_discriminator_forward.23} parent=0 // pred_fallthru
    _
  // Predicated region
  $region26: #{img_discriminator_forward.23} parent=0 // pred_check
    _
  $region27: #{img_discriminator_forward.23} parent=0 // pred_check_branch
    %1456 = sbr.rel (0) target = $region29
  $region28: #{img_discriminator_forward.23} parent=0 // pred_region
    _
  $region29: #{img_discriminator_forward.23} parent=0 // pred_fallthru
    _
  // Predicated region
  $region30: #{img_discriminator_forward.23} parent=0 // pred_check
    _
  $region31: #{img_discriminator_forward.23} parent=0 // pred_check_branch
    %1458 = sbr.rel (0) target = $region33
  $region32: #{img_discriminator_forward.23} parent=0 // pred_region
    _
  $region33: #{img_discriminator_forward.23} parent=0 // pred_fallthru
    _
  // Predicated region
  $region34: #{img_discriminator_forward.23} parent=0 // pred_check
    _
  $region35: #{img_discriminator_forward.23} parent=0 // pred_check_branch
    %1460 = sbr.rel (0) target = $region37
  $region36: #{img_discriminator_forward.23} parent=0 // pred_region
    _
  $region37: #{img_discriminator_forward.23} parent=0 // pred_fallthru
    _

</llo_original>
